<compile_context>
chip_gen: v7x
topology: tpu7x:2x2x1
jax: 0.10.0
libtpu: 0.0.40
codegen_flags: <defaults>
</compile_context>

<pallas_src>
import functools

import jax
import jax.numpy as jnp
from jax.experimental import pallas as pl
from jax.experimental.pallas import tpu as pltpu


_PARAMS = pltpu.CompilerParams(dimension_semantics=("arbitrary",))
_ACT_DTYPE = jnp.bfloat16


# ---------------------------------------------------------------------------
# pallas_call plumbing
# ---------------------------------------------------------------------------

def _full_spec(shape):
  nd = len(shape)

  def idx(i):
    return (0,) * nd

  return pl.BlockSpec(shape, idx)


def _pcall(kernel, out_shape, *arrays, scratch_shapes=()):
  multi = isinstance(out_shape, (tuple, list))
  if multi:
    out_specs = tuple(_full_spec(o.shape) for o in out_shape)
  else:
    out_specs = _full_spec(out_shape.shape)
  return pl.pallas_call(
      kernel,
      out_shape=out_shape,
      grid=(1,),
      in_specs=[_full_spec(a.shape) for a in arrays],
      out_specs=out_specs,
      scratch_shapes=list(scratch_shapes),
      compiler_params=_PARAMS,
  )(*arrays)


# ---------------------------------------------------------------------------
# Pallas kernels
# ---------------------------------------------------------------------------

def _matmul_bias_kernel(x_ref, w_ref, b_ref, o_ref, *, relu):
  """(M,K)@(K,N) + bias (+ReLU).  BN scale is pre-folded into w."""
  y = jnp.dot(x_ref[...], w_ref[...], preferred_element_type=jnp.float32)
  y = y + b_ref[...]
  if relu:
    y = jnp.maximum(y, 0.0)
  o_ref[...] = y.astype(o_ref.dtype)


def _maxpool9_kernel(p_ref, o_ref):
  """9-way elementwise max over a (9, M, C) tap stack (f32 internally)."""
  m = p_ref[0].astype(jnp.float32)
  for k in range(1, 9):
    m = jnp.maximum(m, p_ref[k].astype(jnp.float32))
  o_ref[...] = m.astype(o_ref.dtype)


def _branch2_s1_kernel(x_ref, w1_ref, b1_ref, w9_ref, bd_ref, w2_ref, b2_ref,
                       o_ref, hpad_ref):
  """Fused stride-1 branch2: pw1+BN+ReLU -> 3x3 dw+BN -> pw2+BN+ReLU.

  The pw1 output stays in a zero-padded VMEM scratch; the 9 depthwise taps are
  shifted in-kernel slices of that scratch (no HBM patch stack).
  """
  N, H, W, _ = x_ref.shape
  C = o_ref.shape[-1]

  w1 = w1_ref[...]
  b1 = b1_ref[...]
  w2 = w2_ref[...]
  b2 = b2_ref[...]

  # zero border for the depthwise padding
  hpad_ref[...] = jnp.zeros_like(hpad_ref)

  # pw1 (BN scale folded into w1) + bias + ReLU, row by row into the scratch
  for n in range(N):
    for h in range(H):
      row = jnp.dot(x_ref[n, h, :, :], w1, preferred_element_type=jnp.float32)
      row = jnp.maximum(row + b1, 0.0)
      hpad_ref[n, h + 1, 1:W + 1, :] = row

  # 3x3 depthwise (stride 1, pad 1) + BN bias: 9 shifted taps from VMEM
  acc = jnp.zeros((N, H, W, C), jnp.float32)
  for k in range(9):
    ky, kx = divmod(k, 3)
    acc = acc + hpad_ref[:, ky:ky + H, kx:kx + W, :] * w9_ref[k]
  y = acc + bd_ref[...]

  # pw2 (BN scale folded) + bias + ReLU, row by row to the output
  for n in range(N):
    for h in range(H):
      row = jnp.dot(y[n, h].astype(jnp.bfloat16), w2,
                    preferred_element_type=jnp.float32)
      row = jnp.maximum(row + b2, 0.0)
      o_ref[n, h, :, :] = row.astype(o_ref.dtype)


def _down_block_kernel(p_ref, m_ref,
                       w9a_ref, bda_ref, wpa_ref, bpa_ref,
                       w1_ref, b1_ref, w9b_ref, bdb_ref, w2_ref, b2_ref,
                       o1_ref, o2_ref):
  """Fused stride-2 InvertedResidual block (both branches, one kernel).

  p_ref: (9, M, Cin) strided 3x3 zero-padded taps of the block input.
  m_ref: (9, M, 1)   1.0 where the tap hits a real pixel, 0.0 at padding
                     (needed because branch2's depthwise pads the *pw1 output*
                     with zeros, and relu(0 @ W1 + b1) != 0).
  branch1: dw+BN -> 1x1+BN+ReLU      branch2: 1x1+BN+ReLU -> dw+BN -> 1x1+BN+ReLU
  """
  _, M, Cin = p_ref.shape
  bfw = w1_ref.shape[1]

  w1 = w1_ref[...]
  b1 = b1_ref[...]

  acc1 = jnp.zeros((M, Cin), jnp.float32)
  acc2 = jnp.zeros((M, bfw), jnp.float32)
  for k in range(9):
    tap = p_ref[k]
    # branch1 depthwise tap (input is zero-padded, so the tap is already 0)
    acc1 = acc1 + tap.astype(jnp.float32) * w9a_ref[k]
    # branch2: pw1(+BN+ReLU) applied per tap, masked at pad positions, then dw
    h = jnp.dot(tap, w1, preferred_element_type=jnp.float32)
    h = jnp.maximum(h + b1, 0.0) * m_ref[k]
    acc2 = acc2 + h * w9b_ref[k]

  y1 = (acc1 + bda_ref[...]).astype(jnp.bfloat16)
  o1 = jnp.dot(y1, wpa_ref[...], preferred_element_type=jnp.float32)
  o1 = jnp.maximum(o1 + bpa_ref[...], 0.0)

  y2 = (acc2 + bdb_ref[...]).astype(jnp.bfloat16)
  o2 = jnp.dot(y2, w2_ref[...], preferred_element_type=jnp.float32)
  o2 = jnp.maximum(o2 + b2_ref[...], 0.0)

  o1_ref[...] = o1.astype(o1_ref.dtype)
  o2_ref[...] = o2.astype(o2_ref.dtype)


def _tail_kernel(x_ref, w5_ref, b5_ref, wf_ref, bfc_ref, o_ref, *, N, S):
  """Fused tail: conv5 (1x1)+BN+ReLU -> global average pool -> fc."""
  h = jnp.dot(x_ref[...], w5_ref[...], preferred_element_type=jnp.float32)
  h = jnp.maximum(h + b5_ref[...], 0.0)
  # TODO(synk): dropout between the pool and fc is identity (inference).
  wf = wf_ref[...]
  bfc = bfc_ref[...]
  for n in range(N):
    g = jnp.mean(h[n * S:(n + 1) * S, :], axis=0, keepdims=True)
    logit = jnp.dot(g.astype(jnp.bfloat16), wf,
                    preferred_element_type=jnp.float32) + bfc
    o_ref[n:n + 1, :] = logit.astype(o_ref.dtype)


# ---------------------------------------------------------------------------
# JAX glue (data movement only)
# ---------------------------------------------------------------------------

def extract_patch_stack(x, stride, pad_value):
  """x: (N,H,W,C) -> (9, N*Ho*Wo, C) 3x3 pad-1 tap slabs (used for stride-2)."""
  N, H, W, C = x.shape
  xp = jnp.pad(x, ((0, 0), (1, 1), (1, 1), (0, 0)), constant_values=pad_value)
  Ho = (H + 2 - 3) // stride + 1
  Wo = (W + 2 - 3) // stride + 1
  taps = []
  for ky in range(3):
    for kx in range(3):
      sl = xp[:, ky:ky + (Ho - 1) * stride + 1:stride,
              kx:kx + (Wo - 1) * stride + 1:stride, :]
      taps.append(sl.reshape(N * Ho * Wo, C))
  return jnp.stack(taps, axis=0), Ho, Wo


def conv1_im2col(x):
  """x: (N,H,W,1) -> (N*Ho*Wo, 9) im2col for the dense 3x3/2 conv1 (no transpose)."""
  N, H, W, _ = x.shape
  xp = jnp.pad(x, ((0, 0), (1, 1), (1, 1), (0, 0)))
  Ho = (H + 2 - 3) // 2 + 1
  Wo = (W + 2 - 3) // 2 + 1
  cols = []
  for ky in range(3):
    for kx in range(3):
      cols.append(xp[:, ky:ky + 2 * (Ho - 1) + 1:2,
                     kx:kx + 2 * (Wo - 1) + 1:2, :])
  X = jnp.concatenate(cols, axis=-1).reshape(N * Ho * Wo, 9)
  return X, Ho, Wo


def channel_shuffle(x, groups):
  # NHWC equivalent of the PyTorch NCHW shuffle (same channel permutation).
  N, H, W, C = x.shape
  x = x.reshape(N, H, W, groups, C // groups)
  x = jnp.transpose(x, (0, 1, 2, 4, 3))
  return x.reshape(N, H, W, C)


def branch2_stride1(x, blk):
  """Fused branch2 for stride-1 blocks (single pallas_call)."""
  N, H, W, C = x.shape
  out_shape = jax.ShapeDtypeStruct((N, H, W, C), _ACT_DTYPE)
  return _pcall(
      _branch2_s1_kernel, out_shape,
      x, blk['b2_pw1_w'], blk['b2_pw1_b'], blk['b2_dw_w'], blk['b2_dw_b'],
      blk['b2_pw2_w'], blk['b2_pw2_b'],
      scratch_shapes=(pltpu.VMEM((N, H + 2, W + 2, C), jnp.float32),))


def down_block(x, blk):
  """Fused stride-2 InvertedResidual block (single pallas_call, both branches)."""
  N, H, W, Cin = x.shape
  patches, Ho, Wo = extract_patch_stack(x, 2, 0.0)            # (9, M, Cin)
  mask, _, _ = extract_patch_stack(
      jnp.ones((N, H, W, 1), jnp.float32), 2, 0.0)            # (9, M, 1)
  bfw = blk['b2_pw1_w'].shape[1]
  M = patches.shape[1]
  out_shapes = (jax.ShapeDtypeStruct((M, bfw), _ACT_DTYPE),
                jax.ShapeDtypeStruct((M, bfw), _ACT_DTYPE))
  o1, o2 = _pcall(
      _down_block_kernel, out_shapes,
      patches, mask,
      blk['b1_dw_w'], blk['b1_dw_b'], blk['b1_pw_w'], blk['b1_pw_b'],
      blk['b2_pw1_w'], blk['b2_pw1_b'], blk['b2_dw_w'], blk['b2_dw_b'],
      blk['b2_pw2_w'], blk['b2_pw2_b'])
  out = jnp.concatenate([o1, o2], axis=-1)                    # (M, 2*bfw)
  return out.reshape(N, Ho, Wo, 2 * bfw)


def shufflenet_v2_forward(params, x_nchw):
  # NCHW (PyTorch convention) -> NHWC internal layout, bf16 activations
  x = jnp.transpose(x_nchw, (0, 2, 3, 1)).astype(_ACT_DTYPE)
  N = x.shape[0]

  # conv1: dense 3x3 stride 2 pad 1 (Cin=1) via im2col matmul + folded BN + ReLU
  X, Ho, Wo = conv1_im2col(x)
  co = params['conv1_w'].shape[1]
  y = _pcall(functools.partial(_matmul_bias_kernel, relu=True),
             jax.ShapeDtypeStruct((X.shape[0], co), _ACT_DTYPE),
             X, params['conv1_w'], params['conv1_b'])
  x = y.reshape(N, Ho, Wo, co)

  # maxpool 3x3 stride 2 pad 1 (pad with -inf)
  C = x.shape[-1]
  patches, Ho, Wo = extract_patch_stack(x, 2, -jnp.inf)
  y = _pcall(_maxpool9_kernel,
             jax.ShapeDtypeStruct((patches.shape[1], C), _ACT_DTYPE), patches)
  x = y.reshape(N, Ho, Wo, C)

  # stages 2-4
  for stage in (2, 3, 4):
    for i, blk in enumerate(params[f'stage{stage}']):
      if i == 0:
        out = down_block(x, blk)                 # stride-2, both branches fused
      else:
        Cc = x.shape[-1]
        x1, x2 = x[..., :Cc // 2], x[..., Cc // 2:]
        out = jnp.concatenate([x1, branch2_stride1(x2, blk)], axis=-1)
      x = channel_shuffle(out, 2)

  # fused tail: conv5(1x1)+BN+ReLU -> global avg pool -> (dropout id) -> fc
  Nn, Hf, Wf, C4 = x.shape
  S = Hf * Wf
  x2d = x.reshape(Nn * S, C4)
  logits = _pcall(functools.partial(_tail_kernel, N=Nn, S=S),
                  jax.ShapeDtypeStruct((Nn, params['fc_w'].shape[1]),
                                       jnp.float32),
                  x2d, params['conv5_w'], params['conv5_b'],
                  params['fc_w'], params['fc_b'])
  return logits


# ---------------------------------------------------------------------------
# Deterministic parameter initialization (synthetic, BN scale folded into weights)
# ---------------------------------------------------------------------------

class _ParamGen:
  def __init__(self, seed):
    self._key = jax.random.PRNGKey(seed)
    self._n = 0

  def normal(self, shape, std=0.1):
    self._n += 1
    k = jax.random.fold_in(self._key, self._n)
    return (std * jax.random.normal(k, shape)).astype(jnp.float32)


def _make_bn(pg, c, eps=1e-5):
  gamma = 1.0 + pg.normal((c,), 0.05)
  beta = pg.normal((c,), 0.05)
  mean = pg.normal((c,), 0.05)
  var = 1.0 + jnp.abs(pg.normal((c,), 0.05))
  scale = gamma / jnp.sqrt(var + eps)
  bias = beta - mean * scale
  return scale, bias


def init_params(width_multiplier=0.5, num_classes=10, seed=0):
  pg = _ParamGen(seed)
  soc = [-1, 24, int(116 * width_multiplier), int(232 * width_multiplier),
         int(464 * width_multiplier), int(1024 * width_multiplier)]
  stage_repeats = [4, 8, 4]
  params = {}

  def fold_pw(cin, cout):
    w = pg.normal((cin, cout))
    scale, bias = _make_bn(pg, cout)
    return ((w * scale[None, :]).astype(jnp.bfloat16),
            bias.reshape(1, cout).astype(jnp.float32))

  def fold_dw(c):
    w9 = pg.normal((9, 1, c))
    scale, bias = _make_bn(pg, c)
    return ((w9 * scale[None, None, :]).astype(jnp.float32),
            bias.reshape(1, c).astype(jnp.float32))

  # conv1 3x3/2 (Cin=1 -> 24) in im2col (tap-major) layout, BN folded.
  # TODO(synk): tap ordering must match conv1_im2col's (ky,kx) loop order if
  # real pretrained weights are ever loaded.
  params['conv1_w'], params['conv1_b'] = fold_pw(9, soc[1])

  def make_block(in_c, out_c, stride):
    bfc = out_c // 2
    blk = {}
    if stride > 1:
      blk['b1_dw_w'], blk['b1_dw_b'] = fold_dw(in_c)
      blk['b1_pw_w'], blk['b1_pw_b'] = fold_pw(in_c, bfc)
    b2_in = in_c if stride > 1 else bfc
    blk['b2_pw1_w'], blk['b2_pw1_b'] = fold_pw(b2_in, bfc)
    blk['b2_dw_w'], blk['b2_dw_b'] = fold_dw(bfc)
    blk['b2_pw2_w'], blk['b2_pw2_b'] = fold_pw(bfc, bfc)
    return blk

  for si, stage in enumerate((2, 3, 4)):
    blocks = []
    in_c = soc[stage - 1]
    out_c = soc[stage]
    for i in range(stage_repeats[si]):
      stride = 2 if i == 0 else 1
      blocks.append(make_block(in_c, out_c, stride))
      in_c = out_c
    params[f'stage{stage}'] = blocks

  # conv5 (1x1 232 -> 512) + folded BN, and the final fc
  params['conv5_w'], params['conv5_b'] = fold_pw(soc[4], soc[5])
  params['fc_w'] = pg.normal((soc[5], num_classes)).astype(jnp.bfloat16)
  params['fc_b'] = pg.normal((num_classes,)).reshape(
      1, num_classes).astype(jnp.float32)
  return params


# ---------------------------------------------------------------------------

if __name__ == "__main__":
  key = jax.random.PRNGKey(0)
  # NCHW input like the PyTorch module: batch=2, 1 input channel, 32x32 spatial
  x = jax.random.normal(key, (2, 1, 32, 32), jnp.float32)

  params = init_params(width_multiplier=0.5, num_classes=10, seed=0)
  fwd = jax.jit(shufflenet_v2_forward)
  out = fwd(params, x)
  jax.block_until_ready(out)
  assert out.shape == (2, 10), out.shape
  assert bool(jnp.all(jnp.isfinite(out)))
  print("KERNEL_OK")
</pallas_src>

<mosaic_0001>
module attributes {stable_mosaic.version = 11 : i64} {
  func.func @_matmul_bias_kernel(%arg0: i32, %arg1: memref<512x9xbf16, #tpu.memory_space<vmem>>, %arg2: memref<9x24xbf16, #tpu.memory_space<vmem>>, %arg3: memref<1x24xf32, #tpu.memory_space<vmem>>, %arg4: memref<512x24xbf16, #tpu.memory_space<vmem>>) attributes {dimension_semantics = [#tpu.dimension_semantics<arbitrary>], iteration_bounds = array<i64: 1>, scalar_prefetch = 0 : i64, scratch_operands = 0 : i64, tpu.core_type = #tpu.core_type<tc>, window_params = [{pipeline_mode = #tpu.pipeline_mode<synchronous>, transform_indices = @transform_0, window_bounds = array<i64: 512, 9>}, {pipeline_mode = #tpu.pipeline_mode<synchronous>, transform_indices = @transform_1, window_bounds = array<i64: 9, 24>}, {pipeline_mode = #tpu.pipeline_mode<synchronous>, transform_indices = @transform_2, window_bounds = array<i64: 1, 24>}, {pipeline_mode = #tpu.pipeline_mode<synchronous>, transform_indices = @transform_3, window_bounds = array<i64: 512, 24>}]} {
    %c0 = arith.constant 0 : index
    %c0_0 = arith.constant 0 : index
    %0 = vector.load %arg1[%c0, %c0_0] : memref<512x9xbf16, #tpu.memory_space<vmem>>, vector<512x9xbf16>
    %c0_1 = arith.constant 0 : index
    %c0_2 = arith.constant 0 : index
    %1 = vector.load %arg2[%c0_1, %c0_2] : memref<9x24xbf16, #tpu.memory_space<vmem>>, vector<9x24xbf16>
    %cst = arith.constant dense<0.000000e+00> : vector<512x24xf32>
    %2 = tpu.matmul %0, %1, %cst {dimension_numbers = #tpu.dot_dimension_numbers<[1], [0], [0], [1], [0, 0, 1, 1], [], []>} : vector<512x9xbf16>, vector<9x24xbf16>, vector<512x24xf32> -> vector<512x24xf32>
    %c0_3 = arith.constant 0 : index
    %c0_4 = arith.constant 0 : index
    %3 = vector.load %arg3[%c0_3, %c0_4] : memref<1x24xf32, #tpu.memory_space<vmem>>, vector<1x24xf32>
    %4 = vector.broadcast %3 : vector<1x24xf32> to vector<512x24xf32>
    %5 = arith.addf %2, %4 : vector<512x24xf32>
    %cst_5 = arith.constant 0.000000e+00 : f32
    %6 = vector.broadcast %cst_5 : f32 to vector<512x24xf32>
    %7 = arith.maximumf %5, %6 : vector<512x24xf32>
    %8 = arith.truncf %7 : vector<512x24xf32> to vector<512x24xbf16>
    %c0_6 = arith.constant 0 : index
    %c0_7 = arith.constant 0 : index
    %9 = vector.load %arg4[%c0_6, %c0_7] : memref<512x24xbf16, #tpu.memory_space<vmem>>, vector<512x24xbf16>
    tpu.vector_store %arg4[%c0_6, %c0_7], %8 {strides = array<i32>} : memref<512x24xbf16, #tpu.memory_space<vmem>>, vector<512x24xbf16>,
    return
  }
  func.func @transform_0(%arg0: i32) -> (i32, i32) {
    %c0_i32 = arith.constant 0 : i32
    %c0_i32_0 = arith.constant 0 : i32
    %c0_i32_1 = arith.constant 0 : i32
    return %c0_i32, %c0_i32_0 : i32, i32
  }
  func.func @transform_1(%arg0: i32) -> (i32, i32) {
    %c0_i32 = arith.constant 0 : i32
    %c0_i32_0 = arith.constant 0 : i32
    %c0_i32_1 = arith.constant 0 : i32
    return %c0_i32, %c0_i32_0 : i32, i32
  }
  func.func @transform_2(%arg0: i32) -> (i32, i32) {
    %c0_i32 = arith.constant 0 : i32
    %c0_i32_0 = arith.constant 0 : i32
    %c0_i32_1 = arith.constant 0 : i32
    return %c0_i32, %c0_i32_0 : i32, i32
  }
  func.func @transform_3(%arg0: i32) -> (i32, i32) {
    %c0_i32 = arith.constant 0 : i32
    %c0_i32_0 = arith.constant 0 : i32
    %c0_i32_1 = arith.constant 0 : i32
    return %c0_i32, %c0_i32_0 : i32, i32
  }
}

module attributes {stable_mosaic.version = 11 : i64} {
  func.func @_maxpool9_kernel(%arg0: i32, %arg1: memref<9x128x24xbf16, #tpu.memory_space<vmem>>, %arg2: memref<128x24xbf16, #tpu.memory_space<vmem>>) attributes {dimension_semantics = [#tpu.dimension_semantics<arbitrary>], iteration_bounds = array<i64: 1>, scalar_prefetch = 0 : i64, scratch_operands = 0 : i64, tpu.core_type = #tpu.core_type<tc>, window_params = [{pipeline_mode = #tpu.pipeline_mode<synchronous>, transform_indices = @transform_0, window_bounds = array<i64: 9, 128, 24>}, {pipeline_mode = #tpu.pipeline_mode<synchronous>, transform_indices = @transform_1, window_bounds = array<i64: 128, 24>}]} {
    %c0 = arith.constant 0 : index
    %c0_0 = arith.constant 0 : index
    %c0_1 = arith.constant 0 : index
    %0 = vector.load %arg1[%c0, %c0_0, %c0_1] : memref<9x128x24xbf16, #tpu.memory_space<vmem>>, vector<1x128x24xbf16>
    %1 = vector.shape_cast %0 : vector<1x128x24xbf16> to vector<128x24xbf16>
    %2 = arith.extf %1 : vector<128x24xbf16> to vector<128x24xf32>
    %c1 = arith.constant 1 : index
    %c0_2 = arith.constant 0 : index
    %c0_3 = arith.constant 0 : index
    %3 = vector.load %arg1[%c1, %c0_2, %c0_3] : memref<9x128x24xbf16, #tpu.memory_space<vmem>>, vector<1x128x24xbf16>
    %4 = vector.shape_cast %3 : vector<1x128x24xbf16> to vector<128x24xbf16>
    %5 = arith.extf %4 : vector<128x24xbf16> to vector<128x24xf32>
    %6 = arith.maximumf %2, %5 : vector<128x24xf32>
    %c2 = arith.constant 2 : index
    %c0_4 = arith.constant 0 : index
    %c0_5 = arith.constant 0 : index
    %7 = vector.load %arg1[%c2, %c0_4, %c0_5] : memref<9x128x24xbf16, #tpu.memory_space<vmem>>, vector<1x128x24xbf16>
    %8 = vector.shape_cast %7 : vector<1x128x24xbf16> to vector<128x24xbf16>
    %9 = arith.extf %8 : vector<128x24xbf16> to vector<128x24xf32>
    %10 = arith.maximumf %6, %9 : vector<128x24xf32>
    %c3 = arith.constant 3 : index
    %c0_6 = arith.constant 0 : index
    %c0_7 = arith.constant 0 : index
    %11 = vector.load %arg1[%c3, %c0_6, %c0_7] : memref<9x128x24xbf16, #tpu.memory_space<vmem>>, vector<1x128x24xbf16>
    %12 = vector.shape_cast %11 : vector<1x128x24xbf16> to vector<128x24xbf16>
    %13 = arith.extf %12 : vector<128x24xbf16> to vector<128x24xf32>
    %14 = arith.maximumf %10, %13 : vector<128x24xf32>
    %c4 = arith.constant 4 : index
    %c0_8 = arith.constant 0 : index
    %c0_9 = arith.constant 0 : index
    %15 = vector.load %arg1[%c4, %c0_8, %c0_9] : memref<9x128x24xbf16, #tpu.memory_space<vmem>>, vector<1x128x24xbf16>
    %16 = vector.shape_cast %15 : vector<1x128x24xbf16> to vector<128x24xbf16>
    %17 = arith.extf %16 : vector<128x24xbf16> to vector<128x24xf32>
    %18 = arith.maximumf %14, %17 : vector<128x24xf32>
    %c5 = arith.constant 5 : index
    %c0_10 = arith.constant 0 : index
    %c0_11 = arith.constant 0 : index
    %19 = vector.load %arg1[%c5, %c0_10, %c0_11] : memref<9x128x24xbf16, #tpu.memory_space<vmem>>, vector<1x128x24xbf16>
    %20 = vector.shape_cast %19 : vector<1x128x24xbf16> to vector<128x24xbf16>
    %21 = arith.extf %20 : vector<128x24xbf16> to vector<128x24xf32>
    %22 = arith.maximumf %18, %21 : vector<128x24xf32>
    %c6 = arith.constant 6 : index
    %c0_12 = arith.constant 0 : index
    %c0_13 = arith.constant 0 : index
    %23 = vector.load %arg1[%c6, %c0_12, %c0_13] : memref<9x128x24xbf16, #tpu.memory_space<vmem>>, vector<1x128x24xbf16>
    %24 = vector.shape_cast %23 : vector<1x128x24xbf16> to vector<128x24xbf16>
    %25 = arith.extf %24 : vector<128x24xbf16> to vector<128x24xf32>
    %26 = arith.maximumf %22, %25 : vector<128x24xf32>
    %c7 = arith.constant 7 : index
    %c0_14 = arith.constant 0 : index
    %c0_15 = arith.constant 0 : index
    %27 = vector.load %arg1[%c7, %c0_14, %c0_15] : memref<9x128x24xbf16, #tpu.memory_space<vmem>>, vector<1x128x24xbf16>
    %28 = vector.shape_cast %27 : vector<1x128x24xbf16> to vector<128x24xbf16>
    %29 = arith.extf %28 : vector<128x24xbf16> to vector<128x24xf32>
    %30 = arith.maximumf %26, %29 : vector<128x24xf32>
    %c8 = arith.constant 8 : index
    %c0_16 = arith.constant 0 : index
    %c0_17 = arith.constant 0 : index
    %31 = vector.load %arg1[%c8, %c0_16, %c0_17] : memref<9x128x24xbf16, #tpu.memory_space<vmem>>, vector<1x128x24xbf16>
    %32 = vector.shape_cast %31 : vector<1x128x24xbf16> to vector<128x24xbf16>
    %33 = arith.extf %32 : vector<128x24xbf16> to vector<128x24xf32>
    %34 = arith.maximumf %30, %33 : vector<128x24xf32>
    %35 = arith.truncf %34 : vector<128x24xf32> to vector<128x24xbf16>
    %c0_18 = arith.constant 0 : index
    %c0_19 = arith.constant 0 : index
    %36 = vector.load %arg2[%c0_18, %c0_19] : memref<128x24xbf16, #tpu.memory_space<vmem>>, vector<128x24xbf16>
    tpu.vector_store %arg2[%c0_18, %c0_19], %35 {strides = array<i32>} : memref<128x24xbf16, #tpu.memory_space<vmem>>, vector<128x24xbf16>,
    return
  }
  func.func @transform_0(%arg0: i32) -> (i32, i32, i32) {
    %c0_i32 = arith.constant 0 : i32
    %c0_i32_0 = arith.constant 0 : i32
    %c0_i32_1 = arith.constant 0 : i32
    %c0_i32_2 = arith.constant 0 : i32
    return %c0_i32, %c0_i32_0, %c0_i32_1 : i32, i32, i32
  }
  func.func @transform_1(%arg0: i32) -> (i32, i32) {
    %c0_i32 = arith.constant 0 : i32
    %c0_i32_0 = arith.constant 0 : i32
    %c0_i32_1 = arith.constant 0 : i32
    return %c0_i32, %c0_i32_0 : i32, i32
  }
}

module attributes {stable_mosaic.version = 11 : i64} {
  func.func @_down_block_kernel(%arg0: i32, %arg1: memref<9x32x24xbf16, #tpu.memory_space<vmem>>, %arg2: memref<9x32x1xf32, #tpu.memory_space<vmem>>, %arg3: memref<9x1x24xf32, #tpu.memory_space<vmem>>, %arg4: memref<1x24xf32, #tpu.memory_space<vmem>>, %arg5: memref<24x29xbf16, #tpu.memory_space<vmem>>, %arg6: memref<1x29xf32, #tpu.memory_space<vmem>>, %arg7: memref<24x29xbf16, #tpu.memory_space<vmem>>, %arg8: memref<1x29xf32, #tpu.memory_space<vmem>>, %arg9: memref<9x1x29xf32, #tpu.memory_space<vmem>>, %arg10: memref<1x29xf32, #tpu.memory_space<vmem>>, %arg11: memref<29x29xbf16, #tpu.memory_space<vmem>>, %arg12: memref<1x29xf32, #tpu.memory_space<vmem>>, %arg13: memref<32x29xbf16, #tpu.memory_space<vmem>>, %arg14: memref<32x29xbf16, #tpu.memory_space<vmem>>) attributes {dimension_semantics = [#tpu.dimension_semantics<arbitrary>], iteration_bounds = array<i64: 1>, scalar_prefetch = 0 : i64, scratch_operands = 0 : i64, tpu.core_type = #tpu.core_type<tc>, window_params = [{pipeline_mode = #tpu.pipeline_mode<synchronous>, transform_indices = @transform_0, window_bounds = array<i64: 9, 32, 24>}, {pipeline_mode = #tpu.pipeline_mode<synchronous>, transform_indices = @transform_1, window_bounds = array<i64: 9, 32, 1>}, {pipeline_mode = #tpu.pipeline_mode<synchronous>, transform_indices = @transform_2, window_bounds = array<i64: 9, 1, 24>}, {pipeline_mode = #tpu.pipeline_mode<synchronous>, transform_indices = @transform_3, window_bounds = array<i64: 1, 24>}, {pipeline_mode = #tpu.pipeline_mode<synchronous>, transform_indices = @transform_4, window_bounds = array<i64: 24, 29>}, {pipeline_mode = #tpu.pipeline_mode<synchronous>, transform_indices = @transform_5, window_bounds = array<i64: 1, 29>}, {pipeline_mode = #tpu.pipeline_mode<synchronous>, transform_indices = @transform_6, window_bounds = array<i64: 24, 29>}, {pipeline_mode = #tpu.pipeline_mode<synchronous>, transform_indices = @transform_7, window_bounds = array<i64: 1, 29>}, {pipeline_mode = #tpu.pipeline_mode<synchronous>, transform_indices = @transform_8, window_bounds = array<i64: 9, 1, 29>}, {pipeline_mode = #tpu.pipeline_mode<synchronous>, transform_indices = @transform_9, window_bounds = array<i64: 1, 29>}, {pipeline_mode = #tpu.pipeline_mode<synchronous>, transform_indices = @transform_10, window_bounds = array<i64: 29, 29>}, {pipeline_mode = #tpu.pipeline_mode<synchronous>, transform_indices = @transform_11, window_bounds = array<i64: 1, 29>}, {pipeline_mode = #tpu.pipeline_mode<synchronous>, transform_indices = @transform_12, window_bounds = array<i64: 32, 29>}, {pipeline_mode = #tpu.pipeline_mode<synchronous>, transform_indices = @transform_13, window_bounds = array<i64: 32, 29>}]} {
    %c0 = arith.constant 0 : index
    %c0_0 = arith.constant 0 : index
    %0 = vector.load %arg7[%c0, %c0_0] : memref<24x29xbf16, #tpu.memory_space<vmem>>, vector<24x29xbf16>
    %c0_1 = arith.constant 0 : index
    %c0_2 = arith.constant 0 : index
    %1 = vector.load %arg8[%c0_1, %c0_2] : memref<1x29xf32, #tpu.memory_space<vmem>>, vector<1x29xf32>
    %cst = arith.constant 0.000000e+00 : f32
    %2 = vector.broadcast %cst : f32 to vector<32x24xf32>
    %cst_3 = arith.constant 0.000000e+00 : f32
    %3 = vector.broadcast %cst_3 : f32 to vector<32x29xf32>
    %c0_4 = arith.constant 0 : index
    %c0_5 = arith.constant 0 : index
    %c0_6 = arith.constant 0 : index
    %4 = vector.load %arg1[%c0_4, %c0_5, %c0_6] : memref<9x32x24xbf16, #tpu.memory_space<vmem>>, vector<1x32x24xbf16>
    %5 = vector.shape_cast %4 : vector<1x32x24xbf16> to vector<32x24xbf16>
    %6 = arith.extf %5 : vector<32x24xbf16> to vector<32x24xf32>
    %c0_7 = arith.constant 0 : index
    %c0_8 = arith.constant 0 : index
    %c0_9 = arith.constant 0 : index
    %7 = vector.load %arg3[%c0_7, %c0_8, %c0_9] : memref<9x1x24xf32, #tpu.memory_space<vmem>>, vector<1x1x24xf32>
    %8 = vector.shape_cast %7 : vector<1x1x24xf32> to vector<1x24xf32>
    %9 = vector.broadcast %8 : vector<1x24xf32> to vector<32x24xf32>
    %10 = arith.mulf %6, %9 : vector<32x24xf32>
    %11 = arith.addf %2, %10 : vector<32x24xf32>
    %cst_10 = arith.constant dense<0.000000e+00> : vector<32x29xf32>
    %12 = tpu.matmul %5, %0, %cst_10 {dimension_numbers = #tpu.dot_dimension_numbers<[1], [0], [0], [1], [0, 0, 1, 1], [], []>} : vector<32x24xbf16>, vector<24x29xbf16>, vector<32x29xf32> -> vector<32x29xf32>
    %13 = vector.broadcast %1 : vector<1x29xf32> to vector<32x29xf32>
    %14 = arith.addf %12, %13 : vector<32x29xf32>
    %cst_11 = arith.constant 0.000000e+00 : f32
    %15 = vector.broadcast %cst_11 : f32 to vector<32x29xf32>
    %16 = arith.maximumf %14, %15 : vector<32x29xf32>
    %c0_12 = arith.constant 0 : index
    %c0_13 = arith.constant 0 : index
    %c0_14 = arith.constant 0 : index
    %17 = vector.load %arg2[%c0_12, %c0_13, %c0_14] : memref<9x32x1xf32, #tpu.memory_space<vmem>>, vector<1x32x1xf32>
    %18 = vector.shape_cast %17 : vector<1x32x1xf32> to vector<32x1xf32>
    %19 = vector.broadcast %18 : vector<32x1xf32> to vector<32x29xf32>
    %20 = arith.mulf %16, %19 : vector<32x29xf32>
    %c0_15 = arith.constant 0 : index
    %c0_16 = arith.constant 0 : index
    %c0_17 = arith.constant 0 : index
    %21 = vector.load %arg9[%c0_15, %c0_16, %c0_17] : memref<9x1x29xf32, #tpu.memory_space<vmem>>, vector<1x1x29xf32>
    %22 = vector.shape_cast %21 : vector<1x1x29xf32> to vector<1x29xf32>
    %23 = vector.broadcast %22 : vector<1x29xf32> to vector<32x29xf32>
    %24 = arith.mulf %20, %23 : vector<32x29xf32>
    %25 = arith.addf %3, %24 : vector<32x29xf32>
    %c1 = arith.constant 1 : index
    %c0_18 = arith.constant 0 : index
    %c0_19 = arith.constant 0 : index
    %26 = vector.load %arg1[%c1, %c0_18, %c0_19] : memref<9x32x24xbf16, #tpu.memory_space<vmem>>, vector<1x32x24xbf16>
    %27 = vector.shape_cast %26 : vector<1x32x24xbf16> to vector<32x24xbf16>
    %28 = arith.extf %27 : vector<32x24xbf16> to vector<32x24xf32>
    %c1_20 = arith.constant 1 : index
    %c0_21 = arith.constant 0 : index
    %c0_22 = arith.constant 0 : index
    %29 = vector.load %arg3[%c1_20, %c0_21, %c0_22] : memref<9x1x24xf32, #tpu.memory_space<vmem>>, vector<1x1x24xf32>
    %30 = vector.shape_cast %29 : vector<1x1x24xf32> to vector<1x24xf32>
    %31 = vector.broadcast %30 : vector<1x24xf32> to vector<32x24xf32>
    %32 = arith.mulf %28, %31 : vector<32x24xf32>
    %33 = arith.addf %11, %32 : vector<32x24xf32>
    %cst_23 = arith.constant dense<0.000000e+00> : vector<32x29xf32>
    %34 = tpu.matmul %27, %0, %cst_23 {dimension_numbers = #tpu.dot_dimension_numbers<[1], [0], [0], [1], [0, 0, 1, 1], [], []>} : vector<32x24xbf16>, vector<24x29xbf16>, vector<32x29xf32> -> vector<32x29xf32>
    %35 = vector.broadcast %1 : vector<1x29xf32> to vector<32x29xf32>
    %36 = arith.addf %34, %35 : vector<32x29xf32>
    %cst_24 = arith.constant 0.000000e+00 : f32
    %37 = vector.broadcast %cst_24 : f32 to vector<32x29xf32>
    %38 = arith.maximumf %36, %37 : vector<32x29xf32>
    %c1_25 = arith.constant 1 : index
    %c0_26 = arith.constant 0 : index
    %c0_27 = arith.constant 0 : index
    %39 = vector.load %arg2[%c1_25, %c0_26, %c0_27] : memref<9x32x1xf32, #tpu.memory_space<vmem>>, vector<1x32x1xf32>
    %40 = vector.shape_cast %39 : vector<1x32x1xf32> to vector<32x1xf32>
    %41 = vector.broadcast %40 : vector<32x1xf32> to vector<32x29xf32>
    %42 = arith.mulf %38, %41 : vector<32x29xf32>
    %c1_28 = arith.constant 1 : index
    %c0_29 = arith.constant 0 : index
    %c0_30 = arith.constant 0 : index
    %43 = vector.load %arg9[%c1_28, %c0_29, %c0_30] : memref<9x1x29xf32, #tpu.memory_space<vmem>>, vector<1x1x29xf32>
    %44 = vector.shape_cast %43 : vector<1x1x29xf32> to vector<1x29xf32>
    %45 = vector.broadcast %44 : vector<1x29xf32> to vector<32x29xf32>
    %46 = arith.mulf %42, %45 : vector<32x29xf32>
    %47 = arith.addf %25, %46 : vector<32x29xf32>
    %c2 = arith.constant 2 : index
    %c0_31 = arith.constant 0 : index
    %c0_32 = arith.constant 0 : index
    %48 = vector.load %arg1[%c2, %c0_31, %c0_32] : memref<9x32x24xbf16, #tpu.memory_space<vmem>>, vector<1x32x24xbf16>
    %49 = vector.shape_cast %48 : vector<1x32x24xbf16> to vector<32x24xbf16>
    %50 = arith.extf %49 : vector<32x24xbf16> to vector<32x24xf32>
    %c2_33 = arith.constant 2 : index
    %c0_34 = arith.constant 0 : index
    %c0_35 = arith.constant 0 : index
    %51 = vector.load %arg3[%c2_33, %c0_34, %c0_35] : memref<9x1x24xf32, #tpu.memory_space<vmem>>, vector<1x1x24xf32>
    %52 = vector.shape_cast %51 : vector<1x1x24xf32> to vector<1x24xf32>
    %53 = vector.broadcast %52 : vector<1x24xf32> to vector<32x24xf32>
    %54 = arith.mulf %50, %53 : vector<32x24xf32>
    %55 = arith.addf %33, %54 : vector<32x24xf32>
    %cst_36 = arith.constant dense<0.000000e+00> : vector<32x29xf32>
    %56 = tpu.matmul %49, %0, %cst_36 {dimension_numbers = #tpu.dot_dimension_numbers<[1], [0], [0], [1], [0, 0, 1, 1], [], []>} : vector<32x24xbf16>, vector<24x29xbf16>, vector<32x29xf32> -> vector<32x29xf32>
    %57 = vector.broadcast %1 : vector<1x29xf32> to vector<32x29xf32>
    %58 = arith.addf %56, %57 : vector<32x29xf32>
    %cst_37 = arith.constant 0.000000e+00 : f32
    %59 = vector.broadcast %cst_37 : f32 to vector<32x29xf32>
    %60 = arith.maximumf %58, %59 : vector<32x29xf32>
    %c2_38 = arith.constant 2 : index
    %c0_39 = arith.constant 0 : index
    %c0_40 = arith.constant 0 : index
    %61 = vector.load %arg2[%c2_38, %c0_39, %c0_40] : memref<9x32x1xf32, #tpu.memory_space<vmem>>, vector<1x32x1xf32>
    %62 = vector.shape_cast %61 : vector<1x32x1xf32> to vector<32x1xf32>
    %63 = vector.broadcast %62 : vector<32x1xf32> to vector<32x29xf32>
    %64 = arith.mulf %60, %63 : vector<32x29xf32>
    %c2_41 = arith.constant 2 : index
    %c0_42 = arith.constant 0 : index
    %c0_43 = arith.constant 0 : index
    %65 = vector.load %arg9[%c2_41, %c0_42, %c0_43] : memref<9x1x29xf32, #tpu.memory_space<vmem>>, vector<1x1x29xf32>
    %66 = vector.shape_cast %65 : vector<1x1x29xf32> to vector<1x29xf32>
    %67 = vector.broadcast %66 : vector<1x29xf32> to vector<32x29xf32>
    %68 = arith.mulf %64, %67 : vector<32x29xf32>
    %69 = arith.addf %47, %68 : vector<32x29xf32>
    %c3 = arith.constant 3 : index
    %c0_44 = arith.constant 0 : index
    %c0_45 = arith.constant 0 : index
    %70 = vector.load %arg1[%c3, %c0_44, %c0_45] : memref<9x32x24xbf16, #tpu.memory_space<vmem>>, vector<1x32x24xbf16>
    %71 = vector.shape_cast %70 : vector<1x32x24xbf16> to vector<32x24xbf16>
    %72 = arith.extf %71 : vector<32x24xbf16> to vector<32x24xf32>
    %c3_46 = arith.constant 3 : index
    %c0_47 = arith.constant 0 : index
    %c0_48 = arith.constant 0 : index
    %73 = vector.load %arg3[%c3_46, %c0_47, %c0_48] : memref<9x1x24xf32, #tpu.memory_space<vmem>>, vector<1x1x24xf32>
    %74 = vector.shape_cast %73 : vector<1x1x24xf32> to vector<1x24xf32>
    %75 = vector.broadcast %74 : vector<1x24xf32> to vector<32x24xf32>
    %76 = arith.mulf %72, %75 : vector<32x24xf32>
    %77 = arith.addf %55, %76 : vector<32x24xf32>
    %cst_49 = arith.constant dense<0.000000e+00> : vector<32x29xf32>
    %78 = tpu.matmul %71, %0, %cst_49 {dimension_numbers = #tpu.dot_dimension_numbers<[1], [0], [0], [1], [0, 0, 1, 1], [], []>} : vector<32x24xbf16>, vector<24x29xbf16>, vector<32x29xf32> -> vector<32x29xf32>
    %79 = vector.broadcast %1 : vector<1x29xf32> to vector<32x29xf32>
    %80 = arith.addf %78, %79 : vector<32x29xf32>
    %cst_50 = arith.constant 0.000000e+00 : f32
    %81 = vector.broadcast %cst_50 : f32 to vector<32x29xf32>
    %82 = arith.maximumf %80, %81 : vector<32x29xf32>
    %c3_51 = arith.constant 3 : index
    %c0_52 = arith.constant 0 : index
    %c0_53 = arith.constant 0 : index
    %83 = vector.load %arg2[%c3_51, %c0_52, %c0_53] : memref<9x32x1xf32, #tpu.memory_space<vmem>>, vector<1x32x1xf32>
    %84 = vector.shape_cast %83 : vector<1x32x1xf32> to vector<32x1xf32>
    %85 = vector.broadcast %84 : vector<32x1xf32> to vector<32x29xf32>
    %86 = arith.mulf %82, %85 : vector<32x29xf32>
    %c3_54 = arith.constant 3 : index
    %c0_55 = arith.constant 0 : index
    %c0_56 = arith.constant 0 : index
    %87 = vector.load %arg9[%c3_54, %c0_55, %c0_56] : memref<9x1x29xf32, #tpu.memory_space<vmem>>, vector<1x1x29xf32>
    %88 = vector.shape_cast %87 : vector<1x1x29xf32> to vector<1x29xf32>
    %89 = vector.broadcast %88 : vector<1x29xf32> to vector<32x29xf32>
    %90 = arith.mulf %86, %89 : vector<32x29xf32>
    %91 = arith.addf %69, %90 : vector<32x29xf32>
    %c4 = arith.constant 4 : index
    %c0_57 = arith.constant 0 : index
    %c0_58 = arith.constant 0 : index
    %92 = vector.load %arg1[%c4, %c0_57, %c0_58] : memref<9x32x24xbf16, #tpu.memory_space<vmem>>, vector<1x32x24xbf16>
    %93 = vector.shape_cast %92 : vector<1x32x24xbf16> to vector<32x24xbf16>
    %94 = arith.extf %93 : vector<32x24xbf16> to vector<32x24xf32>
    %c4_59 = arith.constant 4 : index
    %c0_60 = arith.constant 0 : index
    %c0_61 = arith.constant 0 : index
    %95 = vector.load %arg3[%c4_59, %c0_60, %c0_61] : memref<9x1x24xf32, #tpu.memory_space<vmem>>, vector<1x1x24xf32>
    %96 = vector.shape_cast %95 : vector<1x1x24xf32> to vector<1x24xf32>
    %97 = vector.broadcast %96 : vector<1x24xf32> to vector<32x24xf32>
    %98 = arith.mulf %94, %97 : vector<32x24xf32>
    %99 = arith.addf %77, %98 : vector<32x24xf32>
    %cst_62 = arith.constant dense<0.000000e+00> : vector<32x29xf32>
    %100 = tpu.matmul %93, %0, %cst_62 {dimension_numbers = #tpu.dot_dimension_numbers<[1], [0], [0], [1], [0, 0, 1, 1], [], []>} : vector<32x24xbf16>, vector<24x29xbf16>, vector<32x29xf32> -> vector<32x29xf32>
    %101 = vector.broadcast %1 : vector<1x29xf32> to vector<32x29xf32>
    %102 = arith.addf %100, %101 : vector<32x29xf32>
    %cst_63 = arith.constant 0.000000e+00 : f32
    %103 = vector.broadcast %cst_63 : f32 to vector<32x29xf32>
    %104 = arith.maximumf %102, %103 : vector<32x29xf32>
    %c4_64 = arith.constant 4 : index
    %c0_65 = arith.constant 0 : index
    %c0_66 = arith.constant 0 : index
    %105 = vector.load %arg2[%c4_64, %c0_65, %c0_66] : memref<9x32x1xf32, #tpu.memory_space<vmem>>, vector<1x32x1xf32>
    %106 = vector.shape_cast %105 : vector<1x32x1xf32> to vector<32x1xf32>
    %107 = vector.broadcast %106 : vector<32x1xf32> to vector<32x29xf32>
    %108 = arith.mulf %104, %107 : vector<32x29xf32>
    %c4_67 = arith.constant 4 : index
    %c0_68 = arith.constant 0 : index
    %c0_69 = arith.constant 0 : index
    %109 = vector.load %arg9[%c4_67, %c0_68, %c0_69] : memref<9x1x29xf32, #tpu.memory_space<vmem>>, vector<1x1x29xf32>
    %110 = vector.shape_cast %109 : vector<1x1x29xf32> to vector<1x29xf32>
    %111 = vector.broadcast %110 : vector<1x29xf32> to vector<32x29xf32>
    %112 = arith.mulf %108, %111 : vector<32x29xf32>
    %113 = arith.addf %91, %112 : vector<32x29xf32>
    %c5 = arith.constant 5 : index
    %c0_70 = arith.constant 0 : index
    %c0_71 = arith.constant 0 : index
    %114 = vector.load %arg1[%c5, %c0_70, %c0_71] : memref<9x32x24xbf16, #tpu.memory_space<vmem>>, vector<1x32x24xbf16>
    %115 = vector.shape_cast %114 : vector<1x32x24xbf16> to vector<32x24xbf16>
    %116 = arith.extf %115 : vector<32x24xbf16> to vector<32x24xf32>
    %c5_72 = arith.constant 5 : index
    %c0_73 = arith.constant 0 : index
    %c0_74 = arith.constant 0 : index
    %117 = vector.load %arg3[%c5_72, %c0_73, %c0_74] : memref<9x1x24xf32, #tpu.memory_space<vmem>>, vector<1x1x24xf32>
    %118 = vector.shape_cast %117 : vector<1x1x24xf32> to vector<1x24xf32>
    %119 = vector.broadcast %118 : vector<1x24xf32> to vector<32x24xf32>
    %120 = arith.mulf %116, %119 : vector<32x24xf32>
    %121 = arith.addf %99, %120 : vector<32x24xf32>
    %cst_75 = arith.constant dense<0.000000e+00> : vector<32x29xf32>
    %122 = tpu.matmul %115, %0, %cst_75 {dimension_numbers = #tpu.dot_dimension_numbers<[1], [0], [0], [1], [0, 0, 1, 1], [], []>} : vector<32x24xbf16>, vector<24x29xbf16>, vector<32x29xf32> -> vector<32x29xf32>
    %123 = vector.broadcast %1 : vector<1x29xf32> to vector<32x29xf32>
    %124 = arith.addf %122, %123 : vector<32x29xf32>
    %cst_76 = arith.constant 0.000000e+00 : f32
    %125 = vector.broadcast %cst_76 : f32 to vector<32x29xf32>
    %126 = arith.maximumf %124, %125 : vector<32x29xf32>
    %c5_77 = arith.constant 5 : index
    %c0_78 = arith.constant 0 : index
    %c0_79 = arith.constant 0 : index
    %127 = vector.load %arg2[%c5_77, %c0_78, %c0_79] : memref<9x32x1xf32, #tpu.memory_space<vmem>>, vector<1x32x1xf32>
    %128 = vector.shape_cast %127 : vector<1x32x1xf32> to vector<32x1xf32>
    %129 = vector.broadcast %128 : vector<32x1xf32> to vector<32x29xf32>
    %130 = arith.mulf %126, %129 : vector<32x29xf32>
    %c5_80 = arith.constant 5 : index
    %c0_81 = arith.constant 0 : index
    %c0_82 = arith.constant 0 : index
    %131 = vector.load %arg9[%c5_80, %c0_81, %c0_82] : memref<9x1x29xf32, #tpu.memory_space<vmem>>, vector<1x1x29xf32>
    %132 = vector.shape_cast %131 : vector<1x1x29xf32> to vector<1x29xf32>
    %133 = vector.broadcast %132 : vector<1x29xf32> to vector<32x29xf32>
    %134 = arith.mulf %130, %133 : vector<32x29xf32>
    %135 = arith.addf %113, %134 : vector<32x29xf32>
    %c6 = arith.constant 6 : index
    %c0_83 = arith.constant 0 : index
    %c0_84 = arith.constant 0 : index
    %136 = vector.load %arg1[%c6, %c0_83, %c0_84] : memref<9x32x24xbf16, #tpu.memory_space<vmem>>, vector<1x32x24xbf16>
    %137 = vector.shape_cast %136 : vector<1x32x24xbf16> to vector<32x24xbf16>
    %138 = arith.extf %137 : vector<32x24xbf16> to vector<32x24xf32>
    %c6_85 = arith.constant 6 : index
    %c0_86 = arith.constant 0 : index
    %c0_87 = arith.constant 0 : index
    %139 = vector.load %arg3[%c6_85, %c0_86, %c0_87] : memref<9x1x24xf32, #tpu.memory_space<vmem>>, vector<1x1x24xf32>
    %140 = vector.shape_cast %139 : vector<1x1x24xf32> to vector<1x24xf32>
    %141 = vector.broadcast %140 : vector<1x24xf32> to vector<32x24xf32>
    %142 = arith.mulf %138, %141 : vector<32x24xf32>
    %143 = arith.addf %121, %142 : vector<32x24xf32>
    %cst_88 = arith.constant dense<0.000000e+00> : vector<32x29xf32>
    %144 = tpu.matmul %137, %0, %cst_88 {dimension_numbers = #tpu.dot_dimension_numbers<[1], [0], [0], [1], [0, 0, 1, 1], [], []>} : vector<32x24xbf16>, vector<24x29xbf16>, vector<32x29xf32> -> vector<32x29xf32>
    %145 = vector.broadcast %1 : vector<1x29xf32> to vector<32x29xf32>
    %146 = arith.addf %144, %145 : vector<32x29xf32>
    %cst_89 = arith.constant 0.000000e+00 : f32
    %147 = vector.broadcast %cst_89 : f32 to vector<32x29xf32>
    %148 = arith.maximumf %146, %147 : vector<32x29xf32>
    %c6_90 = arith.constant 6 : index
    %c0_91 = arith.constant 0 : index
    %c0_92 = arith.constant 0 : index
    %149 = vector.load %arg2[%c6_90, %c0_91, %c0_92] : memref<9x32x1xf32, #tpu.memory_space<vmem>>, vector<1x32x1xf32>
    %150 = vector.shape_cast %149 : vector<1x32x1xf32> to vector<32x1xf32>
    %151 = vector.broadcast %150 : vector<32x1xf32> to vector<32x29xf32>
    %152 = arith.mulf %148, %151 : vector<32x29xf32>
    %c6_93 = arith.constant 6 : index
    %c0_94 = arith.constant 0 : index
    %c0_95 = arith.constant 0 : index
    %153 = vector.load %arg9[%c6_93, %c0_94, %c0_95] : memref<9x1x29xf32, #tpu.memory_space<vmem>>, vector<1x1x29xf32>
    %154 = vector.shape_cast %153 : vector<1x1x29xf32> to vector<1x29xf32>
    %155 = vector.broadcast %154 : vector<1x29xf32> to vector<32x29xf32>
    %156 = arith.mulf %152, %155 : vector<32x29xf32>
    %157 = arith.addf %135, %156 : vector<32x29xf32>
    %c7 = arith.constant 7 : index
    %c0_96 = arith.constant 0 : index
    %c0_97 = arith.constant 0 : index
    %158 = vector.load %arg1[%c7, %c0_96, %c0_97] : memref<9x32x24xbf16, #tpu.memory_space<vmem>>, vector<1x32x24xbf16>
    %159 = vector.shape_cast %158 : vector<1x32x24xbf16> to vector<32x24xbf16>
    %160 = arith.extf %159 : vector<32x24xbf16> to vector<32x24xf32>
    %c7_98 = arith.constant 7 : index
    %c0_99 = arith.constant 0 : index
    %c0_100 = arith.constant 0 : index
    %161 = vector.load %arg3[%c7_98, %c0_99, %c0_100] : memref<9x1x24xf32, #tpu.memory_space<vmem>>, vector<1x1x24xf32>
    %162 = vector.shape_cast %161 : vector<1x1x24xf32> to vector<1x24xf32>
    %163 = vector.broadcast %162 : vector<1x24xf32> to vector<32x24xf32>
    %164 = arith.mulf %160, %163 : vector<32x24xf32>
    %165 = arith.addf %143, %164 : vector<32x24xf32>
    %cst_101 = arith.constant dense<0.000000e+00> : vector<32x29xf32>
    %166 = tpu.matmul %159, %0, %cst_101 {dimension_numbers = #tpu.dot_dimension_numbers<[1], [0], [0], [1], [0, 0, 1, 1], [], []>} : vector<32x24xbf16>, vector<24x29xbf16>, vector<32x29xf32> -> vector<32x29xf32>
    %167 = vector.broadcast %1 : vector<1x29xf32> to vector<32x29xf32>
    %168 = arith.addf %166, %167 : vector<32x29xf32>
    %cst_102 = arith.constant 0.000000e+00 : f32
    %169 = vector.broadcast %cst_102 : f32 to vector<32x29xf32>
    %170 = arith.maximumf %168, %169 : vector<32x29xf32>
    %c7_103 = arith.constant 7 : index
    %c0_104 = arith.constant 0 : index
    %c0_105 = arith.constant 0 : index
    %171 = vector.load %arg2[%c7_103, %c0_104, %c0_105] : memref<9x32x1xf32, #tpu.memory_space<vmem>>, vector<1x32x1xf32>
    %172 = vector.shape_cast %171 : vector<1x32x1xf32> to vector<32x1xf32>
    %173 = vector.broadcast %172 : vector<32x1xf32> to vector<32x29xf32>
    %174 = arith.mulf %170, %173 : vector<32x29xf32>
    %c7_106 = arith.constant 7 : index
    %c0_107 = arith.constant 0 : index
    %c0_108 = arith.constant 0 : index
    %175 = vector.load %arg9[%c7_106, %c0_107, %c0_108] : memref<9x1x29xf32, #tpu.memory_space<vmem>>, vector<1x1x29xf32>
    %176 = vector.shape_cast %175 : vector<1x1x29xf32> to vector<1x29xf32>
    %177 = vector.broadcast %176 : vector<1x29xf32> to vector<32x29xf32>
    %178 = arith.mulf %174, %177 : vector<32x29xf32>
    %179 = arith.addf %157, %178 : vector<32x29xf32>
    %c8 = arith.constant 8 : index
    %c0_109 = arith.constant 0 : index
    %c0_110 = arith.constant 0 : index
    %180 = vector.load %arg1[%c8, %c0_109, %c0_110] : memref<9x32x24xbf16, #tpu.memory_space<vmem>>, vector<1x32x24xbf16>
    %181 = vector.shape_cast %180 : vector<1x32x24xbf16> to vector<32x24xbf16>
    %182 = arith.extf %181 : vector<32x24xbf16> to vector<32x24xf32>
    %c8_111 = arith.constant 8 : index
    %c0_112 = arith.constant 0 : index
    %c0_113 = arith.constant 0 : index
    %183 = vector.load %arg3[%c8_111, %c0_112, %c0_113] : memref<9x1x24xf32, #tpu.memory_space<vmem>>, vector<1x1x24xf32>
    %184 = vector.shape_cast %183 : vector<1x1x24xf32> to vector<1x24xf32>
    %185 = vector.broadcast %184 : vector<1x24xf32> to vector<32x24xf32>
    %186 = arith.mulf %182, %185 : vector<32x24xf32>
    %187 = arith.addf %165, %186 : vector<32x24xf32>
    %cst_114 = arith.constant dense<0.000000e+00> : vector<32x29xf32>
    %188 = tpu.matmul %181, %0, %cst_114 {dimension_numbers = #tpu.dot_dimension_numbers<[1], [0], [0], [1], [0, 0, 1, 1], [], []>} : vector<32x24xbf16>, vector<24x29xbf16>, vector<32x29xf32> -> vector<32x29xf32>
    %189 = vector.broadcast %1 : vector<1x29xf32> to vector<32x29xf32>
    %190 = arith.addf %188, %189 : vector<32x29xf32>
    %cst_115 = arith.constant 0.000000e+00 : f32
    %191 = vector.broadcast %cst_115 : f32 to vector<32x29xf32>
    %192 = arith.maximumf %190, %191 : vector<32x29xf32>
    %c8_116 = arith.constant 8 : index
    %c0_117 = arith.constant 0 : index
    %c0_118 = arith.constant 0 : index
    %193 = vector.load %arg2[%c8_116, %c0_117, %c0_118] : memref<9x32x1xf32, #tpu.memory_space<vmem>>, vector<1x32x1xf32>
    %194 = vector.shape_cast %193 : vector<1x32x1xf32> to vector<32x1xf32>
    %195 = vector.broadcast %194 : vector<32x1xf32> to vector<32x29xf32>
    %196 = arith.mulf %192, %195 : vector<32x29xf32>
    %c8_119 = arith.constant 8 : index
    %c0_120 = arith.constant 0 : index
    %c0_121 = arith.constant 0 : index
    %197 = vector.load %arg9[%c8_119, %c0_120, %c0_121] : memref<9x1x29xf32, #tpu.memory_space<vmem>>, vector<1x1x29xf32>
    %198 = vector.shape_cast %197 : vector<1x1x29xf32> to vector<1x29xf32>
    %199 = vector.broadcast %198 : vector<1x29xf32> to vector<32x29xf32>
    %200 = arith.mulf %196, %199 : vector<32x29xf32>
    %201 = arith.addf %179, %200 : vector<32x29xf32>
    %c0_122 = arith.constant 0 : index
    %c0_123 = arith.constant 0 : index
    %202 = vector.load %arg4[%c0_122, %c0_123] : memref<1x24xf32, #tpu.memory_space<vmem>>, vector<1x24xf32>
    %203 = vector.broadcast %202 : vector<1x24xf32> to vector<32x24xf32>
    %204 = arith.addf %187, %203 : vector<32x24xf32>
    %205 = arith.truncf %204 : vector<32x24xf32> to vector<32x24xbf16>
    %c0_124 = arith.constant 0 : index
    %c0_125 = arith.constant 0 : index
    %206 = vector.load %arg5[%c0_124, %c0_125] : memref<24x29xbf16, #tpu.memory_space<vmem>>, vector<24x29xbf16>
    %cst_126 = arith.constant dense<0.000000e+00> : vector<32x29xf32>
    %207 = tpu.matmul %205, %206, %cst_126 {dimension_numbers = #tpu.dot_dimension_numbers<[1], [0], [0], [1], [0, 0, 1, 1], [], []>} : vector<32x24xbf16>, vector<24x29xbf16>, vector<32x29xf32> -> vector<32x29xf32>
    %c0_127 = arith.constant 0 : index
    %c0_128 = arith.constant 0 : index
    %208 = vector.load %arg6[%c0_127, %c0_128] : memref<1x29xf32, #tpu.memory_space<vmem>>, vector<1x29xf32>
    %209 = vector.broadcast %208 : vector<1x29xf32> to vector<32x29xf32>
    %210 = arith.addf %207, %209 : vector<32x29xf32>
    %cst_129 = arith.constant 0.000000e+00 : f32
    %211 = vector.broadcast %cst_129 : f32 to vector<32x29xf32>
    %212 = arith.maximumf %210, %211 : vector<32x29xf32>
    %c0_130 = arith.constant 0 : index
    %c0_131 = arith.constant 0 : index
    %213 = vector.load %arg10[%c0_130, %c0_131] : memref<1x29xf32, #tpu.memory_space<vmem>>, vector<1x29xf32>
    %214 = vector.broadcast %213 : vector<1x29xf32> to vector<32x29xf32>
    %215 = arith.addf %201, %214 : vector<32x29xf32>
    %216 = arith.truncf %215 : vector<32x29xf32> to vector<32x29xbf16>
    %c0_132 = arith.constant 0 : index
    %c0_133 = arith.constant 0 : index
    %217 = vector.load %arg11[%c0_132, %c0_133] : memref<29x29xbf16, #tpu.memory_space<vmem>>, vector<29x29xbf16>
    %cst_134 = arith.constant dense<0.000000e+00> : vector<32x29xf32>
    %218 = tpu.matmul %216, %217, %cst_134 {dimension_numbers = #tpu.dot_dimension_numbers<[1], [0], [0], [1], [0, 0, 1, 1], [], []>} : vector<32x29xbf16>, vector<29x29xbf16>, vector<32x29xf32> -> vector<32x29xf32>
    %c0_135 = arith.constant 0 : index
    %c0_136 = arith.constant 0 : index
    %219 = vector.load %arg12[%c0_135, %c0_136] : memref<1x29xf32, #tpu.memory_space<vmem>>, vector<1x29xf32>
    %220 = vector.broadcast %219 : vector<1x29xf32> to vector<32x29xf32>
    %221 = arith.addf %218, %220 : vector<32x29xf32>
    %cst_137 = arith.constant 0.000000e+00 : f32
    %222 = vector.broadcast %cst_137 : f32 to vector<32x29xf32>
    %223 = arith.maximumf %221, %222 : vector<32x29xf32>
    %224 = arith.truncf %212 : vector<32x29xf32> to vector<32x29xbf16>
    %c0_138 = arith.constant 0 : index
    %c0_139 = arith.constant 0 : index
    %225 = vector.load %arg13[%c0_138, %c0_139] : memref<32x29xbf16, #tpu.memory_space<vmem>>, vector<32x29xbf16>
    tpu.vector_store %arg13[%c0_138, %c0_139], %224 {strides = array<i32>} : memref<32x29xbf16, #tpu.memory_space<vmem>>, vector<32x29xbf16>,
    %226 = arith.truncf %223 : vector<32x29xf32> to vector<32x29xbf16>
    %c0_140 = arith.constant 0 : index
    %c0_141 = arith.constant 0 : index
    %227 = vector.load %arg14[%c0_140, %c0_141] : memref<32x29xbf16, #tpu.memory_space<vmem>>, vector<32x29xbf16>
    tpu.vector_store %arg14[%c0_140, %c0_141], %226 {strides = array<i32>} : memref<32x29xbf16, #tpu.memory_space<vmem>>, vector<32x29xbf16>,
    return
  }
  func.func @transform_0(%arg0: i32) -> (i32, i32, i32) {
    %c0_i32 = arith.constant 0 : i32
    %c0_i32_0 = arith.constant 0 : i32
    %c0_i32_1 = arith.constant 0 : i32
    %c0_i32_2 = arith.constant 0 : i32
    return %c0_i32, %c0_i32_0, %c0_i32_1 : i32, i32, i32
  }
  func.func @transform_1(%arg0: i32) -> (i32, i32, i32) {
    %c0_i32 = arith.constant 0 : i32
    %c0_i32_0 = arith.constant 0 : i32
    %c0_i32_1 = arith.constant 0 : i32
    %c0_i32_2 = arith.constant 0 : i32
    return %c0_i32, %c0_i32_0, %c0_i32_1 : i32, i32, i32
  }
  func.func @transform_2(%arg0: i32) -> (i32, i32, i32) {
    %c0_i32 = arith.constant 0 : i32
    %c0_i32_0 = arith.constant 0 : i32
    %c0_i32_1 = arith.constant 0 : i32
    %c0_i32_2 = arith.constant 0 : i32
    return %c0_i32, %c0_i32_0, %c0_i32_1 : i32, i32, i32
  }
  func.func @transform_3(%arg0: i32) -> (i32, i32) {
    %c0_i32 = arith.constant 0 : i32
    %c0_i32_0 = arith.constant 0 : i32
    %c0_i32_1 = arith.constant 0 : i32
    return %c0_i32, %c0_i32_0 : i32, i32
  }
  func.func @transform_4(%arg0: i32) -> (i32, i32) {
    %c0_i32 = arith.constant 0 : i32
    %c0_i32_0 = arith.constant 0 : i32
    %c0_i32_1 = arith.constant 0 : i32
    return %c0_i32, %c0_i32_0 : i32, i32
  }
  func.func @transform_5(%arg0: i32) -> (i32, i32) {
    %c0_i32 = arith.constant 0 : i32
    %c0_i32_0 = arith.constant 0 : i32
    %c0_i32_1 = arith.constant 0 : i32
    return %c0_i32, %c0_i32_0 : i32, i32
  }
  func.func @transform_6(%arg0: i32) -> (i32, i32) {
    %c0_i32 = arith.constant 0 : i32
    %c0_i32_0 = arith.constant 0 : i32
    %c0_i32_1 = arith.constant 0 : i32
    return %c0_i32, %c0_i32_0 : i32, i32
  }
  func.func @transform_7(%arg0: i32) -> (i32, i32) {
    %c0_i32 = arith.constant 0 : i32
    %c0_i32_0 = arith.constant 0 : i32
    %c0_i32_1 = arith.constant 0 : i32
    return %c0_i32, %c0_i32_0 : i32, i32
  }
  func.func @transform_8(%arg0: i32) -> (i32, i32, i32) {
    %c0_i32 = arith.constant 0 : i32
    %c0_i32_0 = arith.constant 0 : i32
    %c0_i32_1 = arith.constant 0 : i32
    %c0_i32_2 = arith.constant 0 : i32
    return %c0_i32, %c0_i32_0, %c0_i32_1 : i32, i32, i32
  }
  func.func @transform_9(%arg0: i32) -> (i32, i32) {
    %c0_i32 = arith.constant 0 : i32
    %c0_i32_0 = arith.constant 0 : i32
    %c0_i32_1 = arith.constant 0 : i32
    return %c0_i32, %c0_i32_0 : i32, i32
  }
  func.func @transform_10(%arg0: i32) -> (i32, i32) {
    %c0_i32 = arith.constant 0 : i32
    %c0_i32_0 = arith.constant 0 : i32
    %c0_i32_1 = arith.constant 0 : i32
    return %c0_i32, %c0_i32_0 : i32, i32
  }
  func.func @transform_11(%arg0: i32) -> (i32, i32) {
    %c0_i32 = arith.constant 0 : i32
    %c0_i32_0 = arith.constant 0 : i32
    %c0_i32_1 = arith.constant 0 : i32
    return %c0_i32, %c0_i32_0 : i32, i32
  }
  func.func @transform_12(%arg0: i32) -> (i32, i32) {
    %c0_i32 = arith.constant 0 : i32
    %c0_i32_0 = arith.constant 0 : i32
    %c0_i32_1 = arith.constant 0 : i32
    return %c0_i32, %c0_i32_0 : i32, i32
  }
  func.func @transform_13(%arg0: i32) -> (i32, i32) {
    %c0_i32 = arith.constant 0 : i32
    %c0_i32_0 = arith.constant 0 : i32
    %c0_i32_1 = arith.constant 0 : i32
    return %c0_i32, %c0_i32_0 : i32, i32
  }
}

module attributes {stable_mosaic.version = 11 : i64} {
  func.func @_branch2_s1_kernel(%arg0: i32, %arg1: memref<2x4x4x29xbf16, #tpu.memory_space<vmem>>, %arg2: memref<29x29xbf16, #tpu.memory_space<vmem>>, %arg3: memref<1x29xf32, #tpu.memory_space<vmem>>, %arg4: memref<9x1x29xf32, #tpu.memory_space<vmem>>, %arg5: memref<1x29xf32, #tpu.memory_space<vmem>>, %arg6: memref<29x29xbf16, #tpu.memory_space<vmem>>, %arg7: memref<1x29xf32, #tpu.memory_space<vmem>>, %arg8: memref<2x4x4x29xbf16, #tpu.memory_space<vmem>>, %arg9: memref<2x6x6x29xf32, #tpu.memory_space<vmem>>) attributes {dimension_semantics = [#tpu.dimension_semantics<arbitrary>], iteration_bounds = array<i64: 1>, scalar_prefetch = 0 : i64, scratch_operands = 1 : i64, tpu.core_type = #tpu.core_type<tc>, window_params = [{pipeline_mode = #tpu.pipeline_mode<synchronous>, transform_indices = @transform_0, window_bounds = array<i64: 2, 4, 4, 29>}, {pipeline_mode = #tpu.pipeline_mode<synchronous>, transform_indices = @transform_1, window_bounds = array<i64: 29, 29>}, {pipeline_mode = #tpu.pipeline_mode<synchronous>, transform_indices = @transform_2, window_bounds = array<i64: 1, 29>}, {pipeline_mode = #tpu.pipeline_mode<synchronous>, transform_indices = @transform_3, window_bounds = array<i64: 9, 1, 29>}, {pipeline_mode = #tpu.pipeline_mode<synchronous>, transform_indices = @transform_4, window_bounds = array<i64: 1, 29>}, {pipeline_mode = #tpu.pipeline_mode<synchronous>, transform_indices = @transform_5, window_bounds = array<i64: 29, 29>}, {pipeline_mode = #tpu.pipeline_mode<synchronous>, transform_indices = @transform_6, window_bounds = array<i64: 1, 29>}, {pipeline_mode = #tpu.pipeline_mode<synchronous>, transform_indices = @transform_7, window_bounds = array<i64: 2, 4, 4, 29>}]} {
    %c0 = arith.constant 0 : index
    %c0_0 = arith.constant 0 : index
    %0 = vector.load %arg2[%c0, %c0_0] : memref<29x29xbf16, #tpu.memory_space<vmem>>, vector<29x29xbf16>
    %c0_1 = arith.constant 0 : index
    %c0_2 = arith.constant 0 : index
    %1 = vector.load %arg3[%c0_1, %c0_2] : memref<1x29xf32, #tpu.memory_space<vmem>>, vector<1x29xf32>
    %c0_3 = arith.constant 0 : index
    %c0_4 = arith.constant 0 : index
    %2 = vector.load %arg6[%c0_3, %c0_4] : memref<29x29xbf16, #tpu.memory_space<vmem>>, vector<29x29xbf16>
    %c0_5 = arith.constant 0 : index
    %c0_6 = arith.constant 0 : index
    %3 = vector.load %arg7[%c0_5, %c0_6] : memref<1x29xf32, #tpu.memory_space<vmem>>, vector<1x29xf32>
    %cst = arith.constant 0.000000e+00 : f32
    %4 = vector.broadcast %cst : f32 to vector<2x6x6x29xf32>
    %c0_7 = arith.constant 0 : index
    %c0_8 = arith.constant 0 : index
    %c0_9 = arith.constant 0 : index
    %c0_10 = arith.constant 0 : index
    %5 = vector.load %arg9[%c0_7, %c0_8, %c0_9, %c0_10] : memref<2x6x6x29xf32, #tpu.memory_space<vmem>>, vector<2x6x6x29xf32>
    tpu.vector_store %arg9[%c0_7, %c0_8, %c0_9, %c0_10], %4 {strides = array<i32>} : memref<2x6x6x29xf32, #tpu.memory_space<vmem>>, vector<2x6x6x29xf32>,
    %c0_11 = arith.constant 0 : index
    %c0_12 = arith.constant 0 : index
    %c0_13 = arith.constant 0 : index
    %c0_14 = arith.constant 0 : index
    %6 = vector.load %arg1[%c0_11, %c0_12, %c0_13, %c0_14] : memref<2x4x4x29xbf16, #tpu.memory_space<vmem>>, vector<1x1x4x29xbf16>
    %7 = vector.shape_cast %6 : vector<1x1x4x29xbf16> to vector<4x29xbf16>
    %cst_15 = arith.constant dense<0.000000e+00> : vector<4x29xf32>
    %8 = tpu.matmul %7, %0, %cst_15 {dimension_numbers = #tpu.dot_dimension_numbers<[1], [0], [0], [1], [0, 0, 1, 1], [], []>} : vector<4x29xbf16>, vector<29x29xbf16>, vector<4x29xf32> -> vector<4x29xf32>
    %9 = vector.broadcast %1 : vector<1x29xf32> to vector<4x29xf32>
    %10 = arith.addf %8, %9 : vector<4x29xf32>
    %cst_16 = arith.constant 0.000000e+00 : f32
    %11 = vector.broadcast %cst_16 : f32 to vector<4x29xf32>
    %12 = arith.maximumf %10, %11 : vector<4x29xf32>
    %c0_17 = arith.constant 0 : index
    %c1 = arith.constant 1 : index
    %c1_18 = arith.constant 1 : index
    %c0_19 = arith.constant 0 : index
    %13 = vector.load %arg9[%c0_17, %c1, %c1_18, %c0_19] : memref<2x6x6x29xf32, #tpu.memory_space<vmem>>, vector<1x1x4x29xf32>
    %14 = vector.shape_cast %13 : vector<1x1x4x29xf32> to vector<4x29xf32>
    %15 = vector.shape_cast %12 : vector<4x29xf32> to vector<1x1x4x29xf32>
    tpu.vector_store %arg9[%c0_17, %c1, %c1_18, %c0_19], %15 {strides = array<i32>} : memref<2x6x6x29xf32, #tpu.memory_space<vmem>>, vector<1x1x4x29xf32>,
    %c0_20 = arith.constant 0 : index
    %c1_21 = arith.constant 1 : index
    %c0_22 = arith.constant 0 : index
    %c0_23 = arith.constant 0 : index
    %16 = vector.load %arg1[%c0_20, %c1_21, %c0_22, %c0_23] : memref<2x4x4x29xbf16, #tpu.memory_space<vmem>>, vector<1x1x4x29xbf16>
    %17 = vector.shape_cast %16 : vector<1x1x4x29xbf16> to vector<4x29xbf16>
    %cst_24 = arith.constant dense<0.000000e+00> : vector<4x29xf32>
    %18 = tpu.matmul %17, %0, %cst_24 {dimension_numbers = #tpu.dot_dimension_numbers<[1], [0], [0], [1], [0, 0, 1, 1], [], []>} : vector<4x29xbf16>, vector<29x29xbf16>, vector<4x29xf32> -> vector<4x29xf32>
    %19 = vector.broadcast %1 : vector<1x29xf32> to vector<4x29xf32>
    %20 = arith.addf %18, %19 : vector<4x29xf32>
    %cst_25 = arith.constant 0.000000e+00 : f32
    %21 = vector.broadcast %cst_25 : f32 to vector<4x29xf32>
    %22 = arith.maximumf %20, %21 : vector<4x29xf32>
    %c0_26 = arith.constant 0 : index
    %c2 = arith.constant 2 : index
    %c1_27 = arith.constant 1 : index
    %c0_28 = arith.constant 0 : index
    %23 = vector.load %arg9[%c0_26, %c2, %c1_27, %c0_28] : memref<2x6x6x29xf32, #tpu.memory_space<vmem>>, vector<1x1x4x29xf32>
    %24 = vector.shape_cast %23 : vector<1x1x4x29xf32> to vector<4x29xf32>
    %25 = vector.shape_cast %22 : vector<4x29xf32> to vector<1x1x4x29xf32>
    tpu.vector_store %arg9[%c0_26, %c2, %c1_27, %c0_28], %25 {strides = array<i32>} : memref<2x6x6x29xf32, #tpu.memory_space<vmem>>, vector<1x1x4x29xf32>,
    %c0_29 = arith.constant 0 : index
    %c2_30 = arith.constant 2 : index
    %c0_31 = arith.constant 0 : index
    %c0_32 = arith.constant 0 : index
    %26 = vector.load %arg1[%c0_29, %c2_30, %c0_31, %c0_32] : memref<2x4x4x29xbf16, #tpu.memory_space<vmem>>, vector<1x1x4x29xbf16>
    %27 = vector.shape_cast %26 : vector<1x1x4x29xbf16> to vector<4x29xbf16>
    %cst_33 = arith.constant dense<0.000000e+00> : vector<4x29xf32>
    %28 = tpu.matmul %27, %0, %cst_33 {dimension_numbers = #tpu.dot_dimension_numbers<[1], [0], [0], [1], [0, 0, 1, 1], [], []>} : vector<4x29xbf16>, vector<29x29xbf16>, vector<4x29xf32> -> vector<4x29xf32>
    %29 = vector.broadcast %1 : vector<1x29xf32> to vector<4x29xf32>
    %30 = arith.addf %28, %29 : vector<4x29xf32>
    %cst_34 = arith.constant 0.000000e+00 : f32
    %31 = vector.broadcast %cst_34 : f32 to vector<4x29xf32>
    %32 = arith.maximumf %30, %31 : vector<4x29xf32>
    %c0_35 = arith.constant 0 : index
    %c3 = arith.constant 3 : index
    %c1_36 = arith.constant 1 : index
    %c0_37 = arith.constant 0 : index
    %33 = vector.load %arg9[%c0_35, %c3, %c1_36, %c0_37] : memref<2x6x6x29xf32, #tpu.memory_space<vmem>>, vector<1x1x4x29xf32>
    %34 = vector.shape_cast %33 : vector<1x1x4x29xf32> to vector<4x29xf32>
    %35 = vector.shape_cast %32 : vector<4x29xf32> to vector<1x1x4x29xf32>
    tpu.vector_store %arg9[%c0_35, %c3, %c1_36, %c0_37], %35 {strides = array<i32>} : memref<2x6x6x29xf32, #tpu.memory_space<vmem>>, vector<1x1x4x29xf32>,
    %c0_38 = arith.constant 0 : index
    %c3_39 = arith.constant 3 : index
    %c0_40 = arith.constant 0 : index
    %c0_41 = arith.constant 0 : index
    %36 = vector.load %arg1[%c0_38, %c3_39, %c0_40, %c0_41] : memref<2x4x4x29xbf16, #tpu.memory_space<vmem>>, vector<1x1x4x29xbf16>
    %37 = vector.shape_cast %36 : vector<1x1x4x29xbf16> to vector<4x29xbf16>
    %cst_42 = arith.constant dense<0.000000e+00> : vector<4x29xf32>
    %38 = tpu.matmul %37, %0, %cst_42 {dimension_numbers = #tpu.dot_dimension_numbers<[1], [0], [0], [1], [0, 0, 1, 1], [], []>} : vector<4x29xbf16>, vector<29x29xbf16>, vector<4x29xf32> -> vector<4x29xf32>
    %39 = vector.broadcast %1 : vector<1x29xf32> to vector<4x29xf32>
    %40 = arith.addf %38, %39 : vector<4x29xf32>
    %cst_43 = arith.constant 0.000000e+00 : f32
    %41 = vector.broadcast %cst_43 : f32 to vector<4x29xf32>
    %42 = arith.maximumf %40, %41 : vector<4x29xf32>
    %c0_44 = arith.constant 0 : index
    %c4 = arith.constant 4 : index
    %c1_45 = arith.constant 1 : index
    %c0_46 = arith.constant 0 : index
    %43 = vector.load %arg9[%c0_44, %c4, %c1_45, %c0_46] : memref<2x6x6x29xf32, #tpu.memory_space<vmem>>, vector<1x1x4x29xf32>
    %44 = vector.shape_cast %43 : vector<1x1x4x29xf32> to vector<4x29xf32>
    %45 = vector.shape_cast %42 : vector<4x29xf32> to vector<1x1x4x29xf32>
    tpu.vector_store %arg9[%c0_44, %c4, %c1_45, %c0_46], %45 {strides = array<i32>} : memref<2x6x6x29xf32, #tpu.memory_space<vmem>>, vector<1x1x4x29xf32>,
    %c1_47 = arith.constant 1 : index
    %c0_48 = arith.constant 0 : index
    %c0_49 = arith.constant 0 : index
    %c0_50 = arith.constant 0 : index
    %46 = vector.load %arg1[%c1_47, %c0_48, %c0_49, %c0_50] : memref<2x4x4x29xbf16, #tpu.memory_space<vmem>>, vector<1x1x4x29xbf16>
    %47 = vector.shape_cast %46 : vector<1x1x4x29xbf16> to vector<4x29xbf16>
    %cst_51 = arith.constant dense<0.000000e+00> : vector<4x29xf32>
    %48 = tpu.matmul %47, %0, %cst_51 {dimension_numbers = #tpu.dot_dimension_numbers<[1], [0], [0], [1], [0, 0, 1, 1], [], []>} : vector<4x29xbf16>, vector<29x29xbf16>, vector<4x29xf32> -> vector<4x29xf32>
    %49 = vector.broadcast %1 : vector<1x29xf32> to vector<4x29xf32>
    %50 = arith.addf %48, %49 : vector<4x29xf32>
    %cst_52 = arith.constant 0.000000e+00 : f32
    %51 = vector.broadcast %cst_52 : f32 to vector<4x29xf32>
    %52 = arith.maximumf %50, %51 : vector<4x29xf32>
    %c1_53 = arith.constant 1 : index
    %c1_54 = arith.constant 1 : index
    %c1_55 = arith.constant 1 : index
    %c0_56 = arith.constant 0 : index
    %53 = vector.load %arg9[%c1_53, %c1_54, %c1_55, %c0_56] : memref<2x6x6x29xf32, #tpu.memory_space<vmem>>, vector<1x1x4x29xf32>
    %54 = vector.shape_cast %53 : vector<1x1x4x29xf32> to vector<4x29xf32>
    %55 = vector.shape_cast %52 : vector<4x29xf32> to vector<1x1x4x29xf32>
    tpu.vector_store %arg9[%c1_53, %c1_54, %c1_55, %c0_56], %55 {strides = array<i32>} : memref<2x6x6x29xf32, #tpu.memory_space<vmem>>, vector<1x1x4x29xf32>,
    %c1_57 = arith.constant 1 : index
    %c1_58 = arith.constant 1 : index
    %c0_59 = arith.constant 0 : index
    %c0_60 = arith.constant 0 : index
    %56 = vector.load %arg1[%c1_57, %c1_58, %c0_59, %c0_60] : memref<2x4x4x29xbf16, #tpu.memory_space<vmem>>, vector<1x1x4x29xbf16>
    %57 = vector.shape_cast %56 : vector<1x1x4x29xbf16> to vector<4x29xbf16>
    %cst_61 = arith.constant dense<0.000000e+00> : vector<4x29xf32>
    %58 = tpu.matmul %57, %0, %cst_61 {dimension_numbers = #tpu.dot_dimension_numbers<[1], [0], [0], [1], [0, 0, 1, 1], [], []>} : vector<4x29xbf16>, vector<29x29xbf16>, vector<4x29xf32> -> vector<4x29xf32>
    %59 = vector.broadcast %1 : vector<1x29xf32> to vector<4x29xf32>
    %60 = arith.addf %58, %59 : vector<4x29xf32>
    %cst_62 = arith.constant 0.000000e+00 : f32
    %61 = vector.broadcast %cst_62 : f32 to vector<4x29xf32>
    %62 = arith.maximumf %60, %61 : vector<4x29xf32>
    %c1_63 = arith.constant 1 : index
    %c2_64 = arith.constant 2 : index
    %c1_65 = arith.constant 1 : index
    %c0_66 = arith.constant 0 : index
    %63 = vector.load %arg9[%c1_63, %c2_64, %c1_65, %c0_66] : memref<2x6x6x29xf32, #tpu.memory_space<vmem>>, vector<1x1x4x29xf32>
    %64 = vector.shape_cast %63 : vector<1x1x4x29xf32> to vector<4x29xf32>
    %65 = vector.shape_cast %62 : vector<4x29xf32> to vector<1x1x4x29xf32>
    tpu.vector_store %arg9[%c1_63, %c2_64, %c1_65, %c0_66], %65 {strides = array<i32>} : memref<2x6x6x29xf32, #tpu.memory_space<vmem>>, vector<1x1x4x29xf32>,
    %c1_67 = arith.constant 1 : index
    %c2_68 = arith.constant 2 : index
    %c0_69 = arith.constant 0 : index
    %c0_70 = arith.constant 0 : index
    %66 = vector.load %arg1[%c1_67, %c2_68, %c0_69, %c0_70] : memref<2x4x4x29xbf16, #tpu.memory_space<vmem>>, vector<1x1x4x29xbf16>
    %67 = vector.shape_cast %66 : vector<1x1x4x29xbf16> to vector<4x29xbf16>
    %cst_71 = arith.constant dense<0.000000e+00> : vector<4x29xf32>
    %68 = tpu.matmul %67, %0, %cst_71 {dimension_numbers = #tpu.dot_dimension_numbers<[1], [0], [0], [1], [0, 0, 1, 1], [], []>} : vector<4x29xbf16>, vector<29x29xbf16>, vector<4x29xf32> -> vector<4x29xf32>
    %69 = vector.broadcast %1 : vector<1x29xf32> to vector<4x29xf32>
    %70 = arith.addf %68, %69 : vector<4x29xf32>
    %cst_72 = arith.constant 0.000000e+00 : f32
    %71 = vector.broadcast %cst_72 : f32 to vector<4x29xf32>
    %72 = arith.maximumf %70, %71 : vector<4x29xf32>
    %c1_73 = arith.constant 1 : index
    %c3_74 = arith.constant 3 : index
    %c1_75 = arith.constant 1 : index
    %c0_76 = arith.constant 0 : index
    %73 = vector.load %arg9[%c1_73, %c3_74, %c1_75, %c0_76] : memref<2x6x6x29xf32, #tpu.memory_space<vmem>>, vector<1x1x4x29xf32>
    %74 = vector.shape_cast %73 : vector<1x1x4x29xf32> to vector<4x29xf32>
    %75 = vector.shape_cast %72 : vector<4x29xf32> to vector<1x1x4x29xf32>
    tpu.vector_store %arg9[%c1_73, %c3_74, %c1_75, %c0_76], %75 {strides = array<i32>} : memref<2x6x6x29xf32, #tpu.memory_space<vmem>>, vector<1x1x4x29xf32>,
    %c1_77 = arith.constant 1 : index
    %c3_78 = arith.constant 3 : index
    %c0_79 = arith.constant 0 : index
    %c0_80 = arith.constant 0 : index
    %76 = vector.load %arg1[%c1_77, %c3_78, %c0_79, %c0_80] : memref<2x4x4x29xbf16, #tpu.memory_space<vmem>>, vector<1x1x4x29xbf16>
    %77 = vector.shape_cast %76 : vector<1x1x4x29xbf16> to vector<4x29xbf16>
    %cst_81 = arith.constant dense<0.000000e+00> : vector<4x29xf32>
    %78 = tpu.matmul %77, %0, %cst_81 {dimension_numbers = #tpu.dot_dimension_numbers<[1], [0], [0], [1], [0, 0, 1, 1], [], []>} : vector<4x29xbf16>, vector<29x29xbf16>, vector<4x29xf32> -> vector<4x29xf32>
    %79 = vector.broadcast %1 : vector<1x29xf32> to vector<4x29xf32>
    %80 = arith.addf %78, %79 : vector<4x29xf32>
    %cst_82 = arith.constant 0.000000e+00 : f32
    %81 = vector.broadcast %cst_82 : f32 to vector<4x29xf32>
    %82 = arith.maximumf %80, %81 : vector<4x29xf32>
    %c1_83 = arith.constant 1 : index
    %c4_84 = arith.constant 4 : index
    %c1_85 = arith.constant 1 : index
    %c0_86 = arith.constant 0 : index
    %83 = vector.load %arg9[%c1_83, %c4_84, %c1_85, %c0_86] : memref<2x6x6x29xf32, #tpu.memory_space<vmem>>, vector<1x1x4x29xf32>
    %84 = vector.shape_cast %83 : vector<1x1x4x29xf32> to vector<4x29xf32>
    %85 = vector.shape_cast %82 : vector<4x29xf32> to vector<1x1x4x29xf32>
    tpu.vector_store %arg9[%c1_83, %c4_84, %c1_85, %c0_86], %85 {strides = array<i32>} : memref<2x6x6x29xf32, #tpu.memory_space<vmem>>, vector<1x1x4x29xf32>,
    %cst_87 = arith.constant 0.000000e+00 : f32
    %86 = vector.broadcast %cst_87 : f32 to vector<2x4x4x29xf32>
    %c0_88 = arith.constant 0 : index
    %c0_89 = arith.constant 0 : index
    %c0_90 = arith.constant 0 : index
    %c0_91 = arith.constant 0 : index
    %87 = vector.load %arg9[%c0_88, %c0_89, %c0_90, %c0_91] : memref<2x6x6x29xf32, #tpu.memory_space<vmem>>, vector<2x4x4x29xf32>
    %c0_92 = arith.constant 0 : index
    %c0_93 = arith.constant 0 : index
    %c0_94 = arith.constant 0 : index
    %88 = vector.load %arg4[%c0_92, %c0_93, %c0_94] : memref<9x1x29xf32, #tpu.memory_space<vmem>>, vector<1x1x29xf32>
    %89 = vector.shape_cast %88 : vector<1x1x29xf32> to vector<1x29xf32>
    %90 = vector.shape_cast %89 : vector<1x29xf32> to vector<1x1x1x29xf32>
    %91 = vector.broadcast %90 : vector<1x1x1x29xf32> to vector<2x4x4x29xf32>
    %92 = arith.mulf %87, %91 : vector<2x4x4x29xf32>
    %93 = arith.addf %86, %92 : vector<2x4x4x29xf32>
    %c0_95 = arith.constant 0 : index
    %c0_96 = arith.constant 0 : index
    %c1_97 = arith.constant 1 : index
    %c0_98 = arith.constant 0 : index
    %94 = vector.load %arg9[%c0_95, %c0_96, %c1_97, %c0_98] : memref<2x6x6x29xf32, #tpu.memory_space<vmem>>, vector<2x4x4x29xf32>
    %c1_99 = arith.constant 1 : index
    %c0_100 = arith.constant 0 : index
    %c0_101 = arith.constant 0 : index
    %95 = vector.load %arg4[%c1_99, %c0_100, %c0_101] : memref<9x1x29xf32, #tpu.memory_space<vmem>>, vector<1x1x29xf32>
    %96 = vector.shape_cast %95 : vector<1x1x29xf32> to vector<1x29xf32>
    %97 = vector.shape_cast %96 : vector<1x29xf32> to vector<1x1x1x29xf32>
    %98 = vector.broadcast %97 : vector<1x1x1x29xf32> to vector<2x4x4x29xf32>
    %99 = arith.mulf %94, %98 : vector<2x4x4x29xf32>
    %100 = arith.addf %93, %99 : vector<2x4x4x29xf32>
    %c0_102 = arith.constant 0 : index
    %c0_103 = arith.constant 0 : index
    %c2_104 = arith.constant 2 : index
    %c0_105 = arith.constant 0 : index
    %101 = vector.load %arg9[%c0_102, %c0_103, %c2_104, %c0_105] : memref<2x6x6x29xf32, #tpu.memory_space<vmem>>, vector<2x4x4x29xf32>
    %c2_106 = arith.constant 2 : index
    %c0_107 = arith.constant 0 : index
    %c0_108 = arith.constant 0 : index
    %102 = vector.load %arg4[%c2_106, %c0_107, %c0_108] : memref<9x1x29xf32, #tpu.memory_space<vmem>>, vector<1x1x29xf32>
    %103 = vector.shape_cast %102 : vector<1x1x29xf32> to vector<1x29xf32>
    %104 = vector.shape_cast %103 : vector<1x29xf32> to vector<1x1x1x29xf32>
    %105 = vector.broadcast %104 : vector<1x1x1x29xf32> to vector<2x4x4x29xf32>
    %106 = arith.mulf %101, %105 : vector<2x4x4x29xf32>
    %107 = arith.addf %100, %106 : vector<2x4x4x29xf32>
    %c0_109 = arith.constant 0 : index
    %c1_110 = arith.constant 1 : index
    %c0_111 = arith.constant 0 : index
    %c0_112 = arith.constant 0 : index
    %108 = vector.load %arg9[%c0_109, %c1_110, %c0_111, %c0_112] : memref<2x6x6x29xf32, #tpu.memory_space<vmem>>, vector<2x4x4x29xf32>
    %c3_113 = arith.constant 3 : index
    %c0_114 = arith.constant 0 : index
    %c0_115 = arith.constant 0 : index
    %109 = vector.load %arg4[%c3_113, %c0_114, %c0_115] : memref<9x1x29xf32, #tpu.memory_space<vmem>>, vector<1x1x29xf32>
    %110 = vector.shape_cast %109 : vector<1x1x29xf32> to vector<1x29xf32>
    %111 = vector.shape_cast %110 : vector<1x29xf32> to vector<1x1x1x29xf32>
    %112 = vector.broadcast %111 : vector<1x1x1x29xf32> to vector<2x4x4x29xf32>
    %113 = arith.mulf %108, %112 : vector<2x4x4x29xf32>
    %114 = arith.addf %107, %113 : vector<2x4x4x29xf32>
    %c0_116 = arith.constant 0 : index
    %c1_117 = arith.constant 1 : index
    %c1_118 = arith.constant 1 : index
    %c0_119 = arith.constant 0 : index
    %115 = vector.load %arg9[%c0_116, %c1_117, %c1_118, %c0_119] : memref<2x6x6x29xf32, #tpu.memory_space<vmem>>, vector<2x4x4x29xf32>
    %c4_120 = arith.constant 4 : index
    %c0_121 = arith.constant 0 : index
    %c0_122 = arith.constant 0 : index
    %116 = vector.load %arg4[%c4_120, %c0_121, %c0_122] : memref<9x1x29xf32, #tpu.memory_space<vmem>>, vector<1x1x29xf32>
    %117 = vector.shape_cast %116 : vector<1x1x29xf32> to vector<1x29xf32>
    %118 = vector.shape_cast %117 : vector<1x29xf32> to vector<1x1x1x29xf32>
    %119 = vector.broadcast %118 : vector<1x1x1x29xf32> to vector<2x4x4x29xf32>
    %120 = arith.mulf %115, %119 : vector<2x4x4x29xf32>
    %121 = arith.addf %114, %120 : vector<2x4x4x29xf32>
    %c0_123 = arith.constant 0 : index
    %c1_124 = arith.constant 1 : index
    %c2_125 = arith.constant 2 : index
    %c0_126 = arith.constant 0 : index
    %122 = vector.load %arg9[%c0_123, %c1_124, %c2_125, %c0_126] : memref<2x6x6x29xf32, #tpu.memory_space<vmem>>, vector<2x4x4x29xf32>
    %c5 = arith.constant 5 : index
    %c0_127 = arith.constant 0 : index
    %c0_128 = arith.constant 0 : index
    %123 = vector.load %arg4[%c5, %c0_127, %c0_128] : memref<9x1x29xf32, #tpu.memory_space<vmem>>, vector<1x1x29xf32>
    %124 = vector.shape_cast %123 : vector<1x1x29xf32> to vector<1x29xf32>
    %125 = vector.shape_cast %124 : vector<1x29xf32> to vector<1x1x1x29xf32>
    %126 = vector.broadcast %125 : vector<1x1x1x29xf32> to vector<2x4x4x29xf32>
    %127 = arith.mulf %122, %126 : vector<2x4x4x29xf32>
    %128 = arith.addf %121, %127 : vector<2x4x4x29xf32>
    %c0_129 = arith.constant 0 : index
    %c2_130 = arith.constant 2 : index
    %c0_131 = arith.constant 0 : index
    %c0_132 = arith.constant 0 : index
    %129 = vector.load %arg9[%c0_129, %c2_130, %c0_131, %c0_132] : memref<2x6x6x29xf32, #tpu.memory_space<vmem>>, vector<2x4x4x29xf32>
    %c6 = arith.constant 6 : index
    %c0_133 = arith.constant 0 : index
    %c0_134 = arith.constant 0 : index
    %130 = vector.load %arg4[%c6, %c0_133, %c0_134] : memref<9x1x29xf32, #tpu.memory_space<vmem>>, vector<1x1x29xf32>
    %131 = vector.shape_cast %130 : vector<1x1x29xf32> to vector<1x29xf32>
    %132 = vector.shape_cast %131 : vector<1x29xf32> to vector<1x1x1x29xf32>
    %133 = vector.broadcast %132 : vector<1x1x1x29xf32> to vector<2x4x4x29xf32>
    %134 = arith.mulf %129, %133 : vector<2x4x4x29xf32>
    %135 = arith.addf %128, %134 : vector<2x4x4x29xf32>
    %c0_135 = arith.constant 0 : index
    %c2_136 = arith.constant 2 : index
    %c1_137 = arith.constant 1 : index
    %c0_138 = arith.constant 0 : index
    %136 = vector.load %arg9[%c0_135, %c2_136, %c1_137, %c0_138] : memref<2x6x6x29xf32, #tpu.memory_space<vmem>>, vector<2x4x4x29xf32>
    %c7 = arith.constant 7 : index
    %c0_139 = arith.constant 0 : index
    %c0_140 = arith.constant 0 : index
    %137 = vector.load %arg4[%c7, %c0_139, %c0_140] : memref<9x1x29xf32, #tpu.memory_space<vmem>>, vector<1x1x29xf32>
    %138 = vector.shape_cast %137 : vector<1x1x29xf32> to vector<1x29xf32>
    %139 = vector.shape_cast %138 : vector<1x29xf32> to vector<1x1x1x29xf32>
    %140 = vector.broadcast %139 : vector<1x1x1x29xf32> to vector<2x4x4x29xf32>
    %141 = arith.mulf %136, %140 : vector<2x4x4x29xf32>
    %142 = arith.addf %135, %141 : vector<2x4x4x29xf32>
    %c0_141 = arith.constant 0 : index
    %c2_142 = arith.constant 2 : index
    %c2_143 = arith.constant 2 : index
    %c0_144 = arith.constant 0 : index
    %143 = vector.load %arg9[%c0_141, %c2_142, %c2_143, %c0_144] : memref<2x6x6x29xf32, #tpu.memory_space<vmem>>, vector<2x4x4x29xf32>
    %c8 = arith.constant 8 : index
    %c0_145 = arith.constant 0 : index
    %c0_146 = arith.constant 0 : index
    %144 = vector.load %arg4[%c8, %c0_145, %c0_146] : memref<9x1x29xf32, #tpu.memory_space<vmem>>, vector<1x1x29xf32>
    %145 = vector.shape_cast %144 : vector<1x1x29xf32> to vector<1x29xf32>
    %146 = vector.shape_cast %145 : vector<1x29xf32> to vector<1x1x1x29xf32>
    %147 = vector.broadcast %146 : vector<1x1x1x29xf32> to vector<2x4x4x29xf32>
    %148 = arith.mulf %143, %147 : vector<2x4x4x29xf32>
    %149 = arith.addf %142, %148 : vector<2x4x4x29xf32>
    %c0_147 = arith.constant 0 : index
    %c0_148 = arith.constant 0 : index
    %150 = vector.load %arg5[%c0_147, %c0_148] : memref<1x29xf32, #tpu.memory_space<vmem>>, vector<1x29xf32>
    %151 = vector.shape_cast %150 : vector<1x29xf32> to vector<1x1x1x29xf32>
    %152 = vector.broadcast %151 : vector<1x1x1x29xf32> to vector<2x4x4x29xf32>
    %153 = arith.addf %149, %152 : vector<2x4x4x29xf32>
    %154 = vector.extract_strided_slice %153 {offsets = [0, 0, 0, 0], sizes = [1, 1, 4, 29], strides = [1, 1, 1, 1]} : vector<2x4x4x29xf32> to vector<1x1x4x29xf32>
    %155 = vector.shape_cast %154 : vector<1x1x4x29xf32> to vector<4x29xf32>
    %156 = arith.truncf %155 : vector<4x29xf32> to vector<4x29xbf16>
    %cst_149 = arith.constant dense<0.000000e+00> : vector<4x29xf32>
    %157 = tpu.matmul %156, %2, %cst_149 {dimension_numbers = #tpu.dot_dimension_numbers<[1], [0], [0], [1], [0, 0, 1, 1], [], []>} : vector<4x29xbf16>, vector<29x29xbf16>, vector<4x29xf32> -> vector<4x29xf32>
    %158 = vector.broadcast %3 : vector<1x29xf32> to vector<4x29xf32>
    %159 = arith.addf %157, %158 : vector<4x29xf32>
    %cst_150 = arith.constant 0.000000e+00 : f32
    %160 = vector.broadcast %cst_150 : f32 to vector<4x29xf32>
    %161 = arith.maximumf %159, %160 : vector<4x29xf32>
    %162 = arith.truncf %161 : vector<4x29xf32> to vector<4x29xbf16>
    %c0_151 = arith.constant 0 : index
    %c0_152 = arith.constant 0 : index
    %c0_153 = arith.constant 0 : index
    %c0_154 = arith.constant 0 : index
    %163 = vector.load %arg8[%c0_151, %c0_152, %c0_153, %c0_154] : memref<2x4x4x29xbf16, #tpu.memory_space<vmem>>, vector<1x1x4x29xbf16>
    %164 = vector.shape_cast %163 : vector<1x1x4x29xbf16> to vector<4x29xbf16>
    %165 = vector.shape_cast %162 : vector<4x29xbf16> to vector<1x1x4x29xbf16>
    tpu.vector_store %arg8[%c0_151, %c0_152, %c0_153, %c0_154], %165 {strides = array<i32>} : memref<2x4x4x29xbf16, #tpu.memory_space<vmem>>, vector<1x1x4x29xbf16>,
    %166 = vector.extract_strided_slice %153 {offsets = [0, 1, 0, 0], sizes = [1, 1, 4, 29], strides = [1, 1, 1, 1]} : vector<2x4x4x29xf32> to vector<1x1x4x29xf32>
    %167 = vector.shape_cast %166 : vector<1x1x4x29xf32> to vector<4x29xf32>
    %168 = arith.truncf %167 : vector<4x29xf32> to vector<4x29xbf16>
    %cst_155 = arith.constant dense<0.000000e+00> : vector<4x29xf32>
    %169 = tpu.matmul %168, %2, %cst_155 {dimension_numbers = #tpu.dot_dimension_numbers<[1], [0], [0], [1], [0, 0, 1, 1], [], []>} : vector<4x29xbf16>, vector<29x29xbf16>, vector<4x29xf32> -> vector<4x29xf32>
    %170 = vector.broadcast %3 : vector<1x29xf32> to vector<4x29xf32>
    %171 = arith.addf %169, %170 : vector<4x29xf32>
    %cst_156 = arith.constant 0.000000e+00 : f32
    %172 = vector.broadcast %cst_156 : f32 to vector<4x29xf32>
    %173 = arith.maximumf %171, %172 : vector<4x29xf32>
    %174 = arith.truncf %173 : vector<4x29xf32> to vector<4x29xbf16>
    %c0_157 = arith.constant 0 : index
    %c1_158 = arith.constant 1 : index
    %c0_159 = arith.constant 0 : index
    %c0_160 = arith.constant 0 : index
    %175 = vector.load %arg8[%c0_157, %c1_158, %c0_159, %c0_160] : memref<2x4x4x29xbf16, #tpu.memory_space<vmem>>, vector<1x1x4x29xbf16>
    %176 = vector.shape_cast %175 : vector<1x1x4x29xbf16> to vector<4x29xbf16>
    %177 = vector.shape_cast %174 : vector<4x29xbf16> to vector<1x1x4x29xbf16>
    tpu.vector_store %arg8[%c0_157, %c1_158, %c0_159, %c0_160], %177 {strides = array<i32>} : memref<2x4x4x29xbf16, #tpu.memory_space<vmem>>, vector<1x1x4x29xbf16>,
    %178 = vector.extract_strided_slice %153 {offsets = [0, 2, 0, 0], sizes = [1, 1, 4, 29], strides = [1, 1, 1, 1]} : vector<2x4x4x29xf32> to vector<1x1x4x29xf32>
    %179 = vector.shape_cast %178 : vector<1x1x4x29xf32> to vector<4x29xf32>
    %180 = arith.truncf %179 : vector<4x29xf32> to vector<4x29xbf16>
    %cst_161 = arith.constant dense<0.000000e+00> : vector<4x29xf32>
    %181 = tpu.matmul %180, %2, %cst_161 {dimension_numbers = #tpu.dot_dimension_numbers<[1], [0], [0], [1], [0, 0, 1, 1], [], []>} : vector<4x29xbf16>, vector<29x29xbf16>, vector<4x29xf32> -> vector<4x29xf32>
    %182 = vector.broadcast %3 : vector<1x29xf32> to vector<4x29xf32>
    %183 = arith.addf %181, %182 : vector<4x29xf32>
    %cst_162 = arith.constant 0.000000e+00 : f32
    %184 = vector.broadcast %cst_162 : f32 to vector<4x29xf32>
    %185 = arith.maximumf %183, %184 : vector<4x29xf32>
    %186 = arith.truncf %185 : vector<4x29xf32> to vector<4x29xbf16>
    %c0_163 = arith.constant 0 : index
    %c2_164 = arith.constant 2 : index
    %c0_165 = arith.constant 0 : index
    %c0_166 = arith.constant 0 : index
    %187 = vector.load %arg8[%c0_163, %c2_164, %c0_165, %c0_166] : memref<2x4x4x29xbf16, #tpu.memory_space<vmem>>, vector<1x1x4x29xbf16>
    %188 = vector.shape_cast %187 : vector<1x1x4x29xbf16> to vector<4x29xbf16>
    %189 = vector.shape_cast %186 : vector<4x29xbf16> to vector<1x1x4x29xbf16>
    tpu.vector_store %arg8[%c0_163, %c2_164, %c0_165, %c0_166], %189 {strides = array<i32>} : memref<2x4x4x29xbf16, #tpu.memory_space<vmem>>, vector<1x1x4x29xbf16>,
    %190 = vector.extract_strided_slice %153 {offsets = [0, 3, 0, 0], sizes = [1, 1, 4, 29], strides = [1, 1, 1, 1]} : vector<2x4x4x29xf32> to vector<1x1x4x29xf32>
    %191 = vector.shape_cast %190 : vector<1x1x4x29xf32> to vector<4x29xf32>
    %192 = arith.truncf %191 : vector<4x29xf32> to vector<4x29xbf16>
    %cst_167 = arith.constant dense<0.000000e+00> : vector<4x29xf32>
    %193 = tpu.matmul %192, %2, %cst_167 {dimension_numbers = #tpu.dot_dimension_numbers<[1], [0], [0], [1], [0, 0, 1, 1], [], []>} : vector<4x29xbf16>, vector<29x29xbf16>, vector<4x29xf32> -> vector<4x29xf32>
    %194 = vector.broadcast %3 : vector<1x29xf32> to vector<4x29xf32>
    %195 = arith.addf %193, %194 : vector<4x29xf32>
    %cst_168 = arith.constant 0.000000e+00 : f32
    %196 = vector.broadcast %cst_168 : f32 to vector<4x29xf32>
    %197 = arith.maximumf %195, %196 : vector<4x29xf32>
    %198 = arith.truncf %197 : vector<4x29xf32> to vector<4x29xbf16>
    %c0_169 = arith.constant 0 : index
    %c3_170 = arith.constant 3 : index
    %c0_171 = arith.constant 0 : index
    %c0_172 = arith.constant 0 : index
    %199 = vector.load %arg8[%c0_169, %c3_170, %c0_171, %c0_172] : memref<2x4x4x29xbf16, #tpu.memory_space<vmem>>, vector<1x1x4x29xbf16>
    %200 = vector.shape_cast %199 : vector<1x1x4x29xbf16> to vector<4x29xbf16>
    %201 = vector.shape_cast %198 : vector<4x29xbf16> to vector<1x1x4x29xbf16>
    tpu.vector_store %arg8[%c0_169, %c3_170, %c0_171, %c0_172], %201 {strides = array<i32>} : memref<2x4x4x29xbf16, #tpu.memory_space<vmem>>, vector<1x1x4x29xbf16>,
    %202 = vector.extract_strided_slice %153 {offsets = [1, 0, 0, 0], sizes = [1, 1, 4, 29], strides = [1, 1, 1, 1]} : vector<2x4x4x29xf32> to vector<1x1x4x29xf32>
    %203 = vector.shape_cast %202 : vector<1x1x4x29xf32> to vector<4x29xf32>
    %204 = arith.truncf %203 : vector<4x29xf32> to vector<4x29xbf16>
    %cst_173 = arith.constant dense<0.000000e+00> : vector<4x29xf32>
    %205 = tpu.matmul %204, %2, %cst_173 {dimension_numbers = #tpu.dot_dimension_numbers<[1], [0], [0], [1], [0, 0, 1, 1], [], []>} : vector<4x29xbf16>, vector<29x29xbf16>, vector<4x29xf32> -> vector<4x29xf32>
    %206 = vector.broadcast %3 : vector<1x29xf32> to vector<4x29xf32>
    %207 = arith.addf %205, %206 : vector<4x29xf32>
    %cst_174 = arith.constant 0.000000e+00 : f32
    %208 = vector.broadcast %cst_174 : f32 to vector<4x29xf32>
    %209 = arith.maximumf %207, %208 : vector<4x29xf32>
    %210 = arith.truncf %209 : vector<4x29xf32> to vector<4x29xbf16>
    %c1_175 = arith.constant 1 : index
    %c0_176 = arith.constant 0 : index
    %c0_177 = arith.constant 0 : index
    %c0_178 = arith.constant 0 : index
    %211 = vector.load %arg8[%c1_175, %c0_176, %c0_177, %c0_178] : memref<2x4x4x29xbf16, #tpu.memory_space<vmem>>, vector<1x1x4x29xbf16>
    %212 = vector.shape_cast %211 : vector<1x1x4x29xbf16> to vector<4x29xbf16>
    %213 = vector.shape_cast %210 : vector<4x29xbf16> to vector<1x1x4x29xbf16>
    tpu.vector_store %arg8[%c1_175, %c0_176, %c0_177, %c0_178], %213 {strides = array<i32>} : memref<2x4x4x29xbf16, #tpu.memory_space<vmem>>, vector<1x1x4x29xbf16>,
    %214 = vector.extract_strided_slice %153 {offsets = [1, 1, 0, 0], sizes = [1, 1, 4, 29], strides = [1, 1, 1, 1]} : vector<2x4x4x29xf32> to vector<1x1x4x29xf32>
    %215 = vector.shape_cast %214 : vector<1x1x4x29xf32> to vector<4x29xf32>
    %216 = arith.truncf %215 : vector<4x29xf32> to vector<4x29xbf16>
    %cst_179 = arith.constant dense<0.000000e+00> : vector<4x29xf32>
    %217 = tpu.matmul %216, %2, %cst_179 {dimension_numbers = #tpu.dot_dimension_numbers<[1], [0], [0], [1], [0, 0, 1, 1], [], []>} : vector<4x29xbf16>, vector<29x29xbf16>, vector<4x29xf32> -> vector<4x29xf32>
    %218 = vector.broadcast %3 : vector<1x29xf32> to vector<4x29xf32>
    %219 = arith.addf %217, %218 : vector<4x29xf32>
    %cst_180 = arith.constant 0.000000e+00 : f32
    %220 = vector.broadcast %cst_180 : f32 to vector<4x29xf32>
    %221 = arith.maximumf %219, %220 : vector<4x29xf32>
    %222 = arith.truncf %221 : vector<4x29xf32> to vector<4x29xbf16>
    %c1_181 = arith.constant 1 : index
    %c1_182 = arith.constant 1 : index
    %c0_183 = arith.constant 0 : index
    %c0_184 = arith.constant 0 : index
    %223 = vector.load %arg8[%c1_181, %c1_182, %c0_183, %c0_184] : memref<2x4x4x29xbf16, #tpu.memory_space<vmem>>, vector<1x1x4x29xbf16>
    %224 = vector.shape_cast %223 : vector<1x1x4x29xbf16> to vector<4x29xbf16>
    %225 = vector.shape_cast %222 : vector<4x29xbf16> to vector<1x1x4x29xbf16>
    tpu.vector_store %arg8[%c1_181, %c1_182, %c0_183, %c0_184], %225 {strides = array<i32>} : memref<2x4x4x29xbf16, #tpu.memory_space<vmem>>, vector<1x1x4x29xbf16>,
    %226 = vector.extract_strided_slice %153 {offsets = [1, 2, 0, 0], sizes = [1, 1, 4, 29], strides = [1, 1, 1, 1]} : vector<2x4x4x29xf32> to vector<1x1x4x29xf32>
    %227 = vector.shape_cast %226 : vector<1x1x4x29xf32> to vector<4x29xf32>
    %228 = arith.truncf %227 : vector<4x29xf32> to vector<4x29xbf16>
    %cst_185 = arith.constant dense<0.000000e+00> : vector<4x29xf32>
    %229 = tpu.matmul %228, %2, %cst_185 {dimension_numbers = #tpu.dot_dimension_numbers<[1], [0], [0], [1], [0, 0, 1, 1], [], []>} : vector<4x29xbf16>, vector<29x29xbf16>, vector<4x29xf32> -> vector<4x29xf32>
    %230 = vector.broadcast %3 : vector<1x29xf32> to vector<4x29xf32>
    %231 = arith.addf %229, %230 : vector<4x29xf32>
    %cst_186 = arith.constant 0.000000e+00 : f32
    %232 = vector.broadcast %cst_186 : f32 to vector<4x29xf32>
    %233 = arith.maximumf %231, %232 : vector<4x29xf32>
    %234 = arith.truncf %233 : vector<4x29xf32> to vector<4x29xbf16>
    %c1_187 = arith.constant 1 : index
    %c2_188 = arith.constant 2 : index
    %c0_189 = arith.constant 0 : index
    %c0_190 = arith.constant 0 : index
    %235 = vector.load %arg8[%c1_187, %c2_188, %c0_189, %c0_190] : memref<2x4x4x29xbf16, #tpu.memory_space<vmem>>, vector<1x1x4x29xbf16>
    %236 = vector.shape_cast %235 : vector<1x1x4x29xbf16> to vector<4x29xbf16>
    %237 = vector.shape_cast %234 : vector<4x29xbf16> to vector<1x1x4x29xbf16>
    tpu.vector_store %arg8[%c1_187, %c2_188, %c0_189, %c0_190], %237 {strides = array<i32>} : memref<2x4x4x29xbf16, #tpu.memory_space<vmem>>, vector<1x1x4x29xbf16>,
    %238 = vector.extract_strided_slice %153 {offsets = [1, 3, 0, 0], sizes = [1, 1, 4, 29], strides = [1, 1, 1, 1]} : vector<2x4x4x29xf32> to vector<1x1x4x29xf32>
    %239 = vector.shape_cast %238 : vector<1x1x4x29xf32> to vector<4x29xf32>
    %240 = arith.truncf %239 : vector<4x29xf32> to vector<4x29xbf16>
    %cst_191 = arith.constant dense<0.000000e+00> : vector<4x29xf32>
    %241 = tpu.matmul %240, %2, %cst_191 {dimension_numbers = #tpu.dot_dimension_numbers<[1], [0], [0], [1], [0, 0, 1, 1], [], []>} : vector<4x29xbf16>, vector<29x29xbf16>, vector<4x29xf32> -> vector<4x29xf32>
    %242 = vector.broadcast %3 : vector<1x29xf32> to vector<4x29xf32>
    %243 = arith.addf %241, %242 : vector<4x29xf32>
    %cst_192 = arith.constant 0.000000e+00 : f32
    %244 = vector.broadcast %cst_192 : f32 to vector<4x29xf32>
    %245 = arith.maximumf %243, %244 : vector<4x29xf32>
    %246 = arith.truncf %245 : vector<4x29xf32> to vector<4x29xbf16>
    %c1_193 = arith.constant 1 : index
    %c3_194 = arith.constant 3 : index
    %c0_195 = arith.constant 0 : index
    %c0_196 = arith.constant 0 : index
    %247 = vector.load %arg8[%c1_193, %c3_194, %c0_195, %c0_196] : memref<2x4x4x29xbf16, #tpu.memory_space<vmem>>, vector<1x1x4x29xbf16>
    %248 = vector.shape_cast %247 : vector<1x1x4x29xbf16> to vector<4x29xbf16>
    %249 = vector.shape_cast %246 : vector<4x29xbf16> to vector<1x1x4x29xbf16>
    tpu.vector_store %arg8[%c1_193, %c3_194, %c0_195, %c0_196], %249 {strides = array<i32>} : memref<2x4x4x29xbf16, #tpu.memory_space<vmem>>, vector<1x1x4x29xbf16>,
    return
  }
  func.func @transform_0(%arg0: i32) -> (i32, i32, i32, i32) {
    %c0_i32 = arith.constant 0 : i32
    %c0_i32_0 = arith.constant 0 : i32
    %c0_i32_1 = arith.constant 0 : i32
    %c0_i32_2 = arith.constant 0 : i32
    %c0_i32_3 = arith.constant 0 : i32
    return %c0_i32, %c0_i32_0, %c0_i32_1, %c0_i32_2 : i32, i32, i32, i32
  }
  func.func @transform_1(%arg0: i32) -> (i32, i32) {
    %c0_i32 = arith.constant 0 : i32
    %c0_i32_0 = arith.constant 0 : i32
    %c0_i32_1 = arith.constant 0 : i32
    return %c0_i32, %c0_i32_0 : i32, i32
  }
  func.func @transform_2(%arg0: i32) -> (i32, i32) {
    %c0_i32 = arith.constant 0 : i32
    %c0_i32_0 = arith.constant 0 : i32
    %c0_i32_1 = arith.constant 0 : i32
    return %c0_i32, %c0_i32_0 : i32, i32
  }
  func.func @transform_3(%arg0: i32) -> (i32, i32, i32) {
    %c0_i32 = arith.constant 0 : i32
    %c0_i32_0 = arith.constant 0 : i32
    %c0_i32_1 = arith.constant 0 : i32
    %c0_i32_2 = arith.constant 0 : i32
    return %c0_i32, %c0_i32_0, %c0_i32_1 : i32, i32, i32
  }
  func.func @transform_4(%arg0: i32) -> (i32, i32) {
    %c0_i32 = arith.constant 0 : i32
    %c0_i32_0 = arith.constant 0 : i32
    %c0_i32_1 = arith.constant 0 : i32
    return %c0_i32, %c0_i32_0 : i32, i32
  }
  func.func @transform_5(%arg0: i32) -> (i32, i32) {
    %c0_i32 = arith.constant 0 : i32
    %c0_i32_0 = arith.constant 0 : i32
    %c0_i32_1 = arith.constant 0 : i32
    return %c0_i32, %c0_i32_0 : i32, i32
  }
  func.func @transform_6(%arg0: i32) -> (i32, i32) {
    %c0_i32 = arith.constant 0 : i32
    %c0_i32_0 = arith.constant 0 : i32
    %c0_i32_1 = arith.constant 0 : i32
    return %c0_i32, %c0_i32_0 : i32, i32
  }
  func.func @transform_7(%arg0: i32) -> (i32, i32, i32, i32) {
    %c0_i32 = arith.constant 0 : i32
    %c0_i32_0 = arith.constant 0 : i32
    %c0_i32_1 = arith.constant 0 : i32
    %c0_i32_2 = arith.constant 0 : i32
    %c0_i32_3 = arith.constant 0 : i32
    return %c0_i32, %c0_i32_0, %c0_i32_1, %c0_i32_2 : i32, i32, i32, i32
  }
}

module attributes {stable_mosaic.version = 11 : i64} {
  func.func @_down_block_kernel(%arg0: i32, %arg1: memref<9x8x58xbf16, #tpu.memory_space<vmem>>, %arg2: memref<9x8x1xf32, #tpu.memory_space<vmem>>, %arg3: memref<9x1x58xf32, #tpu.memory_space<vmem>>, %arg4: memref<1x58xf32, #tpu.memory_space<vmem>>, %arg5: memref<58x58xbf16, #tpu.memory_space<vmem>>, %arg6: memref<1x58xf32, #tpu.memory_space<vmem>>, %arg7: memref<58x58xbf16, #tpu.memory_space<vmem>>, %arg8: memref<1x58xf32, #tpu.memory_space<vmem>>, %arg9: memref<9x1x58xf32, #tpu.memory_space<vmem>>, %arg10: memref<1x58xf32, #tpu.memory_space<vmem>>, %arg11: memref<58x58xbf16, #tpu.memory_space<vmem>>, %arg12: memref<1x58xf32, #tpu.memory_space<vmem>>, %arg13: memref<8x58xbf16, #tpu.memory_space<vmem>>, %arg14: memref<8x58xbf16, #tpu.memory_space<vmem>>) attributes {dimension_semantics = [#tpu.dimension_semantics<arbitrary>], iteration_bounds = array<i64: 1>, scalar_prefetch = 0 : i64, scratch_operands = 0 : i64, tpu.core_type = #tpu.core_type<tc>, window_params = [{pipeline_mode = #tpu.pipeline_mode<synchronous>, transform_indices = @transform_0, window_bounds = array<i64: 9, 8, 58>}, {pipeline_mode = #tpu.pipeline_mode<synchronous>, transform_indices = @transform_1, window_bounds = array<i64: 9, 8, 1>}, {pipeline_mode = #tpu.pipeline_mode<synchronous>, transform_indices = @transform_2, window_bounds = array<i64: 9, 1, 58>}, {pipeline_mode = #tpu.pipeline_mode<synchronous>, transform_indices = @transform_3, window_bounds = array<i64: 1, 58>}, {pipeline_mode = #tpu.pipeline_mode<synchronous>, transform_indices = @transform_4, window_bounds = array<i64: 58, 58>}, {pipeline_mode = #tpu.pipeline_mode<synchronous>, transform_indices = @transform_5, window_bounds = array<i64: 1, 58>}, {pipeline_mode = #tpu.pipeline_mode<synchronous>, transform_indices = @transform_6, window_bounds = array<i64: 58, 58>}, {pipeline_mode = #tpu.pipeline_mode<synchronous>, transform_indices = @transform_7, window_bounds = array<i64: 1, 58>}, {pipeline_mode = #tpu.pipeline_mode<synchronous>, transform_indices = @transform_8, window_bounds = array<i64: 9, 1, 58>}, {pipeline_mode = #tpu.pipeline_mode<synchronous>, transform_indices = @transform_9, window_bounds = array<i64: 1, 58>}, {pipeline_mode = #tpu.pipeline_mode<synchronous>, transform_indices = @transform_10, window_bounds = array<i64: 58, 58>}, {pipeline_mode = #tpu.pipeline_mode<synchronous>, transform_indices = @transform_11, window_bounds = array<i64: 1, 58>}, {pipeline_mode = #tpu.pipeline_mode<synchronous>, transform_indices = @transform_12, window_bounds = array<i64: 8, 58>}, {pipeline_mode = #tpu.pipeline_mode<synchronous>, transform_indices = @transform_13, window_bounds = array<i64: 8, 58>}]} {
    %c0 = arith.constant 0 : index
    %c0_0 = arith.constant 0 : index
    %0 = vector.load %arg7[%c0, %c0_0] : memref<58x58xbf16, #tpu.memory_space<vmem>>, vector<58x58xbf16>
    %c0_1 = arith.constant 0 : index
    %c0_2 = arith.constant 0 : index
    %1 = vector.load %arg8[%c0_1, %c0_2] : memref<1x58xf32, #tpu.memory_space<vmem>>, vector<1x58xf32>
    %cst = arith.constant 0.000000e+00 : f32
    %2 = vector.broadcast %cst : f32 to vector<8x58xf32>
    %cst_3 = arith.constant 0.000000e+00 : f32
    %3 = vector.broadcast %cst_3 : f32 to vector<8x58xf32>
    %c0_4 = arith.constant 0 : index
    %c0_5 = arith.constant 0 : index
    %c0_6 = arith.constant 0 : index
    %4 = vector.load %arg1[%c0_4, %c0_5, %c0_6] : memref<9x8x58xbf16, #tpu.memory_space<vmem>>, vector<1x8x58xbf16>
    %5 = vector.shape_cast %4 : vector<1x8x58xbf16> to vector<8x58xbf16>
    %6 = arith.extf %5 : vector<8x58xbf16> to vector<8x58xf32>
    %c0_7 = arith.constant 0 : index
    %c0_8 = arith.constant 0 : index
    %c0_9 = arith.constant 0 : index
    %7 = vector.load %arg3[%c0_7, %c0_8, %c0_9] : memref<9x1x58xf32, #tpu.memory_space<vmem>>, vector<1x1x58xf32>
    %8 = vector.shape_cast %7 : vector<1x1x58xf32> to vector<1x58xf32>
    %9 = vector.broadcast %8 : vector<1x58xf32> to vector<8x58xf32>
    %10 = arith.mulf %6, %9 : vector<8x58xf32>
    %11 = arith.addf %2, %10 : vector<8x58xf32>
    %cst_10 = arith.constant dense<0.000000e+00> : vector<8x58xf32>
    %12 = tpu.matmul %5, %0, %cst_10 {dimension_numbers = #tpu.dot_dimension_numbers<[1], [0], [0], [1], [0, 0, 1, 1], [], []>} : vector<8x58xbf16>, vector<58x58xbf16>, vector<8x58xf32> -> vector<8x58xf32>
    %13 = vector.broadcast %1 : vector<1x58xf32> to vector<8x58xf32>
    %14 = arith.addf %12, %13 : vector<8x58xf32>
    %cst_11 = arith.constant 0.000000e+00 : f32
    %15 = vector.broadcast %cst_11 : f32 to vector<8x58xf32>
    %16 = arith.maximumf %14, %15 : vector<8x58xf32>
    %c0_12 = arith.constant 0 : index
    %c0_13 = arith.constant 0 : index
    %c0_14 = arith.constant 0 : index
    %17 = vector.load %arg2[%c0_12, %c0_13, %c0_14] : memref<9x8x1xf32, #tpu.memory_space<vmem>>, vector<1x8x1xf32>
    %18 = vector.shape_cast %17 : vector<1x8x1xf32> to vector<8x1xf32>
    %19 = vector.broadcast %18 : vector<8x1xf32> to vector<8x58xf32>
    %20 = arith.mulf %16, %19 : vector<8x58xf32>
    %c0_15 = arith.constant 0 : index
    %c0_16 = arith.constant 0 : index
    %c0_17 = arith.constant 0 : index
    %21 = vector.load %arg9[%c0_15, %c0_16, %c0_17] : memref<9x1x58xf32, #tpu.memory_space<vmem>>, vector<1x1x58xf32>
    %22 = vector.shape_cast %21 : vector<1x1x58xf32> to vector<1x58xf32>
    %23 = vector.broadcast %22 : vector<1x58xf32> to vector<8x58xf32>
    %24 = arith.mulf %20, %23 : vector<8x58xf32>
    %25 = arith.addf %3, %24 : vector<8x58xf32>
    %c1 = arith.constant 1 : index
    %c0_18 = arith.constant 0 : index
    %c0_19 = arith.constant 0 : index
    %26 = vector.load %arg1[%c1, %c0_18, %c0_19] : memref<9x8x58xbf16, #tpu.memory_space<vmem>>, vector<1x8x58xbf16>
    %27 = vector.shape_cast %26 : vector<1x8x58xbf16> to vector<8x58xbf16>
    %28 = arith.extf %27 : vector<8x58xbf16> to vector<8x58xf32>
    %c1_20 = arith.constant 1 : index
    %c0_21 = arith.constant 0 : index
    %c0_22 = arith.constant 0 : index
    %29 = vector.load %arg3[%c1_20, %c0_21, %c0_22] : memref<9x1x58xf32, #tpu.memory_space<vmem>>, vector<1x1x58xf32>
    %30 = vector.shape_cast %29 : vector<1x1x58xf32> to vector<1x58xf32>
    %31 = vector.broadcast %30 : vector<1x58xf32> to vector<8x58xf32>
    %32 = arith.mulf %28, %31 : vector<8x58xf32>
    %33 = arith.addf %11, %32 : vector<8x58xf32>
    %cst_23 = arith.constant dense<0.000000e+00> : vector<8x58xf32>
    %34 = tpu.matmul %27, %0, %cst_23 {dimension_numbers = #tpu.dot_dimension_numbers<[1], [0], [0], [1], [0, 0, 1, 1], [], []>} : vector<8x58xbf16>, vector<58x58xbf16>, vector<8x58xf32> -> vector<8x58xf32>
    %35 = vector.broadcast %1 : vector<1x58xf32> to vector<8x58xf32>
    %36 = arith.addf %34, %35 : vector<8x58xf32>
    %cst_24 = arith.constant 0.000000e+00 : f32
    %37 = vector.broadcast %cst_24 : f32 to vector<8x58xf32>
    %38 = arith.maximumf %36, %37 : vector<8x58xf32>
    %c1_25 = arith.constant 1 : index
    %c0_26 = arith.constant 0 : index
    %c0_27 = arith.constant 0 : index
    %39 = vector.load %arg2[%c1_25, %c0_26, %c0_27] : memref<9x8x1xf32, #tpu.memory_space<vmem>>, vector<1x8x1xf32>
    %40 = vector.shape_cast %39 : vector<1x8x1xf32> to vector<8x1xf32>
    %41 = vector.broadcast %40 : vector<8x1xf32> to vector<8x58xf32>
    %42 = arith.mulf %38, %41 : vector<8x58xf32>
    %c1_28 = arith.constant 1 : index
    %c0_29 = arith.constant 0 : index
    %c0_30 = arith.constant 0 : index
    %43 = vector.load %arg9[%c1_28, %c0_29, %c0_30] : memref<9x1x58xf32, #tpu.memory_space<vmem>>, vector<1x1x58xf32>
    %44 = vector.shape_cast %43 : vector<1x1x58xf32> to vector<1x58xf32>
    %45 = vector.broadcast %44 : vector<1x58xf32> to vector<8x58xf32>
    %46 = arith.mulf %42, %45 : vector<8x58xf32>
    %47 = arith.addf %25, %46 : vector<8x58xf32>
    %c2 = arith.constant 2 : index
    %c0_31 = arith.constant 0 : index
    %c0_32 = arith.constant 0 : index
    %48 = vector.load %arg1[%c2, %c0_31, %c0_32] : memref<9x8x58xbf16, #tpu.memory_space<vmem>>, vector<1x8x58xbf16>
    %49 = vector.shape_cast %48 : vector<1x8x58xbf16> to vector<8x58xbf16>
    %50 = arith.extf %49 : vector<8x58xbf16> to vector<8x58xf32>
    %c2_33 = arith.constant 2 : index
    %c0_34 = arith.constant 0 : index
    %c0_35 = arith.constant 0 : index
    %51 = vector.load %arg3[%c2_33, %c0_34, %c0_35] : memref<9x1x58xf32, #tpu.memory_space<vmem>>, vector<1x1x58xf32>
    %52 = vector.shape_cast %51 : vector<1x1x58xf32> to vector<1x58xf32>
    %53 = vector.broadcast %52 : vector<1x58xf32> to vector<8x58xf32>
    %54 = arith.mulf %50, %53 : vector<8x58xf32>
    %55 = arith.addf %33, %54 : vector<8x58xf32>
    %cst_36 = arith.constant dense<0.000000e+00> : vector<8x58xf32>
    %56 = tpu.matmul %49, %0, %cst_36 {dimension_numbers = #tpu.dot_dimension_numbers<[1], [0], [0], [1], [0, 0, 1, 1], [], []>} : vector<8x58xbf16>, vector<58x58xbf16>, vector<8x58xf32> -> vector<8x58xf32>
    %57 = vector.broadcast %1 : vector<1x58xf32> to vector<8x58xf32>
    %58 = arith.addf %56, %57 : vector<8x58xf32>
    %cst_37 = arith.constant 0.000000e+00 : f32
    %59 = vector.broadcast %cst_37 : f32 to vector<8x58xf32>
    %60 = arith.maximumf %58, %59 : vector<8x58xf32>
    %c2_38 = arith.constant 2 : index
    %c0_39 = arith.constant 0 : index
    %c0_40 = arith.constant 0 : index
    %61 = vector.load %arg2[%c2_38, %c0_39, %c0_40] : memref<9x8x1xf32, #tpu.memory_space<vmem>>, vector<1x8x1xf32>
    %62 = vector.shape_cast %61 : vector<1x8x1xf32> to vector<8x1xf32>
    %63 = vector.broadcast %62 : vector<8x1xf32> to vector<8x58xf32>
    %64 = arith.mulf %60, %63 : vector<8x58xf32>
    %c2_41 = arith.constant 2 : index
    %c0_42 = arith.constant 0 : index
    %c0_43 = arith.constant 0 : index
    %65 = vector.load %arg9[%c2_41, %c0_42, %c0_43] : memref<9x1x58xf32, #tpu.memory_space<vmem>>, vector<1x1x58xf32>
    %66 = vector.shape_cast %65 : vector<1x1x58xf32> to vector<1x58xf32>
    %67 = vector.broadcast %66 : vector<1x58xf32> to vector<8x58xf32>
    %68 = arith.mulf %64, %67 : vector<8x58xf32>
    %69 = arith.addf %47, %68 : vector<8x58xf32>
    %c3 = arith.constant 3 : index
    %c0_44 = arith.constant 0 : index
    %c0_45 = arith.constant 0 : index
    %70 = vector.load %arg1[%c3, %c0_44, %c0_45] : memref<9x8x58xbf16, #tpu.memory_space<vmem>>, vector<1x8x58xbf16>
    %71 = vector.shape_cast %70 : vector<1x8x58xbf16> to vector<8x58xbf16>
    %72 = arith.extf %71 : vector<8x58xbf16> to vector<8x58xf32>
    %c3_46 = arith.constant 3 : index
    %c0_47 = arith.constant 0 : index
    %c0_48 = arith.constant 0 : index
    %73 = vector.load %arg3[%c3_46, %c0_47, %c0_48] : memref<9x1x58xf32, #tpu.memory_space<vmem>>, vector<1x1x58xf32>
    %74 = vector.shape_cast %73 : vector<1x1x58xf32> to vector<1x58xf32>
    %75 = vector.broadcast %74 : vector<1x58xf32> to vector<8x58xf32>
    %76 = arith.mulf %72, %75 : vector<8x58xf32>
    %77 = arith.addf %55, %76 : vector<8x58xf32>
    %cst_49 = arith.constant dense<0.000000e+00> : vector<8x58xf32>
    %78 = tpu.matmul %71, %0, %cst_49 {dimension_numbers = #tpu.dot_dimension_numbers<[1], [0], [0], [1], [0, 0, 1, 1], [], []>} : vector<8x58xbf16>, vector<58x58xbf16>, vector<8x58xf32> -> vector<8x58xf32>
    %79 = vector.broadcast %1 : vector<1x58xf32> to vector<8x58xf32>
    %80 = arith.addf %78, %79 : vector<8x58xf32>
    %cst_50 = arith.constant 0.000000e+00 : f32
    %81 = vector.broadcast %cst_50 : f32 to vector<8x58xf32>
    %82 = arith.maximumf %80, %81 : vector<8x58xf32>
    %c3_51 = arith.constant 3 : index
    %c0_52 = arith.constant 0 : index
    %c0_53 = arith.constant 0 : index
    %83 = vector.load %arg2[%c3_51, %c0_52, %c0_53] : memref<9x8x1xf32, #tpu.memory_space<vmem>>, vector<1x8x1xf32>
    %84 = vector.shape_cast %83 : vector<1x8x1xf32> to vector<8x1xf32>
    %85 = vector.broadcast %84 : vector<8x1xf32> to vector<8x58xf32>
    %86 = arith.mulf %82, %85 : vector<8x58xf32>
    %c3_54 = arith.constant 3 : index
    %c0_55 = arith.constant 0 : index
    %c0_56 = arith.constant 0 : index
    %87 = vector.load %arg9[%c3_54, %c0_55, %c0_56] : memref<9x1x58xf32, #tpu.memory_space<vmem>>, vector<1x1x58xf32>
    %88 = vector.shape_cast %87 : vector<1x1x58xf32> to vector<1x58xf32>
    %89 = vector.broadcast %88 : vector<1x58xf32> to vector<8x58xf32>
    %90 = arith.mulf %86, %89 : vector<8x58xf32>
    %91 = arith.addf %69, %90 : vector<8x58xf32>
    %c4 = arith.constant 4 : index
    %c0_57 = arith.constant 0 : index
    %c0_58 = arith.constant 0 : index
    %92 = vector.load %arg1[%c4, %c0_57, %c0_58] : memref<9x8x58xbf16, #tpu.memory_space<vmem>>, vector<1x8x58xbf16>
    %93 = vector.shape_cast %92 : vector<1x8x58xbf16> to vector<8x58xbf16>
    %94 = arith.extf %93 : vector<8x58xbf16> to vector<8x58xf32>
    %c4_59 = arith.constant 4 : index
    %c0_60 = arith.constant 0 : index
    %c0_61 = arith.constant 0 : index
    %95 = vector.load %arg3[%c4_59, %c0_60, %c0_61] : memref<9x1x58xf32, #tpu.memory_space<vmem>>, vector<1x1x58xf32>
    %96 = vector.shape_cast %95 : vector<1x1x58xf32> to vector<1x58xf32>
    %97 = vector.broadcast %96 : vector<1x58xf32> to vector<8x58xf32>
    %98 = arith.mulf %94, %97 : vector<8x58xf32>
    %99 = arith.addf %77, %98 : vector<8x58xf32>
    %cst_62 = arith.constant dense<0.000000e+00> : vector<8x58xf32>
    %100 = tpu.matmul %93, %0, %cst_62 {dimension_numbers = #tpu.dot_dimension_numbers<[1], [0], [0], [1], [0, 0, 1, 1], [], []>} : vector<8x58xbf16>, vector<58x58xbf16>, vector<8x58xf32> -> vector<8x58xf32>
    %101 = vector.broadcast %1 : vector<1x58xf32> to vector<8x58xf32>
    %102 = arith.addf %100, %101 : vector<8x58xf32>
    %cst_63 = arith.constant 0.000000e+00 : f32
    %103 = vector.broadcast %cst_63 : f32 to vector<8x58xf32>
    %104 = arith.maximumf %102, %103 : vector<8x58xf32>
    %c4_64 = arith.constant 4 : index
    %c0_65 = arith.constant 0 : index
    %c0_66 = arith.constant 0 : index
    %105 = vector.load %arg2[%c4_64, %c0_65, %c0_66] : memref<9x8x1xf32, #tpu.memory_space<vmem>>, vector<1x8x1xf32>
    %106 = vector.shape_cast %105 : vector<1x8x1xf32> to vector<8x1xf32>
    %107 = vector.broadcast %106 : vector<8x1xf32> to vector<8x58xf32>
    %108 = arith.mulf %104, %107 : vector<8x58xf32>
    %c4_67 = arith.constant 4 : index
    %c0_68 = arith.constant 0 : index
    %c0_69 = arith.constant 0 : index
    %109 = vector.load %arg9[%c4_67, %c0_68, %c0_69] : memref<9x1x58xf32, #tpu.memory_space<vmem>>, vector<1x1x58xf32>
    %110 = vector.shape_cast %109 : vector<1x1x58xf32> to vector<1x58xf32>
    %111 = vector.broadcast %110 : vector<1x58xf32> to vector<8x58xf32>
    %112 = arith.mulf %108, %111 : vector<8x58xf32>
    %113 = arith.addf %91, %112 : vector<8x58xf32>
    %c5 = arith.constant 5 : index
    %c0_70 = arith.constant 0 : index
    %c0_71 = arith.constant 0 : index
    %114 = vector.load %arg1[%c5, %c0_70, %c0_71] : memref<9x8x58xbf16, #tpu.memory_space<vmem>>, vector<1x8x58xbf16>
    %115 = vector.shape_cast %114 : vector<1x8x58xbf16> to vector<8x58xbf16>
    %116 = arith.extf %115 : vector<8x58xbf16> to vector<8x58xf32>
    %c5_72 = arith.constant 5 : index
    %c0_73 = arith.constant 0 : index
    %c0_74 = arith.constant 0 : index
    %117 = vector.load %arg3[%c5_72, %c0_73, %c0_74] : memref<9x1x58xf32, #tpu.memory_space<vmem>>, vector<1x1x58xf32>
    %118 = vector.shape_cast %117 : vector<1x1x58xf32> to vector<1x58xf32>
    %119 = vector.broadcast %118 : vector<1x58xf32> to vector<8x58xf32>
    %120 = arith.mulf %116, %119 : vector<8x58xf32>
    %121 = arith.addf %99, %120 : vector<8x58xf32>
    %cst_75 = arith.constant dense<0.000000e+00> : vector<8x58xf32>
    %122 = tpu.matmul %115, %0, %cst_75 {dimension_numbers = #tpu.dot_dimension_numbers<[1], [0], [0], [1], [0, 0, 1, 1], [], []>} : vector<8x58xbf16>, vector<58x58xbf16>, vector<8x58xf32> -> vector<8x58xf32>
    %123 = vector.broadcast %1 : vector<1x58xf32> to vector<8x58xf32>
    %124 = arith.addf %122, %123 : vector<8x58xf32>
    %cst_76 = arith.constant 0.000000e+00 : f32
    %125 = vector.broadcast %cst_76 : f32 to vector<8x58xf32>
    %126 = arith.maximumf %124, %125 : vector<8x58xf32>
    %c5_77 = arith.constant 5 : index
    %c0_78 = arith.constant 0 : index
    %c0_79 = arith.constant 0 : index
    %127 = vector.load %arg2[%c5_77, %c0_78, %c0_79] : memref<9x8x1xf32, #tpu.memory_space<vmem>>, vector<1x8x1xf32>
    %128 = vector.shape_cast %127 : vector<1x8x1xf32> to vector<8x1xf32>
    %129 = vector.broadcast %128 : vector<8x1xf32> to vector<8x58xf32>
    %130 = arith.mulf %126, %129 : vector<8x58xf32>
    %c5_80 = arith.constant 5 : index
    %c0_81 = arith.constant 0 : index
    %c0_82 = arith.constant 0 : index
    %131 = vector.load %arg9[%c5_80, %c0_81, %c0_82] : memref<9x1x58xf32, #tpu.memory_space<vmem>>, vector<1x1x58xf32>
    %132 = vector.shape_cast %131 : vector<1x1x58xf32> to vector<1x58xf32>
    %133 = vector.broadcast %132 : vector<1x58xf32> to vector<8x58xf32>
    %134 = arith.mulf %130, %133 : vector<8x58xf32>
    %135 = arith.addf %113, %134 : vector<8x58xf32>
    %c6 = arith.constant 6 : index
    %c0_83 = arith.constant 0 : index
    %c0_84 = arith.constant 0 : index
    %136 = vector.load %arg1[%c6, %c0_83, %c0_84] : memref<9x8x58xbf16, #tpu.memory_space<vmem>>, vector<1x8x58xbf16>
    %137 = vector.shape_cast %136 : vector<1x8x58xbf16> to vector<8x58xbf16>
    %138 = arith.extf %137 : vector<8x58xbf16> to vector<8x58xf32>
    %c6_85 = arith.constant 6 : index
    %c0_86 = arith.constant 0 : index
    %c0_87 = arith.constant 0 : index
    %139 = vector.load %arg3[%c6_85, %c0_86, %c0_87] : memref<9x1x58xf32, #tpu.memory_space<vmem>>, vector<1x1x58xf32>
    %140 = vector.shape_cast %139 : vector<1x1x58xf32> to vector<1x58xf32>
    %141 = vector.broadcast %140 : vector<1x58xf32> to vector<8x58xf32>
    %142 = arith.mulf %138, %141 : vector<8x58xf32>
    %143 = arith.addf %121, %142 : vector<8x58xf32>
    %cst_88 = arith.constant dense<0.000000e+00> : vector<8x58xf32>
    %144 = tpu.matmul %137, %0, %cst_88 {dimension_numbers = #tpu.dot_dimension_numbers<[1], [0], [0], [1], [0, 0, 1, 1], [], []>} : vector<8x58xbf16>, vector<58x58xbf16>, vector<8x58xf32> -> vector<8x58xf32>
    %145 = vector.broadcast %1 : vector<1x58xf32> to vector<8x58xf32>
    %146 = arith.addf %144, %145 : vector<8x58xf32>
    %cst_89 = arith.constant 0.000000e+00 : f32
    %147 = vector.broadcast %cst_89 : f32 to vector<8x58xf32>
    %148 = arith.maximumf %146, %147 : vector<8x58xf32>
    %c6_90 = arith.constant 6 : index
    %c0_91 = arith.constant 0 : index
    %c0_92 = arith.constant 0 : index
    %149 = vector.load %arg2[%c6_90, %c0_91, %c0_92] : memref<9x8x1xf32, #tpu.memory_space<vmem>>, vector<1x8x1xf32>
    %150 = vector.shape_cast %149 : vector<1x8x1xf32> to vector<8x1xf32>
    %151 = vector.broadcast %150 : vector<8x1xf32> to vector<8x58xf32>
    %152 = arith.mulf %148, %151 : vector<8x58xf32>
    %c6_93 = arith.constant 6 : index
    %c0_94 = arith.constant 0 : index
    %c0_95 = arith.constant 0 : index
    %153 = vector.load %arg9[%c6_93, %c0_94, %c0_95] : memref<9x1x58xf32, #tpu.memory_space<vmem>>, vector<1x1x58xf32>
    %154 = vector.shape_cast %153 : vector<1x1x58xf32> to vector<1x58xf32>
    %155 = vector.broadcast %154 : vector<1x58xf32> to vector<8x58xf32>
    %156 = arith.mulf %152, %155 : vector<8x58xf32>
    %157 = arith.addf %135, %156 : vector<8x58xf32>
    %c7 = arith.constant 7 : index
    %c0_96 = arith.constant 0 : index
    %c0_97 = arith.constant 0 : index
    %158 = vector.load %arg1[%c7, %c0_96, %c0_97] : memref<9x8x58xbf16, #tpu.memory_space<vmem>>, vector<1x8x58xbf16>
    %159 = vector.shape_cast %158 : vector<1x8x58xbf16> to vector<8x58xbf16>
    %160 = arith.extf %159 : vector<8x58xbf16> to vector<8x58xf32>
    %c7_98 = arith.constant 7 : index
    %c0_99 = arith.constant 0 : index
    %c0_100 = arith.constant 0 : index
    %161 = vector.load %arg3[%c7_98, %c0_99, %c0_100] : memref<9x1x58xf32, #tpu.memory_space<vmem>>, vector<1x1x58xf32>
    %162 = vector.shape_cast %161 : vector<1x1x58xf32> to vector<1x58xf32>
    %163 = vector.broadcast %162 : vector<1x58xf32> to vector<8x58xf32>
    %164 = arith.mulf %160, %163 : vector<8x58xf32>
    %165 = arith.addf %143, %164 : vector<8x58xf32>
    %cst_101 = arith.constant dense<0.000000e+00> : vector<8x58xf32>
    %166 = tpu.matmul %159, %0, %cst_101 {dimension_numbers = #tpu.dot_dimension_numbers<[1], [0], [0], [1], [0, 0, 1, 1], [], []>} : vector<8x58xbf16>, vector<58x58xbf16>, vector<8x58xf32> -> vector<8x58xf32>
    %167 = vector.broadcast %1 : vector<1x58xf32> to vector<8x58xf32>
    %168 = arith.addf %166, %167 : vector<8x58xf32>
    %cst_102 = arith.constant 0.000000e+00 : f32
    %169 = vector.broadcast %cst_102 : f32 to vector<8x58xf32>
    %170 = arith.maximumf %168, %169 : vector<8x58xf32>
    %c7_103 = arith.constant 7 : index
    %c0_104 = arith.constant 0 : index
    %c0_105 = arith.constant 0 : index
    %171 = vector.load %arg2[%c7_103, %c0_104, %c0_105] : memref<9x8x1xf32, #tpu.memory_space<vmem>>, vector<1x8x1xf32>
    %172 = vector.shape_cast %171 : vector<1x8x1xf32> to vector<8x1xf32>
    %173 = vector.broadcast %172 : vector<8x1xf32> to vector<8x58xf32>
    %174 = arith.mulf %170, %173 : vector<8x58xf32>
    %c7_106 = arith.constant 7 : index
    %c0_107 = arith.constant 0 : index
    %c0_108 = arith.constant 0 : index
    %175 = vector.load %arg9[%c7_106, %c0_107, %c0_108] : memref<9x1x58xf32, #tpu.memory_space<vmem>>, vector<1x1x58xf32>
    %176 = vector.shape_cast %175 : vector<1x1x58xf32> to vector<1x58xf32>
    %177 = vector.broadcast %176 : vector<1x58xf32> to vector<8x58xf32>
    %178 = arith.mulf %174, %177 : vector<8x58xf32>
    %179 = arith.addf %157, %178 : vector<8x58xf32>
    %c8 = arith.constant 8 : index
    %c0_109 = arith.constant 0 : index
    %c0_110 = arith.constant 0 : index
    %180 = vector.load %arg1[%c8, %c0_109, %c0_110] : memref<9x8x58xbf16, #tpu.memory_space<vmem>>, vector<1x8x58xbf16>
    %181 = vector.shape_cast %180 : vector<1x8x58xbf16> to vector<8x58xbf16>
    %182 = arith.extf %181 : vector<8x58xbf16> to vector<8x58xf32>
    %c8_111 = arith.constant 8 : index
    %c0_112 = arith.constant 0 : index
    %c0_113 = arith.constant 0 : index
    %183 = vector.load %arg3[%c8_111, %c0_112, %c0_113] : memref<9x1x58xf32, #tpu.memory_space<vmem>>, vector<1x1x58xf32>
    %184 = vector.shape_cast %183 : vector<1x1x58xf32> to vector<1x58xf32>
    %185 = vector.broadcast %184 : vector<1x58xf32> to vector<8x58xf32>
    %186 = arith.mulf %182, %185 : vector<8x58xf32>
    %187 = arith.addf %165, %186 : vector<8x58xf32>
    %cst_114 = arith.constant dense<0.000000e+00> : vector<8x58xf32>
    %188 = tpu.matmul %181, %0, %cst_114 {dimension_numbers = #tpu.dot_dimension_numbers<[1], [0], [0], [1], [0, 0, 1, 1], [], []>} : vector<8x58xbf16>, vector<58x58xbf16>, vector<8x58xf32> -> vector<8x58xf32>
    %189 = vector.broadcast %1 : vector<1x58xf32> to vector<8x58xf32>
    %190 = arith.addf %188, %189 : vector<8x58xf32>
    %cst_115 = arith.constant 0.000000e+00 : f32
    %191 = vector.broadcast %cst_115 : f32 to vector<8x58xf32>
    %192 = arith.maximumf %190, %191 : vector<8x58xf32>
    %c8_116 = arith.constant 8 : index
    %c0_117 = arith.constant 0 : index
    %c0_118 = arith.constant 0 : index
    %193 = vector.load %arg2[%c8_116, %c0_117, %c0_118] : memref<9x8x1xf32, #tpu.memory_space<vmem>>, vector<1x8x1xf32>
    %194 = vector.shape_cast %193 : vector<1x8x1xf32> to vector<8x1xf32>
    %195 = vector.broadcast %194 : vector<8x1xf32> to vector<8x58xf32>
    %196 = arith.mulf %192, %195 : vector<8x58xf32>
    %c8_119 = arith.constant 8 : index
    %c0_120 = arith.constant 0 : index
    %c0_121 = arith.constant 0 : index
    %197 = vector.load %arg9[%c8_119, %c0_120, %c0_121] : memref<9x1x58xf32, #tpu.memory_space<vmem>>, vector<1x1x58xf32>
    %198 = vector.shape_cast %197 : vector<1x1x58xf32> to vector<1x58xf32>
    %199 = vector.broadcast %198 : vector<1x58xf32> to vector<8x58xf32>
    %200 = arith.mulf %196, %199 : vector<8x58xf32>
    %201 = arith.addf %179, %200 : vector<8x58xf32>
    %c0_122 = arith.constant 0 : index
    %c0_123 = arith.constant 0 : index
    %202 = vector.load %arg4[%c0_122, %c0_123] : memref<1x58xf32, #tpu.memory_space<vmem>>, vector<1x58xf32>
    %203 = vector.broadcast %202 : vector<1x58xf32> to vector<8x58xf32>
    %204 = arith.addf %187, %203 : vector<8x58xf32>
    %205 = arith.truncf %204 : vector<8x58xf32> to vector<8x58xbf16>
    %c0_124 = arith.constant 0 : index
    %c0_125 = arith.constant 0 : index
    %206 = vector.load %arg5[%c0_124, %c0_125] : memref<58x58xbf16, #tpu.memory_space<vmem>>, vector<58x58xbf16>
    %cst_126 = arith.constant dense<0.000000e+00> : vector<8x58xf32>
    %207 = tpu.matmul %205, %206, %cst_126 {dimension_numbers = #tpu.dot_dimension_numbers<[1], [0], [0], [1], [0, 0, 1, 1], [], []>} : vector<8x58xbf16>, vector<58x58xbf16>, vector<8x58xf32> -> vector<8x58xf32>
    %c0_127 = arith.constant 0 : index
    %c0_128 = arith.constant 0 : index
    %208 = vector.load %arg6[%c0_127, %c0_128] : memref<1x58xf32, #tpu.memory_space<vmem>>, vector<1x58xf32>
    %209 = vector.broadcast %208 : vector<1x58xf32> to vector<8x58xf32>
    %210 = arith.addf %207, %209 : vector<8x58xf32>
    %cst_129 = arith.constant 0.000000e+00 : f32
    %211 = vector.broadcast %cst_129 : f32 to vector<8x58xf32>
    %212 = arith.maximumf %210, %211 : vector<8x58xf32>
    %c0_130 = arith.constant 0 : index
    %c0_131 = arith.constant 0 : index
    %213 = vector.load %arg10[%c0_130, %c0_131] : memref<1x58xf32, #tpu.memory_space<vmem>>, vector<1x58xf32>
    %214 = vector.broadcast %213 : vector<1x58xf32> to vector<8x58xf32>
    %215 = arith.addf %201, %214 : vector<8x58xf32>
    %216 = arith.truncf %215 : vector<8x58xf32> to vector<8x58xbf16>
    %c0_132 = arith.constant 0 : index
    %c0_133 = arith.constant 0 : index
    %217 = vector.load %arg11[%c0_132, %c0_133] : memref<58x58xbf16, #tpu.memory_space<vmem>>, vector<58x58xbf16>
    %cst_134 = arith.constant dense<0.000000e+00> : vector<8x58xf32>
    %218 = tpu.matmul %216, %217, %cst_134 {dimension_numbers = #tpu.dot_dimension_numbers<[1], [0], [0], [1], [0, 0, 1, 1], [], []>} : vector<8x58xbf16>, vector<58x58xbf16>, vector<8x58xf32> -> vector<8x58xf32>
    %c0_135 = arith.constant 0 : index
    %c0_136 = arith.constant 0 : index
    %219 = vector.load %arg12[%c0_135, %c0_136] : memref<1x58xf32, #tpu.memory_space<vmem>>, vector<1x58xf32>
    %220 = vector.broadcast %219 : vector<1x58xf32> to vector<8x58xf32>
    %221 = arith.addf %218, %220 : vector<8x58xf32>
    %cst_137 = arith.constant 0.000000e+00 : f32
    %222 = vector.broadcast %cst_137 : f32 to vector<8x58xf32>
    %223 = arith.maximumf %221, %222 : vector<8x58xf32>
    %224 = arith.truncf %212 : vector<8x58xf32> to vector<8x58xbf16>
    %c0_138 = arith.constant 0 : index
    %c0_139 = arith.constant 0 : index
    %225 = vector.load %arg13[%c0_138, %c0_139] : memref<8x58xbf16, #tpu.memory_space<vmem>>, vector<8x58xbf16>
    tpu.vector_store %arg13[%c0_138, %c0_139], %224 {strides = array<i32>} : memref<8x58xbf16, #tpu.memory_space<vmem>>, vector<8x58xbf16>,
    %226 = arith.truncf %223 : vector<8x58xf32> to vector<8x58xbf16>
    %c0_140 = arith.constant 0 : index
    %c0_141 = arith.constant 0 : index
    %227 = vector.load %arg14[%c0_140, %c0_141] : memref<8x58xbf16, #tpu.memory_space<vmem>>, vector<8x58xbf16>
    tpu.vector_store %arg14[%c0_140, %c0_141], %226 {strides = array<i32>} : memref<8x58xbf16, #tpu.memory_space<vmem>>, vector<8x58xbf16>,
    return
  }
  func.func @transform_0(%arg0: i32) -> (i32, i32, i32) {
    %c0_i32 = arith.constant 0 : i32
    %c0_i32_0 = arith.constant 0 : i32
    %c0_i32_1 = arith.constant 0 : i32
    %c0_i32_2 = arith.constant 0 : i32
    return %c0_i32, %c0_i32_0, %c0_i32_1 : i32, i32, i32
  }
  func.func @transform_1(%arg0: i32) -> (i32, i32, i32) {
    %c0_i32 = arith.constant 0 : i32
    %c0_i32_0 = arith.constant 0 : i32
    %c0_i32_1 = arith.constant 0 : i32
    %c0_i32_2 = arith.constant 0 : i32
    return %c0_i32, %c0_i32_0, %c0_i32_1 : i32, i32, i32
  }
  func.func @transform_2(%arg0: i32) -> (i32, i32, i32) {
    %c0_i32 = arith.constant 0 : i32
    %c0_i32_0 = arith.constant 0 : i32
    %c0_i32_1 = arith.constant 0 : i32
    %c0_i32_2 = arith.constant 0 : i32
    return %c0_i32, %c0_i32_0, %c0_i32_1 : i32, i32, i32
  }
  func.func @transform_3(%arg0: i32) -> (i32, i32) {
    %c0_i32 = arith.constant 0 : i32
    %c0_i32_0 = arith.constant 0 : i32
    %c0_i32_1 = arith.constant 0 : i32
    return %c0_i32, %c0_i32_0 : i32, i32
  }
  func.func @transform_4(%arg0: i32) -> (i32, i32) {
    %c0_i32 = arith.constant 0 : i32
    %c0_i32_0 = arith.constant 0 : i32
    %c0_i32_1 = arith.constant 0 : i32
    return %c0_i32, %c0_i32_0 : i32, i32
  }
  func.func @transform_5(%arg0: i32) -> (i32, i32) {
    %c0_i32 = arith.constant 0 : i32
    %c0_i32_0 = arith.constant 0 : i32
    %c0_i32_1 = arith.constant 0 : i32
    return %c0_i32, %c0_i32_0 : i32, i32
  }
  func.func @transform_6(%arg0: i32) -> (i32, i32) {
    %c0_i32 = arith.constant 0 : i32
    %c0_i32_0 = arith.constant 0 : i32
    %c0_i32_1 = arith.constant 0 : i32
    return %c0_i32, %c0_i32_0 : i32, i32
  }
  func.func @transform_7(%arg0: i32) -> (i32, i32) {
    %c0_i32 = arith.constant 0 : i32
    %c0_i32_0 = arith.constant 0 : i32
    %c0_i32_1 = arith.constant 0 : i32
    return %c0_i32, %c0_i32_0 : i32, i32
  }
  func.func @transform_8(%arg0: i32) -> (i32, i32, i32) {
    %c0_i32 = arith.constant 0 : i32
    %c0_i32_0 = arith.constant 0 : i32
    %c0_i32_1 = arith.constant 0 : i32
    %c0_i32_2 = arith.constant 0 : i32
    return %c0_i32, %c0_i32_0, %c0_i32_1 : i32, i32, i32
  }
  func.func @transform_9(%arg0: i32) -> (i32, i32) {
    %c0_i32 = arith.constant 0 : i32
    %c0_i32_0 = arith.constant 0 : i32
    %c0_i32_1 = arith.constant 0 : i32
    return %c0_i32, %c0_i32_0 : i32, i32
  }
  func.func @transform_10(%arg0: i32) -> (i32, i32) {
    %c0_i32 = arith.constant 0 : i32
    %c0_i32_0 = arith.constant 0 : i32
    %c0_i32_1 = arith.constant 0 : i32
    return %c0_i32, %c0_i32_0 : i32, i32
  }
  func.func @transform_11(%arg0: i32) -> (i32, i32) {
    %c0_i32 = arith.constant 0 : i32
    %c0_i32_0 = arith.constant 0 : i32
    %c0_i32_1 = arith.constant 0 : i32
    return %c0_i32, %c0_i32_0 : i32, i32
  }
  func.func @transform_12(%arg0: i32) -> (i32, i32) {
    %c0_i32 = arith.constant 0 : i32
    %c0_i32_0 = arith.constant 0 : i32
    %c0_i32_1 = arith.constant 0 : i32
    return %c0_i32, %c0_i32_0 : i32, i32
  }
  func.func @transform_13(%arg0: i32) -> (i32, i32) {
    %c0_i32 = arith.constant 0 : i32
    %c0_i32_0 = arith.constant 0 : i32
    %c0_i32_1 = arith.constant 0 : i32
    return %c0_i32, %c0_i32_0 : i32, i32
  }
}

module attributes {stable_mosaic.version = 11 : i64} {
  func.func @_branch2_s1_kernel(%arg0: i32, %arg1: memref<2x2x2x58xbf16, #tpu.memory_space<vmem>>, %arg2: memref<58x58xbf16, #tpu.memory_space<vmem>>, %arg3: memref<1x58xf32, #tpu.memory_space<vmem>>, %arg4: memref<9x1x58xf32, #tpu.memory_space<vmem>>, %arg5: memref<1x58xf32, #tpu.memory_space<vmem>>, %arg6: memref<58x58xbf16, #tpu.memory_space<vmem>>, %arg7: memref<1x58xf32, #tpu.memory_space<vmem>>, %arg8: memref<2x2x2x58xbf16, #tpu.memory_space<vmem>>, %arg9: memref<2x4x4x58xf32, #tpu.memory_space<vmem>>) attributes {dimension_semantics = [#tpu.dimension_semantics<arbitrary>], iteration_bounds = array<i64: 1>, scalar_prefetch = 0 : i64, scratch_operands = 1 : i64, tpu.core_type = #tpu.core_type<tc>, window_params = [{pipeline_mode = #tpu.pipeline_mode<synchronous>, transform_indices = @transform_0, window_bounds = array<i64: 2, 2, 2, 58>}, {pipeline_mode = #tpu.pipeline_mode<synchronous>, transform_indices = @transform_1, window_bounds = array<i64: 58, 58>}, {pipeline_mode = #tpu.pipeline_mode<synchronous>, transform_indices = @transform_2, window_bounds = array<i64: 1, 58>}, {pipeline_mode = #tpu.pipeline_mode<synchronous>, transform_indices = @transform_3, window_bounds = array<i64: 9, 1, 58>}, {pipeline_mode = #tpu.pipeline_mode<synchronous>, transform_indices = @transform_4, window_bounds = array<i64: 1, 58>}, {pipeline_mode = #tpu.pipeline_mode<synchronous>, transform_indices = @transform_5, window_bounds = array<i64: 58, 58>}, {pipeline_mode = #tpu.pipeline_mode<synchronous>, transform_indices = @transform_6, window_bounds = array<i64: 1, 58>}, {pipeline_mode = #tpu.pipeline_mode<synchronous>, transform_indices = @transform_7, window_bounds = array<i64: 2, 2, 2, 58>}]} {
    %c0 = arith.constant 0 : index
    %c0_0 = arith.constant 0 : index
    %0 = vector.load %arg2[%c0, %c0_0] : memref<58x58xbf16, #tpu.memory_space<vmem>>, vector<58x58xbf16>
    %c0_1 = arith.constant 0 : index
    %c0_2 = arith.constant 0 : index
    %1 = vector.load %arg3[%c0_1, %c0_2] : memref<1x58xf32, #tpu.memory_space<vmem>>, vector<1x58xf32>
    %c0_3 = arith.constant 0 : index
    %c0_4 = arith.constant 0 : index
    %2 = vector.load %arg6[%c0_3, %c0_4] : memref<58x58xbf16, #tpu.memory_space<vmem>>, vector<58x58xbf16>
    %c0_5 = arith.constant 0 : index
    %c0_6 = arith.constant 0 : index
    %3 = vector.load %arg7[%c0_5, %c0_6] : memref<1x58xf32, #tpu.memory_space<vmem>>, vector<1x58xf32>
    %cst = arith.constant 0.000000e+00 : f32
    %4 = vector.broadcast %cst : f32 to vector<2x4x4x58xf32>
    %c0_7 = arith.constant 0 : index
    %c0_8 = arith.constant 0 : index
    %c0_9 = arith.constant 0 : index
    %c0_10 = arith.constant 0 : index
    %5 = vector.load %arg9[%c0_7, %c0_8, %c0_9, %c0_10] : memref<2x4x4x58xf32, #tpu.memory_space<vmem>>, vector<2x4x4x58xf32>
    tpu.vector_store %arg9[%c0_7, %c0_8, %c0_9, %c0_10], %4 {strides = array<i32>} : memref<2x4x4x58xf32, #tpu.memory_space<vmem>>, vector<2x4x4x58xf32>,
    %c0_11 = arith.constant 0 : index
    %c0_12 = arith.constant 0 : index
    %c0_13 = arith.constant 0 : index
    %c0_14 = arith.constant 0 : index
    %6 = vector.load %arg1[%c0_11, %c0_12, %c0_13, %c0_14] : memref<2x2x2x58xbf16, #tpu.memory_space<vmem>>, vector<1x1x2x58xbf16>
    %7 = vector.shape_cast %6 : vector<1x1x2x58xbf16> to vector<2x58xbf16>
    %cst_15 = arith.constant dense<0.000000e+00> : vector<2x58xf32>
    %8 = tpu.matmul %7, %0, %cst_15 {dimension_numbers = #tpu.dot_dimension_numbers<[1], [0], [0], [1], [0, 0, 1, 1], [], []>} : vector<2x58xbf16>, vector<58x58xbf16>, vector<2x58xf32> -> vector<2x58xf32>
    %9 = vector.broadcast %1 : vector<1x58xf32> to vector<2x58xf32>
    %10 = arith.addf %8, %9 : vector<2x58xf32>
    %cst_16 = arith.constant 0.000000e+00 : f32
    %11 = vector.broadcast %cst_16 : f32 to vector<2x58xf32>
    %12 = arith.maximumf %10, %11 : vector<2x58xf32>
    %c0_17 = arith.constant 0 : index
    %c1 = arith.constant 1 : index
    %c1_18 = arith.constant 1 : index
    %c0_19 = arith.constant 0 : index
    %13 = vector.load %arg9[%c0_17, %c1, %c1_18, %c0_19] : memref<2x4x4x58xf32, #tpu.memory_space<vmem>>, vector<1x1x2x58xf32>
    %14 = vector.shape_cast %13 : vector<1x1x2x58xf32> to vector<2x58xf32>
    %15 = vector.shape_cast %12 : vector<2x58xf32> to vector<1x1x2x58xf32>
    tpu.vector_store %arg9[%c0_17, %c1, %c1_18, %c0_19], %15 {strides = array<i32>} : memref<2x4x4x58xf32, #tpu.memory_space<vmem>>, vector<1x1x2x58xf32>,
    %c0_20 = arith.constant 0 : index
    %c1_21 = arith.constant 1 : index
    %c0_22 = arith.constant 0 : index
    %c0_23 = arith.constant 0 : index
    %16 = vector.load %arg1[%c0_20, %c1_21, %c0_22, %c0_23] : memref<2x2x2x58xbf16, #tpu.memory_space<vmem>>, vector<1x1x2x58xbf16>
    %17 = vector.shape_cast %16 : vector<1x1x2x58xbf16> to vector<2x58xbf16>
    %cst_24 = arith.constant dense<0.000000e+00> : vector<2x58xf32>
    %18 = tpu.matmul %17, %0, %cst_24 {dimension_numbers = #tpu.dot_dimension_numbers<[1], [0], [0], [1], [0, 0, 1, 1], [], []>} : vector<2x58xbf16>, vector<58x58xbf16>, vector<2x58xf32> -> vector<2x58xf32>
    %19 = vector.broadcast %1 : vector<1x58xf32> to vector<2x58xf32>
    %20 = arith.addf %18, %19 : vector<2x58xf32>
    %cst_25 = arith.constant 0.000000e+00 : f32
    %21 = vector.broadcast %cst_25 : f32 to vector<2x58xf32>
    %22 = arith.maximumf %20, %21 : vector<2x58xf32>
    %c0_26 = arith.constant 0 : index
    %c2 = arith.constant 2 : index
    %c1_27 = arith.constant 1 : index
    %c0_28 = arith.constant 0 : index
    %23 = vector.load %arg9[%c0_26, %c2, %c1_27, %c0_28] : memref<2x4x4x58xf32, #tpu.memory_space<vmem>>, vector<1x1x2x58xf32>
    %24 = vector.shape_cast %23 : vector<1x1x2x58xf32> to vector<2x58xf32>
    %25 = vector.shape_cast %22 : vector<2x58xf32> to vector<1x1x2x58xf32>
    tpu.vector_store %arg9[%c0_26, %c2, %c1_27, %c0_28], %25 {strides = array<i32>} : memref<2x4x4x58xf32, #tpu.memory_space<vmem>>, vector<1x1x2x58xf32>,
    %c1_29 = arith.constant 1 : index
    %c0_30 = arith.constant 0 : index
    %c0_31 = arith.constant 0 : index
    %c0_32 = arith.constant 0 : index
    %26 = vector.load %arg1[%c1_29, %c0_30, %c0_31, %c0_32] : memref<2x2x2x58xbf16, #tpu.memory_space<vmem>>, vector<1x1x2x58xbf16>
    %27 = vector.shape_cast %26 : vector<1x1x2x58xbf16> to vector<2x58xbf16>
    %cst_33 = arith.constant dense<0.000000e+00> : vector<2x58xf32>
    %28 = tpu.matmul %27, %0, %cst_33 {dimension_numbers = #tpu.dot_dimension_numbers<[1], [0], [0], [1], [0, 0, 1, 1], [], []>} : vector<2x58xbf16>, vector<58x58xbf16>, vector<2x58xf32> -> vector<2x58xf32>
    %29 = vector.broadcast %1 : vector<1x58xf32> to vector<2x58xf32>
    %30 = arith.addf %28, %29 : vector<2x58xf32>
    %cst_34 = arith.constant 0.000000e+00 : f32
    %31 = vector.broadcast %cst_34 : f32 to vector<2x58xf32>
    %32 = arith.maximumf %30, %31 : vector<2x58xf32>
    %c1_35 = arith.constant 1 : index
    %c1_36 = arith.constant 1 : index
    %c1_37 = arith.constant 1 : index
    %c0_38 = arith.constant 0 : index
    %33 = vector.load %arg9[%c1_35, %c1_36, %c1_37, %c0_38] : memref<2x4x4x58xf32, #tpu.memory_space<vmem>>, vector<1x1x2x58xf32>
    %34 = vector.shape_cast %33 : vector<1x1x2x58xf32> to vector<2x58xf32>
    %35 = vector.shape_cast %32 : vector<2x58xf32> to vector<1x1x2x58xf32>
    tpu.vector_store %arg9[%c1_35, %c1_36, %c1_37, %c0_38], %35 {strides = array<i32>} : memref<2x4x4x58xf32, #tpu.memory_space<vmem>>, vector<1x1x2x58xf32>,
    %c1_39 = arith.constant 1 : index
    %c1_40 = arith.constant 1 : index
    %c0_41 = arith.constant 0 : index
    %c0_42 = arith.constant 0 : index
    %36 = vector.load %arg1[%c1_39, %c1_40, %c0_41, %c0_42] : memref<2x2x2x58xbf16, #tpu.memory_space<vmem>>, vector<1x1x2x58xbf16>
    %37 = vector.shape_cast %36 : vector<1x1x2x58xbf16> to vector<2x58xbf16>
    %cst_43 = arith.constant dense<0.000000e+00> : vector<2x58xf32>
    %38 = tpu.matmul %37, %0, %cst_43 {dimension_numbers = #tpu.dot_dimension_numbers<[1], [0], [0], [1], [0, 0, 1, 1], [], []>} : vector<2x58xbf16>, vector<58x58xbf16>, vector<2x58xf32> -> vector<2x58xf32>
    %39 = vector.broadcast %1 : vector<1x58xf32> to vector<2x58xf32>
    %40 = arith.addf %38, %39 : vector<2x58xf32>
    %cst_44 = arith.constant 0.000000e+00 : f32
    %41 = vector.broadcast %cst_44 : f32 to vector<2x58xf32>
    %42 = arith.maximumf %40, %41 : vector<2x58xf32>
    %c1_45 = arith.constant 1 : index
    %c2_46 = arith.constant 2 : index
    %c1_47 = arith.constant 1 : index
    %c0_48 = arith.constant 0 : index
    %43 = vector.load %arg9[%c1_45, %c2_46, %c1_47, %c0_48] : memref<2x4x4x58xf32, #tpu.memory_space<vmem>>, vector<1x1x2x58xf32>
    %44 = vector.shape_cast %43 : vector<1x1x2x58xf32> to vector<2x58xf32>
    %45 = vector.shape_cast %42 : vector<2x58xf32> to vector<1x1x2x58xf32>
    tpu.vector_store %arg9[%c1_45, %c2_46, %c1_47, %c0_48], %45 {strides = array<i32>} : memref<2x4x4x58xf32, #tpu.memory_space<vmem>>, vector<1x1x2x58xf32>,
    %cst_49 = arith.constant 0.000000e+00 : f32
    %46 = vector.broadcast %cst_49 : f32 to vector<2x2x2x58xf32>
    %c0_50 = arith.constant 0 : index
    %c0_51 = arith.constant 0 : index
    %c0_52 = arith.constant 0 : index
    %c0_53 = arith.constant 0 : index
    %47 = vector.load %arg9[%c0_50, %c0_51, %c0_52, %c0_53] : memref<2x4x4x58xf32, #tpu.memory_space<vmem>>, vector<2x2x2x58xf32>
    %c0_54 = arith.constant 0 : index
    %c0_55 = arith.constant 0 : index
    %c0_56 = arith.constant 0 : index
    %48 = vector.load %arg4[%c0_54, %c0_55, %c0_56] : memref<9x1x58xf32, #tpu.memory_space<vmem>>, vector<1x1x58xf32>
    %49 = vector.shape_cast %48 : vector<1x1x58xf32> to vector<1x58xf32>
    %50 = vector.shape_cast %49 : vector<1x58xf32> to vector<1x1x1x58xf32>
    %51 = vector.broadcast %50 : vector<1x1x1x58xf32> to vector<2x2x2x58xf32>
    %52 = arith.mulf %47, %51 : vector<2x2x2x58xf32>
    %53 = arith.addf %46, %52 : vector<2x2x2x58xf32>
    %c0_57 = arith.constant 0 : index
    %c0_58 = arith.constant 0 : index
    %c1_59 = arith.constant 1 : index
    %c0_60 = arith.constant 0 : index
    %54 = vector.load %arg9[%c0_57, %c0_58, %c1_59, %c0_60] : memref<2x4x4x58xf32, #tpu.memory_space<vmem>>, vector<2x2x2x58xf32>
    %c1_61 = arith.constant 1 : index
    %c0_62 = arith.constant 0 : index
    %c0_63 = arith.constant 0 : index
    %55 = vector.load %arg4[%c1_61, %c0_62, %c0_63] : memref<9x1x58xf32, #tpu.memory_space<vmem>>, vector<1x1x58xf32>
    %56 = vector.shape_cast %55 : vector<1x1x58xf32> to vector<1x58xf32>
    %57 = vector.shape_cast %56 : vector<1x58xf32> to vector<1x1x1x58xf32>
    %58 = vector.broadcast %57 : vector<1x1x1x58xf32> to vector<2x2x2x58xf32>
    %59 = arith.mulf %54, %58 : vector<2x2x2x58xf32>
    %60 = arith.addf %53, %59 : vector<2x2x2x58xf32>
    %c0_64 = arith.constant 0 : index
    %c0_65 = arith.constant 0 : index
    %c2_66 = arith.constant 2 : index
    %c0_67 = arith.constant 0 : index
    %61 = vector.load %arg9[%c0_64, %c0_65, %c2_66, %c0_67] : memref<2x4x4x58xf32, #tpu.memory_space<vmem>>, vector<2x2x2x58xf32>
    %c2_68 = arith.constant 2 : index
    %c0_69 = arith.constant 0 : index
    %c0_70 = arith.constant 0 : index
    %62 = vector.load %arg4[%c2_68, %c0_69, %c0_70] : memref<9x1x58xf32, #tpu.memory_space<vmem>>, vector<1x1x58xf32>
    %63 = vector.shape_cast %62 : vector<1x1x58xf32> to vector<1x58xf32>
    %64 = vector.shape_cast %63 : vector<1x58xf32> to vector<1x1x1x58xf32>
    %65 = vector.broadcast %64 : vector<1x1x1x58xf32> to vector<2x2x2x58xf32>
    %66 = arith.mulf %61, %65 : vector<2x2x2x58xf32>
    %67 = arith.addf %60, %66 : vector<2x2x2x58xf32>
    %c0_71 = arith.constant 0 : index
    %c1_72 = arith.constant 1 : index
    %c0_73 = arith.constant 0 : index
    %c0_74 = arith.constant 0 : index
    %68 = vector.load %arg9[%c0_71, %c1_72, %c0_73, %c0_74] : memref<2x4x4x58xf32, #tpu.memory_space<vmem>>, vector<2x2x2x58xf32>
    %c3 = arith.constant 3 : index
    %c0_75 = arith.constant 0 : index
    %c0_76 = arith.constant 0 : index
    %69 = vector.load %arg4[%c3, %c0_75, %c0_76] : memref<9x1x58xf32, #tpu.memory_space<vmem>>, vector<1x1x58xf32>
    %70 = vector.shape_cast %69 : vector<1x1x58xf32> to vector<1x58xf32>
    %71 = vector.shape_cast %70 : vector<1x58xf32> to vector<1x1x1x58xf32>
    %72 = vector.broadcast %71 : vector<1x1x1x58xf32> to vector<2x2x2x58xf32>
    %73 = arith.mulf %68, %72 : vector<2x2x2x58xf32>
    %74 = arith.addf %67, %73 : vector<2x2x2x58xf32>
    %c0_77 = arith.constant 0 : index
    %c1_78 = arith.constant 1 : index
    %c1_79 = arith.constant 1 : index
    %c0_80 = arith.constant 0 : index
    %75 = vector.load %arg9[%c0_77, %c1_78, %c1_79, %c0_80] : memref<2x4x4x58xf32, #tpu.memory_space<vmem>>, vector<2x2x2x58xf32>
    %c4 = arith.constant 4 : index
    %c0_81 = arith.constant 0 : index
    %c0_82 = arith.constant 0 : index
    %76 = vector.load %arg4[%c4, %c0_81, %c0_82] : memref<9x1x58xf32, #tpu.memory_space<vmem>>, vector<1x1x58xf32>
    %77 = vector.shape_cast %76 : vector<1x1x58xf32> to vector<1x58xf32>
    %78 = vector.shape_cast %77 : vector<1x58xf32> to vector<1x1x1x58xf32>
    %79 = vector.broadcast %78 : vector<1x1x1x58xf32> to vector<2x2x2x58xf32>
    %80 = arith.mulf %75, %79 : vector<2x2x2x58xf32>
    %81 = arith.addf %74, %80 : vector<2x2x2x58xf32>
    %c0_83 = arith.constant 0 : index
    %c1_84 = arith.constant 1 : index
    %c2_85 = arith.constant 2 : index
    %c0_86 = arith.constant 0 : index
    %82 = vector.load %arg9[%c0_83, %c1_84, %c2_85, %c0_86] : memref<2x4x4x58xf32, #tpu.memory_space<vmem>>, vector<2x2x2x58xf32>
    %c5 = arith.constant 5 : index
    %c0_87 = arith.constant 0 : index
    %c0_88 = arith.constant 0 : index
    %83 = vector.load %arg4[%c5, %c0_87, %c0_88] : memref<9x1x58xf32, #tpu.memory_space<vmem>>, vector<1x1x58xf32>
    %84 = vector.shape_cast %83 : vector<1x1x58xf32> to vector<1x58xf32>
    %85 = vector.shape_cast %84 : vector<1x58xf32> to vector<1x1x1x58xf32>
    %86 = vector.broadcast %85 : vector<1x1x1x58xf32> to vector<2x2x2x58xf32>
    %87 = arith.mulf %82, %86 : vector<2x2x2x58xf32>
    %88 = arith.addf %81, %87 : vector<2x2x2x58xf32>
    %c0_89 = arith.constant 0 : index
    %c2_90 = arith.constant 2 : index
    %c0_91 = arith.constant 0 : index
    %c0_92 = arith.constant 0 : index
    %89 = vector.load %arg9[%c0_89, %c2_90, %c0_91, %c0_92] : memref<2x4x4x58xf32, #tpu.memory_space<vmem>>, vector<2x2x2x58xf32>
    %c6 = arith.constant 6 : index
    %c0_93 = arith.constant 0 : index
    %c0_94 = arith.constant 0 : index
    %90 = vector.load %arg4[%c6, %c0_93, %c0_94] : memref<9x1x58xf32, #tpu.memory_space<vmem>>, vector<1x1x58xf32>
    %91 = vector.shape_cast %90 : vector<1x1x58xf32> to vector<1x58xf32>
    %92 = vector.shape_cast %91 : vector<1x58xf32> to vector<1x1x1x58xf32>
    %93 = vector.broadcast %92 : vector<1x1x1x58xf32> to vector<2x2x2x58xf32>
    %94 = arith.mulf %89, %93 : vector<2x2x2x58xf32>
    %95 = arith.addf %88, %94 : vector<2x2x2x58xf32>
    %c0_95 = arith.constant 0 : index
    %c2_96 = arith.constant 2 : index
    %c1_97 = arith.constant 1 : index
    %c0_98 = arith.constant 0 : index
    %96 = vector.load %arg9[%c0_95, %c2_96, %c1_97, %c0_98] : memref<2x4x4x58xf32, #tpu.memory_space<vmem>>, vector<2x2x2x58xf32>
    %c7 = arith.constant 7 : index
    %c0_99 = arith.constant 0 : index
    %c0_100 = arith.constant 0 : index
    %97 = vector.load %arg4[%c7, %c0_99, %c0_100] : memref<9x1x58xf32, #tpu.memory_space<vmem>>, vector<1x1x58xf32>
    %98 = vector.shape_cast %97 : vector<1x1x58xf32> to vector<1x58xf32>
    %99 = vector.shape_cast %98 : vector<1x58xf32> to vector<1x1x1x58xf32>
    %100 = vector.broadcast %99 : vector<1x1x1x58xf32> to vector<2x2x2x58xf32>
    %101 = arith.mulf %96, %100 : vector<2x2x2x58xf32>
    %102 = arith.addf %95, %101 : vector<2x2x2x58xf32>
    %c0_101 = arith.constant 0 : index
    %c2_102 = arith.constant 2 : index
    %c2_103 = arith.constant 2 : index
    %c0_104 = arith.constant 0 : index
    %103 = vector.load %arg9[%c0_101, %c2_102, %c2_103, %c0_104] : memref<2x4x4x58xf32, #tpu.memory_space<vmem>>, vector<2x2x2x58xf32>
    %c8 = arith.constant 8 : index
    %c0_105 = arith.constant 0 : index
    %c0_106 = arith.constant 0 : index
    %104 = vector.load %arg4[%c8, %c0_105, %c0_106] : memref<9x1x58xf32, #tpu.memory_space<vmem>>, vector<1x1x58xf32>
    %105 = vector.shape_cast %104 : vector<1x1x58xf32> to vector<1x58xf32>
    %106 = vector.shape_cast %105 : vector<1x58xf32> to vector<1x1x1x58xf32>
    %107 = vector.broadcast %106 : vector<1x1x1x58xf32> to vector<2x2x2x58xf32>
    %108 = arith.mulf %103, %107 : vector<2x2x2x58xf32>
    %109 = arith.addf %102, %108 : vector<2x2x2x58xf32>
    %c0_107 = arith.constant 0 : index
    %c0_108 = arith.constant 0 : index
    %110 = vector.load %arg5[%c0_107, %c0_108] : memref<1x58xf32, #tpu.memory_space<vmem>>, vector<1x58xf32>
    %111 = vector.shape_cast %110 : vector<1x58xf32> to vector<1x1x1x58xf32>
    %112 = vector.broadcast %111 : vector<1x1x1x58xf32> to vector<2x2x2x58xf32>
    %113 = arith.addf %109, %112 : vector<2x2x2x58xf32>
    %114 = vector.extract_strided_slice %113 {offsets = [0, 0, 0, 0], sizes = [1, 1, 2, 58], strides = [1, 1, 1, 1]} : vector<2x2x2x58xf32> to vector<1x1x2x58xf32>
    %115 = vector.shape_cast %114 : vector<1x1x2x58xf32> to vector<2x58xf32>
    %116 = arith.truncf %115 : vector<2x58xf32> to vector<2x58xbf16>
    %cst_109 = arith.constant dense<0.000000e+00> : vector<2x58xf32>
    %117 = tpu.matmul %116, %2, %cst_109 {dimension_numbers = #tpu.dot_dimension_numbers<[1], [0], [0], [1], [0, 0, 1, 1], [], []>} : vector<2x58xbf16>, vector<58x58xbf16>, vector<2x58xf32> -> vector<2x58xf32>
    %118 = vector.broadcast %3 : vector<1x58xf32> to vector<2x58xf32>
    %119 = arith.addf %117, %118 : vector<2x58xf32>
    %cst_110 = arith.constant 0.000000e+00 : f32
    %120 = vector.broadcast %cst_110 : f32 to vector<2x58xf32>
    %121 = arith.maximumf %119, %120 : vector<2x58xf32>
    %122 = arith.truncf %121 : vector<2x58xf32> to vector<2x58xbf16>
    %c0_111 = arith.constant 0 : index
    %c0_112 = arith.constant 0 : index
    %c0_113 = arith.constant 0 : index
    %c0_114 = arith.constant 0 : index
    %123 = vector.load %arg8[%c0_111, %c0_112, %c0_113, %c0_114] : memref<2x2x2x58xbf16, #tpu.memory_space<vmem>>, vector<1x1x2x58xbf16>
    %124 = vector.shape_cast %123 : vector<1x1x2x58xbf16> to vector<2x58xbf16>
    %125 = vector.shape_cast %122 : vector<2x58xbf16> to vector<1x1x2x58xbf16>
    tpu.vector_store %arg8[%c0_111, %c0_112, %c0_113, %c0_114], %125 {strides = array<i32>} : memref<2x2x2x58xbf16, #tpu.memory_space<vmem>>, vector<1x1x2x58xbf16>,
    %126 = vector.extract_strided_slice %113 {offsets = [0, 1, 0, 0], sizes = [1, 1, 2, 58], strides = [1, 1, 1, 1]} : vector<2x2x2x58xf32> to vector<1x1x2x58xf32>
    %127 = vector.shape_cast %126 : vector<1x1x2x58xf32> to vector<2x58xf32>
    %128 = arith.truncf %127 : vector<2x58xf32> to vector<2x58xbf16>
    %cst_115 = arith.constant dense<0.000000e+00> : vector<2x58xf32>
    %129 = tpu.matmul %128, %2, %cst_115 {dimension_numbers = #tpu.dot_dimension_numbers<[1], [0], [0], [1], [0, 0, 1, 1], [], []>} : vector<2x58xbf16>, vector<58x58xbf16>, vector<2x58xf32> -> vector<2x58xf32>
    %130 = vector.broadcast %3 : vector<1x58xf32> to vector<2x58xf32>
    %131 = arith.addf %129, %130 : vector<2x58xf32>
    %cst_116 = arith.constant 0.000000e+00 : f32
    %132 = vector.broadcast %cst_116 : f32 to vector<2x58xf32>
    %133 = arith.maximumf %131, %132 : vector<2x58xf32>
    %134 = arith.truncf %133 : vector<2x58xf32> to vector<2x58xbf16>
    %c0_117 = arith.constant 0 : index
    %c1_118 = arith.constant 1 : index
    %c0_119 = arith.constant 0 : index
    %c0_120 = arith.constant 0 : index
    %135 = vector.load %arg8[%c0_117, %c1_118, %c0_119, %c0_120] : memref<2x2x2x58xbf16, #tpu.memory_space<vmem>>, vector<1x1x2x58xbf16>
    %136 = vector.shape_cast %135 : vector<1x1x2x58xbf16> to vector<2x58xbf16>
    %137 = vector.shape_cast %134 : vector<2x58xbf16> to vector<1x1x2x58xbf16>
    tpu.vector_store %arg8[%c0_117, %c1_118, %c0_119, %c0_120], %137 {strides = array<i32>} : memref<2x2x2x58xbf16, #tpu.memory_space<vmem>>, vector<1x1x2x58xbf16>,
    %138 = vector.extract_strided_slice %113 {offsets = [1, 0, 0, 0], sizes = [1, 1, 2, 58], strides = [1, 1, 1, 1]} : vector<2x2x2x58xf32> to vector<1x1x2x58xf32>
    %139 = vector.shape_cast %138 : vector<1x1x2x58xf32> to vector<2x58xf32>
    %140 = arith.truncf %139 : vector<2x58xf32> to vector<2x58xbf16>
    %cst_121 = arith.constant dense<0.000000e+00> : vector<2x58xf32>
    %141 = tpu.matmul %140, %2, %cst_121 {dimension_numbers = #tpu.dot_dimension_numbers<[1], [0], [0], [1], [0, 0, 1, 1], [], []>} : vector<2x58xbf16>, vector<58x58xbf16>, vector<2x58xf32> -> vector<2x58xf32>
    %142 = vector.broadcast %3 : vector<1x58xf32> to vector<2x58xf32>
    %143 = arith.addf %141, %142 : vector<2x58xf32>
    %cst_122 = arith.constant 0.000000e+00 : f32
    %144 = vector.broadcast %cst_122 : f32 to vector<2x58xf32>
    %145 = arith.maximumf %143, %144 : vector<2x58xf32>
    %146 = arith.truncf %145 : vector<2x58xf32> to vector<2x58xbf16>
    %c1_123 = arith.constant 1 : index
    %c0_124 = arith.constant 0 : index
    %c0_125 = arith.constant 0 : index
    %c0_126 = arith.constant 0 : index
    %147 = vector.load %arg8[%c1_123, %c0_124, %c0_125, %c0_126] : memref<2x2x2x58xbf16, #tpu.memory_space<vmem>>, vector<1x1x2x58xbf16>
    %148 = vector.shape_cast %147 : vector<1x1x2x58xbf16> to vector<2x58xbf16>
    %149 = vector.shape_cast %146 : vector<2x58xbf16> to vector<1x1x2x58xbf16>
    tpu.vector_store %arg8[%c1_123, %c0_124, %c0_125, %c0_126], %149 {strides = array<i32>} : memref<2x2x2x58xbf16, #tpu.memory_space<vmem>>, vector<1x1x2x58xbf16>,
    %150 = vector.extract_strided_slice %113 {offsets = [1, 1, 0, 0], sizes = [1, 1, 2, 58], strides = [1, 1, 1, 1]} : vector<2x2x2x58xf32> to vector<1x1x2x58xf32>
    %151 = vector.shape_cast %150 : vector<1x1x2x58xf32> to vector<2x58xf32>
    %152 = arith.truncf %151 : vector<2x58xf32> to vector<2x58xbf16>
    %cst_127 = arith.constant dense<0.000000e+00> : vector<2x58xf32>
    %153 = tpu.matmul %152, %2, %cst_127 {dimension_numbers = #tpu.dot_dimension_numbers<[1], [0], [0], [1], [0, 0, 1, 1], [], []>} : vector<2x58xbf16>, vector<58x58xbf16>, vector<2x58xf32> -> vector<2x58xf32>
    %154 = vector.broadcast %3 : vector<1x58xf32> to vector<2x58xf32>
    %155 = arith.addf %153, %154 : vector<2x58xf32>
    %cst_128 = arith.constant 0.000000e+00 : f32
    %156 = vector.broadcast %cst_128 : f32 to vector<2x58xf32>
    %157 = arith.maximumf %155, %156 : vector<2x58xf32>
    %158 = arith.truncf %157 : vector<2x58xf32> to vector<2x58xbf16>
    %c1_129 = arith.constant 1 : index
    %c1_130 = arith.constant 1 : index
    %c0_131 = arith.constant 0 : index
    %c0_132 = arith.constant 0 : index
    %159 = vector.load %arg8[%c1_129, %c1_130, %c0_131, %c0_132] : memref<2x2x2x58xbf16, #tpu.memory_space<vmem>>, vector<1x1x2x58xbf16>
    %160 = vector.shape_cast %159 : vector<1x1x2x58xbf16> to vector<2x58xbf16>
    %161 = vector.shape_cast %158 : vector<2x58xbf16> to vector<1x1x2x58xbf16>
    tpu.vector_store %arg8[%c1_129, %c1_130, %c0_131, %c0_132], %161 {strides = array<i32>} : memref<2x2x2x58xbf16, #tpu.memory_space<vmem>>, vector<1x1x2x58xbf16>,
    return
  }
  func.func @transform_0(%arg0: i32) -> (i32, i32, i32, i32) {
    %c0_i32 = arith.constant 0 : i32
    %c0_i32_0 = arith.constant 0 : i32
    %c0_i32_1 = arith.constant 0 : i32
    %c0_i32_2 = arith.constant 0 : i32
    %c0_i32_3 = arith.constant 0 : i32
    return %c0_i32, %c0_i32_0, %c0_i32_1, %c0_i32_2 : i32, i32, i32, i32
  }
  func.func @transform_1(%arg0: i32) -> (i32, i32) {
    %c0_i32 = arith.constant 0 : i32
    %c0_i32_0 = arith.constant 0 : i32
    %c0_i32_1 = arith.constant 0 : i32
    return %c0_i32, %c0_i32_0 : i32, i32
  }
  func.func @transform_2(%arg0: i32) -> (i32, i32) {
    %c0_i32 = arith.constant 0 : i32
    %c0_i32_0 = arith.constant 0 : i32
    %c0_i32_1 = arith.constant 0 : i32
    return %c0_i32, %c0_i32_0 : i32, i32
  }
  func.func @transform_3(%arg0: i32) -> (i32, i32, i32) {
    %c0_i32 = arith.constant 0 : i32
    %c0_i32_0 = arith.constant 0 : i32
    %c0_i32_1 = arith.constant 0 : i32
    %c0_i32_2 = arith.constant 0 : i32
    return %c0_i32, %c0_i32_0, %c0_i32_1 : i32, i32, i32
  }
  func.func @transform_4(%arg0: i32) -> (i32, i32) {
    %c0_i32 = arith.constant 0 : i32
    %c0_i32_0 = arith.constant 0 : i32
    %c0_i32_1 = arith.constant 0 : i32
    return %c0_i32, %c0_i32_0 : i32, i32
  }
  func.func @transform_5(%arg0: i32) -> (i32, i32) {
    %c0_i32 = arith.constant 0 : i32
    %c0_i32_0 = arith.constant 0 : i32
    %c0_i32_1 = arith.constant 0 : i32
    return %c0_i32, %c0_i32_0 : i32, i32
  }
  func.func @transform_6(%arg0: i32) -> (i32, i32) {
    %c0_i32 = arith.constant 0 : i32
    %c0_i32_0 = arith.constant 0 : i32
    %c0_i32_1 = arith.constant 0 : i32
    return %c0_i32, %c0_i32_0 : i32, i32
  }
  func.func @transform_7(%arg0: i32) -> (i32, i32, i32, i32) {
    %c0_i32 = arith.constant 0 : i32
    %c0_i32_0 = arith.constant 0 : i32
    %c0_i32_1 = arith.constant 0 : i32
    %c0_i32_2 = arith.constant 0 : i32
    %c0_i32_3 = arith.constant 0 : i32
    return %c0_i32, %c0_i32_0, %c0_i32_1, %c0_i32_2 : i32, i32, i32, i32
  }
}

module attributes {stable_mosaic.version = 11 : i64} {
  func.func @_down_block_kernel(%arg0: i32, %arg1: memref<9x2x116xbf16, #tpu.memory_space<vmem>>, %arg2: memref<9x2x1xf32, #tpu.memory_space<vmem>>, %arg3: memref<9x1x116xf32, #tpu.memory_space<vmem>>, %arg4: memref<1x116xf32, #tpu.memory_space<vmem>>, %arg5: memref<116x116xbf16, #tpu.memory_space<vmem>>, %arg6: memref<1x116xf32, #tpu.memory_space<vmem>>, %arg7: memref<116x116xbf16, #tpu.memory_space<vmem>>, %arg8: memref<1x116xf32, #tpu.memory_space<vmem>>, %arg9: memref<9x1x116xf32, #tpu.memory_space<vmem>>, %arg10: memref<1x116xf32, #tpu.memory_space<vmem>>, %arg11: memref<116x116xbf16, #tpu.memory_space<vmem>>, %arg12: memref<1x116xf32, #tpu.memory_space<vmem>>, %arg13: memref<2x116xbf16, #tpu.memory_space<vmem>>, %arg14: memref<2x116xbf16, #tpu.memory_space<vmem>>) attributes {dimension_semantics = [#tpu.dimension_semantics<arbitrary>], iteration_bounds = array<i64: 1>, scalar_prefetch = 0 : i64, scratch_operands = 0 : i64, tpu.core_type = #tpu.core_type<tc>, window_params = [{pipeline_mode = #tpu.pipeline_mode<synchronous>, transform_indices = @transform_0, window_bounds = array<i64: 9, 2, 116>}, {pipeline_mode = #tpu.pipeline_mode<synchronous>, transform_indices = @transform_1, window_bounds = array<i64: 9, 2, 1>}, {pipeline_mode = #tpu.pipeline_mode<synchronous>, transform_indices = @transform_2, window_bounds = array<i64: 9, 1, 116>}, {pipeline_mode = #tpu.pipeline_mode<synchronous>, transform_indices = @transform_3, window_bounds = array<i64: 1, 116>}, {pipeline_mode = #tpu.pipeline_mode<synchronous>, transform_indices = @transform_4, window_bounds = array<i64: 116, 116>}, {pipeline_mode = #tpu.pipeline_mode<synchronous>, transform_indices = @transform_5, window_bounds = array<i64: 1, 116>}, {pipeline_mode = #tpu.pipeline_mode<synchronous>, transform_indices = @transform_6, window_bounds = array<i64: 116, 116>}, {pipeline_mode = #tpu.pipeline_mode<synchronous>, transform_indices = @transform_7, window_bounds = array<i64: 1, 116>}, {pipeline_mode = #tpu.pipeline_mode<synchronous>, transform_indices = @transform_8, window_bounds = array<i64: 9, 1, 116>}, {pipeline_mode = #tpu.pipeline_mode<synchronous>, transform_indices = @transform_9, window_bounds = array<i64: 1, 116>}, {pipeline_mode = #tpu.pipeline_mode<synchronous>, transform_indices = @transform_10, window_bounds = array<i64: 116, 116>}, {pipeline_mode = #tpu.pipeline_mode<synchronous>, transform_indices = @transform_11, window_bounds = array<i64: 1, 116>}, {pipeline_mode = #tpu.pipeline_mode<synchronous>, transform_indices = @transform_12, window_bounds = array<i64: 2, 116>}, {pipeline_mode = #tpu.pipeline_mode<synchronous>, transform_indices = @transform_13, window_bounds = array<i64: 2, 116>}]} {
    %c0 = arith.constant 0 : index
    %c0_0 = arith.constant 0 : index
    %0 = vector.load %arg7[%c0, %c0_0] : memref<116x116xbf16, #tpu.memory_space<vmem>>, vector<116x116xbf16>
    %c0_1 = arith.constant 0 : index
    %c0_2 = arith.constant 0 : index
    %1 = vector.load %arg8[%c0_1, %c0_2] : memref<1x116xf32, #tpu.memory_space<vmem>>, vector<1x116xf32>
    %cst = arith.constant 0.000000e+00 : f32
    %2 = vector.broadcast %cst : f32 to vector<2x116xf32>
    %cst_3 = arith.constant 0.000000e+00 : f32
    %3 = vector.broadcast %cst_3 : f32 to vector<2x116xf32>
    %c0_4 = arith.constant 0 : index
    %c0_5 = arith.constant 0 : index
    %c0_6 = arith.constant 0 : index
    %4 = vector.load %arg1[%c0_4, %c0_5, %c0_6] : memref<9x2x116xbf16, #tpu.memory_space<vmem>>, vector<1x2x116xbf16>
    %5 = vector.shape_cast %4 : vector<1x2x116xbf16> to vector<2x116xbf16>
    %6 = arith.extf %5 : vector<2x116xbf16> to vector<2x116xf32>
    %c0_7 = arith.constant 0 : index
    %c0_8 = arith.constant 0 : index
    %c0_9 = arith.constant 0 : index
    %7 = vector.load %arg3[%c0_7, %c0_8, %c0_9] : memref<9x1x116xf32, #tpu.memory_space<vmem>>, vector<1x1x116xf32>
    %8 = vector.shape_cast %7 : vector<1x1x116xf32> to vector<1x116xf32>
    %9 = vector.broadcast %8 : vector<1x116xf32> to vector<2x116xf32>
    %10 = arith.mulf %6, %9 : vector<2x116xf32>
    %11 = arith.addf %2, %10 : vector<2x116xf32>
    %cst_10 = arith.constant dense<0.000000e+00> : vector<2x116xf32>
    %12 = tpu.matmul %5, %0, %cst_10 {dimension_numbers = #tpu.dot_dimension_numbers<[1], [0], [0], [1], [0, 0, 1, 1], [], []>} : vector<2x116xbf16>, vector<116x116xbf16>, vector<2x116xf32> -> vector<2x116xf32>
    %13 = vector.broadcast %1 : vector<1x116xf32> to vector<2x116xf32>
    %14 = arith.addf %12, %13 : vector<2x116xf32>
    %cst_11 = arith.constant 0.000000e+00 : f32
    %15 = vector.broadcast %cst_11 : f32 to vector<2x116xf32>
    %16 = arith.maximumf %14, %15 : vector<2x116xf32>
    %c0_12 = arith.constant 0 : index
    %c0_13 = arith.constant 0 : index
    %c0_14 = arith.constant 0 : index
    %17 = vector.load %arg2[%c0_12, %c0_13, %c0_14] : memref<9x2x1xf32, #tpu.memory_space<vmem>>, vector<1x2x1xf32>
    %18 = vector.shape_cast %17 : vector<1x2x1xf32> to vector<2x1xf32>
    %19 = vector.broadcast %18 : vector<2x1xf32> to vector<2x116xf32>
    %20 = arith.mulf %16, %19 : vector<2x116xf32>
    %c0_15 = arith.constant 0 : index
    %c0_16 = arith.constant 0 : index
    %c0_17 = arith.constant 0 : index
    %21 = vector.load %arg9[%c0_15, %c0_16, %c0_17] : memref<9x1x116xf32, #tpu.memory_space<vmem>>, vector<1x1x116xf32>
    %22 = vector.shape_cast %21 : vector<1x1x116xf32> to vector<1x116xf32>
    %23 = vector.broadcast %22 : vector<1x116xf32> to vector<2x116xf32>
    %24 = arith.mulf %20, %23 : vector<2x116xf32>
    %25 = arith.addf %3, %24 : vector<2x116xf32>
    %c1 = arith.constant 1 : index
    %c0_18 = arith.constant 0 : index
    %c0_19 = arith.constant 0 : index
    %26 = vector.load %arg1[%c1, %c0_18, %c0_19] : memref<9x2x116xbf16, #tpu.memory_space<vmem>>, vector<1x2x116xbf16>
    %27 = vector.shape_cast %26 : vector<1x2x116xbf16> to vector<2x116xbf16>
    %28 = arith.extf %27 : vector<2x116xbf16> to vector<2x116xf32>
    %c1_20 = arith.constant 1 : index
    %c0_21 = arith.constant 0 : index
    %c0_22 = arith.constant 0 : index
    %29 = vector.load %arg3[%c1_20, %c0_21, %c0_22] : memref<9x1x116xf32, #tpu.memory_space<vmem>>, vector<1x1x116xf32>
    %30 = vector.shape_cast %29 : vector<1x1x116xf32> to vector<1x116xf32>
    %31 = vector.broadcast %30 : vector<1x116xf32> to vector<2x116xf32>
    %32 = arith.mulf %28, %31 : vector<2x116xf32>
    %33 = arith.addf %11, %32 : vector<2x116xf32>
    %cst_23 = arith.constant dense<0.000000e+00> : vector<2x116xf32>
    %34 = tpu.matmul %27, %0, %cst_23 {dimension_numbers = #tpu.dot_dimension_numbers<[1], [0], [0], [1], [0, 0, 1, 1], [], []>} : vector<2x116xbf16>, vector<116x116xbf16>, vector<2x116xf32> -> vector<2x116xf32>
    %35 = vector.broadcast %1 : vector<1x116xf32> to vector<2x116xf32>
    %36 = arith.addf %34, %35 : vector<2x116xf32>
    %cst_24 = arith.constant 0.000000e+00 : f32
    %37 = vector.broadcast %cst_24 : f32 to vector<2x116xf32>
    %38 = arith.maximumf %36, %37 : vector<2x116xf32>
    %c1_25 = arith.constant 1 : index
    %c0_26 = arith.constant 0 : index
    %c0_27 = arith.constant 0 : index
    %39 = vector.load %arg2[%c1_25, %c0_26, %c0_27] : memref<9x2x1xf32, #tpu.memory_space<vmem>>, vector<1x2x1xf32>
    %40 = vector.shape_cast %39 : vector<1x2x1xf32> to vector<2x1xf32>
    %41 = vector.broadcast %40 : vector<2x1xf32> to vector<2x116xf32>
    %42 = arith.mulf %38, %41 : vector<2x116xf32>
    %c1_28 = arith.constant 1 : index
    %c0_29 = arith.constant 0 : index
    %c0_30 = arith.constant 0 : index
    %43 = vector.load %arg9[%c1_28, %c0_29, %c0_30] : memref<9x1x116xf32, #tpu.memory_space<vmem>>, vector<1x1x116xf32>
    %44 = vector.shape_cast %43 : vector<1x1x116xf32> to vector<1x116xf32>
    %45 = vector.broadcast %44 : vector<1x116xf32> to vector<2x116xf32>
    %46 = arith.mulf %42, %45 : vector<2x116xf32>
    %47 = arith.addf %25, %46 : vector<2x116xf32>
    %c2 = arith.constant 2 : index
    %c0_31 = arith.constant 0 : index
    %c0_32 = arith.constant 0 : index
    %48 = vector.load %arg1[%c2, %c0_31, %c0_32] : memref<9x2x116xbf16, #tpu.memory_space<vmem>>, vector<1x2x116xbf16>
    %49 = vector.shape_cast %48 : vector<1x2x116xbf16> to vector<2x116xbf16>
    %50 = arith.extf %49 : vector<2x116xbf16> to vector<2x116xf32>
    %c2_33 = arith.constant 2 : index
    %c0_34 = arith.constant 0 : index
    %c0_35 = arith.constant 0 : index
    %51 = vector.load %arg3[%c2_33, %c0_34, %c0_35] : memref<9x1x116xf32, #tpu.memory_space<vmem>>, vector<1x1x116xf32>
    %52 = vector.shape_cast %51 : vector<1x1x116xf32> to vector<1x116xf32>
    %53 = vector.broadcast %52 : vector<1x116xf32> to vector<2x116xf32>
    %54 = arith.mulf %50, %53 : vector<2x116xf32>
    %55 = arith.addf %33, %54 : vector<2x116xf32>
    %cst_36 = arith.constant dense<0.000000e+00> : vector<2x116xf32>
    %56 = tpu.matmul %49, %0, %cst_36 {dimension_numbers = #tpu.dot_dimension_numbers<[1], [0], [0], [1], [0, 0, 1, 1], [], []>} : vector<2x116xbf16>, vector<116x116xbf16>, vector<2x116xf32> -> vector<2x116xf32>
    %57 = vector.broadcast %1 : vector<1x116xf32> to vector<2x116xf32>
    %58 = arith.addf %56, %57 : vector<2x116xf32>
    %cst_37 = arith.constant 0.000000e+00 : f32
    %59 = vector.broadcast %cst_37 : f32 to vector<2x116xf32>
    %60 = arith.maximumf %58, %59 : vector<2x116xf32>
    %c2_38 = arith.constant 2 : index
    %c0_39 = arith.constant 0 : index
    %c0_40 = arith.constant 0 : index
    %61 = vector.load %arg2[%c2_38, %c0_39, %c0_40] : memref<9x2x1xf32, #tpu.memory_space<vmem>>, vector<1x2x1xf32>
    %62 = vector.shape_cast %61 : vector<1x2x1xf32> to vector<2x1xf32>
    %63 = vector.broadcast %62 : vector<2x1xf32> to vector<2x116xf32>
    %64 = arith.mulf %60, %63 : vector<2x116xf32>
    %c2_41 = arith.constant 2 : index
    %c0_42 = arith.constant 0 : index
    %c0_43 = arith.constant 0 : index
    %65 = vector.load %arg9[%c2_41, %c0_42, %c0_43] : memref<9x1x116xf32, #tpu.memory_space<vmem>>, vector<1x1x116xf32>
    %66 = vector.shape_cast %65 : vector<1x1x116xf32> to vector<1x116xf32>
    %67 = vector.broadcast %66 : vector<1x116xf32> to vector<2x116xf32>
    %68 = arith.mulf %64, %67 : vector<2x116xf32>
    %69 = arith.addf %47, %68 : vector<2x116xf32>
    %c3 = arith.constant 3 : index
    %c0_44 = arith.constant 0 : index
    %c0_45 = arith.constant 0 : index
    %70 = vector.load %arg1[%c3, %c0_44, %c0_45] : memref<9x2x116xbf16, #tpu.memory_space<vmem>>, vector<1x2x116xbf16>
    %71 = vector.shape_cast %70 : vector<1x2x116xbf16> to vector<2x116xbf16>
    %72 = arith.extf %71 : vector<2x116xbf16> to vector<2x116xf32>
    %c3_46 = arith.constant 3 : index
    %c0_47 = arith.constant 0 : index
    %c0_48 = arith.constant 0 : index
    %73 = vector.load %arg3[%c3_46, %c0_47, %c0_48] : memref<9x1x116xf32, #tpu.memory_space<vmem>>, vector<1x1x116xf32>
    %74 = vector.shape_cast %73 : vector<1x1x116xf32> to vector<1x116xf32>
    %75 = vector.broadcast %74 : vector<1x116xf32> to vector<2x116xf32>
    %76 = arith.mulf %72, %75 : vector<2x116xf32>
    %77 = arith.addf %55, %76 : vector<2x116xf32>
    %cst_49 = arith.constant dense<0.000000e+00> : vector<2x116xf32>
    %78 = tpu.matmul %71, %0, %cst_49 {dimension_numbers = #tpu.dot_dimension_numbers<[1], [0], [0], [1], [0, 0, 1, 1], [], []>} : vector<2x116xbf16>, vector<116x116xbf16>, vector<2x116xf32> -> vector<2x116xf32>
    %79 = vector.broadcast %1 : vector<1x116xf32> to vector<2x116xf32>
    %80 = arith.addf %78, %79 : vector<2x116xf32>
    %cst_50 = arith.constant 0.000000e+00 : f32
    %81 = vector.broadcast %cst_50 : f32 to vector<2x116xf32>
    %82 = arith.maximumf %80, %81 : vector<2x116xf32>
    %c3_51 = arith.constant 3 : index
    %c0_52 = arith.constant 0 : index
    %c0_53 = arith.constant 0 : index
    %83 = vector.load %arg2[%c3_51, %c0_52, %c0_53] : memref<9x2x1xf32, #tpu.memory_space<vmem>>, vector<1x2x1xf32>
    %84 = vector.shape_cast %83 : vector<1x2x1xf32> to vector<2x1xf32>
    %85 = vector.broadcast %84 : vector<2x1xf32> to vector<2x116xf32>
    %86 = arith.mulf %82, %85 : vector<2x116xf32>
    %c3_54 = arith.constant 3 : index
    %c0_55 = arith.constant 0 : index
    %c0_56 = arith.constant 0 : index
    %87 = vector.load %arg9[%c3_54, %c0_55, %c0_56] : memref<9x1x116xf32, #tpu.memory_space<vmem>>, vector<1x1x116xf32>
    %88 = vector.shape_cast %87 : vector<1x1x116xf32> to vector<1x116xf32>
    %89 = vector.broadcast %88 : vector<1x116xf32> to vector<2x116xf32>
    %90 = arith.mulf %86, %89 : vector<2x116xf32>
    %91 = arith.addf %69, %90 : vector<2x116xf32>
    %c4 = arith.constant 4 : index
    %c0_57 = arith.constant 0 : index
    %c0_58 = arith.constant 0 : index
    %92 = vector.load %arg1[%c4, %c0_57, %c0_58] : memref<9x2x116xbf16, #tpu.memory_space<vmem>>, vector<1x2x116xbf16>
    %93 = vector.shape_cast %92 : vector<1x2x116xbf16> to vector<2x116xbf16>
    %94 = arith.extf %93 : vector<2x116xbf16> to vector<2x116xf32>
    %c4_59 = arith.constant 4 : index
    %c0_60 = arith.constant 0 : index
    %c0_61 = arith.constant 0 : index
    %95 = vector.load %arg3[%c4_59, %c0_60, %c0_61] : memref<9x1x116xf32, #tpu.memory_space<vmem>>, vector<1x1x116xf32>
    %96 = vector.shape_cast %95 : vector<1x1x116xf32> to vector<1x116xf32>
    %97 = vector.broadcast %96 : vector<1x116xf32> to vector<2x116xf32>
    %98 = arith.mulf %94, %97 : vector<2x116xf32>
    %99 = arith.addf %77, %98 : vector<2x116xf32>
    %cst_62 = arith.constant dense<0.000000e+00> : vector<2x116xf32>
    %100 = tpu.matmul %93, %0, %cst_62 {dimension_numbers = #tpu.dot_dimension_numbers<[1], [0], [0], [1], [0, 0, 1, 1], [], []>} : vector<2x116xbf16>, vector<116x116xbf16>, vector<2x116xf32> -> vector<2x116xf32>
    %101 = vector.broadcast %1 : vector<1x116xf32> to vector<2x116xf32>
    %102 = arith.addf %100, %101 : vector<2x116xf32>
    %cst_63 = arith.constant 0.000000e+00 : f32
    %103 = vector.broadcast %cst_63 : f32 to vector<2x116xf32>
    %104 = arith.maximumf %102, %103 : vector<2x116xf32>
    %c4_64 = arith.constant 4 : index
    %c0_65 = arith.constant 0 : index
    %c0_66 = arith.constant 0 : index
    %105 = vector.load %arg2[%c4_64, %c0_65, %c0_66] : memref<9x2x1xf32, #tpu.memory_space<vmem>>, vector<1x2x1xf32>
    %106 = vector.shape_cast %105 : vector<1x2x1xf32> to vector<2x1xf32>
    %107 = vector.broadcast %106 : vector<2x1xf32> to vector<2x116xf32>
    %108 = arith.mulf %104, %107 : vector<2x116xf32>
    %c4_67 = arith.constant 4 : index
    %c0_68 = arith.constant 0 : index
    %c0_69 = arith.constant 0 : index
    %109 = vector.load %arg9[%c4_67, %c0_68, %c0_69] : memref<9x1x116xf32, #tpu.memory_space<vmem>>, vector<1x1x116xf32>
    %110 = vector.shape_cast %109 : vector<1x1x116xf32> to vector<1x116xf32>
    %111 = vector.broadcast %110 : vector<1x116xf32> to vector<2x116xf32>
    %112 = arith.mulf %108, %111 : vector<2x116xf32>
    %113 = arith.addf %91, %112 : vector<2x116xf32>
    %c5 = arith.constant 5 : index
    %c0_70 = arith.constant 0 : index
    %c0_71 = arith.constant 0 : index
    %114 = vector.load %arg1[%c5, %c0_70, %c0_71] : memref<9x2x116xbf16, #tpu.memory_space<vmem>>, vector<1x2x116xbf16>
    %115 = vector.shape_cast %114 : vector<1x2x116xbf16> to vector<2x116xbf16>
    %116 = arith.extf %115 : vector<2x116xbf16> to vector<2x116xf32>
    %c5_72 = arith.constant 5 : index
    %c0_73 = arith.constant 0 : index
    %c0_74 = arith.constant 0 : index
    %117 = vector.load %arg3[%c5_72, %c0_73, %c0_74] : memref<9x1x116xf32, #tpu.memory_space<vmem>>, vector<1x1x116xf32>
    %118 = vector.shape_cast %117 : vector<1x1x116xf32> to vector<1x116xf32>
    %119 = vector.broadcast %118 : vector<1x116xf32> to vector<2x116xf32>
    %120 = arith.mulf %116, %119 : vector<2x116xf32>
    %121 = arith.addf %99, %120 : vector<2x116xf32>
    %cst_75 = arith.constant dense<0.000000e+00> : vector<2x116xf32>
    %122 = tpu.matmul %115, %0, %cst_75 {dimension_numbers = #tpu.dot_dimension_numbers<[1], [0], [0], [1], [0, 0, 1, 1], [], []>} : vector<2x116xbf16>, vector<116x116xbf16>, vector<2x116xf32> -> vector<2x116xf32>
    %123 = vector.broadcast %1 : vector<1x116xf32> to vector<2x116xf32>
    %124 = arith.addf %122, %123 : vector<2x116xf32>
    %cst_76 = arith.constant 0.000000e+00 : f32
    %125 = vector.broadcast %cst_76 : f32 to vector<2x116xf32>
    %126 = arith.maximumf %124, %125 : vector<2x116xf32>
    %c5_77 = arith.constant 5 : index
    %c0_78 = arith.constant 0 : index
    %c0_79 = arith.constant 0 : index
    %127 = vector.load %arg2[%c5_77, %c0_78, %c0_79] : memref<9x2x1xf32, #tpu.memory_space<vmem>>, vector<1x2x1xf32>
    %128 = vector.shape_cast %127 : vector<1x2x1xf32> to vector<2x1xf32>
    %129 = vector.broadcast %128 : vector<2x1xf32> to vector<2x116xf32>
    %130 = arith.mulf %126, %129 : vector<2x116xf32>
    %c5_80 = arith.constant 5 : index
    %c0_81 = arith.constant 0 : index
    %c0_82 = arith.constant 0 : index
    %131 = vector.load %arg9[%c5_80, %c0_81, %c0_82] : memref<9x1x116xf32, #tpu.memory_space<vmem>>, vector<1x1x116xf32>
    %132 = vector.shape_cast %131 : vector<1x1x116xf32> to vector<1x116xf32>
    %133 = vector.broadcast %132 : vector<1x116xf32> to vector<2x116xf32>
    %134 = arith.mulf %130, %133 : vector<2x116xf32>
    %135 = arith.addf %113, %134 : vector<2x116xf32>
    %c6 = arith.constant 6 : index
    %c0_83 = arith.constant 0 : index
    %c0_84 = arith.constant 0 : index
    %136 = vector.load %arg1[%c6, %c0_83, %c0_84] : memref<9x2x116xbf16, #tpu.memory_space<vmem>>, vector<1x2x116xbf16>
    %137 = vector.shape_cast %136 : vector<1x2x116xbf16> to vector<2x116xbf16>
    %138 = arith.extf %137 : vector<2x116xbf16> to vector<2x116xf32>
    %c6_85 = arith.constant 6 : index
    %c0_86 = arith.constant 0 : index
    %c0_87 = arith.constant 0 : index
    %139 = vector.load %arg3[%c6_85, %c0_86, %c0_87] : memref<9x1x116xf32, #tpu.memory_space<vmem>>, vector<1x1x116xf32>
    %140 = vector.shape_cast %139 : vector<1x1x116xf32> to vector<1x116xf32>
    %141 = vector.broadcast %140 : vector<1x116xf32> to vector<2x116xf32>
    %142 = arith.mulf %138, %141 : vector<2x116xf32>
    %143 = arith.addf %121, %142 : vector<2x116xf32>
    %cst_88 = arith.constant dense<0.000000e+00> : vector<2x116xf32>
    %144 = tpu.matmul %137, %0, %cst_88 {dimension_numbers = #tpu.dot_dimension_numbers<[1], [0], [0], [1], [0, 0, 1, 1], [], []>} : vector<2x116xbf16>, vector<116x116xbf16>, vector<2x116xf32> -> vector<2x116xf32>
    %145 = vector.broadcast %1 : vector<1x116xf32> to vector<2x116xf32>
    %146 = arith.addf %144, %145 : vector<2x116xf32>
    %cst_89 = arith.constant 0.000000e+00 : f32
    %147 = vector.broadcast %cst_89 : f32 to vector<2x116xf32>
    %148 = arith.maximumf %146, %147 : vector<2x116xf32>
    %c6_90 = arith.constant 6 : index
    %c0_91 = arith.constant 0 : index
    %c0_92 = arith.constant 0 : index
    %149 = vector.load %arg2[%c6_90, %c0_91, %c0_92] : memref<9x2x1xf32, #tpu.memory_space<vmem>>, vector<1x2x1xf32>
    %150 = vector.shape_cast %149 : vector<1x2x1xf32> to vector<2x1xf32>
    %151 = vector.broadcast %150 : vector<2x1xf32> to vector<2x116xf32>
    %152 = arith.mulf %148, %151 : vector<2x116xf32>
    %c6_93 = arith.constant 6 : index
    %c0_94 = arith.constant 0 : index
    %c0_95 = arith.constant 0 : index
    %153 = vector.load %arg9[%c6_93, %c0_94, %c0_95] : memref<9x1x116xf32, #tpu.memory_space<vmem>>, vector<1x1x116xf32>
    %154 = vector.shape_cast %153 : vector<1x1x116xf32> to vector<1x116xf32>
    %155 = vector.broadcast %154 : vector<1x116xf32> to vector<2x116xf32>
    %156 = arith.mulf %152, %155 : vector<2x116xf32>
    %157 = arith.addf %135, %156 : vector<2x116xf32>
    %c7 = arith.constant 7 : index
    %c0_96 = arith.constant 0 : index
    %c0_97 = arith.constant 0 : index
    %158 = vector.load %arg1[%c7, %c0_96, %c0_97] : memref<9x2x116xbf16, #tpu.memory_space<vmem>>, vector<1x2x116xbf16>
    %159 = vector.shape_cast %158 : vector<1x2x116xbf16> to vector<2x116xbf16>
    %160 = arith.extf %159 : vector<2x116xbf16> to vector<2x116xf32>
    %c7_98 = arith.constant 7 : index
    %c0_99 = arith.constant 0 : index
    %c0_100 = arith.constant 0 : index
    %161 = vector.load %arg3[%c7_98, %c0_99, %c0_100] : memref<9x1x116xf32, #tpu.memory_space<vmem>>, vector<1x1x116xf32>
    %162 = vector.shape_cast %161 : vector<1x1x116xf32> to vector<1x116xf32>
    %163 = vector.broadcast %162 : vector<1x116xf32> to vector<2x116xf32>
    %164 = arith.mulf %160, %163 : vector<2x116xf32>
    %165 = arith.addf %143, %164 : vector<2x116xf32>
    %cst_101 = arith.constant dense<0.000000e+00> : vector<2x116xf32>
    %166 = tpu.matmul %159, %0, %cst_101 {dimension_numbers = #tpu.dot_dimension_numbers<[1], [0], [0], [1], [0, 0, 1, 1], [], []>} : vector<2x116xbf16>, vector<116x116xbf16>, vector<2x116xf32> -> vector<2x116xf32>
    %167 = vector.broadcast %1 : vector<1x116xf32> to vector<2x116xf32>
    %168 = arith.addf %166, %167 : vector<2x116xf32>
    %cst_102 = arith.constant 0.000000e+00 : f32
    %169 = vector.broadcast %cst_102 : f32 to vector<2x116xf32>
    %170 = arith.maximumf %168, %169 : vector<2x116xf32>
    %c7_103 = arith.constant 7 : index
    %c0_104 = arith.constant 0 : index
    %c0_105 = arith.constant 0 : index
    %171 = vector.load %arg2[%c7_103, %c0_104, %c0_105] : memref<9x2x1xf32, #tpu.memory_space<vmem>>, vector<1x2x1xf32>
    %172 = vector.shape_cast %171 : vector<1x2x1xf32> to vector<2x1xf32>
    %173 = vector.broadcast %172 : vector<2x1xf32> to vector<2x116xf32>
    %174 = arith.mulf %170, %173 : vector<2x116xf32>
    %c7_106 = arith.constant 7 : index
    %c0_107 = arith.constant 0 : index
    %c0_108 = arith.constant 0 : index
    %175 = vector.load %arg9[%c7_106, %c0_107, %c0_108] : memref<9x1x116xf32, #tpu.memory_space<vmem>>, vector<1x1x116xf32>
    %176 = vector.shape_cast %175 : vector<1x1x116xf32> to vector<1x116xf32>
    %177 = vector.broadcast %176 : vector<1x116xf32> to vector<2x116xf32>
    %178 = arith.mulf %174, %177 : vector<2x116xf32>
    %179 = arith.addf %157, %178 : vector<2x116xf32>
    %c8 = arith.constant 8 : index
    %c0_109 = arith.constant 0 : index
    %c0_110 = arith.constant 0 : index
    %180 = vector.load %arg1[%c8, %c0_109, %c0_110] : memref<9x2x116xbf16, #tpu.memory_space<vmem>>, vector<1x2x116xbf16>
    %181 = vector.shape_cast %180 : vector<1x2x116xbf16> to vector<2x116xbf16>
    %182 = arith.extf %181 : vector<2x116xbf16> to vector<2x116xf32>
    %c8_111 = arith.constant 8 : index
    %c0_112 = arith.constant 0 : index
    %c0_113 = arith.constant 0 : index
    %183 = vector.load %arg3[%c8_111, %c0_112, %c0_113] : memref<9x1x116xf32, #tpu.memory_space<vmem>>, vector<1x1x116xf32>
    %184 = vector.shape_cast %183 : vector<1x1x116xf32> to vector<1x116xf32>
    %185 = vector.broadcast %184 : vector<1x116xf32> to vector<2x116xf32>
    %186 = arith.mulf %182, %185 : vector<2x116xf32>
    %187 = arith.addf %165, %186 : vector<2x116xf32>
    %cst_114 = arith.constant dense<0.000000e+00> : vector<2x116xf32>
    %188 = tpu.matmul %181, %0, %cst_114 {dimension_numbers = #tpu.dot_dimension_numbers<[1], [0], [0], [1], [0, 0, 1, 1], [], []>} : vector<2x116xbf16>, vector<116x116xbf16>, vector<2x116xf32> -> vector<2x116xf32>
    %189 = vector.broadcast %1 : vector<1x116xf32> to vector<2x116xf32>
    %190 = arith.addf %188, %189 : vector<2x116xf32>
    %cst_115 = arith.constant 0.000000e+00 : f32
    %191 = vector.broadcast %cst_115 : f32 to vector<2x116xf32>
    %192 = arith.maximumf %190, %191 : vector<2x116xf32>
    %c8_116 = arith.constant 8 : index
    %c0_117 = arith.constant 0 : index
    %c0_118 = arith.constant 0 : index
    %193 = vector.load %arg2[%c8_116, %c0_117, %c0_118] : memref<9x2x1xf32, #tpu.memory_space<vmem>>, vector<1x2x1xf32>
    %194 = vector.shape_cast %193 : vector<1x2x1xf32> to vector<2x1xf32>
    %195 = vector.broadcast %194 : vector<2x1xf32> to vector<2x116xf32>
    %196 = arith.mulf %192, %195 : vector<2x116xf32>
    %c8_119 = arith.constant 8 : index
    %c0_120 = arith.constant 0 : index
    %c0_121 = arith.constant 0 : index
    %197 = vector.load %arg9[%c8_119, %c0_120, %c0_121] : memref<9x1x116xf32, #tpu.memory_space<vmem>>, vector<1x1x116xf32>
    %198 = vector.shape_cast %197 : vector<1x1x116xf32> to vector<1x116xf32>
    %199 = vector.broadcast %198 : vector<1x116xf32> to vector<2x116xf32>
    %200 = arith.mulf %196, %199 : vector<2x116xf32>
    %201 = arith.addf %179, %200 : vector<2x116xf32>
    %c0_122 = arith.constant 0 : index
    %c0_123 = arith.constant 0 : index
    %202 = vector.load %arg4[%c0_122, %c0_123] : memref<1x116xf32, #tpu.memory_space<vmem>>, vector<1x116xf32>
    %203 = vector.broadcast %202 : vector<1x116xf32> to vector<2x116xf32>
    %204 = arith.addf %187, %203 : vector<2x116xf32>
    %205 = arith.truncf %204 : vector<2x116xf32> to vector<2x116xbf16>
    %c0_124 = arith.constant 0 : index
    %c0_125 = arith.constant 0 : index
    %206 = vector.load %arg5[%c0_124, %c0_125] : memref<116x116xbf16, #tpu.memory_space<vmem>>, vector<116x116xbf16>
    %cst_126 = arith.constant dense<0.000000e+00> : vector<2x116xf32>
    %207 = tpu.matmul %205, %206, %cst_126 {dimension_numbers = #tpu.dot_dimension_numbers<[1], [0], [0], [1], [0, 0, 1, 1], [], []>} : vector<2x116xbf16>, vector<116x116xbf16>, vector<2x116xf32> -> vector<2x116xf32>
    %c0_127 = arith.constant 0 : index
    %c0_128 = arith.constant 0 : index
    %208 = vector.load %arg6[%c0_127, %c0_128] : memref<1x116xf32, #tpu.memory_space<vmem>>, vector<1x116xf32>
    %209 = vector.broadcast %208 : vector<1x116xf32> to vector<2x116xf32>
    %210 = arith.addf %207, %209 : vector<2x116xf32>
    %cst_129 = arith.constant 0.000000e+00 : f32
    %211 = vector.broadcast %cst_129 : f32 to vector<2x116xf32>
    %212 = arith.maximumf %210, %211 : vector<2x116xf32>
    %c0_130 = arith.constant 0 : index
    %c0_131 = arith.constant 0 : index
    %213 = vector.load %arg10[%c0_130, %c0_131] : memref<1x116xf32, #tpu.memory_space<vmem>>, vector<1x116xf32>
    %214 = vector.broadcast %213 : vector<1x116xf32> to vector<2x116xf32>
    %215 = arith.addf %201, %214 : vector<2x116xf32>
    %216 = arith.truncf %215 : vector<2x116xf32> to vector<2x116xbf16>
    %c0_132 = arith.constant 0 : index
    %c0_133 = arith.constant 0 : index
    %217 = vector.load %arg11[%c0_132, %c0_133] : memref<116x116xbf16, #tpu.memory_space<vmem>>, vector<116x116xbf16>
    %cst_134 = arith.constant dense<0.000000e+00> : vector<2x116xf32>
    %218 = tpu.matmul %216, %217, %cst_134 {dimension_numbers = #tpu.dot_dimension_numbers<[1], [0], [0], [1], [0, 0, 1, 1], [], []>} : vector<2x116xbf16>, vector<116x116xbf16>, vector<2x116xf32> -> vector<2x116xf32>
    %c0_135 = arith.constant 0 : index
    %c0_136 = arith.constant 0 : index
    %219 = vector.load %arg12[%c0_135, %c0_136] : memref<1x116xf32, #tpu.memory_space<vmem>>, vector<1x116xf32>
    %220 = vector.broadcast %219 : vector<1x116xf32> to vector<2x116xf32>
    %221 = arith.addf %218, %220 : vector<2x116xf32>
    %cst_137 = arith.constant 0.000000e+00 : f32
    %222 = vector.broadcast %cst_137 : f32 to vector<2x116xf32>
    %223 = arith.maximumf %221, %222 : vector<2x116xf32>
    %224 = arith.truncf %212 : vector<2x116xf32> to vector<2x116xbf16>
    %c0_138 = arith.constant 0 : index
    %c0_139 = arith.constant 0 : index
    %225 = vector.load %arg13[%c0_138, %c0_139] : memref<2x116xbf16, #tpu.memory_space<vmem>>, vector<2x116xbf16>
    tpu.vector_store %arg13[%c0_138, %c0_139], %224 {strides = array<i32>} : memref<2x116xbf16, #tpu.memory_space<vmem>>, vector<2x116xbf16>,
    %226 = arith.truncf %223 : vector<2x116xf32> to vector<2x116xbf16>
    %c0_140 = arith.constant 0 : index
    %c0_141 = arith.constant 0 : index
    %227 = vector.load %arg14[%c0_140, %c0_141] : memref<2x116xbf16, #tpu.memory_space<vmem>>, vector<2x116xbf16>
    tpu.vector_store %arg14[%c0_140, %c0_141], %226 {strides = array<i32>} : memref<2x116xbf16, #tpu.memory_space<vmem>>, vector<2x116xbf16>,
    return
  }
  func.func @transform_0(%arg0: i32) -> (i32, i32, i32) {
    %c0_i32 = arith.constant 0 : i32
    %c0_i32_0 = arith.constant 0 : i32
    %c0_i32_1 = arith.constant 0 : i32
    %c0_i32_2 = arith.constant 0 : i32
    return %c0_i32, %c0_i32_0, %c0_i32_1 : i32, i32, i32
  }
  func.func @transform_1(%arg0: i32) -> (i32, i32, i32) {
    %c0_i32 = arith.constant 0 : i32
    %c0_i32_0 = arith.constant 0 : i32
    %c0_i32_1 = arith.constant 0 : i32
    %c0_i32_2 = arith.constant 0 : i32
    return %c0_i32, %c0_i32_0, %c0_i32_1 : i32, i32, i32
  }
  func.func @transform_2(%arg0: i32) -> (i32, i32, i32) {
    %c0_i32 = arith.constant 0 : i32
    %c0_i32_0 = arith.constant 0 : i32
    %c0_i32_1 = arith.constant 0 : i32
    %c0_i32_2 = arith.constant 0 : i32
    return %c0_i32, %c0_i32_0, %c0_i32_1 : i32, i32, i32
  }
  func.func @transform_3(%arg0: i32) -> (i32, i32) {
    %c0_i32 = arith.constant 0 : i32
    %c0_i32_0 = arith.constant 0 : i32
    %c0_i32_1 = arith.constant 0 : i32
    return %c0_i32, %c0_i32_0 : i32, i32
  }
  func.func @transform_4(%arg0: i32) -> (i32, i32) {
    %c0_i32 = arith.constant 0 : i32
    %c0_i32_0 = arith.constant 0 : i32
    %c0_i32_1 = arith.constant 0 : i32
    return %c0_i32, %c0_i32_0 : i32, i32
  }
  func.func @transform_5(%arg0: i32) -> (i32, i32) {
    %c0_i32 = arith.constant 0 : i32
    %c0_i32_0 = arith.constant 0 : i32
    %c0_i32_1 = arith.constant 0 : i32
    return %c0_i32, %c0_i32_0 : i32, i32
  }
  func.func @transform_6(%arg0: i32) -> (i32, i32) {
    %c0_i32 = arith.constant 0 : i32
    %c0_i32_0 = arith.constant 0 : i32
    %c0_i32_1 = arith.constant 0 : i32
    return %c0_i32, %c0_i32_0 : i32, i32
  }
  func.func @transform_7(%arg0: i32) -> (i32, i32) {
    %c0_i32 = arith.constant 0 : i32
    %c0_i32_0 = arith.constant 0 : i32
    %c0_i32_1 = arith.constant 0 : i32
    return %c0_i32, %c0_i32_0 : i32, i32
  }
  func.func @transform_8(%arg0: i32) -> (i32, i32, i32) {
    %c0_i32 = arith.constant 0 : i32
    %c0_i32_0 = arith.constant 0 : i32
    %c0_i32_1 = arith.constant 0 : i32
    %c0_i32_2 = arith.constant 0 : i32
    return %c0_i32, %c0_i32_0, %c0_i32_1 : i32, i32, i32
  }
  func.func @transform_9(%arg0: i32) -> (i32, i32) {
    %c0_i32 = arith.constant 0 : i32
    %c0_i32_0 = arith.constant 0 : i32
    %c0_i32_1 = arith.constant 0 : i32
    return %c0_i32, %c0_i32_0 : i32, i32
  }
  func.func @transform_10(%arg0: i32) -> (i32, i32) {
    %c0_i32 = arith.constant 0 : i32
    %c0_i32_0 = arith.constant 0 : i32
    %c0_i32_1 = arith.constant 0 : i32
    return %c0_i32, %c0_i32_0 : i32, i32
  }
  func.func @transform_11(%arg0: i32) -> (i32, i32) {
    %c0_i32 = arith.constant 0 : i32
    %c0_i32_0 = arith.constant 0 : i32
    %c0_i32_1 = arith.constant 0 : i32
    return %c0_i32, %c0_i32_0 : i32, i32
  }
  func.func @transform_12(%arg0: i32) -> (i32, i32) {
    %c0_i32 = arith.constant 0 : i32
    %c0_i32_0 = arith.constant 0 : i32
    %c0_i32_1 = arith.constant 0 : i32
    return %c0_i32, %c0_i32_0 : i32, i32
  }
  func.func @transform_13(%arg0: i32) -> (i32, i32) {
    %c0_i32 = arith.constant 0 : i32
    %c0_i32_0 = arith.constant 0 : i32
    %c0_i32_1 = arith.constant 0 : i32
    return %c0_i32, %c0_i32_0 : i32, i32
  }
}

module attributes {stable_mosaic.version = 11 : i64} {
  func.func @_branch2_s1_kernel(%arg0: i32, %arg1: memref<2x1x1x116xbf16, #tpu.memory_space<vmem>>, %arg2: memref<116x116xbf16, #tpu.memory_space<vmem>>, %arg3: memref<1x116xf32, #tpu.memory_space<vmem>>, %arg4: memref<9x1x116xf32, #tpu.memory_space<vmem>>, %arg5: memref<1x116xf32, #tpu.memory_space<vmem>>, %arg6: memref<116x116xbf16, #tpu.memory_space<vmem>>, %arg7: memref<1x116xf32, #tpu.memory_space<vmem>>, %arg8: memref<2x1x1x116xbf16, #tpu.memory_space<vmem>>, %arg9: memref<2x3x3x116xf32, #tpu.memory_space<vmem>>) attributes {dimension_semantics = [#tpu.dimension_semantics<arbitrary>], iteration_bounds = array<i64: 1>, scalar_prefetch = 0 : i64, scratch_operands = 1 : i64, tpu.core_type = #tpu.core_type<tc>, window_params = [{pipeline_mode = #tpu.pipeline_mode<synchronous>, transform_indices = @transform_0, window_bounds = array<i64: 2, 1, 1, 116>}, {pipeline_mode = #tpu.pipeline_mode<synchronous>, transform_indices = @transform_1, window_bounds = array<i64: 116, 116>}, {pipeline_mode = #tpu.pipeline_mode<synchronous>, transform_indices = @transform_2, window_bounds = array<i64: 1, 116>}, {pipeline_mode = #tpu.pipeline_mode<synchronous>, transform_indices = @transform_3, window_bounds = array<i64: 9, 1, 116>}, {pipeline_mode = #tpu.pipeline_mode<synchronous>, transform_indices = @transform_4, window_bounds = array<i64: 1, 116>}, {pipeline_mode = #tpu.pipeline_mode<synchronous>, transform_indices = @transform_5, window_bounds = array<i64: 116, 116>}, {pipeline_mode = #tpu.pipeline_mode<synchronous>, transform_indices = @transform_6, window_bounds = array<i64: 1, 116>}, {pipeline_mode = #tpu.pipeline_mode<synchronous>, transform_indices = @transform_7, window_bounds = array<i64: 2, 1, 1, 116>}]} {
    %c0 = arith.constant 0 : index
    %c0_0 = arith.constant 0 : index
    %0 = vector.load %arg2[%c0, %c0_0] : memref<116x116xbf16, #tpu.memory_space<vmem>>, vector<116x116xbf16>
    %c0_1 = arith.constant 0 : index
    %c0_2 = arith.constant 0 : index
    %1 = vector.load %arg3[%c0_1, %c0_2] : memref<1x116xf32, #tpu.memory_space<vmem>>, vector<1x116xf32>
    %c0_3 = arith.constant 0 : index
    %c0_4 = arith.constant 0 : index
    %2 = vector.load %arg6[%c0_3, %c0_4] : memref<116x116xbf16, #tpu.memory_space<vmem>>, vector<116x116xbf16>
    %c0_5 = arith.constant 0 : index
    %c0_6 = arith.constant 0 : index
    %3 = vector.load %arg7[%c0_5, %c0_6] : memref<1x116xf32, #tpu.memory_space<vmem>>, vector<1x116xf32>
    %cst = arith.constant 0.000000e+00 : f32
    %4 = vector.broadcast %cst : f32 to vector<2x3x3x116xf32>
    %c0_7 = arith.constant 0 : index
    %c0_8 = arith.constant 0 : index
    %c0_9 = arith.constant 0 : index
    %c0_10 = arith.constant 0 : index
    %5 = vector.load %arg9[%c0_7, %c0_8, %c0_9, %c0_10] : memref<2x3x3x116xf32, #tpu.memory_space<vmem>>, vector<2x3x3x116xf32>
    tpu.vector_store %arg9[%c0_7, %c0_8, %c0_9, %c0_10], %4 {strides = array<i32>} : memref<2x3x3x116xf32, #tpu.memory_space<vmem>>, vector<2x3x3x116xf32>,
    %c0_11 = arith.constant 0 : index
    %c0_12 = arith.constant 0 : index
    %c0_13 = arith.constant 0 : index
    %c0_14 = arith.constant 0 : index
    %6 = vector.load %arg1[%c0_11, %c0_12, %c0_13, %c0_14] : memref<2x1x1x116xbf16, #tpu.memory_space<vmem>>, vector<1x1x1x116xbf16>
    %7 = vector.shape_cast %6 : vector<1x1x1x116xbf16> to vector<1x116xbf16>
    %cst_15 = arith.constant dense<0.000000e+00> : vector<1x116xf32>
    %8 = tpu.matmul %7, %0, %cst_15 {dimension_numbers = #tpu.dot_dimension_numbers<[1], [0], [0], [1], [0, 0, 1, 1], [], []>} : vector<1x116xbf16>, vector<116x116xbf16>, vector<1x116xf32> -> vector<1x116xf32>
    %9 = arith.addf %8, %1 : vector<1x116xf32>
    %cst_16 = arith.constant 0.000000e+00 : f32
    %10 = vector.broadcast %cst_16 : f32 to vector<1x116xf32>
    %11 = arith.maximumf %9, %10 : vector<1x116xf32>
    %c0_17 = arith.constant 0 : index
    %c1 = arith.constant 1 : index
    %c1_18 = arith.constant 1 : index
    %c0_19 = arith.constant 0 : index
    %12 = vector.load %arg9[%c0_17, %c1, %c1_18, %c0_19] : memref<2x3x3x116xf32, #tpu.memory_space<vmem>>, vector<1x1x1x116xf32>
    %13 = vector.shape_cast %12 : vector<1x1x1x116xf32> to vector<1x116xf32>
    %14 = vector.shape_cast %11 : vector<1x116xf32> to vector<1x1x1x116xf32>
    tpu.vector_store %arg9[%c0_17, %c1, %c1_18, %c0_19], %14 {strides = array<i32>} : memref<2x3x3x116xf32, #tpu.memory_space<vmem>>, vector<1x1x1x116xf32>,
    %c1_20 = arith.constant 1 : index
    %c0_21 = arith.constant 0 : index
    %c0_22 = arith.constant 0 : index
    %c0_23 = arith.constant 0 : index
    %15 = vector.load %arg1[%c1_20, %c0_21, %c0_22, %c0_23] : memref<2x1x1x116xbf16, #tpu.memory_space<vmem>>, vector<1x1x1x116xbf16>
    %16 = vector.shape_cast %15 : vector<1x1x1x116xbf16> to vector<1x116xbf16>
    %cst_24 = arith.constant dense<0.000000e+00> : vector<1x116xf32>
    %17 = tpu.matmul %16, %0, %cst_24 {dimension_numbers = #tpu.dot_dimension_numbers<[1], [0], [0], [1], [0, 0, 1, 1], [], []>} : vector<1x116xbf16>, vector<116x116xbf16>, vector<1x116xf32> -> vector<1x116xf32>
    %18 = arith.addf %17, %1 : vector<1x116xf32>
    %cst_25 = arith.constant 0.000000e+00 : f32
    %19 = vector.broadcast %cst_25 : f32 to vector<1x116xf32>
    %20 = arith.maximumf %18, %19 : vector<1x116xf32>
    %c1_26 = arith.constant 1 : index
    %c1_27 = arith.constant 1 : index
    %c1_28 = arith.constant 1 : index
    %c0_29 = arith.constant 0 : index
    %21 = vector.load %arg9[%c1_26, %c1_27, %c1_28, %c0_29] : memref<2x3x3x116xf32, #tpu.memory_space<vmem>>, vector<1x1x1x116xf32>
    %22 = vector.shape_cast %21 : vector<1x1x1x116xf32> to vector<1x116xf32>
    %23 = vector.shape_cast %20 : vector<1x116xf32> to vector<1x1x1x116xf32>
    tpu.vector_store %arg9[%c1_26, %c1_27, %c1_28, %c0_29], %23 {strides = array<i32>} : memref<2x3x3x116xf32, #tpu.memory_space<vmem>>, vector<1x1x1x116xf32>,
    %cst_30 = arith.constant 0.000000e+00 : f32
    %24 = vector.broadcast %cst_30 : f32 to vector<2x1x1x116xf32>
    %c0_31 = arith.constant 0 : index
    %c0_32 = arith.constant 0 : index
    %c0_33 = arith.constant 0 : index
    %c0_34 = arith.constant 0 : index
    %25 = vector.load %arg9[%c0_31, %c0_32, %c0_33, %c0_34] : memref<2x3x3x116xf32, #tpu.memory_space<vmem>>, vector<2x1x1x116xf32>
    %c0_35 = arith.constant 0 : index
    %c0_36 = arith.constant 0 : index
    %c0_37 = arith.constant 0 : index
    %26 = vector.load %arg4[%c0_35, %c0_36, %c0_37] : memref<9x1x116xf32, #tpu.memory_space<vmem>>, vector<1x1x116xf32>
    %27 = vector.shape_cast %26 : vector<1x1x116xf32> to vector<1x116xf32>
    %28 = vector.shape_cast %27 : vector<1x116xf32> to vector<1x1x1x116xf32>
    %29 = vector.broadcast %28 : vector<1x1x1x116xf32> to vector<2x1x1x116xf32>
    %30 = arith.mulf %25, %29 : vector<2x1x1x116xf32>
    %31 = arith.addf %24, %30 : vector<2x1x1x116xf32>
    %c0_38 = arith.constant 0 : index
    %c0_39 = arith.constant 0 : index
    %c1_40 = arith.constant 1 : index
    %c0_41 = arith.constant 0 : index
    %32 = vector.load %arg9[%c0_38, %c0_39, %c1_40, %c0_41] : memref<2x3x3x116xf32, #tpu.memory_space<vmem>>, vector<2x1x1x116xf32>
    %c1_42 = arith.constant 1 : index
    %c0_43 = arith.constant 0 : index
    %c0_44 = arith.constant 0 : index
    %33 = vector.load %arg4[%c1_42, %c0_43, %c0_44] : memref<9x1x116xf32, #tpu.memory_space<vmem>>, vector<1x1x116xf32>
    %34 = vector.shape_cast %33 : vector<1x1x116xf32> to vector<1x116xf32>
    %35 = vector.shape_cast %34 : vector<1x116xf32> to vector<1x1x1x116xf32>
    %36 = vector.broadcast %35 : vector<1x1x1x116xf32> to vector<2x1x1x116xf32>
    %37 = arith.mulf %32, %36 : vector<2x1x1x116xf32>
    %38 = arith.addf %31, %37 : vector<2x1x1x116xf32>
    %c0_45 = arith.constant 0 : index
    %c0_46 = arith.constant 0 : index
    %c2 = arith.constant 2 : index
    %c0_47 = arith.constant 0 : index
    %39 = vector.load %arg9[%c0_45, %c0_46, %c2, %c0_47] : memref<2x3x3x116xf32, #tpu.memory_space<vmem>>, vector<2x1x1x116xf32>
    %c2_48 = arith.constant 2 : index
    %c0_49 = arith.constant 0 : index
    %c0_50 = arith.constant 0 : index
    %40 = vector.load %arg4[%c2_48, %c0_49, %c0_50] : memref<9x1x116xf32, #tpu.memory_space<vmem>>, vector<1x1x116xf32>
    %41 = vector.shape_cast %40 : vector<1x1x116xf32> to vector<1x116xf32>
    %42 = vector.shape_cast %41 : vector<1x116xf32> to vector<1x1x1x116xf32>
    %43 = vector.broadcast %42 : vector<1x1x1x116xf32> to vector<2x1x1x116xf32>
    %44 = arith.mulf %39, %43 : vector<2x1x1x116xf32>
    %45 = arith.addf %38, %44 : vector<2x1x1x116xf32>
    %c0_51 = arith.constant 0 : index
    %c1_52 = arith.constant 1 : index
    %c0_53 = arith.constant 0 : index
    %c0_54 = arith.constant 0 : index
    %46 = vector.load %arg9[%c0_51, %c1_52, %c0_53, %c0_54] : memref<2x3x3x116xf32, #tpu.memory_space<vmem>>, vector<2x1x1x116xf32>
    %c3 = arith.constant 3 : index
    %c0_55 = arith.constant 0 : index
    %c0_56 = arith.constant 0 : index
    %47 = vector.load %arg4[%c3, %c0_55, %c0_56] : memref<9x1x116xf32, #tpu.memory_space<vmem>>, vector<1x1x116xf32>
    %48 = vector.shape_cast %47 : vector<1x1x116xf32> to vector<1x116xf32>
    %49 = vector.shape_cast %48 : vector<1x116xf32> to vector<1x1x1x116xf32>
    %50 = vector.broadcast %49 : vector<1x1x1x116xf32> to vector<2x1x1x116xf32>
    %51 = arith.mulf %46, %50 : vector<2x1x1x116xf32>
    %52 = arith.addf %45, %51 : vector<2x1x1x116xf32>
    %c0_57 = arith.constant 0 : index
    %c1_58 = arith.constant 1 : index
    %c1_59 = arith.constant 1 : index
    %c0_60 = arith.constant 0 : index
    %53 = vector.load %arg9[%c0_57, %c1_58, %c1_59, %c0_60] : memref<2x3x3x116xf32, #tpu.memory_space<vmem>>, vector<2x1x1x116xf32>
    %c4 = arith.constant 4 : index
    %c0_61 = arith.constant 0 : index
    %c0_62 = arith.constant 0 : index
    %54 = vector.load %arg4[%c4, %c0_61, %c0_62] : memref<9x1x116xf32, #tpu.memory_space<vmem>>, vector<1x1x116xf32>
    %55 = vector.shape_cast %54 : vector<1x1x116xf32> to vector<1x116xf32>
    %56 = vector.shape_cast %55 : vector<1x116xf32> to vector<1x1x1x116xf32>
    %57 = vector.broadcast %56 : vector<1x1x1x116xf32> to vector<2x1x1x116xf32>
    %58 = arith.mulf %53, %57 : vector<2x1x1x116xf32>
    %59 = arith.addf %52, %58 : vector<2x1x1x116xf32>
    %c0_63 = arith.constant 0 : index
    %c1_64 = arith.constant 1 : index
    %c2_65 = arith.constant 2 : index
    %c0_66 = arith.constant 0 : index
    %60 = vector.load %arg9[%c0_63, %c1_64, %c2_65, %c0_66] : memref<2x3x3x116xf32, #tpu.memory_space<vmem>>, vector<2x1x1x116xf32>
    %c5 = arith.constant 5 : index
    %c0_67 = arith.constant 0 : index
    %c0_68 = arith.constant 0 : index
    %61 = vector.load %arg4[%c5, %c0_67, %c0_68] : memref<9x1x116xf32, #tpu.memory_space<vmem>>, vector<1x1x116xf32>
    %62 = vector.shape_cast %61 : vector<1x1x116xf32> to vector<1x116xf32>
    %63 = vector.shape_cast %62 : vector<1x116xf32> to vector<1x1x1x116xf32>
    %64 = vector.broadcast %63 : vector<1x1x1x116xf32> to vector<2x1x1x116xf32>
    %65 = arith.mulf %60, %64 : vector<2x1x1x116xf32>
    %66 = arith.addf %59, %65 : vector<2x1x1x116xf32>
    %c0_69 = arith.constant 0 : index
    %c2_70 = arith.constant 2 : index
    %c0_71 = arith.constant 0 : index
    %c0_72 = arith.constant 0 : index
    %67 = vector.load %arg9[%c0_69, %c2_70, %c0_71, %c0_72] : memref<2x3x3x116xf32, #tpu.memory_space<vmem>>, vector<2x1x1x116xf32>
    %c6 = arith.constant 6 : index
    %c0_73 = arith.constant 0 : index
    %c0_74 = arith.constant 0 : index
    %68 = vector.load %arg4[%c6, %c0_73, %c0_74] : memref<9x1x116xf32, #tpu.memory_space<vmem>>, vector<1x1x116xf32>
    %69 = vector.shape_cast %68 : vector<1x1x116xf32> to vector<1x116xf32>
    %70 = vector.shape_cast %69 : vector<1x116xf32> to vector<1x1x1x116xf32>
    %71 = vector.broadcast %70 : vector<1x1x1x116xf32> to vector<2x1x1x116xf32>
    %72 = arith.mulf %67, %71 : vector<2x1x1x116xf32>
    %73 = arith.addf %66, %72 : vector<2x1x1x116xf32>
    %c0_75 = arith.constant 0 : index
    %c2_76 = arith.constant 2 : index
    %c1_77 = arith.constant 1 : index
    %c0_78 = arith.constant 0 : index
    %74 = vector.load %arg9[%c0_75, %c2_76, %c1_77, %c0_78] : memref<2x3x3x116xf32, #tpu.memory_space<vmem>>, vector<2x1x1x116xf32>
    %c7 = arith.constant 7 : index
    %c0_79 = arith.constant 0 : index
    %c0_80 = arith.constant 0 : index
    %75 = vector.load %arg4[%c7, %c0_79, %c0_80] : memref<9x1x116xf32, #tpu.memory_space<vmem>>, vector<1x1x116xf32>
    %76 = vector.shape_cast %75 : vector<1x1x116xf32> to vector<1x116xf32>
    %77 = vector.shape_cast %76 : vector<1x116xf32> to vector<1x1x1x116xf32>
    %78 = vector.broadcast %77 : vector<1x1x1x116xf32> to vector<2x1x1x116xf32>
    %79 = arith.mulf %74, %78 : vector<2x1x1x116xf32>
    %80 = arith.addf %73, %79 : vector<2x1x1x116xf32>
    %c0_81 = arith.constant 0 : index
    %c2_82 = arith.constant 2 : index
    %c2_83 = arith.constant 2 : index
    %c0_84 = arith.constant 0 : index
    %81 = vector.load %arg9[%c0_81, %c2_82, %c2_83, %c0_84] : memref<2x3x3x116xf32, #tpu.memory_space<vmem>>, vector<2x1x1x116xf32>
    %c8 = arith.constant 8 : index
    %c0_85 = arith.constant 0 : index
    %c0_86 = arith.constant 0 : index
    %82 = vector.load %arg4[%c8, %c0_85, %c0_86] : memref<9x1x116xf32, #tpu.memory_space<vmem>>, vector<1x1x116xf32>
    %83 = vector.shape_cast %82 : vector<1x1x116xf32> to vector<1x116xf32>
    %84 = vector.shape_cast %83 : vector<1x116xf32> to vector<1x1x1x116xf32>
    %85 = vector.broadcast %84 : vector<1x1x1x116xf32> to vector<2x1x1x116xf32>
    %86 = arith.mulf %81, %85 : vector<2x1x1x116xf32>
    %87 = arith.addf %80, %86 : vector<2x1x1x116xf32>
    %c0_87 = arith.constant 0 : index
    %c0_88 = arith.constant 0 : index
    %88 = vector.load %arg5[%c0_87, %c0_88] : memref<1x116xf32, #tpu.memory_space<vmem>>, vector<1x116xf32>
    %89 = vector.shape_cast %88 : vector<1x116xf32> to vector<1x1x1x116xf32>
    %90 = vector.broadcast %89 : vector<1x1x1x116xf32> to vector<2x1x1x116xf32>
    %91 = arith.addf %87, %90 : vector<2x1x1x116xf32>
    %92 = vector.extract_strided_slice %91 {offsets = [0, 0, 0, 0], sizes = [1, 1, 1, 116], strides = [1, 1, 1, 1]} : vector<2x1x1x116xf32> to vector<1x1x1x116xf32>
    %93 = vector.shape_cast %92 : vector<1x1x1x116xf32> to vector<1x116xf32>
    %94 = arith.truncf %93 : vector<1x116xf32> to vector<1x116xbf16>
    %cst_89 = arith.constant dense<0.000000e+00> : vector<1x116xf32>
    %95 = tpu.matmul %94, %2, %cst_89 {dimension_numbers = #tpu.dot_dimension_numbers<[1], [0], [0], [1], [0, 0, 1, 1], [], []>} : vector<1x116xbf16>, vector<116x116xbf16>, vector<1x116xf32> -> vector<1x116xf32>
    %96 = arith.addf %95, %3 : vector<1x116xf32>
    %cst_90 = arith.constant 0.000000e+00 : f32
    %97 = vector.broadcast %cst_90 : f32 to vector<1x116xf32>
    %98 = arith.maximumf %96, %97 : vector<1x116xf32>
    %99 = arith.truncf %98 : vector<1x116xf32> to vector<1x116xbf16>
    %c0_91 = arith.constant 0 : index
    %c0_92 = arith.constant 0 : index
    %c0_93 = arith.constant 0 : index
    %c0_94 = arith.constant 0 : index
    %100 = vector.load %arg8[%c0_91, %c0_92, %c0_93, %c0_94] : memref<2x1x1x116xbf16, #tpu.memory_space<vmem>>, vector<1x1x1x116xbf16>
    %101 = vector.shape_cast %100 : vector<1x1x1x116xbf16> to vector<1x116xbf16>
    %102 = vector.shape_cast %99 : vector<1x116xbf16> to vector<1x1x1x116xbf16>
    tpu.vector_store %arg8[%c0_91, %c0_92, %c0_93, %c0_94], %102 {strides = array<i32>} : memref<2x1x1x116xbf16, #tpu.memory_space<vmem>>, vector<1x1x1x116xbf16>,
    %103 = vector.extract_strided_slice %91 {offsets = [1, 0, 0, 0], sizes = [1, 1, 1, 116], strides = [1, 1, 1, 1]} : vector<2x1x1x116xf32> to vector<1x1x1x116xf32>
    %104 = vector.shape_cast %103 : vector<1x1x1x116xf32> to vector<1x116xf32>
    %105 = arith.truncf %104 : vector<1x116xf32> to vector<1x116xbf16>
    %cst_95 = arith.constant dense<0.000000e+00> : vector<1x116xf32>
    %106 = tpu.matmul %105, %2, %cst_95 {dimension_numbers = #tpu.dot_dimension_numbers<[1], [0], [0], [1], [0, 0, 1, 1], [], []>} : vector<1x116xbf16>, vector<116x116xbf16>, vector<1x116xf32> -> vector<1x116xf32>
    %107 = arith.addf %106, %3 : vector<1x116xf32>
    %cst_96 = arith.constant 0.000000e+00 : f32
    %108 = vector.broadcast %cst_96 : f32 to vector<1x116xf32>
    %109 = arith.maximumf %107, %108 : vector<1x116xf32>
    %110 = arith.truncf %109 : vector<1x116xf32> to vector<1x116xbf16>
    %c1_97 = arith.constant 1 : index
    %c0_98 = arith.constant 0 : index
    %c0_99 = arith.constant 0 : index
    %c0_100 = arith.constant 0 : index
    %111 = vector.load %arg8[%c1_97, %c0_98, %c0_99, %c0_100] : memref<2x1x1x116xbf16, #tpu.memory_space<vmem>>, vector<1x1x1x116xbf16>
    %112 = vector.shape_cast %111 : vector<1x1x1x116xbf16> to vector<1x116xbf16>
    %113 = vector.shape_cast %110 : vector<1x116xbf16> to vector<1x1x1x116xbf16>
    tpu.vector_store %arg8[%c1_97, %c0_98, %c0_99, %c0_100], %113 {strides = array<i32>} : memref<2x1x1x116xbf16, #tpu.memory_space<vmem>>, vector<1x1x1x116xbf16>,
    return
  }
  func.func @transform_0(%arg0: i32) -> (i32, i32, i32, i32) {
    %c0_i32 = arith.constant 0 : i32
    %c0_i32_0 = arith.constant 0 : i32
    %c0_i32_1 = arith.constant 0 : i32
    %c0_i32_2 = arith.constant 0 : i32
    %c0_i32_3 = arith.constant 0 : i32
    return %c0_i32, %c0_i32_0, %c0_i32_1, %c0_i32_2 : i32, i32, i32, i32
  }
  func.func @transform_1(%arg0: i32) -> (i32, i32) {
    %c0_i32 = arith.constant 0 : i32
    %c0_i32_0 = arith.constant 0 : i32
    %c0_i32_1 = arith.constant 0 : i32
    return %c0_i32, %c0_i32_0 : i32, i32
  }
  func.func @transform_2(%arg0: i32) -> (i32, i32) {
    %c0_i32 = arith.constant 0 : i32
    %c0_i32_0 = arith.constant 0 : i32
    %c0_i32_1 = arith.constant 0 : i32
    return %c0_i32, %c0_i32_0 : i32, i32
  }
  func.func @transform_3(%arg0: i32) -> (i32, i32, i32) {
    %c0_i32 = arith.constant 0 : i32
    %c0_i32_0 = arith.constant 0 : i32
    %c0_i32_1 = arith.constant 0 : i32
    %c0_i32_2 = arith.constant 0 : i32
    return %c0_i32, %c0_i32_0, %c0_i32_1 : i32, i32, i32
  }
  func.func @transform_4(%arg0: i32) -> (i32, i32) {
    %c0_i32 = arith.constant 0 : i32
    %c0_i32_0 = arith.constant 0 : i32
    %c0_i32_1 = arith.constant 0 : i32
    return %c0_i32, %c0_i32_0 : i32, i32
  }
  func.func @transform_5(%arg0: i32) -> (i32, i32) {
    %c0_i32 = arith.constant 0 : i32
    %c0_i32_0 = arith.constant 0 : i32
    %c0_i32_1 = arith.constant 0 : i32
    return %c0_i32, %c0_i32_0 : i32, i32
  }
  func.func @transform_6(%arg0: i32) -> (i32, i32) {
    %c0_i32 = arith.constant 0 : i32
    %c0_i32_0 = arith.constant 0 : i32
    %c0_i32_1 = arith.constant 0 : i32
    return %c0_i32, %c0_i32_0 : i32, i32
  }
  func.func @transform_7(%arg0: i32) -> (i32, i32, i32, i32) {
    %c0_i32 = arith.constant 0 : i32
    %c0_i32_0 = arith.constant 0 : i32
    %c0_i32_1 = arith.constant 0 : i32
    %c0_i32_2 = arith.constant 0 : i32
    %c0_i32_3 = arith.constant 0 : i32
    return %c0_i32, %c0_i32_0, %c0_i32_1, %c0_i32_2 : i32, i32, i32, i32
  }
}

module attributes {stable_mosaic.version = 11 : i64} {
  func.func @_tail_kernel(%arg0: i32, %arg1: memref<2x232xbf16, #tpu.memory_space<vmem>>, %arg2: memref<232x512xbf16, #tpu.memory_space<vmem>>, %arg3: memref<1x512xf32, #tpu.memory_space<vmem>>, %arg4: memref<512x10xbf16, #tpu.memory_space<vmem>>, %arg5: memref<1x10xf32, #tpu.memory_space<vmem>>, %arg6: memref<2x10xf32, #tpu.memory_space<vmem>>) attributes {dimension_semantics = [#tpu.dimension_semantics<arbitrary>], iteration_bounds = array<i64: 1>, scalar_prefetch = 0 : i64, scratch_operands = 0 : i64, tpu.core_type = #tpu.core_type<tc>, window_params = [{pipeline_mode = #tpu.pipeline_mode<synchronous>, transform_indices = @transform_0, window_bounds = array<i64: 2, 232>}, {pipeline_mode = #tpu.pipeline_mode<synchronous>, transform_indices = @transform_1, window_bounds = array<i64: 232, 512>}, {pipeline_mode = #tpu.pipeline_mode<synchronous>, transform_indices = @transform_2, window_bounds = array<i64: 1, 512>}, {pipeline_mode = #tpu.pipeline_mode<synchronous>, transform_indices = @transform_3, window_bounds = array<i64: 512, 10>}, {pipeline_mode = #tpu.pipeline_mode<synchronous>, transform_indices = @transform_4, window_bounds = array<i64: 1, 10>}, {pipeline_mode = #tpu.pipeline_mode<synchronous>, transform_indices = @transform_5, window_bounds = array<i64: 2, 10>}]} {
    %c0 = arith.constant 0 : index
    %c0_0 = arith.constant 0 : index
    %0 = vector.load %arg1[%c0, %c0_0] : memref<2x232xbf16, #tpu.memory_space<vmem>>, vector<2x232xbf16>
    %c0_1 = arith.constant 0 : index
    %c0_2 = arith.constant 0 : index
    %1 = vector.load %arg2[%c0_1, %c0_2] : memref<232x512xbf16, #tpu.memory_space<vmem>>, vector<232x512xbf16>
    %cst = arith.constant dense<0.000000e+00> : vector<2x512xf32>
    %2 = tpu.matmul %0, %1, %cst {dimension_numbers = #tpu.dot_dimension_numbers<[1], [0], [0], [1], [0, 0, 1, 1], [], []>} : vector<2x232xbf16>, vector<232x512xbf16>, vector<2x512xf32> -> vector<2x512xf32>
    %c0_3 = arith.constant 0 : index
    %c0_4 = arith.constant 0 : index
    %3 = vector.load %arg3[%c0_3, %c0_4] : memref<1x512xf32, #tpu.memory_space<vmem>>, vector<1x512xf32>
    %4 = vector.broadcast %3 : vector<1x512xf32> to vector<2x512xf32>
    %5 = arith.addf %2, %4 : vector<2x512xf32>
    %cst_5 = arith.constant 0.000000e+00 : f32
    %6 = vector.broadcast %cst_5 : f32 to vector<2x512xf32>
    %7 = arith.maximumf %5, %6 : vector<2x512xf32>
    %c0_6 = arith.constant 0 : index
    %c0_7 = arith.constant 0 : index
    %8 = vector.load %arg4[%c0_6, %c0_7] : memref<512x10xbf16, #tpu.memory_space<vmem>>, vector<512x10xbf16>
    %c0_8 = arith.constant 0 : index
    %c0_9 = arith.constant 0 : index
    %9 = vector.load %arg5[%c0_8, %c0_9] : memref<1x10xf32, #tpu.memory_space<vmem>>, vector<1x10xf32>
    %10 = vector.extract_strided_slice %7 {offsets = [0, 0], sizes = [1, 512], strides = [1, 1]} : vector<2x512xf32> to vector<1x512xf32>
    %cst_10 = arith.constant dense<0.000000e+00> : vector<512xf32>
    %11 = vector.multi_reduction <add>, %10, %cst_10 [0] : vector<1x512xf32> to vector<512xf32>
    %12 = vector.shape_cast %11 : vector<512xf32> to vector<1x512xf32>
    %cst_11 = arith.constant 1.000000e+00 : f32
    %13 = vector.broadcast %cst_11 : f32 to vector<1x512xf32>
    %14 = arith.divf %12, %13 : vector<1x512xf32>
    %15 = arith.truncf %14 : vector<1x512xf32> to vector<1x512xbf16>
    %cst_12 = arith.constant dense<0.000000e+00> : vector<1x10xf32>
    %16 = tpu.matmul %15, %8, %cst_12 {dimension_numbers = #tpu.dot_dimension_numbers<[1], [0], [0], [1], [0, 0, 1, 1], [], []>} : vector<1x512xbf16>, vector<512x10xbf16>, vector<1x10xf32> -> vector<1x10xf32>
    %17 = arith.addf %16, %9 : vector<1x10xf32>
    %c0_13 = arith.constant 0 : index
    %c0_14 = arith.constant 0 : index
    %18 = vector.load %arg6[%c0_13, %c0_14] : memref<2x10xf32, #tpu.memory_space<vmem>>, vector<1x10xf32>
    tpu.vector_store %arg6[%c0_13, %c0_14], %17 {strides = array<i32>} : memref<2x10xf32, #tpu.memory_space<vmem>>, vector<1x10xf32>,
    %19 = vector.extract_strided_slice %7 {offsets = [1, 0], sizes = [1, 512], strides = [1, 1]} : vector<2x512xf32> to vector<1x512xf32>
    %cst_15 = arith.constant dense<0.000000e+00> : vector<512xf32>
    %20 = vector.multi_reduction <add>, %19, %cst_15 [0] : vector<1x512xf32> to vector<512xf32>
    %21 = vector.shape_cast %20 : vector<512xf32> to vector<1x512xf32>
    %cst_16 = arith.constant 1.000000e+00 : f32
    %22 = vector.broadcast %cst_16 : f32 to vector<1x512xf32>
    %23 = arith.divf %21, %22 : vector<1x512xf32>
    %24 = arith.truncf %23 : vector<1x512xf32> to vector<1x512xbf16>
    %cst_17 = arith.constant dense<0.000000e+00> : vector<1x10xf32>
    %25 = tpu.matmul %24, %8, %cst_17 {dimension_numbers = #tpu.dot_dimension_numbers<[1], [0], [0], [1], [0, 0, 1, 1], [], []>} : vector<1x512xbf16>, vector<512x10xbf16>, vector<1x10xf32> -> vector<1x10xf32>
    %26 = arith.addf %25, %9 : vector<1x10xf32>
    %c1 = arith.constant 1 : index
    %c0_18 = arith.constant 0 : index
    %27 = vector.load %arg6[%c1, %c0_18] : memref<2x10xf32, #tpu.memory_space<vmem>>, vector<1x10xf32>
    tpu.vector_store %arg6[%c1, %c0_18], %26 {strides = array<i32>} : memref<2x10xf32, #tpu.memory_space<vmem>>, vector<1x10xf32>,
    return
  }
  func.func @transform_0(%arg0: i32) -> (i32, i32) {
    %c0_i32 = arith.constant 0 : i32
    %c0_i32_0 = arith.constant 0 : i32
    %c0_i32_1 = arith.constant 0 : i32
    return %c0_i32, %c0_i32_0 : i32, i32
  }
  func.func @transform_1(%arg0: i32) -> (i32, i32) {
    %c0_i32 = arith.constant 0 : i32
    %c0_i32_0 = arith.constant 0 : i32
    %c0_i32_1 = arith.constant 0 : i32
    return %c0_i32, %c0_i32_0 : i32, i32
  }
  func.func @transform_2(%arg0: i32) -> (i32, i32) {
    %c0_i32 = arith.constant 0 : i32
    %c0_i32_0 = arith.constant 0 : i32
    %c0_i32_1 = arith.constant 0 : i32
    return %c0_i32, %c0_i32_0 : i32, i32
  }
  func.func @transform_3(%arg0: i32) -> (i32, i32) {
    %c0_i32 = arith.constant 0 : i32
    %c0_i32_0 = arith.constant 0 : i32
    %c0_i32_1 = arith.constant 0 : i32
    return %c0_i32, %c0_i32_0 : i32, i32
  }
  func.func @transform_4(%arg0: i32) -> (i32, i32) {
    %c0_i32 = arith.constant 0 : i32
    %c0_i32_0 = arith.constant 0 : i32
    %c0_i32_1 = arith.constant 0 : i32
    return %c0_i32, %c0_i32_0 : i32, i32
  }
  func.func @transform_5(%arg0: i32) -> (i32, i32) {
    %c0_i32 = arith.constant 0 : i32
    %c0_i32_0 = arith.constant 0 : i32
    %c0_i32_1 = arith.constant 0 : i32
    return %c0_i32, %c0_i32_0 : i32, i32
  }
}

</mosaic_0001>

<llo_original>
// kernel: shufflenet_v2_forward.19
$region0: #{shufflenet_v2_forward.19}
  #allocation0 [shape = 'u32[]', space=smem, size = 0x4, offset = 0x4, fixed_abs, tag = 'smem constant byte address 0x4 - core index']
  #allocation1 [shape = 'u32[144,128]{1,0:T(1,128)}', space=vmem, size = 0x12000, scoped, tag = 'internal scratch']
  %s0 = inlined_call_operand.vmem [shape: bf16[512,9], index: 0, kind: input, shape index: {}]
  %s1 = inlined_call_operand.vmem [shape: bf16[9,24], index: 1, kind: input, shape index: {}]
  %s2 = inlined_call_operand.vmem [shape: f32[1,24], index: 2, kind: input, shape index: {}]
  %s3 = inlined_call_operand.vmem [shape: bf16[512,24], index: 3, kind: output, shape index: {}]
  %s4 = sld [smem:[#allocation0]]
  $region22: #{shufflenet_v2_forward.19} parent=0
    _
  %s6 = ssub.s32 1, %s4
  %s7 = scalar_select 0, %s6, %s4
  // Predicated region
  $region2: #{shufflenet_v2_forward.19} parent=0 // pred_check
    _
  $region3: #{shufflenet_v2_forward.19} parent=0 // pred_check_branch
    %9 = sbr.rel (0) target = $region5
  $region4: #{shufflenet_v2_forward.19} parent=0 // pred_region
    _
  $region5: #{shufflenet_v2_forward.19} parent=0 // pred_fallthru
    _
  // Predicated region
  $region6: #{shufflenet_v2_forward.19} parent=0 // pred_check
    _
  $region7: #{shufflenet_v2_forward.19} parent=0 // pred_check_branch
    %11 = sbr.rel (0) target = $region9
  $region8: #{shufflenet_v2_forward.19} parent=0 // pred_region
    _
  $region9: #{shufflenet_v2_forward.19} parent=0 // pred_fallthru
    _
  // Predicated region
  $region10: #{shufflenet_v2_forward.19} parent=0 // pred_check
    _
  $region11: #{shufflenet_v2_forward.19} parent=0 // pred_check_branch
    %13 = sbr.rel (0) target = $region13
  $region12: #{shufflenet_v2_forward.19} parent=0 // pred_region
    _
  $region13: #{shufflenet_v2_forward.19} parent=0 // pred_fallthru
    _
  %v15 = vld [vmem:[%s0] sm:$0xf]
  %v16 = vld [vmem:[%s0 + $0x4] sm:$0xf]
  %v17 = vld [vmem:[%s0 + $0x8] sm:$0xf]
  %v18 = vld [vmem:[%s0 + $0xc] sm:$0xf]
  %v19 = vld [vmem:[%s0 + $0x10] sm:$0xf]
  %v20 = vld [vmem:[%s0 + $0x14] sm:$0xf]
  %v21 = vld [vmem:[%s0 + $0x18] sm:$0xf]
  %v22 = vld [vmem:[%s0 + $0x1c] sm:$0xf]
  %v23 = vld [vmem:[%s0 + $0x20] sm:$0xf]
  %v24 = vld [vmem:[%s0 + $0x24] sm:$0xf]
  %v25 = vld [vmem:[%s0 + $0x28] sm:$0xf]
  %v26 = vld [vmem:[%s0 + $0x2c] sm:$0xf]
  %v27 = vld [vmem:[%s0 + $0x30] sm:$0xf]
  %v28 = vld [vmem:[%s0 + $0x34] sm:$0xf]
  %v29 = vld [vmem:[%s0 + $0x38] sm:$0xf]
  %v30 = vld [vmem:[%s0 + $0x3c] sm:$0xf]
  %v31 = vld [vmem:[%s0 + $0x40] sm:$0xf]
  %v32 = vld [vmem:[%s0 + $0x44] sm:$0xf]
  %v33 = vld [vmem:[%s0 + $0x48] sm:$0xf]
  %v34 = vld [vmem:[%s0 + $0x4c] sm:$0xf]
  %v35 = vld [vmem:[%s0 + $0x50] sm:$0xf]
  %v36 = vld [vmem:[%s0 + $0x54] sm:$0xf]
  %v37 = vld [vmem:[%s0 + $0x58] sm:$0xf]
  %v38 = vld [vmem:[%s0 + $0x5c] sm:$0xf]
  %v39 = vld [vmem:[%s0 + $0x60] sm:$0xf]
  %v40 = vld [vmem:[%s0 + $0x64] sm:$0xf]
  %v41 = vld [vmem:[%s0 + $0x68] sm:$0xf]
  %v42 = vld [vmem:[%s0 + $0x6c] sm:$0xf]
  %v43 = vld [vmem:[%s0 + $0x70] sm:$0xf]
  %v44 = vld [vmem:[%s0 + $0x74] sm:$0xf]
  %v45 = vld [vmem:[%s0 + $0x78] sm:$0xf]
  %v46 = vld [vmem:[%s0 + $0x7c] sm:$0xf]
  %v47 = vld [vmem:[%s0 + $0x80] sm:$0xf]
  %v48 = vld [vmem:[%s0 + $0x84] sm:$0xf]
  %v49 = vld [vmem:[%s0 + $0x88] sm:$0xf]
  %v50 = vld [vmem:[%s0 + $0x8c] sm:$0xf]
  %v51 = vld [vmem:[%s0 + $0x90] sm:$0xf]
  %v52 = vld [vmem:[%s0 + $0x94] sm:$0xf]
  %v53 = vld [vmem:[%s0 + $0x98] sm:$0xf]
  %v54 = vld [vmem:[%s0 + $0x9c] sm:$0xf]
  %v55 = vld [vmem:[%s0 + $0xa0] sm:$0xf]
  %v56 = vld [vmem:[%s0 + $0xa4] sm:$0xf]
  %v57 = vld [vmem:[%s0 + $0xa8] sm:$0xf]
  %v58 = vld [vmem:[%s0 + $0xac] sm:$0xf]
  %v59 = vld [vmem:[%s0 + $0xb0] sm:$0xf]
  %v60 = vld [vmem:[%s0 + $0xb4] sm:$0xf]
  %v61 = vld [vmem:[%s0 + $0xb8] sm:$0xf]
  %v62 = vld [vmem:[%s0 + $0xbc] sm:$0xf]
  %v63 = vld [vmem:[%s0 + $0xc0] sm:$0xf]
  %v64 = vld [vmem:[%s0 + $0xc4] sm:$0xf]
  %v65 = vld [vmem:[%s0 + $0xc8] sm:$0xf]
  %v66 = vld [vmem:[%s0 + $0xcc] sm:$0xf]
  %v67 = vld [vmem:[%s0 + $0xd0] sm:$0xf]
  %v68 = vld [vmem:[%s0 + $0xd4] sm:$0xf]
  %v69 = vld [vmem:[%s0 + $0xd8] sm:$0xf]
  %v70 = vld [vmem:[%s0 + $0xdc] sm:$0xf]
  %v71 = vld [vmem:[%s0 + $0xe0] sm:$0xf]
  %v72 = vld [vmem:[%s0 + $0xe4] sm:$0xf]
  %v73 = vld [vmem:[%s0 + $0xe8] sm:$0xf]
  %v74 = vld [vmem:[%s0 + $0xec] sm:$0xf]
  %v75 = vld [vmem:[%s0 + $0xf0] sm:$0xf]
  %v76 = vld [vmem:[%s0 + $0xf4] sm:$0xf]
  %v77 = vld [vmem:[%s0 + $0xf8] sm:$0xf]
  %v78 = vld [vmem:[%s0 + $0xfc] sm:$0xf]
  %v79 = vld [vmem:[%s1] sm:$0xf]
  %v80 = vld [vmem:[%s1 + $0x4] sm:$0x1]
  %v81 = vld [vmem:[%s2] sm:$0x1]
  %v83 = vlaneseq
  %v84 = vshrl.u32 %v83, 7
  %v85 = vsub.s32 0, %v84
  %v86 = vrot.slane %v81, %v85
  %v152 = vunpack.c.l.b16 %v15
  %v153 = vunpack.c.l.b16 %v16
  %v154 = vunpack.c.l.b16 %v17
  %v155 = vunpack.c.l.b16 %v18
  %v156 = vunpack.c.l.b16 %v19
  %v157 = vunpack.c.l.b16 %v20
  %v158 = vunpack.c.l.b16 %v21
  %v159 = vunpack.c.l.b16 %v22
  %v160 = vunpack.c.l.b16 %v23
  %v161 = vunpack.c.l.b16 %v24
  %v162 = vunpack.c.l.b16 %v25
  %v163 = vunpack.c.l.b16 %v26
  %v164 = vunpack.c.l.b16 %v27
  %v165 = vunpack.c.l.b16 %v28
  %v166 = vunpack.c.l.b16 %v29
  %v167 = vunpack.c.l.b16 %v30
  %v168 = vunpack.c.l.b16 %v31
  %v169 = vunpack.c.l.b16 %v32
  %v170 = vunpack.c.l.b16 %v33
  %v171 = vunpack.c.l.b16 %v34
  %v172 = vunpack.c.l.b16 %v35
  %v173 = vunpack.c.l.b16 %v36
  %v174 = vunpack.c.l.b16 %v37
  %v175 = vunpack.c.l.b16 %v38
  %v176 = vunpack.c.l.b16 %v39
  %v177 = vunpack.c.l.b16 %v40
  %v178 = vunpack.c.l.b16 %v41
  %v179 = vunpack.c.l.b16 %v42
  %v180 = vunpack.c.l.b16 %v43
  %v181 = vunpack.c.l.b16 %v44
  %v182 = vunpack.c.l.b16 %v45
  %v183 = vunpack.c.l.b16 %v46
  %v184 = vunpack.c.l.b16 %v47
  %v185 = vunpack.c.l.b16 %v48
  %v186 = vunpack.c.l.b16 %v49
  %v187 = vunpack.c.l.b16 %v50
  %v188 = vunpack.c.l.b16 %v51
  %v189 = vunpack.c.l.b16 %v52
  %v190 = vunpack.c.l.b16 %v53
  %v191 = vunpack.c.l.b16 %v54
  %v192 = vunpack.c.l.b16 %v55
  %v193 = vunpack.c.l.b16 %v56
  %v194 = vunpack.c.l.b16 %v57
  %v195 = vunpack.c.l.b16 %v58
  %v196 = vunpack.c.l.b16 %v59
  %v197 = vunpack.c.l.b16 %v60
  %v198 = vunpack.c.l.b16 %v61
  %v199 = vunpack.c.l.b16 %v62
  %v200 = vunpack.c.l.b16 %v63
  %v201 = vunpack.c.l.b16 %v64
  %v202 = vunpack.c.l.b16 %v65
  %v203 = vunpack.c.l.b16 %v66
  %v204 = vunpack.c.l.b16 %v67
  %v205 = vunpack.c.l.b16 %v68
  %v206 = vunpack.c.l.b16 %v69
  %v207 = vunpack.c.l.b16 %v70
  %v208 = vunpack.c.l.b16 %v71
  %v209 = vunpack.c.l.b16 %v72
  %v210 = vunpack.c.l.b16 %v73
  %v211 = vunpack.c.l.b16 %v74
  %v212 = vunpack.c.l.b16 %v75
  %v213 = vunpack.c.l.b16 %v76
  %v214 = vunpack.c.l.b16 %v77
  %v215 = vunpack.c.l.b16 %v78
  %v216 = vpack.c.b16 %v153, %v152
  %v217 = vpack.c.b16 %v155, %v154
  %v218 = vpack.c.b16 %v157, %v156
  %v219 = vpack.c.b16 %v159, %v158
  %v220 = vpack.c.b16 %v161, %v160
  %v221 = vpack.c.b16 %v163, %v162
  %v222 = vpack.c.b16 %v165, %v164
  %v223 = vpack.c.b16 %v167, %v166
  %v224 = vpack.c.b16 %v169, %v168
  %v225 = vpack.c.b16 %v171, %v170
  %v226 = vpack.c.b16 %v173, %v172
  %v227 = vpack.c.b16 %v175, %v174
  %v228 = vpack.c.b16 %v177, %v176
  %v229 = vpack.c.b16 %v179, %v178
  %v230 = vpack.c.b16 %v181, %v180
  %v231 = vpack.c.b16 %v183, %v182
  %v232 = vpack.c.b16 %v185, %v184
  %v233 = vpack.c.b16 %v187, %v186
  %v234 = vpack.c.b16 %v189, %v188
  %v235 = vpack.c.b16 %v191, %v190
  %v236 = vpack.c.b16 %v193, %v192
  %v237 = vpack.c.b16 %v195, %v194
  %v238 = vpack.c.b16 %v197, %v196
  %v239 = vpack.c.b16 %v199, %v198
  %v240 = vpack.c.b16 %v201, %v200
  %v241 = vpack.c.b16 %v203, %v202
  %v242 = vpack.c.b16 %v205, %v204
  %v243 = vpack.c.b16 %v207, %v206
  %v244 = vpack.c.b16 %v209, %v208
  %v245 = vpack.c.b16 %v211, %v210
  %v246 = vpack.c.b16 %v213, %v212
  %v247 = vpack.c.b16 %v215, %v214
  %v250 = vunpack.c.l.b16 %v79
  %v251 = vunpack.c.l.b16 %v80
  %v252 = vpack.c.b16 %v251, %v250
  %vm253 = vcmask 72704
  %v255 = vsel %vm253, %v216, 0
  %v258 = vsel %vm253, %v217, 0
  %v261 = vsel %vm253, %v218, 0
  %v264 = vsel %vm253, %v219, 0
  %v267 = vsel %vm253, %v220, 0
  %v270 = vsel %vm253, %v221, 0
  %v273 = vsel %vm253, %v222, 0
  %v276 = vsel %vm253, %v223, 0
  %v279 = vsel %vm253, %v224, 0
  %v282 = vsel %vm253, %v225, 0
  %v285 = vsel %vm253, %v226, 0
  %v288 = vsel %vm253, %v227, 0
  %v291 = vsel %vm253, %v228, 0
  %v294 = vsel %vm253, %v229, 0
  %v297 = vsel %vm253, %v230, 0
  %v300 = vsel %vm253, %v231, 0
  %v303 = vsel %vm253, %v232, 0
  %v306 = vsel %vm253, %v233, 0
  %v309 = vsel %vm253, %v234, 0
  %v312 = vsel %vm253, %v235, 0
  %v315 = vsel %vm253, %v236, 0
  %v318 = vsel %vm253, %v237, 0
  %v321 = vsel %vm253, %v238, 0
  %v324 = vsel %vm253, %v239, 0
  %v327 = vsel %vm253, %v240, 0
  %v330 = vsel %vm253, %v241, 0
  %v333 = vsel %vm253, %v242, 0
  %v336 = vsel %vm253, %v243, 0
  %v339 = vsel %vm253, %v244, 0
  %v342 = vsel %vm253, %v245, 0
  %v345 = vsel %vm253, %v246, 0
  %v348 = vsel %vm253, %v247, 0
  %vm350 = vcmask 1043456
  %vm351 = vcmask 1044480
  %v352 = vsel %vm350, 4294967295, 65535
  %v353 = vsel %vm351, %v352, 0
  %v355 = vand.u32 %v252, %v353
  %357 = vmatprep.subr.bf16.mxu0 0
  %358 = vmatpush1.bf16.msra.mxu0 %v355
  %359 = vmatprep.subr.bf16.mxu0 0
  %360 = vmatpush1.bf16.msra.mxu0 0
  %361 = vmatprep.subr.bf16.mxu0 0
  %362 = vmatpush1.bf16.msra.mxu0 0
  %363 = vmatprep.subr.bf16.mxu0 0
  %364 = vmatpush1.bf16.msra.mxu0 0
  %365 = vmatprep.subr.bf16.mxu0 0
  %366 = vmatpush1.bf16.msra.mxu0 0
  %367 = vmatprep.subr.bf16.mxu0 0
  %368 = vmatpush1.bf16.msra.mxu0 0
  %369 = vmatprep.subr.bf16.mxu0 0
  %370 = vmatpush1.bf16.msra.mxu0 0
  %371 = vmatprep.subr.bf16.mxu0 0
  %372 = vmatpush1.bf16.msra.mxu0 0
  %373 = vmatprep.subr.bf16.mxu0 0
  %374 = vmatpush1.bf16.msra.mxu0 0
  %375 = vmatprep.subr.bf16.mxu0 0
  %376 = vmatpush1.bf16.msra.mxu0 0
  %377 = vmatprep.subr.bf16.mxu0 0
  %378 = vmatpush1.bf16.msra.mxu0 0
  %379 = vmatprep.subr.bf16.mxu0 0
  %380 = vmatpush1.bf16.msra.mxu0 0
  %381 = vmatprep.subr.bf16.mxu0 0
  %382 = vmatpush1.bf16.msra.mxu0 0
  %383 = vmatprep.subr.bf16.mxu0 0
  %384 = vmatpush1.bf16.msra.mxu0 0
  %385 = vmatprep.subr.bf16.mxu0 0
  %386 = vmatpush1.bf16.msra.mxu0 0
  %387 = vmatprep.subr.bf16.mxu0 0
  %388 = vmatpush1.bf16.msra.mxu0 0
  %389 = vmatprep.mubr.bf16.mxu0 0
  %390 = vmatmul.mubr.bf16.gmra.mrb[0].mxu0 %v255
  %v391 = vpop.f32.mrb[0].mxu0
  %v392 = vadd.f32 %v86, %v391
  %v393 = vpop.f32.mrb[0].mxu0
  %v394 = vpop.f32.mrb[0].mxu0
  %v395 = vadd.f32 %v86, %v394
  %v396 = vpop.f32.mrb[0].mxu0
  %397 = vmatprep.mubr.bf16.mxu0 0
  %398 = vmatmul.mubr.bf16.gmra.mrb[0].mxu0 %v258
  %v399 = vpop.f32.mrb[0].mxu0
  %v400 = vadd.f32 %v86, %v399
  %v401 = vpop.f32.mrb[0].mxu0
  %v402 = vpop.f32.mrb[0].mxu0
  %v403 = vadd.f32 %v86, %v402
  %v404 = vpop.f32.mrb[0].mxu0
  %405 = vmatprep.mubr.bf16.mxu0 0
  %406 = vmatmul.mubr.bf16.gmra.mrb[0].mxu0 %v261
  %v407 = vpop.f32.mrb[0].mxu0
  %v408 = vadd.f32 %v86, %v407
  %v409 = vpop.f32.mrb[0].mxu0
  %v410 = vpop.f32.mrb[0].mxu0
  %v411 = vadd.f32 %v86, %v410
  %v412 = vpop.f32.mrb[0].mxu0
  %413 = vmatprep.mubr.bf16.mxu0 0
  %414 = vmatmul.mubr.bf16.gmra.mrb[0].mxu0 %v264
  %v415 = vpop.f32.mrb[0].mxu0
  %v416 = vadd.f32 %v86, %v415
  %v417 = vpop.f32.mrb[0].mxu0
  %v418 = vpop.f32.mrb[0].mxu0
  %v419 = vadd.f32 %v86, %v418
  %v420 = vpop.f32.mrb[0].mxu0
  %421 = vmatprep.mubr.bf16.mxu0 0
  %422 = vmatmul.mubr.bf16.gmra.mrb[0].mxu0 %v267
  %v423 = vpop.f32.mrb[0].mxu0
  %v424 = vadd.f32 %v86, %v423
  %v425 = vpop.f32.mrb[0].mxu0
  %v426 = vpop.f32.mrb[0].mxu0
  %v427 = vadd.f32 %v86, %v426
  %v428 = vpop.f32.mrb[0].mxu0
  %429 = vmatprep.mubr.bf16.mxu0 0
  %430 = vmatmul.mubr.bf16.gmra.mrb[0].mxu0 %v270
  %v431 = vpop.f32.mrb[0].mxu0
  %v432 = vadd.f32 %v86, %v431
  %v433 = vpop.f32.mrb[0].mxu0
  %v434 = vpop.f32.mrb[0].mxu0
  %v435 = vadd.f32 %v86, %v434
  %v436 = vpop.f32.mrb[0].mxu0
  %437 = vmatprep.mubr.bf16.mxu0 0
  %438 = vmatmul.mubr.bf16.gmra.mrb[0].mxu0 %v273
  %v439 = vpop.f32.mrb[0].mxu0
  %v440 = vadd.f32 %v86, %v439
  %v441 = vpop.f32.mrb[0].mxu0
  %v442 = vpop.f32.mrb[0].mxu0
  %v443 = vadd.f32 %v86, %v442
  %v444 = vpop.f32.mrb[0].mxu0
  %445 = vmatprep.mubr.bf16.mxu0 0
  %446 = vmatmul.mubr.bf16.gmra.mrb[0].mxu0 %v276
  %v447 = vpop.f32.mrb[0].mxu0
  %v448 = vadd.f32 %v86, %v447
  %v449 = vpop.f32.mrb[0].mxu0
  %v450 = vpop.f32.mrb[0].mxu0
  %v451 = vadd.f32 %v86, %v450
  %v452 = vpop.f32.mrb[0].mxu0
  %453 = vmatprep.mubr.bf16.mxu0 0
  %454 = vmatmul.mubr.bf16.gmra.mrb[0].mxu0 %v279
  %v455 = vpop.f32.mrb[0].mxu0
  %v456 = vadd.f32 %v86, %v455
  %v457 = vpop.f32.mrb[0].mxu0
  %v458 = vpop.f32.mrb[0].mxu0
  %v459 = vadd.f32 %v86, %v458
  %v460 = vpop.f32.mrb[0].mxu0
  %461 = vmatprep.mubr.bf16.mxu0 0
  %462 = vmatmul.mubr.bf16.gmra.mrb[0].mxu0 %v282
  %v463 = vpop.f32.mrb[0].mxu0
  %v464 = vadd.f32 %v86, %v463
  %v465 = vpop.f32.mrb[0].mxu0
  %v466 = vpop.f32.mrb[0].mxu0
  %v467 = vadd.f32 %v86, %v466
  %v468 = vpop.f32.mrb[0].mxu0
  %469 = vmatprep.mubr.bf16.mxu0 0
  %470 = vmatmul.mubr.bf16.gmra.mrb[0].mxu0 %v285
  %v471 = vpop.f32.mrb[0].mxu0
  %v472 = vadd.f32 %v86, %v471
  %v473 = vpop.f32.mrb[0].mxu0
  %v474 = vpop.f32.mrb[0].mxu0
  %v475 = vadd.f32 %v86, %v474
  %v476 = vpop.f32.mrb[0].mxu0
  %477 = vmatprep.mubr.bf16.mxu0 0
  %478 = vmatmul.mubr.bf16.gmra.mrb[0].mxu0 %v288
  %v479 = vpop.f32.mrb[0].mxu0
  %v480 = vadd.f32 %v86, %v479
  %v481 = vpop.f32.mrb[0].mxu0
  %v482 = vpop.f32.mrb[0].mxu0
  %v483 = vadd.f32 %v86, %v482
  %v484 = vpop.f32.mrb[0].mxu0
  %485 = vmatprep.mubr.bf16.mxu0 0
  %486 = vmatmul.mubr.bf16.gmra.mrb[0].mxu0 %v291
  %v487 = vpop.f32.mrb[0].mxu0
  %v488 = vadd.f32 %v86, %v487
  %v489 = vpop.f32.mrb[0].mxu0
  %v490 = vpop.f32.mrb[0].mxu0
  %v491 = vadd.f32 %v86, %v490
  %v492 = vpop.f32.mrb[0].mxu0
  %493 = vmatprep.mubr.bf16.mxu0 0
  %494 = vmatmul.mubr.bf16.gmra.mrb[0].mxu0 %v294
  %v495 = vpop.f32.mrb[0].mxu0
  %v496 = vadd.f32 %v86, %v495
  %v497 = vpop.f32.mrb[0].mxu0
  %v498 = vpop.f32.mrb[0].mxu0
  %v499 = vadd.f32 %v86, %v498
  %v500 = vpop.f32.mrb[0].mxu0
  %501 = vmatprep.mubr.bf16.mxu0 0
  %502 = vmatmul.mubr.bf16.gmra.mrb[0].mxu0 %v297
  %v503 = vpop.f32.mrb[0].mxu0
  %v504 = vadd.f32 %v86, %v503
  %v505 = vpop.f32.mrb[0].mxu0
  %v506 = vpop.f32.mrb[0].mxu0
  %v507 = vadd.f32 %v86, %v506
  %v508 = vpop.f32.mrb[0].mxu0
  %509 = vmatprep.mubr.bf16.mxu0 0
  %510 = vmatmul.mubr.bf16.gmra.mrb[0].mxu0 %v300
  %v511 = vpop.f32.mrb[0].mxu0
  %v512 = vadd.f32 %v86, %v511
  %v513 = vpop.f32.mrb[0].mxu0
  %v514 = vpop.f32.mrb[0].mxu0
  %v515 = vadd.f32 %v86, %v514
  %v516 = vpop.f32.mrb[0].mxu0
  %517 = vmatprep.mubr.bf16.mxu0 0
  %518 = vmatmul.mubr.bf16.gmra.mrb[0].mxu0 %v303
  %v519 = vpop.f32.mrb[0].mxu0
  %v520 = vadd.f32 %v86, %v519
  %v521 = vpop.f32.mrb[0].mxu0
  %v522 = vpop.f32.mrb[0].mxu0
  %v523 = vadd.f32 %v86, %v522
  %v524 = vpop.f32.mrb[0].mxu0
  %525 = vmatprep.mubr.bf16.mxu0 0
  %526 = vmatmul.mubr.bf16.gmra.mrb[0].mxu0 %v306
  %v527 = vpop.f32.mrb[0].mxu0
  %v528 = vadd.f32 %v86, %v527
  %v529 = vpop.f32.mrb[0].mxu0
  %v530 = vpop.f32.mrb[0].mxu0
  %v531 = vadd.f32 %v86, %v530
  %v532 = vpop.f32.mrb[0].mxu0
  %533 = vmatprep.mubr.bf16.mxu0 0
  %534 = vmatmul.mubr.bf16.gmra.mrb[0].mxu0 %v309
  %v535 = vpop.f32.mrb[0].mxu0
  %v536 = vadd.f32 %v86, %v535
  %v537 = vpop.f32.mrb[0].mxu0
  %v538 = vpop.f32.mrb[0].mxu0
  %v539 = vadd.f32 %v86, %v538
  %v540 = vpop.f32.mrb[0].mxu0
  %541 = vmatprep.mubr.bf16.mxu0 0
  %542 = vmatmul.mubr.bf16.gmra.mrb[0].mxu0 %v312
  %v543 = vpop.f32.mrb[0].mxu0
  %v544 = vadd.f32 %v86, %v543
  %v545 = vpop.f32.mrb[0].mxu0
  %v546 = vpop.f32.mrb[0].mxu0
  %v547 = vadd.f32 %v86, %v546
  %v548 = vpop.f32.mrb[0].mxu0
  %549 = vmatprep.mubr.bf16.mxu0 0
  %550 = vmatmul.mubr.bf16.gmra.mrb[0].mxu0 %v315
  %v551 = vpop.f32.mrb[0].mxu0
  %v552 = vadd.f32 %v86, %v551
  %v553 = vpop.f32.mrb[0].mxu0
  %v554 = vpop.f32.mrb[0].mxu0
  %v555 = vadd.f32 %v86, %v554
  %v556 = vpop.f32.mrb[0].mxu0
  %557 = vmatprep.mubr.bf16.mxu0 0
  %558 = vmatmul.mubr.bf16.gmra.mrb[0].mxu0 %v318
  %v559 = vpop.f32.mrb[0].mxu0
  %v560 = vadd.f32 %v86, %v559
  %v561 = vpop.f32.mrb[0].mxu0
  %v562 = vpop.f32.mrb[0].mxu0
  %v563 = vadd.f32 %v86, %v562
  %v564 = vpop.f32.mrb[0].mxu0
  %565 = vmatprep.mubr.bf16.mxu0 0
  %566 = vmatmul.mubr.bf16.gmra.mrb[0].mxu0 %v321
  %v567 = vpop.f32.mrb[0].mxu0
  %v568 = vadd.f32 %v86, %v567
  %v569 = vpop.f32.mrb[0].mxu0
  %v570 = vpop.f32.mrb[0].mxu0
  %v571 = vadd.f32 %v86, %v570
  %v572 = vpop.f32.mrb[0].mxu0
  %573 = vmatprep.mubr.bf16.mxu0 0
  %574 = vmatmul.mubr.bf16.gmra.mrb[0].mxu0 %v324
  %v575 = vpop.f32.mrb[0].mxu0
  %v576 = vadd.f32 %v86, %v575
  %v577 = vpop.f32.mrb[0].mxu0
  %v578 = vpop.f32.mrb[0].mxu0
  %v579 = vadd.f32 %v86, %v578
  %v580 = vpop.f32.mrb[0].mxu0
  %581 = vmatprep.mubr.bf16.mxu0 0
  %582 = vmatmul.mubr.bf16.gmra.mrb[0].mxu0 %v327
  %v583 = vpop.f32.mrb[0].mxu0
  %v584 = vadd.f32 %v86, %v583
  %v585 = vpop.f32.mrb[0].mxu0
  %v586 = vpop.f32.mrb[0].mxu0
  %v587 = vadd.f32 %v86, %v586
  %v588 = vpop.f32.mrb[0].mxu0
  %589 = vmatprep.mubr.bf16.mxu0 0
  %590 = vmatmul.mubr.bf16.gmra.mrb[0].mxu0 %v330
  %v591 = vpop.f32.mrb[0].mxu0
  %v592 = vadd.f32 %v86, %v591
  %v593 = vpop.f32.mrb[0].mxu0
  %v594 = vpop.f32.mrb[0].mxu0
  %v595 = vadd.f32 %v86, %v594
  %v596 = vpop.f32.mrb[0].mxu0
  %597 = vmatprep.mubr.bf16.mxu0 0
  %598 = vmatmul.mubr.bf16.gmra.mrb[0].mxu0 %v333
  %v599 = vpop.f32.mrb[0].mxu0
  %v600 = vadd.f32 %v86, %v599
  %v601 = vpop.f32.mrb[0].mxu0
  %v602 = vpop.f32.mrb[0].mxu0
  %v603 = vadd.f32 %v86, %v602
  %v604 = vpop.f32.mrb[0].mxu0
  %605 = vmatprep.mubr.bf16.mxu0 0
  %606 = vmatmul.mubr.bf16.gmra.mrb[0].mxu0 %v336
  %v607 = vpop.f32.mrb[0].mxu0
  %v608 = vadd.f32 %v86, %v607
  %v609 = vpop.f32.mrb[0].mxu0
  %v610 = vpop.f32.mrb[0].mxu0
  %v611 = vadd.f32 %v86, %v610
  %v612 = vpop.f32.mrb[0].mxu0
  %613 = vmatprep.mubr.bf16.mxu0 0
  %614 = vmatmul.mubr.bf16.gmra.mrb[0].mxu0 %v339
  %v615 = vpop.f32.mrb[0].mxu0
  %v616 = vadd.f32 %v86, %v615
  %v617 = vpop.f32.mrb[0].mxu0
  %v618 = vpop.f32.mrb[0].mxu0
  %v619 = vadd.f32 %v86, %v618
  %v620 = vpop.f32.mrb[0].mxu0
  %621 = vmatprep.mubr.bf16.mxu0 0
  %622 = vmatmul.mubr.bf16.gmra.mrb[0].mxu0 %v342
  %v623 = vpop.f32.mrb[0].mxu0
  %v624 = vadd.f32 %v86, %v623
  %v625 = vpop.f32.mrb[0].mxu0
  %v626 = vpop.f32.mrb[0].mxu0
  %v627 = vadd.f32 %v86, %v626
  %v628 = vpop.f32.mrb[0].mxu0
  %629 = vmatprep.mubr.bf16.mxu0 0
  %630 = vmatmul.mubr.bf16.gmra.mrb[0].mxu0 %v345
  %v631 = vpop.f32.mrb[0].mxu0
  %v632 = vadd.f32 %v86, %v631
  %v633 = vpop.f32.mrb[0].mxu0
  %v634 = vpop.f32.mrb[0].mxu0
  %v635 = vadd.f32 %v86, %v634
  %v636 = vpop.f32.mrb[0].mxu0
  %637 = vmatprep.mubr.bf16.mxu0 0
  %638 = vmatmul.mubr.bf16.gmra.mrb[0].mxu0 %v348
  %v639 = vpop.f32.mrb[0].mxu0
  %v640 = vadd.f32 %v86, %v639
  %v641 = vpop.f32.mrb[0].mxu0
  %v642 = vpop.f32.mrb[0].mxu0
  %v643 = vadd.f32 %v86, %v642
  %v644 = vpop.f32.mrb[0].mxu0
  %645 = vdwg.mxu0
  %v646 = vmax.f32 %v392, 0.0
  %v647 = vmax.f32 %v395, 0.0
  %v648 = vmax.f32 %v400, 0.0
  %v649 = vmax.f32 %v403, 0.0
  %v650 = vmax.f32 %v408, 0.0
  %v651 = vmax.f32 %v411, 0.0
  %v652 = vmax.f32 %v416, 0.0
  %v653 = vmax.f32 %v419, 0.0
  %v654 = vmax.f32 %v424, 0.0
  %v655 = vmax.f32 %v427, 0.0
  %v656 = vmax.f32 %v432, 0.0
  %v657 = vmax.f32 %v435, 0.0
  %v658 = vmax.f32 %v440, 0.0
  %v659 = vmax.f32 %v443, 0.0
  %v660 = vmax.f32 %v448, 0.0
  %v661 = vmax.f32 %v451, 0.0
  %v662 = vmax.f32 %v456, 0.0
  %v663 = vmax.f32 %v459, 0.0
  %v664 = vmax.f32 %v464, 0.0
  %v665 = vmax.f32 %v467, 0.0
  %v666 = vmax.f32 %v472, 0.0
  %v667 = vmax.f32 %v475, 0.0
  %v668 = vmax.f32 %v480, 0.0
  %v669 = vmax.f32 %v483, 0.0
  %v670 = vmax.f32 %v488, 0.0
  %v671 = vmax.f32 %v491, 0.0
  %v672 = vmax.f32 %v496, 0.0
  %v673 = vmax.f32 %v499, 0.0
  %v674 = vmax.f32 %v504, 0.0
  %v675 = vmax.f32 %v507, 0.0
  %v676 = vmax.f32 %v512, 0.0
  %v677 = vmax.f32 %v515, 0.0
  %v678 = vmax.f32 %v520, 0.0
  %v679 = vmax.f32 %v523, 0.0
  %v680 = vmax.f32 %v528, 0.0
  %v681 = vmax.f32 %v531, 0.0
  %v682 = vmax.f32 %v536, 0.0
  %v683 = vmax.f32 %v539, 0.0
  %v684 = vmax.f32 %v544, 0.0
  %v685 = vmax.f32 %v547, 0.0
  %v686 = vmax.f32 %v552, 0.0
  %v687 = vmax.f32 %v555, 0.0
  %v688 = vmax.f32 %v560, 0.0
  %v689 = vmax.f32 %v563, 0.0
  %v690 = vmax.f32 %v568, 0.0
  %v691 = vmax.f32 %v571, 0.0
  %v692 = vmax.f32 %v576, 0.0
  %v693 = vmax.f32 %v579, 0.0
  %v694 = vmax.f32 %v584, 0.0
  %v695 = vmax.f32 %v587, 0.0
  %v696 = vmax.f32 %v592, 0.0
  %v697 = vmax.f32 %v595, 0.0
  %v698 = vmax.f32 %v600, 0.0
  %v699 = vmax.f32 %v603, 0.0
  %v700 = vmax.f32 %v608, 0.0
  %v701 = vmax.f32 %v611, 0.0
  %v702 = vmax.f32 %v616, 0.0
  %v703 = vmax.f32 %v619, 0.0
  %v704 = vmax.f32 %v624, 0.0
  %v705 = vmax.f32 %v627, 0.0
  %v706 = vmax.f32 %v632, 0.0
  %v707 = vmax.f32 %v635, 0.0
  %v708 = vmax.f32 %v640, 0.0
  %v709 = vmax.f32 %v643, 0.0
  %v710 = vpack.c.bf16 %v647, %v646
  %v711 = vpack.c.bf16 %v649, %v648
  %v712 = vpack.c.bf16 %v651, %v650
  %v713 = vpack.c.bf16 %v653, %v652
  %v714 = vpack.c.bf16 %v655, %v654
  %v715 = vpack.c.bf16 %v657, %v656
  %v716 = vpack.c.bf16 %v659, %v658
  %v717 = vpack.c.bf16 %v661, %v660
  %v718 = vpack.c.bf16 %v663, %v662
  %v719 = vpack.c.bf16 %v665, %v664
  %v720 = vpack.c.bf16 %v667, %v666
  %v721 = vpack.c.bf16 %v669, %v668
  %v722 = vpack.c.bf16 %v671, %v670
  %v723 = vpack.c.bf16 %v673, %v672
  %v724 = vpack.c.bf16 %v675, %v674
  %v725 = vpack.c.bf16 %v677, %v676
  %v726 = vpack.c.bf16 %v679, %v678
  %v727 = vpack.c.bf16 %v681, %v680
  %v728 = vpack.c.bf16 %v683, %v682
  %v729 = vpack.c.bf16 %v685, %v684
  %v730 = vpack.c.bf16 %v687, %v686
  %v731 = vpack.c.bf16 %v689, %v688
  %v732 = vpack.c.bf16 %v691, %v690
  %v733 = vpack.c.bf16 %v693, %v692
  %v734 = vpack.c.bf16 %v695, %v694
  %v735 = vpack.c.bf16 %v697, %v696
  %v736 = vpack.c.bf16 %v699, %v698
  %v737 = vpack.c.bf16 %v701, %v700
  %v738 = vpack.c.bf16 %v703, %v702
  %v739 = vpack.c.bf16 %v705, %v704
  %v740 = vpack.c.bf16 %v707, %v706
  %v741 = vpack.c.bf16 %v709, %v708
  %v774 = vunpack.c.l.b16 %v710
  %v775 = vunpack.c.h.b16 %v710
  %v776 = vunpack.c.l.b16 %v711
  %v777 = vunpack.c.h.b16 %v711
  %v778 = vunpack.c.l.b16 %v712
  %v779 = vunpack.c.h.b16 %v712
  %v780 = vunpack.c.l.b16 %v713
  %v781 = vunpack.c.h.b16 %v713
  %v782 = vunpack.c.l.b16 %v714
  %v783 = vunpack.c.h.b16 %v714
  %v784 = vunpack.c.l.b16 %v715
  %v785 = vunpack.c.h.b16 %v715
  %v786 = vunpack.c.l.b16 %v716
  %v787 = vunpack.c.h.b16 %v716
  %v788 = vunpack.c.l.b16 %v717
  %v789 = vunpack.c.h.b16 %v717
  %v790 = vunpack.c.l.b16 %v718
  %v791 = vunpack.c.h.b16 %v718
  %v792 = vunpack.c.l.b16 %v719
  %v793 = vunpack.c.h.b16 %v719
  %v794 = vunpack.c.l.b16 %v720
  %v795 = vunpack.c.h.b16 %v720
  %v796 = vunpack.c.l.b16 %v721
  %v797 = vunpack.c.h.b16 %v721
  %v798 = vunpack.c.l.b16 %v722
  %v799 = vunpack.c.h.b16 %v722
  %v800 = vunpack.c.l.b16 %v723
  %v801 = vunpack.c.h.b16 %v723
  %v802 = vunpack.c.l.b16 %v724
  %v803 = vunpack.c.h.b16 %v724
  %v804 = vunpack.c.l.b16 %v725
  %v805 = vunpack.c.h.b16 %v725
  %v806 = vunpack.c.l.b16 %v726
  %v807 = vunpack.c.h.b16 %v726
  %v808 = vunpack.c.l.b16 %v727
  %v809 = vunpack.c.h.b16 %v727
  %v810 = vunpack.c.l.b16 %v728
  %v811 = vunpack.c.h.b16 %v728
  %v812 = vunpack.c.l.b16 %v729
  %v813 = vunpack.c.h.b16 %v729
  %v814 = vunpack.c.l.b16 %v730
  %v815 = vunpack.c.h.b16 %v730
  %v816 = vunpack.c.l.b16 %v731
  %v817 = vunpack.c.h.b16 %v731
  %v818 = vunpack.c.l.b16 %v732
  %v819 = vunpack.c.h.b16 %v732
  %v820 = vunpack.c.l.b16 %v733
  %v821 = vunpack.c.h.b16 %v733
  %v822 = vunpack.c.l.b16 %v734
  %v823 = vunpack.c.h.b16 %v734
  %v824 = vunpack.c.l.b16 %v735
  %v825 = vunpack.c.h.b16 %v735
  %v826 = vunpack.c.l.b16 %v736
  %v827 = vunpack.c.h.b16 %v736
  %v828 = vunpack.c.l.b16 %v737
  %v829 = vunpack.c.h.b16 %v737
  %v830 = vunpack.c.l.b16 %v738
  %v831 = vunpack.c.h.b16 %v738
  %v832 = vunpack.c.l.b16 %v739
  %v833 = vunpack.c.h.b16 %v739
  %v834 = vunpack.c.l.b16 %v740
  %v835 = vunpack.c.h.b16 %v740
  %v836 = vunpack.c.l.b16 %v741
  %v837 = vunpack.c.h.b16 %v741
  %v838 = vpack.c.b16 %v774, %v774
  %v839 = vpack.c.b16 %v775, %v775
  %v840 = vpack.c.b16 %v776, %v776
  %v841 = vpack.c.b16 %v777, %v777
  %v842 = vpack.c.b16 %v778, %v778
  %v843 = vpack.c.b16 %v779, %v779
  %v844 = vpack.c.b16 %v780, %v780
  %v845 = vpack.c.b16 %v781, %v781
  %v846 = vpack.c.b16 %v782, %v782
  %v847 = vpack.c.b16 %v783, %v783
  %v848 = vpack.c.b16 %v784, %v784
  %v849 = vpack.c.b16 %v785, %v785
  %v850 = vpack.c.b16 %v786, %v786
  %v851 = vpack.c.b16 %v787, %v787
  %v852 = vpack.c.b16 %v788, %v788
  %v853 = vpack.c.b16 %v789, %v789
  %v854 = vpack.c.b16 %v790, %v790
  %v855 = vpack.c.b16 %v791, %v791
  %v856 = vpack.c.b16 %v792, %v792
  %v857 = vpack.c.b16 %v793, %v793
  %v858 = vpack.c.b16 %v794, %v794
  %v859 = vpack.c.b16 %v795, %v795
  %v860 = vpack.c.b16 %v796, %v796
  %v861 = vpack.c.b16 %v797, %v797
  %v862 = vpack.c.b16 %v798, %v798
  %v863 = vpack.c.b16 %v799, %v799
  %v864 = vpack.c.b16 %v800, %v800
  %v865 = vpack.c.b16 %v801, %v801
  %v866 = vpack.c.b16 %v802, %v802
  %v867 = vpack.c.b16 %v803, %v803
  %v868 = vpack.c.b16 %v804, %v804
  %v869 = vpack.c.b16 %v805, %v805
  %v870 = vpack.c.b16 %v806, %v806
  %v871 = vpack.c.b16 %v807, %v807
  %v872 = vpack.c.b16 %v808, %v808
  %v873 = vpack.c.b16 %v809, %v809
  %v874 = vpack.c.b16 %v810, %v810
  %v875 = vpack.c.b16 %v811, %v811
  %v876 = vpack.c.b16 %v812, %v812
  %v877 = vpack.c.b16 %v813, %v813
  %v878 = vpack.c.b16 %v814, %v814
  %v879 = vpack.c.b16 %v815, %v815
  %v880 = vpack.c.b16 %v816, %v816
  %v881 = vpack.c.b16 %v817, %v817
  %v882 = vpack.c.b16 %v818, %v818
  %v883 = vpack.c.b16 %v819, %v819
  %v884 = vpack.c.b16 %v820, %v820
  %v885 = vpack.c.b16 %v821, %v821
  %v886 = vpack.c.b16 %v822, %v822
  %v887 = vpack.c.b16 %v823, %v823
  %v888 = vpack.c.b16 %v824, %v824
  %v889 = vpack.c.b16 %v825, %v825
  %v890 = vpack.c.b16 %v826, %v826
  %v891 = vpack.c.b16 %v827, %v827
  %v892 = vpack.c.b16 %v828, %v828
  %v893 = vpack.c.b16 %v829, %v829
  %v894 = vpack.c.b16 %v830, %v830
  %v895 = vpack.c.b16 %v831, %v831
  %v896 = vpack.c.b16 %v832, %v832
  %v897 = vpack.c.b16 %v833, %v833
  %v898 = vpack.c.b16 %v834, %v834
  %v899 = vpack.c.b16 %v835, %v835
  %v900 = vpack.c.b16 %v836, %v836
  %v901 = vpack.c.b16 %v837, %v837
  %vm966 = vcmask 191488
  %967 = vst.msk [vmem:[%s3] sm:$0xf] %vm966, %v838
  %968 = vst.msk [vmem:[%s3 + $0x4] sm:$0xf] %vm966, %v839
  %969 = vst.msk [vmem:[%s3 + $0x8] sm:$0xf] %vm966, %v840
  %970 = vst.msk [vmem:[%s3 + $0xc] sm:$0xf] %vm966, %v841
  %971 = vst.msk [vmem:[%s3 + $0x10] sm:$0xf] %vm966, %v842
  %972 = vst.msk [vmem:[%s3 + $0x14] sm:$0xf] %vm966, %v843
  %973 = vst.msk [vmem:[%s3 + $0x18] sm:$0xf] %vm966, %v844
  %974 = vst.msk [vmem:[%s3 + $0x1c] sm:$0xf] %vm966, %v845
  %975 = vst.msk [vmem:[%s3 + $0x20] sm:$0xf] %vm966, %v846
  %976 = vst.msk [vmem:[%s3 + $0x24] sm:$0xf] %vm966, %v847
  %977 = vst.msk [vmem:[%s3 + $0x28] sm:$0xf] %vm966, %v848
  %978 = vst.msk [vmem:[%s3 + $0x2c] sm:$0xf] %vm966, %v849
  %979 = vst.msk [vmem:[%s3 + $0x30] sm:$0xf] %vm966, %v850
  %980 = vst.msk [vmem:[%s3 + $0x34] sm:$0xf] %vm966, %v851
  %981 = vst.msk [vmem:[%s3 + $0x38] sm:$0xf] %vm966, %v852
  %982 = vst.msk [vmem:[%s3 + $0x3c] sm:$0xf] %vm966, %v853
  %983 = vst.msk [vmem:[%s3 + $0x40] sm:$0xf] %vm966, %v854
  %984 = vst.msk [vmem:[%s3 + $0x44] sm:$0xf] %vm966, %v855
  %985 = vst.msk [vmem:[%s3 + $0x48] sm:$0xf] %vm966, %v856
  %986 = vst.msk [vmem:[%s3 + $0x4c] sm:$0xf] %vm966, %v857
  %987 = vst.msk [vmem:[%s3 + $0x50] sm:$0xf] %vm966, %v858
  %988 = vst.msk [vmem:[%s3 + $0x54] sm:$0xf] %vm966, %v859
  %989 = vst.msk [vmem:[%s3 + $0x58] sm:$0xf] %vm966, %v860
  %990 = vst.msk [vmem:[%s3 + $0x5c] sm:$0xf] %vm966, %v861
  %991 = vst.msk [vmem:[%s3 + $0x60] sm:$0xf] %vm966, %v862
  %992 = vst.msk [vmem:[%s3 + $0x64] sm:$0xf] %vm966, %v863
  %993 = vst.msk [vmem:[%s3 + $0x68] sm:$0xf] %vm966, %v864
  %994 = vst.msk [vmem:[%s3 + $0x6c] sm:$0xf] %vm966, %v865
  %995 = vst.msk [vmem:[%s3 + $0x70] sm:$0xf] %vm966, %v866
  %996 = vst.msk [vmem:[%s3 + $0x74] sm:$0xf] %vm966, %v867
  %997 = vst.msk [vmem:[%s3 + $0x78] sm:$0xf] %vm966, %v868
  %998 = vst.msk [vmem:[%s3 + $0x7c] sm:$0xf] %vm966, %v869
  %999 = vst.msk [vmem:[%s3 + $0x80] sm:$0xf] %vm966, %v870
  %1000 = vst.msk [vmem:[%s3 + $0x84] sm:$0xf] %vm966, %v871
  %1001 = vst.msk [vmem:[%s3 + $0x88] sm:$0xf] %vm966, %v872
  %1002 = vst.msk [vmem:[%s3 + $0x8c] sm:$0xf] %vm966, %v873
  %1003 = vst.msk [vmem:[%s3 + $0x90] sm:$0xf] %vm966, %v874
  %1004 = vst.msk [vmem:[%s3 + $0x94] sm:$0xf] %vm966, %v875
  %1005 = vst.msk [vmem:[%s3 + $0x98] sm:$0xf] %vm966, %v876
  %1006 = vst.msk [vmem:[%s3 + $0x9c] sm:$0xf] %vm966, %v877
  %1007 = vst.msk [vmem:[%s3 + $0xa0] sm:$0xf] %vm966, %v878
  %1008 = vst.msk [vmem:[%s3 + $0xa4] sm:$0xf] %vm966, %v879
  %1009 = vst.msk [vmem:[%s3 + $0xa8] sm:$0xf] %vm966, %v880
  %1010 = vst.msk [vmem:[%s3 + $0xac] sm:$0xf] %vm966, %v881
  %1011 = vst.msk [vmem:[%s3 + $0xb0] sm:$0xf] %vm966, %v882
  %1012 = vst.msk [vmem:[%s3 + $0xb4] sm:$0xf] %vm966, %v883
  %1013 = vst.msk [vmem:[%s3 + $0xb8] sm:$0xf] %vm966, %v884
  %1014 = vst.msk [vmem:[%s3 + $0xbc] sm:$0xf] %vm966, %v885
  %1015 = vst.msk [vmem:[%s3 + $0xc0] sm:$0xf] %vm966, %v886
  %1016 = vst.msk [vmem:[%s3 + $0xc4] sm:$0xf] %vm966, %v887
  %1017 = vst.msk [vmem:[%s3 + $0xc8] sm:$0xf] %vm966, %v888
  %1018 = vst.msk [vmem:[%s3 + $0xcc] sm:$0xf] %vm966, %v889
  %1019 = vst.msk [vmem:[%s3 + $0xd0] sm:$0xf] %vm966, %v890
  %1020 = vst.msk [vmem:[%s3 + $0xd4] sm:$0xf] %vm966, %v891
  %1021 = vst.msk [vmem:[%s3 + $0xd8] sm:$0xf] %vm966, %v892
  %1022 = vst.msk [vmem:[%s3 + $0xdc] sm:$0xf] %vm966, %v893
  %1023 = vst.msk [vmem:[%s3 + $0xe0] sm:$0xf] %vm966, %v894
  %1024 = vst.msk [vmem:[%s3 + $0xe4] sm:$0xf] %vm966, %v895
  %1025 = vst.msk [vmem:[%s3 + $0xe8] sm:$0xf] %vm966, %v896
  %1026 = vst.msk [vmem:[%s3 + $0xec] sm:$0xf] %vm966, %v897
  %1027 = vst.msk [vmem:[%s3 + $0xf0] sm:$0xf] %vm966, %v898
  %1028 = vst.msk [vmem:[%s3 + $0xf4] sm:$0xf] %vm966, %v899
  %1029 = vst.msk [vmem:[%s3 + $0xf8] sm:$0xf] %vm966, %v900
  %1030 = vst.msk [vmem:[%s3 + $0xfc] sm:$0xf] %vm966, %v901
  // Predicated region
  $region14: #{shufflenet_v2_forward.19} parent=0 // pred_check
    _
  $region15: #{shufflenet_v2_forward.19} parent=0 // pred_check_branch
    %1032 = sbr.rel (0) target = $region17
  $region16: #{shufflenet_v2_forward.19} parent=0 // pred_region
    _
  $region17: #{shufflenet_v2_forward.19} parent=0 // pred_fallthru
    _
  // Predicated region
  $region18: #{shufflenet_v2_forward.19} parent=0 // pred_check
    _
  $region19: #{shufflenet_v2_forward.19} parent=0 // pred_check_branch
    %1034 = sbr.rel (0) target = $region21
  $region20: #{shufflenet_v2_forward.19} parent=0 // pred_region
    _
  $region21: #{shufflenet_v2_forward.19} parent=0 // pred_fallthru
    _

// kernel: shufflenet_v2_forward.20
$region0: #{shufflenet_v2_forward.20}
  #allocation0 [shape = 'u32[]', space=smem, size = 0x4, offset = 0x4, fixed_abs, tag = 'smem constant byte address 0x4 - core index']
  #allocation1 [shape = 'u32[144,128]{1,0:T(1,128)}', space=vmem, size = 0x12000, scoped, tag = 'internal scratch']
  %s0 = inlined_call_operand.vmem [shape: bf16[9,128,24], index: 0, kind: input, shape index: {}]
  %s1 = inlined_call_operand.vmem [shape: bf16[128,24], index: 1, kind: output, shape index: {}]
  %s2 = sld [smem:[#allocation0]]
  $region14: #{shufflenet_v2_forward.20} parent=0
    _
  %s4 = ssub.s32 1, %s2
  %s5 = scalar_select 0, %s4, %s2
  // Predicated region
  $region2: #{shufflenet_v2_forward.20} parent=0 // pred_check
    _
  $region3: #{shufflenet_v2_forward.20} parent=0 // pred_check_branch
    %7 = sbr.rel (0) target = $region5
  $region4: #{shufflenet_v2_forward.20} parent=0 // pred_region
    _
  $region5: #{shufflenet_v2_forward.20} parent=0 // pred_fallthru
    _
  %v8 = vld [vmem:[%s0] sm:$0xf]
  %v9 = vld [vmem:[%s0 + $0x4] sm:$0xf]
  %v10 = vld [vmem:[%s0 + $0x8] sm:$0xf]
  %v11 = vld [vmem:[%s0 + $0xc] sm:$0xf]
  %v12 = vld [vmem:[%s0 + $0x10] sm:$0xf]
  %v13 = vld [vmem:[%s0 + $0x14] sm:$0xf]
  %v14 = vld [vmem:[%s0 + $0x18] sm:$0xf]
  %v15 = vld [vmem:[%s0 + $0x1c] sm:$0xf]
  %v16 = vld [vmem:[%s0 + $0x20] sm:$0xf]
  %v17 = vld [vmem:[%s0 + $0x24] sm:$0xf]
  %v18 = vld [vmem:[%s0 + $0x28] sm:$0xf]
  %v19 = vld [vmem:[%s0 + $0x2c] sm:$0xf]
  %v20 = vld [vmem:[%s0 + $0x30] sm:$0xf]
  %v21 = vld [vmem:[%s0 + $0x34] sm:$0xf]
  %v22 = vld [vmem:[%s0 + $0x38] sm:$0xf]
  %v23 = vld [vmem:[%s0 + $0x3c] sm:$0xf]
  %v24 = vunpack.c.l.bf16 %v8
  %v25 = vunpack.c.l.bf16 %v9
  %v26 = vunpack.c.l.bf16 %v10
  %v27 = vunpack.c.l.bf16 %v11
  %v28 = vunpack.c.l.bf16 %v12
  %v29 = vunpack.c.l.bf16 %v13
  %v30 = vunpack.c.l.bf16 %v14
  %v31 = vunpack.c.l.bf16 %v15
  %v32 = vunpack.c.l.bf16 %v16
  %v33 = vunpack.c.l.bf16 %v17
  %v34 = vunpack.c.l.bf16 %v18
  %v35 = vunpack.c.l.bf16 %v19
  %v36 = vunpack.c.l.bf16 %v20
  %v37 = vunpack.c.l.bf16 %v21
  %v38 = vunpack.c.l.bf16 %v22
  %v39 = vunpack.c.l.bf16 %v23
  %s40 = scalar_lea.vmem %s0, 64
  %v41 = vld [vmem:[%s40] sm:$0xf]
  %v42 = vld [vmem:[%s40 + $0x4] sm:$0xf]
  %v43 = vld [vmem:[%s40 + $0x8] sm:$0xf]
  %v44 = vld [vmem:[%s40 + $0xc] sm:$0xf]
  %v45 = vld [vmem:[%s40 + $0x10] sm:$0xf]
  %v46 = vld [vmem:[%s40 + $0x14] sm:$0xf]
  %v47 = vld [vmem:[%s40 + $0x18] sm:$0xf]
  %v48 = vld [vmem:[%s40 + $0x1c] sm:$0xf]
  %v49 = vld [vmem:[%s40 + $0x20] sm:$0xf]
  %v50 = vld [vmem:[%s40 + $0x24] sm:$0xf]
  %v51 = vld [vmem:[%s40 + $0x28] sm:$0xf]
  %v52 = vld [vmem:[%s40 + $0x2c] sm:$0xf]
  %v53 = vld [vmem:[%s40 + $0x30] sm:$0xf]
  %v54 = vld [vmem:[%s40 + $0x34] sm:$0xf]
  %v55 = vld [vmem:[%s40 + $0x38] sm:$0xf]
  %v56 = vld [vmem:[%s40 + $0x3c] sm:$0xf]
  %v57 = vunpack.c.l.bf16 %v41
  %v58 = vunpack.c.l.bf16 %v42
  %v59 = vunpack.c.l.bf16 %v43
  %v60 = vunpack.c.l.bf16 %v44
  %v61 = vunpack.c.l.bf16 %v45
  %v62 = vunpack.c.l.bf16 %v46
  %v63 = vunpack.c.l.bf16 %v47
  %v64 = vunpack.c.l.bf16 %v48
  %v65 = vunpack.c.l.bf16 %v49
  %v66 = vunpack.c.l.bf16 %v50
  %v67 = vunpack.c.l.bf16 %v51
  %v68 = vunpack.c.l.bf16 %v52
  %v69 = vunpack.c.l.bf16 %v53
  %v70 = vunpack.c.l.bf16 %v54
  %v71 = vunpack.c.l.bf16 %v55
  %v72 = vunpack.c.l.bf16 %v56
  %v73 = vmax.f32 %v24, %v57
  %v74 = vmax.f32 %v25, %v58
  %v75 = vmax.f32 %v26, %v59
  %v76 = vmax.f32 %v27, %v60
  %v77 = vmax.f32 %v28, %v61
  %v78 = vmax.f32 %v29, %v62
  %v79 = vmax.f32 %v30, %v63
  %v80 = vmax.f32 %v31, %v64
  %v81 = vmax.f32 %v32, %v65
  %v82 = vmax.f32 %v33, %v66
  %v83 = vmax.f32 %v34, %v67
  %v84 = vmax.f32 %v35, %v68
  %v85 = vmax.f32 %v36, %v69
  %v86 = vmax.f32 %v37, %v70
  %v87 = vmax.f32 %v38, %v71
  %v88 = vmax.f32 %v39, %v72
  %s89 = scalar_lea.vmem %s0, 128
  %v90 = vld [vmem:[%s89] sm:$0xf]
  %v91 = vld [vmem:[%s89 + $0x4] sm:$0xf]
  %v92 = vld [vmem:[%s89 + $0x8] sm:$0xf]
  %v93 = vld [vmem:[%s89 + $0xc] sm:$0xf]
  %v94 = vld [vmem:[%s89 + $0x10] sm:$0xf]
  %v95 = vld [vmem:[%s89 + $0x14] sm:$0xf]
  %v96 = vld [vmem:[%s89 + $0x18] sm:$0xf]
  %v97 = vld [vmem:[%s89 + $0x1c] sm:$0xf]
  %v98 = vld [vmem:[%s89 + $0x20] sm:$0xf]
  %v99 = vld [vmem:[%s89 + $0x24] sm:$0xf]
  %v100 = vld [vmem:[%s89 + $0x28] sm:$0xf]
  %v101 = vld [vmem:[%s89 + $0x2c] sm:$0xf]
  %v102 = vld [vmem:[%s89 + $0x30] sm:$0xf]
  %v103 = vld [vmem:[%s89 + $0x34] sm:$0xf]
  %v104 = vld [vmem:[%s89 + $0x38] sm:$0xf]
  %v105 = vld [vmem:[%s89 + $0x3c] sm:$0xf]
  %v106 = vunpack.c.l.bf16 %v90
  %v107 = vunpack.c.l.bf16 %v91
  %v108 = vunpack.c.l.bf16 %v92
  %v109 = vunpack.c.l.bf16 %v93
  %v110 = vunpack.c.l.bf16 %v94
  %v111 = vunpack.c.l.bf16 %v95
  %v112 = vunpack.c.l.bf16 %v96
  %v113 = vunpack.c.l.bf16 %v97
  %v114 = vunpack.c.l.bf16 %v98
  %v115 = vunpack.c.l.bf16 %v99
  %v116 = vunpack.c.l.bf16 %v100
  %v117 = vunpack.c.l.bf16 %v101
  %v118 = vunpack.c.l.bf16 %v102
  %v119 = vunpack.c.l.bf16 %v103
  %v120 = vunpack.c.l.bf16 %v104
  %v121 = vunpack.c.l.bf16 %v105
  %v122 = vmax.f32 %v73, %v106
  %v123 = vmax.f32 %v74, %v107
  %v124 = vmax.f32 %v75, %v108
  %v125 = vmax.f32 %v76, %v109
  %v126 = vmax.f32 %v77, %v110
  %v127 = vmax.f32 %v78, %v111
  %v128 = vmax.f32 %v79, %v112
  %v129 = vmax.f32 %v80, %v113
  %v130 = vmax.f32 %v81, %v114
  %v131 = vmax.f32 %v82, %v115
  %v132 = vmax.f32 %v83, %v116
  %v133 = vmax.f32 %v84, %v117
  %v134 = vmax.f32 %v85, %v118
  %v135 = vmax.f32 %v86, %v119
  %v136 = vmax.f32 %v87, %v120
  %v137 = vmax.f32 %v88, %v121
  %s138 = scalar_lea.vmem %s0, 192
  %v139 = vld [vmem:[%s138] sm:$0xf]
  %v140 = vld [vmem:[%s138 + $0x4] sm:$0xf]
  %v141 = vld [vmem:[%s138 + $0x8] sm:$0xf]
  %v142 = vld [vmem:[%s138 + $0xc] sm:$0xf]
  %v143 = vld [vmem:[%s138 + $0x10] sm:$0xf]
  %v144 = vld [vmem:[%s138 + $0x14] sm:$0xf]
  %v145 = vld [vmem:[%s138 + $0x18] sm:$0xf]
  %v146 = vld [vmem:[%s138 + $0x1c] sm:$0xf]
  %v147 = vld [vmem:[%s138 + $0x20] sm:$0xf]
  %v148 = vld [vmem:[%s138 + $0x24] sm:$0xf]
  %v149 = vld [vmem:[%s138 + $0x28] sm:$0xf]
  %v150 = vld [vmem:[%s138 + $0x2c] sm:$0xf]
  %v151 = vld [vmem:[%s138 + $0x30] sm:$0xf]
  %v152 = vld [vmem:[%s138 + $0x34] sm:$0xf]
  %v153 = vld [vmem:[%s138 + $0x38] sm:$0xf]
  %v154 = vld [vmem:[%s138 + $0x3c] sm:$0xf]
  %v155 = vunpack.c.l.bf16 %v139
  %v156 = vunpack.c.l.bf16 %v140
  %v157 = vunpack.c.l.bf16 %v141
  %v158 = vunpack.c.l.bf16 %v142
  %v159 = vunpack.c.l.bf16 %v143
  %v160 = vunpack.c.l.bf16 %v144
  %v161 = vunpack.c.l.bf16 %v145
  %v162 = vunpack.c.l.bf16 %v146
  %v163 = vunpack.c.l.bf16 %v147
  %v164 = vunpack.c.l.bf16 %v148
  %v165 = vunpack.c.l.bf16 %v149
  %v166 = vunpack.c.l.bf16 %v150
  %v167 = vunpack.c.l.bf16 %v151
  %v168 = vunpack.c.l.bf16 %v152
  %v169 = vunpack.c.l.bf16 %v153
  %v170 = vunpack.c.l.bf16 %v154
  %v171 = vmax.f32 %v122, %v155
  %v172 = vmax.f32 %v123, %v156
  %v173 = vmax.f32 %v124, %v157
  %v174 = vmax.f32 %v125, %v158
  %v175 = vmax.f32 %v126, %v159
  %v176 = vmax.f32 %v127, %v160
  %v177 = vmax.f32 %v128, %v161
  %v178 = vmax.f32 %v129, %v162
  %v179 = vmax.f32 %v130, %v163
  %v180 = vmax.f32 %v131, %v164
  %v181 = vmax.f32 %v132, %v165
  %v182 = vmax.f32 %v133, %v166
  %v183 = vmax.f32 %v134, %v167
  %v184 = vmax.f32 %v135, %v168
  %v185 = vmax.f32 %v136, %v169
  %v186 = vmax.f32 %v137, %v170
  %s187 = scalar_lea.vmem %s0, 256
  %v188 = vld [vmem:[%s187] sm:$0xf]
  %v189 = vld [vmem:[%s187 + $0x4] sm:$0xf]
  %v190 = vld [vmem:[%s187 + $0x8] sm:$0xf]
  %v191 = vld [vmem:[%s187 + $0xc] sm:$0xf]
  %v192 = vld [vmem:[%s187 + $0x10] sm:$0xf]
  %v193 = vld [vmem:[%s187 + $0x14] sm:$0xf]
  %v194 = vld [vmem:[%s187 + $0x18] sm:$0xf]
  %v195 = vld [vmem:[%s187 + $0x1c] sm:$0xf]
  %v196 = vld [vmem:[%s187 + $0x20] sm:$0xf]
  %v197 = vld [vmem:[%s187 + $0x24] sm:$0xf]
  %v198 = vld [vmem:[%s187 + $0x28] sm:$0xf]
  %v199 = vld [vmem:[%s187 + $0x2c] sm:$0xf]
  %v200 = vld [vmem:[%s187 + $0x30] sm:$0xf]
  %v201 = vld [vmem:[%s187 + $0x34] sm:$0xf]
  %v202 = vld [vmem:[%s187 + $0x38] sm:$0xf]
  %v203 = vld [vmem:[%s187 + $0x3c] sm:$0xf]
  %v204 = vunpack.c.l.bf16 %v188
  %v205 = vunpack.c.l.bf16 %v189
  %v206 = vunpack.c.l.bf16 %v190
  %v207 = vunpack.c.l.bf16 %v191
  %v208 = vunpack.c.l.bf16 %v192
  %v209 = vunpack.c.l.bf16 %v193
  %v210 = vunpack.c.l.bf16 %v194
  %v211 = vunpack.c.l.bf16 %v195
  %v212 = vunpack.c.l.bf16 %v196
  %v213 = vunpack.c.l.bf16 %v197
  %v214 = vunpack.c.l.bf16 %v198
  %v215 = vunpack.c.l.bf16 %v199
  %v216 = vunpack.c.l.bf16 %v200
  %v217 = vunpack.c.l.bf16 %v201
  %v218 = vunpack.c.l.bf16 %v202
  %v219 = vunpack.c.l.bf16 %v203
  %v220 = vmax.f32 %v171, %v204
  %v221 = vmax.f32 %v172, %v205
  %v222 = vmax.f32 %v173, %v206
  %v223 = vmax.f32 %v174, %v207
  %v224 = vmax.f32 %v175, %v208
  %v225 = vmax.f32 %v176, %v209
  %v226 = vmax.f32 %v177, %v210
  %v227 = vmax.f32 %v178, %v211
  %v228 = vmax.f32 %v179, %v212
  %v229 = vmax.f32 %v180, %v213
  %v230 = vmax.f32 %v181, %v214
  %v231 = vmax.f32 %v182, %v215
  %v232 = vmax.f32 %v183, %v216
  %v233 = vmax.f32 %v184, %v217
  %v234 = vmax.f32 %v185, %v218
  %v235 = vmax.f32 %v186, %v219
  %s236 = scalar_lea.vmem %s0, 320
  %v237 = vld [vmem:[%s236] sm:$0xf]
  %v238 = vld [vmem:[%s236 + $0x4] sm:$0xf]
  %v239 = vld [vmem:[%s236 + $0x8] sm:$0xf]
  %v240 = vld [vmem:[%s236 + $0xc] sm:$0xf]
  %v241 = vld [vmem:[%s236 + $0x10] sm:$0xf]
  %v242 = vld [vmem:[%s236 + $0x14] sm:$0xf]
  %v243 = vld [vmem:[%s236 + $0x18] sm:$0xf]
  %v244 = vld [vmem:[%s236 + $0x1c] sm:$0xf]
  %v245 = vld [vmem:[%s236 + $0x20] sm:$0xf]
  %v246 = vld [vmem:[%s236 + $0x24] sm:$0xf]
  %v247 = vld [vmem:[%s236 + $0x28] sm:$0xf]
  %v248 = vld [vmem:[%s236 + $0x2c] sm:$0xf]
  %v249 = vld [vmem:[%s236 + $0x30] sm:$0xf]
  %v250 = vld [vmem:[%s236 + $0x34] sm:$0xf]
  %v251 = vld [vmem:[%s236 + $0x38] sm:$0xf]
  %v252 = vld [vmem:[%s236 + $0x3c] sm:$0xf]
  %v253 = vunpack.c.l.bf16 %v237
  %v254 = vunpack.c.l.bf16 %v238
  %v255 = vunpack.c.l.bf16 %v239
  %v256 = vunpack.c.l.bf16 %v240
  %v257 = vunpack.c.l.bf16 %v241
  %v258 = vunpack.c.l.bf16 %v242
  %v259 = vunpack.c.l.bf16 %v243
  %v260 = vunpack.c.l.bf16 %v244
  %v261 = vunpack.c.l.bf16 %v245
  %v262 = vunpack.c.l.bf16 %v246
  %v263 = vunpack.c.l.bf16 %v247
  %v264 = vunpack.c.l.bf16 %v248
  %v265 = vunpack.c.l.bf16 %v249
  %v266 = vunpack.c.l.bf16 %v250
  %v267 = vunpack.c.l.bf16 %v251
  %v268 = vunpack.c.l.bf16 %v252
  %v269 = vmax.f32 %v220, %v253
  %v270 = vmax.f32 %v221, %v254
  %v271 = vmax.f32 %v222, %v255
  %v272 = vmax.f32 %v223, %v256
  %v273 = vmax.f32 %v224, %v257
  %v274 = vmax.f32 %v225, %v258
  %v275 = vmax.f32 %v226, %v259
  %v276 = vmax.f32 %v227, %v260
  %v277 = vmax.f32 %v228, %v261
  %v278 = vmax.f32 %v229, %v262
  %v279 = vmax.f32 %v230, %v263
  %v280 = vmax.f32 %v231, %v264
  %v281 = vmax.f32 %v232, %v265
  %v282 = vmax.f32 %v233, %v266
  %v283 = vmax.f32 %v234, %v267
  %v284 = vmax.f32 %v235, %v268
  %s285 = scalar_lea.vmem %s0, 384
  %v286 = vld [vmem:[%s285] sm:$0xf]
  %v287 = vld [vmem:[%s285 + $0x4] sm:$0xf]
  %v288 = vld [vmem:[%s285 + $0x8] sm:$0xf]
  %v289 = vld [vmem:[%s285 + $0xc] sm:$0xf]
  %v290 = vld [vmem:[%s285 + $0x10] sm:$0xf]
  %v291 = vld [vmem:[%s285 + $0x14] sm:$0xf]
  %v292 = vld [vmem:[%s285 + $0x18] sm:$0xf]
  %v293 = vld [vmem:[%s285 + $0x1c] sm:$0xf]
  %v294 = vld [vmem:[%s285 + $0x20] sm:$0xf]
  %v295 = vld [vmem:[%s285 + $0x24] sm:$0xf]
  %v296 = vld [vmem:[%s285 + $0x28] sm:$0xf]
  %v297 = vld [vmem:[%s285 + $0x2c] sm:$0xf]
  %v298 = vld [vmem:[%s285 + $0x30] sm:$0xf]
  %v299 = vld [vmem:[%s285 + $0x34] sm:$0xf]
  %v300 = vld [vmem:[%s285 + $0x38] sm:$0xf]
  %v301 = vld [vmem:[%s285 + $0x3c] sm:$0xf]
  %v302 = vunpack.c.l.bf16 %v286
  %v303 = vunpack.c.l.bf16 %v287
  %v304 = vunpack.c.l.bf16 %v288
  %v305 = vunpack.c.l.bf16 %v289
  %v306 = vunpack.c.l.bf16 %v290
  %v307 = vunpack.c.l.bf16 %v291
  %v308 = vunpack.c.l.bf16 %v292
  %v309 = vunpack.c.l.bf16 %v293
  %v310 = vunpack.c.l.bf16 %v294
  %v311 = vunpack.c.l.bf16 %v295
  %v312 = vunpack.c.l.bf16 %v296
  %v313 = vunpack.c.l.bf16 %v297
  %v314 = vunpack.c.l.bf16 %v298
  %v315 = vunpack.c.l.bf16 %v299
  %v316 = vunpack.c.l.bf16 %v300
  %v317 = vunpack.c.l.bf16 %v301
  %v318 = vmax.f32 %v269, %v302
  %v319 = vmax.f32 %v270, %v303
  %v320 = vmax.f32 %v271, %v304
  %v321 = vmax.f32 %v272, %v305
  %v322 = vmax.f32 %v273, %v306
  %v323 = vmax.f32 %v274, %v307
  %v324 = vmax.f32 %v275, %v308
  %v325 = vmax.f32 %v276, %v309
  %v326 = vmax.f32 %v277, %v310
  %v327 = vmax.f32 %v278, %v311
  %v328 = vmax.f32 %v279, %v312
  %v329 = vmax.f32 %v280, %v313
  %v330 = vmax.f32 %v281, %v314
  %v331 = vmax.f32 %v282, %v315
  %v332 = vmax.f32 %v283, %v316
  %v333 = vmax.f32 %v284, %v317
  %s334 = scalar_lea.vmem %s0, 448
  %v335 = vld [vmem:[%s334] sm:$0xf]
  %v336 = vld [vmem:[%s334 + $0x4] sm:$0xf]
  %v337 = vld [vmem:[%s334 + $0x8] sm:$0xf]
  %v338 = vld [vmem:[%s334 + $0xc] sm:$0xf]
  %v339 = vld [vmem:[%s334 + $0x10] sm:$0xf]
  %v340 = vld [vmem:[%s334 + $0x14] sm:$0xf]
  %v341 = vld [vmem:[%s334 + $0x18] sm:$0xf]
  %v342 = vld [vmem:[%s334 + $0x1c] sm:$0xf]
  %v343 = vld [vmem:[%s334 + $0x20] sm:$0xf]
  %v344 = vld [vmem:[%s334 + $0x24] sm:$0xf]
  %v345 = vld [vmem:[%s334 + $0x28] sm:$0xf]
  %v346 = vld [vmem:[%s334 + $0x2c] sm:$0xf]
  %v347 = vld [vmem:[%s334 + $0x30] sm:$0xf]
  %v348 = vld [vmem:[%s334 + $0x34] sm:$0xf]
  %v349 = vld [vmem:[%s334 + $0x38] sm:$0xf]
  %v350 = vld [vmem:[%s334 + $0x3c] sm:$0xf]
  %v351 = vunpack.c.l.bf16 %v335
  %v352 = vunpack.c.l.bf16 %v336
  %v353 = vunpack.c.l.bf16 %v337
  %v354 = vunpack.c.l.bf16 %v338
  %v355 = vunpack.c.l.bf16 %v339
  %v356 = vunpack.c.l.bf16 %v340
  %v357 = vunpack.c.l.bf16 %v341
  %v358 = vunpack.c.l.bf16 %v342
  %v359 = vunpack.c.l.bf16 %v343
  %v360 = vunpack.c.l.bf16 %v344
  %v361 = vunpack.c.l.bf16 %v345
  %v362 = vunpack.c.l.bf16 %v346
  %v363 = vunpack.c.l.bf16 %v347
  %v364 = vunpack.c.l.bf16 %v348
  %v365 = vunpack.c.l.bf16 %v349
  %v366 = vunpack.c.l.bf16 %v350
  %v367 = vmax.f32 %v318, %v351
  %v368 = vmax.f32 %v319, %v352
  %v369 = vmax.f32 %v320, %v353
  %v370 = vmax.f32 %v321, %v354
  %v371 = vmax.f32 %v322, %v355
  %v372 = vmax.f32 %v323, %v356
  %v373 = vmax.f32 %v324, %v357
  %v374 = vmax.f32 %v325, %v358
  %v375 = vmax.f32 %v326, %v359
  %v376 = vmax.f32 %v327, %v360
  %v377 = vmax.f32 %v328, %v361
  %v378 = vmax.f32 %v329, %v362
  %v379 = vmax.f32 %v330, %v363
  %v380 = vmax.f32 %v331, %v364
  %v381 = vmax.f32 %v332, %v365
  %v382 = vmax.f32 %v333, %v366
  %s383 = scalar_lea.vmem %s0, 512
  %v384 = vld [vmem:[%s383] sm:$0xf]
  %v385 = vld [vmem:[%s383 + $0x4] sm:$0xf]
  %v386 = vld [vmem:[%s383 + $0x8] sm:$0xf]
  %v387 = vld [vmem:[%s383 + $0xc] sm:$0xf]
  %v388 = vld [vmem:[%s383 + $0x10] sm:$0xf]
  %v389 = vld [vmem:[%s383 + $0x14] sm:$0xf]
  %v390 = vld [vmem:[%s383 + $0x18] sm:$0xf]
  %v391 = vld [vmem:[%s383 + $0x1c] sm:$0xf]
  %v392 = vld [vmem:[%s383 + $0x20] sm:$0xf]
  %v393 = vld [vmem:[%s383 + $0x24] sm:$0xf]
  %v394 = vld [vmem:[%s383 + $0x28] sm:$0xf]
  %v395 = vld [vmem:[%s383 + $0x2c] sm:$0xf]
  %v396 = vld [vmem:[%s383 + $0x30] sm:$0xf]
  %v397 = vld [vmem:[%s383 + $0x34] sm:$0xf]
  %v398 = vld [vmem:[%s383 + $0x38] sm:$0xf]
  %v399 = vld [vmem:[%s383 + $0x3c] sm:$0xf]
  %v400 = vunpack.c.l.bf16 %v384
  %v401 = vunpack.c.l.bf16 %v385
  %v402 = vunpack.c.l.bf16 %v386
  %v403 = vunpack.c.l.bf16 %v387
  %v404 = vunpack.c.l.bf16 %v388
  %v405 = vunpack.c.l.bf16 %v389
  %v406 = vunpack.c.l.bf16 %v390
  %v407 = vunpack.c.l.bf16 %v391
  %v408 = vunpack.c.l.bf16 %v392
  %v409 = vunpack.c.l.bf16 %v393
  %v410 = vunpack.c.l.bf16 %v394
  %v411 = vunpack.c.l.bf16 %v395
  %v412 = vunpack.c.l.bf16 %v396
  %v413 = vunpack.c.l.bf16 %v397
  %v414 = vunpack.c.l.bf16 %v398
  %v415 = vunpack.c.l.bf16 %v399
  %v416 = vmax.f32 %v367, %v400
  %v417 = vmax.f32 %v368, %v401
  %v418 = vmax.f32 %v369, %v402
  %v419 = vmax.f32 %v370, %v403
  %v420 = vmax.f32 %v371, %v404
  %v421 = vmax.f32 %v372, %v405
  %v422 = vmax.f32 %v373, %v406
  %v423 = vmax.f32 %v374, %v407
  %v424 = vmax.f32 %v375, %v408
  %v425 = vmax.f32 %v376, %v409
  %v426 = vmax.f32 %v377, %v410
  %v427 = vmax.f32 %v378, %v411
  %v428 = vmax.f32 %v379, %v412
  %v429 = vmax.f32 %v380, %v413
  %v430 = vmax.f32 %v381, %v414
  %v431 = vmax.f32 %v382, %v415
  %v432 = vpack.c.bf16 %v417, %v416
  %v433 = vpack.c.bf16 %v419, %v418
  %v434 = vpack.c.bf16 %v421, %v420
  %v435 = vpack.c.bf16 %v423, %v422
  %v436 = vpack.c.bf16 %v425, %v424
  %v437 = vpack.c.bf16 %v427, %v426
  %v438 = vpack.c.bf16 %v429, %v428
  %v439 = vpack.c.bf16 %v431, %v430
  %v448 = vunpack.c.l.b16 %v432
  %v449 = vunpack.c.h.b16 %v432
  %v450 = vunpack.c.l.b16 %v433
  %v451 = vunpack.c.h.b16 %v433
  %v452 = vunpack.c.l.b16 %v434
  %v453 = vunpack.c.h.b16 %v434
  %v454 = vunpack.c.l.b16 %v435
  %v455 = vunpack.c.h.b16 %v435
  %v456 = vunpack.c.l.b16 %v436
  %v457 = vunpack.c.h.b16 %v436
  %v458 = vunpack.c.l.b16 %v437
  %v459 = vunpack.c.h.b16 %v437
  %v460 = vunpack.c.l.b16 %v438
  %v461 = vunpack.c.h.b16 %v438
  %v462 = vunpack.c.l.b16 %v439
  %v463 = vunpack.c.h.b16 %v439
  %v464 = vpack.c.b16 %v448, %v448
  %v465 = vpack.c.b16 %v449, %v449
  %v466 = vpack.c.b16 %v450, %v450
  %v467 = vpack.c.b16 %v451, %v451
  %v468 = vpack.c.b16 %v452, %v452
  %v469 = vpack.c.b16 %v453, %v453
  %v470 = vpack.c.b16 %v454, %v454
  %v471 = vpack.c.b16 %v455, %v455
  %v472 = vpack.c.b16 %v456, %v456
  %v473 = vpack.c.b16 %v457, %v457
  %v474 = vpack.c.b16 %v458, %v458
  %v475 = vpack.c.b16 %v459, %v459
  %v476 = vpack.c.b16 %v460, %v460
  %v477 = vpack.c.b16 %v461, %v461
  %v478 = vpack.c.b16 %v462, %v462
  %v479 = vpack.c.b16 %v463, %v463
  %vm496 = vcmask 191488
  %497 = vst.msk [vmem:[%s1] sm:$0xf] %vm496, %v464
  %498 = vst.msk [vmem:[%s1 + $0x4] sm:$0xf] %vm496, %v465
  %499 = vst.msk [vmem:[%s1 + $0x8] sm:$0xf] %vm496, %v466
  %500 = vst.msk [vmem:[%s1 + $0xc] sm:$0xf] %vm496, %v467
  %501 = vst.msk [vmem:[%s1 + $0x10] sm:$0xf] %vm496, %v468
  %502 = vst.msk [vmem:[%s1 + $0x14] sm:$0xf] %vm496, %v469
  %503 = vst.msk [vmem:[%s1 + $0x18] sm:$0xf] %vm496, %v470
  %504 = vst.msk [vmem:[%s1 + $0x1c] sm:$0xf] %vm496, %v471
  %505 = vst.msk [vmem:[%s1 + $0x20] sm:$0xf] %vm496, %v472
  %506 = vst.msk [vmem:[%s1 + $0x24] sm:$0xf] %vm496, %v473
  %507 = vst.msk [vmem:[%s1 + $0x28] sm:$0xf] %vm496, %v474
  %508 = vst.msk [vmem:[%s1 + $0x2c] sm:$0xf] %vm496, %v475
  %509 = vst.msk [vmem:[%s1 + $0x30] sm:$0xf] %vm496, %v476
  %510 = vst.msk [vmem:[%s1 + $0x34] sm:$0xf] %vm496, %v477
  %511 = vst.msk [vmem:[%s1 + $0x38] sm:$0xf] %vm496, %v478
  %512 = vst.msk [vmem:[%s1 + $0x3c] sm:$0xf] %vm496, %v479
  // Predicated region
  $region6: #{shufflenet_v2_forward.20} parent=0 // pred_check
    _
  $region7: #{shufflenet_v2_forward.20} parent=0 // pred_check_branch
    %514 = sbr.rel (0) target = $region9
  $region8: #{shufflenet_v2_forward.20} parent=0 // pred_region
    _
  $region9: #{shufflenet_v2_forward.20} parent=0 // pred_fallthru
    _
  // Predicated region
  $region10: #{shufflenet_v2_forward.20} parent=0 // pred_check
    _
  $region11: #{shufflenet_v2_forward.20} parent=0 // pred_check_branch
    %516 = sbr.rel (0) target = $region13
  $region12: #{shufflenet_v2_forward.20} parent=0 // pred_region
    _
  $region13: #{shufflenet_v2_forward.20} parent=0 // pred_fallthru
    _

// kernel: shufflenet_v2_forward.21
$region0: #{shufflenet_v2_forward.21}
  #allocation0 [shape = 'u32[]', space=smem, size = 0x4, offset = 0x4, fixed_abs, tag = 'smem constant byte address 0x4 - core index']
  #allocation1 [shape = 'u32[144,128]{1,0:T(1,128)}', space=vmem, size = 0x12000, scoped, tag = 'internal scratch']
  %s0 = inlined_call_operand.vmem [shape: bf16[9,32,24], index: 0, kind: input, shape index: {}]
  %s1 = inlined_call_operand.vmem [shape: f32[9,32,1], index: 1, kind: input, shape index: {}]
  %s2 = inlined_call_operand.vmem [shape: f32[9,1,24], index: 2, kind: input, shape index: {}]
  %s3 = inlined_call_operand.vmem [shape: f32[1,24], index: 3, kind: input, shape index: {}]
  %s4 = inlined_call_operand.vmem [shape: bf16[24,29], index: 4, kind: input, shape index: {}]
  %s5 = inlined_call_operand.vmem [shape: f32[1,29], index: 5, kind: input, shape index: {}]
  %s6 = inlined_call_operand.vmem [shape: bf16[24,29], index: 6, kind: input, shape index: {}]
  %s7 = inlined_call_operand.vmem [shape: f32[1,29], index: 7, kind: input, shape index: {}]
  %s8 = inlined_call_operand.vmem [shape: f32[9,1,29], index: 8, kind: input, shape index: {}]
  %s9 = inlined_call_operand.vmem [shape: f32[1,29], index: 9, kind: input, shape index: {}]
  %s10 = inlined_call_operand.vmem [shape: bf16[29,29], index: 10, kind: input, shape index: {}]
  %s11 = inlined_call_operand.vmem [shape: f32[1,29], index: 11, kind: input, shape index: {}]
  %s12 = inlined_call_operand.vmem [shape: bf16[32,29], index: 12, kind: output, shape index: {0}]
  %s13 = inlined_call_operand.vmem [shape: bf16[32,29], index: 13, kind: output, shape index: {1}]
  %14 = xla_tuple %s12, %s13
  %s15 = sld [smem:[#allocation0]]
  $region66: #{shufflenet_v2_forward.21} parent=0
    _
  %s17 = ssub.s32 1, %s15
  %s18 = scalar_select 0, %s17, %s15
  // Predicated region
  $region2: #{shufflenet_v2_forward.21} parent=0 // pred_check
    _
  $region3: #{shufflenet_v2_forward.21} parent=0 // pred_check_branch
    %20 = sbr.rel (0) target = $region5
  $region4: #{shufflenet_v2_forward.21} parent=0 // pred_region
    _
  $region5: #{shufflenet_v2_forward.21} parent=0 // pred_fallthru
    _
  // Predicated region
  $region6: #{shufflenet_v2_forward.21} parent=0 // pred_check
    _
  $region7: #{shufflenet_v2_forward.21} parent=0 // pred_check_branch
    %22 = sbr.rel (0) target = $region9
  $region8: #{shufflenet_v2_forward.21} parent=0 // pred_region
    _
  $region9: #{shufflenet_v2_forward.21} parent=0 // pred_fallthru
    _
  // Predicated region
  $region10: #{shufflenet_v2_forward.21} parent=0 // pred_check
    _
  $region11: #{shufflenet_v2_forward.21} parent=0 // pred_check_branch
    %24 = sbr.rel (0) target = $region13
  $region12: #{shufflenet_v2_forward.21} parent=0 // pred_region
    _
  $region13: #{shufflenet_v2_forward.21} parent=0 // pred_fallthru
    _
  // Predicated region
  $region14: #{shufflenet_v2_forward.21} parent=0 // pred_check
    _
  $region15: #{shufflenet_v2_forward.21} parent=0 // pred_check_branch
    %26 = sbr.rel (0) target = $region17
  $region16: #{shufflenet_v2_forward.21} parent=0 // pred_region
    _
  $region17: #{shufflenet_v2_forward.21} parent=0 // pred_fallthru
    _
  // Predicated region
  $region18: #{shufflenet_v2_forward.21} parent=0 // pred_check
    _
  $region19: #{shufflenet_v2_forward.21} parent=0 // pred_check_branch
    %28 = sbr.rel (0) target = $region21
  $region20: #{shufflenet_v2_forward.21} parent=0 // pred_region
    _
  $region21: #{shufflenet_v2_forward.21} parent=0 // pred_fallthru
    _
  // Predicated region
  $region22: #{shufflenet_v2_forward.21} parent=0 // pred_check
    _
  $region23: #{shufflenet_v2_forward.21} parent=0 // pred_check_branch
    %30 = sbr.rel (0) target = $region25
  $region24: #{shufflenet_v2_forward.21} parent=0 // pred_region
    _
  $region25: #{shufflenet_v2_forward.21} parent=0 // pred_fallthru
    _
  // Predicated region
  $region26: #{shufflenet_v2_forward.21} parent=0 // pred_check
    _
  $region27: #{shufflenet_v2_forward.21} parent=0 // pred_check_branch
    %32 = sbr.rel (0) target = $region29
  $region28: #{shufflenet_v2_forward.21} parent=0 // pred_region
    _
  $region29: #{shufflenet_v2_forward.21} parent=0 // pred_fallthru
    _
  // Predicated region
  $region30: #{shufflenet_v2_forward.21} parent=0 // pred_check
    _
  $region31: #{shufflenet_v2_forward.21} parent=0 // pred_check_branch
    %34 = sbr.rel (0) target = $region33
  $region32: #{shufflenet_v2_forward.21} parent=0 // pred_region
    _
  $region33: #{shufflenet_v2_forward.21} parent=0 // pred_fallthru
    _
  // Predicated region
  $region34: #{shufflenet_v2_forward.21} parent=0 // pred_check
    _
  $region35: #{shufflenet_v2_forward.21} parent=0 // pred_check_branch
    %36 = sbr.rel (0) target = $region37
  $region36: #{shufflenet_v2_forward.21} parent=0 // pred_region
    _
  $region37: #{shufflenet_v2_forward.21} parent=0 // pred_fallthru
    _
  // Predicated region
  $region38: #{shufflenet_v2_forward.21} parent=0 // pred_check
    _
  $region39: #{shufflenet_v2_forward.21} parent=0 // pred_check_branch
    %38 = sbr.rel (0) target = $region41
  $region40: #{shufflenet_v2_forward.21} parent=0 // pred_region
    _
  $region41: #{shufflenet_v2_forward.21} parent=0 // pred_fallthru
    _
  // Predicated region
  $region42: #{shufflenet_v2_forward.21} parent=0 // pred_check
    _
  $region43: #{shufflenet_v2_forward.21} parent=0 // pred_check_branch
    %40 = sbr.rel (0) target = $region45
  $region44: #{shufflenet_v2_forward.21} parent=0 // pred_region
    _
  $region45: #{shufflenet_v2_forward.21} parent=0 // pred_fallthru
    _
  // Predicated region
  $region46: #{shufflenet_v2_forward.21} parent=0 // pred_check
    _
  $region47: #{shufflenet_v2_forward.21} parent=0 // pred_check_branch
    %42 = sbr.rel (0) target = $region49
  $region48: #{shufflenet_v2_forward.21} parent=0 // pred_region
    _
  $region49: #{shufflenet_v2_forward.21} parent=0 // pred_fallthru
    _
  %v44 = vld [vmem:[%s6] sm:$0xf]
  %v45 = vld [vmem:[%s6 + $0x4] sm:$0xf]
  %v46 = vld [vmem:[%s6 + $0x8] sm:$0xf]
  %v47 = vld [vmem:[%s7] sm:$0x1]
  %v48 = vld [vmem:[%s0] sm:$0xf]
  %v49 = vld [vmem:[%s0 + $0x4] sm:$0xf]
  %v50 = vld [vmem:[%s0 + $0x8] sm:$0xf]
  %v51 = vld [vmem:[%s0 + $0xc] sm:$0xf]
  %v52 = vunpack.c.l.bf16 %v48
  %v53 = vunpack.c.l.bf16 %v49
  %v54 = vunpack.c.l.bf16 %v50
  %v55 = vunpack.c.l.bf16 %v51
  %v56 = vld [vmem:[%s2] sm:$0x1]
  %v58 = vlaneseq
  %v59 = vshrl.u32 %v58, 7
  %v60 = vsub.s32 0, %v59
  %v61 = vrot.slane %v56, %v60
  %v63 = vmul.f32 %v52, %v61
  %v64 = vmul.f32 %v53, %v61
  %v65 = vmul.f32 %v54, %v61
  %v66 = vmul.f32 %v55, %v61
  %v67 = vadd.f32 %v63, 0.0
  %v68 = vadd.f32 %v64, 0.0
  %v69 = vadd.f32 %v65, 0.0
  %v70 = vadd.f32 %v66, 0.0
  %v72 = vlaneseq
  %v73 = vshrl.u32 %v72, 7
  %v74 = vsub.s32 0, %v73
  %v75 = vrot.slane %v47, %v74
  %v81 = vunpack.c.l.b16 %v48
  %v82 = vunpack.c.l.b16 %v49
  %v83 = vunpack.c.l.b16 %v50
  %v84 = vunpack.c.l.b16 %v51
  %v85 = vpack.c.b16 %v82, %v81
  %v86 = vpack.c.b16 %v84, %v83
  %v90 = vunpack.c.l.b16 %v44
  %v91 = vunpack.c.l.b16 %v45
  %v92 = vunpack.c.l.b16 %v46
  %v93 = vpack.c.b16 %v91, %v90
  %v94 = vpack.c.b16 %v92, %v92
  %vm96 = vcmask 195584
  %v98 = vsel %vm96, %v85, 0
  %v101 = vsel %vm96, %v86, 0
  %vm103 = vcmask 1043456
  %v105 = vsel %vm103, %v94, 0
  %107 = vmatprep.subr.bf16.mxu0 0
  %108 = vmatpush1.bf16.msra.mxu0 %v93
  %109 = vmatprep.subr.bf16.mxu0 0
  %110 = vmatpush1.bf16.msra.mxu0 %v105
  %111 = vmatprep.subr.bf16.mxu0 0
  %112 = vmatpush1.bf16.msra.mxu0 0
  %113 = vmatprep.subr.bf16.mxu0 0
  %114 = vmatpush1.bf16.msra.mxu0 0
  %115 = vmatprep.subr.bf16.mxu0 0
  %116 = vmatpush1.bf16.msra.mxu0 0
  %117 = vmatprep.subr.bf16.mxu0 0
  %118 = vmatpush1.bf16.msra.mxu0 0
  %119 = vmatprep.subr.bf16.mxu0 0
  %120 = vmatpush1.bf16.msra.mxu0 0
  %121 = vmatprep.subr.bf16.mxu0 0
  %122 = vmatpush1.bf16.msra.mxu0 0
  %123 = vmatprep.subr.bf16.mxu0 0
  %124 = vmatpush1.bf16.msra.mxu0 0
  %125 = vmatprep.subr.bf16.mxu0 0
  %126 = vmatpush1.bf16.msra.mxu0 0
  %127 = vmatprep.subr.bf16.mxu0 0
  %128 = vmatpush1.bf16.msra.mxu0 0
  %129 = vmatprep.subr.bf16.mxu0 0
  %130 = vmatpush1.bf16.msra.mxu0 0
  %131 = vmatprep.subr.bf16.mxu0 0
  %132 = vmatpush1.bf16.msra.mxu0 0
  %133 = vmatprep.subr.bf16.mxu0 0
  %134 = vmatpush1.bf16.msra.mxu0 0
  %135 = vmatprep.subr.bf16.mxu0 0
  %136 = vmatpush1.bf16.msra.mxu0 0
  %137 = vmatprep.subr.bf16.mxu0 0
  %138 = vmatpush1.bf16.msra.mxu0 0
  %139 = vmatprep.mubr.bf16.mxu0 0
  %140 = vmatmul.mubr.bf16.gmra.mrb[0].mxu0 %v98
  %v141 = vpop.f32.mrb[0].mxu0
  %v142 = vadd.f32 %v75, %v141
  %v143 = vpop.f32.mrb[0].mxu0
  %v144 = vpop.f32.mrb[0].mxu0
  %v145 = vadd.f32 %v75, %v144
  %v146 = vpop.f32.mrb[0].mxu0
  %147 = vmatprep.mubr.bf16.mxu0 0
  %148 = vmatmul.mubr.bf16.gmra.mrb[0].mxu0 %v101
  %v149 = vpop.f32.mrb[0].mxu0
  %v150 = vadd.f32 %v75, %v149
  %v151 = vpop.f32.mrb[0].mxu0
  %v152 = vpop.f32.mrb[0].mxu0
  %v153 = vadd.f32 %v75, %v152
  %v154 = vpop.f32.mrb[0].mxu0
  %155 = vdwg.mxu0
  %v156 = vmax.f32 %v142, 0.0
  %v157 = vmax.f32 %v145, 0.0
  %v158 = vmax.f32 %v150, 0.0
  %v159 = vmax.f32 %v153, 0.0
  %v160 = vld [vmem:[%s1] sm:$0xff]
  %v161 = vld [vmem:[%s1 + $0x8] sm:$0xff]
  %v162 = vld [vmem:[%s1 + $0x10] sm:$0xff]
  %v163 = vld [vmem:[%s1 + $0x18] sm:$0xff]
  %165 = vset.pattern.permute.xlu0 0
  %166 = vperm.xlu0 %165, %v160
  %v167 = vpop.permute.xlu0 %166
  %170 = vset.pattern.permute.xlu0 0
  %171 = vperm.xlu0 %170, %v161
  %v172 = vpop.permute.xlu0 %171
  %175 = vset.pattern.permute.xlu0 0
  %176 = vperm.xlu0 %175, %v162
  %v177 = vpop.permute.xlu0 %176
  %180 = vset.pattern.permute.xlu0 0
  %181 = vperm.xlu0 %180, %v163
  %v182 = vpop.permute.xlu0 %181
  %v184 = vmul.f32 %v156, %v167
  %v185 = vmul.f32 %v157, %v172
  %v186 = vmul.f32 %v158, %v177
  %v187 = vmul.f32 %v159, %v182
  %v188 = vld [vmem:[%s8] sm:$0x1]
  %v190 = vlaneseq
  %v191 = vshrl.u32 %v190, 7
  %v192 = vsub.s32 0, %v191
  %v193 = vrot.slane %v188, %v192
  %v195 = vmul.f32 %v184, %v193
  %v196 = vmul.f32 %v185, %v193
  %v197 = vmul.f32 %v186, %v193
  %v198 = vmul.f32 %v187, %v193
  %v199 = vadd.f32 %v195, 0.0
  %v200 = vadd.f32 %v196, 0.0
  %v201 = vadd.f32 %v197, 0.0
  %v202 = vadd.f32 %v198, 0.0
  %s203 = scalar_lea.vmem %s0, 16
  %v204 = vld [vmem:[%s203] sm:$0xf]
  %v205 = vld [vmem:[%s203 + $0x4] sm:$0xf]
  %v206 = vld [vmem:[%s203 + $0x8] sm:$0xf]
  %v207 = vld [vmem:[%s203 + $0xc] sm:$0xf]
  %v208 = vunpack.c.l.bf16 %v204
  %v209 = vunpack.c.l.bf16 %v205
  %v210 = vunpack.c.l.bf16 %v206
  %v211 = vunpack.c.l.bf16 %v207
  %s212 = scalar_lea.vmem %s2, 1
  %v213 = vld [vmem:[%s212] sm:$0x1]
  %v215 = vlaneseq
  %v216 = vshrl.u32 %v215, 7
  %v217 = vsub.s32 0, %v216
  %v218 = vrot.slane %v213, %v217
  %v220 = vmul.f32 %v208, %v218
  %v221 = vmul.f32 %v209, %v218
  %v222 = vmul.f32 %v210, %v218
  %v223 = vmul.f32 %v211, %v218
  %v224 = vadd.f32 %v67, %v220
  %v225 = vadd.f32 %v68, %v221
  %v226 = vadd.f32 %v69, %v222
  %v227 = vadd.f32 %v70, %v223
  %v232 = vunpack.c.l.b16 %v204
  %v233 = vunpack.c.l.b16 %v205
  %v234 = vunpack.c.l.b16 %v206
  %v235 = vunpack.c.l.b16 %v207
  %v236 = vpack.c.b16 %v233, %v232
  %v237 = vpack.c.b16 %v235, %v234
  %v239 = vsel %vm96, %v236, 0
  %v242 = vsel %vm96, %v237, 0
  %244 = vmatprep.subr.bf16.mxu0 0
  %245 = vmatpush1.bf16.msra.mxu0 %v93
  %246 = vmatprep.subr.bf16.mxu0 0
  %247 = vmatpush1.bf16.msra.mxu0 %v105
  %248 = vmatprep.subr.bf16.mxu0 0
  %249 = vmatpush1.bf16.msra.mxu0 0
  %250 = vmatprep.subr.bf16.mxu0 0
  %251 = vmatpush1.bf16.msra.mxu0 0
  %252 = vmatprep.subr.bf16.mxu0 0
  %253 = vmatpush1.bf16.msra.mxu0 0
  %254 = vmatprep.subr.bf16.mxu0 0
  %255 = vmatpush1.bf16.msra.mxu0 0
  %256 = vmatprep.subr.bf16.mxu0 0
  %257 = vmatpush1.bf16.msra.mxu0 0
  %258 = vmatprep.subr.bf16.mxu0 0
  %259 = vmatpush1.bf16.msra.mxu0 0
  %260 = vmatprep.subr.bf16.mxu0 0
  %261 = vmatpush1.bf16.msra.mxu0 0
  %262 = vmatprep.subr.bf16.mxu0 0
  %263 = vmatpush1.bf16.msra.mxu0 0
  %264 = vmatprep.subr.bf16.mxu0 0
  %265 = vmatpush1.bf16.msra.mxu0 0
  %266 = vmatprep.subr.bf16.mxu0 0
  %267 = vmatpush1.bf16.msra.mxu0 0
  %268 = vmatprep.subr.bf16.mxu0 0
  %269 = vmatpush1.bf16.msra.mxu0 0
  %270 = vmatprep.subr.bf16.mxu0 0
  %271 = vmatpush1.bf16.msra.mxu0 0
  %272 = vmatprep.subr.bf16.mxu0 0
  %273 = vmatpush1.bf16.msra.mxu0 0
  %274 = vmatprep.subr.bf16.mxu0 0
  %275 = vmatpush1.bf16.msra.mxu0 0
  %276 = vmatprep.mubr.bf16.mxu0 0
  %277 = vmatmul.mubr.bf16.gmra.mrb[0].mxu0 %v239
  %v278 = vpop.f32.mrb[0].mxu0
  %v279 = vadd.f32 %v75, %v278
  %v280 = vpop.f32.mrb[0].mxu0
  %v281 = vpop.f32.mrb[0].mxu0
  %v282 = vadd.f32 %v75, %v281
  %v283 = vpop.f32.mrb[0].mxu0
  %284 = vmatprep.mubr.bf16.mxu0 0
  %285 = vmatmul.mubr.bf16.gmra.mrb[0].mxu0 %v242
  %v286 = vpop.f32.mrb[0].mxu0
  %v287 = vadd.f32 %v75, %v286
  %v288 = vpop.f32.mrb[0].mxu0
  %v289 = vpop.f32.mrb[0].mxu0
  %v290 = vadd.f32 %v75, %v289
  %v291 = vpop.f32.mrb[0].mxu0
  %292 = vdwg.mxu0
  %v293 = vmax.f32 %v279, 0.0
  %v294 = vmax.f32 %v282, 0.0
  %v295 = vmax.f32 %v287, 0.0
  %v296 = vmax.f32 %v290, 0.0
  %s297 = scalar_lea.vmem %s1, 32
  %v298 = vld [vmem:[%s297] sm:$0xff]
  %v299 = vld [vmem:[%s297 + $0x8] sm:$0xff]
  %v300 = vld [vmem:[%s297 + $0x10] sm:$0xff]
  %v301 = vld [vmem:[%s297 + $0x18] sm:$0xff]
  %303 = vset.pattern.permute.xlu0 0
  %304 = vperm.xlu0 %303, %v298
  %v305 = vpop.permute.xlu0 %304
  %308 = vset.pattern.permute.xlu0 0
  %309 = vperm.xlu0 %308, %v299
  %v310 = vpop.permute.xlu0 %309
  %313 = vset.pattern.permute.xlu0 0
  %314 = vperm.xlu0 %313, %v300
  %v315 = vpop.permute.xlu0 %314
  %318 = vset.pattern.permute.xlu0 0
  %319 = vperm.xlu0 %318, %v301
  %v320 = vpop.permute.xlu0 %319
  %v322 = vmul.f32 %v293, %v305
  %v323 = vmul.f32 %v294, %v310
  %v324 = vmul.f32 %v295, %v315
  %v325 = vmul.f32 %v296, %v320
  %s326 = scalar_lea.vmem %s8, 1
  %v327 = vld [vmem:[%s326] sm:$0x1]
  %v329 = vlaneseq
  %v330 = vshrl.u32 %v329, 7
  %v331 = vsub.s32 0, %v330
  %v332 = vrot.slane %v327, %v331
  %v334 = vmul.f32 %v322, %v332
  %v335 = vmul.f32 %v323, %v332
  %v336 = vmul.f32 %v324, %v332
  %v337 = vmul.f32 %v325, %v332
  %v338 = vadd.f32 %v199, %v334
  %v339 = vadd.f32 %v200, %v335
  %v340 = vadd.f32 %v201, %v336
  %v341 = vadd.f32 %v202, %v337
  %s342 = scalar_lea.vmem %s0, 32
  %v343 = vld [vmem:[%s342] sm:$0xf]
  %v344 = vld [vmem:[%s342 + $0x4] sm:$0xf]
  %v345 = vld [vmem:[%s342 + $0x8] sm:$0xf]
  %v346 = vld [vmem:[%s342 + $0xc] sm:$0xf]
  %v347 = vunpack.c.l.bf16 %v343
  %v348 = vunpack.c.l.bf16 %v344
  %v349 = vunpack.c.l.bf16 %v345
  %v350 = vunpack.c.l.bf16 %v346
  %s351 = scalar_lea.vmem %s2, 2
  %v352 = vld [vmem:[%s351] sm:$0x1]
  %v354 = vlaneseq
  %v355 = vshrl.u32 %v354, 7
  %v356 = vsub.s32 0, %v355
  %v357 = vrot.slane %v352, %v356
  %v359 = vmul.f32 %v347, %v357
  %v360 = vmul.f32 %v348, %v357
  %v361 = vmul.f32 %v349, %v357
  %v362 = vmul.f32 %v350, %v357
  %v363 = vadd.f32 %v224, %v359
  %v364 = vadd.f32 %v225, %v360
  %v365 = vadd.f32 %v226, %v361
  %v366 = vadd.f32 %v227, %v362
  %v371 = vunpack.c.l.b16 %v343
  %v372 = vunpack.c.l.b16 %v344
  %v373 = vunpack.c.l.b16 %v345
  %v374 = vunpack.c.l.b16 %v346
  %v375 = vpack.c.b16 %v372, %v371
  %v376 = vpack.c.b16 %v374, %v373
  %v378 = vsel %vm96, %v375, 0
  %v381 = vsel %vm96, %v376, 0
  %383 = vmatprep.subr.bf16.mxu0 0
  %384 = vmatpush1.bf16.msra.mxu0 %v93
  %385 = vmatprep.subr.bf16.mxu0 0
  %386 = vmatpush1.bf16.msra.mxu0 %v105
  %387 = vmatprep.subr.bf16.mxu0 0
  %388 = vmatpush1.bf16.msra.mxu0 0
  %389 = vmatprep.subr.bf16.mxu0 0
  %390 = vmatpush1.bf16.msra.mxu0 0
  %391 = vmatprep.subr.bf16.mxu0 0
  %392 = vmatpush1.bf16.msra.mxu0 0
  %393 = vmatprep.subr.bf16.mxu0 0
  %394 = vmatpush1.bf16.msra.mxu0 0
  %395 = vmatprep.subr.bf16.mxu0 0
  %396 = vmatpush1.bf16.msra.mxu0 0
  %397 = vmatprep.subr.bf16.mxu0 0
  %398 = vmatpush1.bf16.msra.mxu0 0
  %399 = vmatprep.subr.bf16.mxu0 0
  %400 = vmatpush1.bf16.msra.mxu0 0
  %401 = vmatprep.subr.bf16.mxu0 0
  %402 = vmatpush1.bf16.msra.mxu0 0
  %403 = vmatprep.subr.bf16.mxu0 0
  %404 = vmatpush1.bf16.msra.mxu0 0
  %405 = vmatprep.subr.bf16.mxu0 0
  %406 = vmatpush1.bf16.msra.mxu0 0
  %407 = vmatprep.subr.bf16.mxu0 0
  %408 = vmatpush1.bf16.msra.mxu0 0
  %409 = vmatprep.subr.bf16.mxu0 0
  %410 = vmatpush1.bf16.msra.mxu0 0
  %411 = vmatprep.subr.bf16.mxu0 0
  %412 = vmatpush1.bf16.msra.mxu0 0
  %413 = vmatprep.subr.bf16.mxu0 0
  %414 = vmatpush1.bf16.msra.mxu0 0
  %415 = vmatprep.mubr.bf16.mxu0 0
  %416 = vmatmul.mubr.bf16.gmra.mrb[0].mxu0 %v378
  %v417 = vpop.f32.mrb[0].mxu0
  %v418 = vadd.f32 %v75, %v417
  %v419 = vpop.f32.mrb[0].mxu0
  %v420 = vpop.f32.mrb[0].mxu0
  %v421 = vadd.f32 %v75, %v420
  %v422 = vpop.f32.mrb[0].mxu0
  %423 = vmatprep.mubr.bf16.mxu0 0
  %424 = vmatmul.mubr.bf16.gmra.mrb[0].mxu0 %v381
  %v425 = vpop.f32.mrb[0].mxu0
  %v426 = vadd.f32 %v75, %v425
  %v427 = vpop.f32.mrb[0].mxu0
  %v428 = vpop.f32.mrb[0].mxu0
  %v429 = vadd.f32 %v75, %v428
  %v430 = vpop.f32.mrb[0].mxu0
  %431 = vdwg.mxu0
  %v432 = vmax.f32 %v418, 0.0
  %v433 = vmax.f32 %v421, 0.0
  %v434 = vmax.f32 %v426, 0.0
  %v435 = vmax.f32 %v429, 0.0
  %s436 = scalar_lea.vmem %s1, 64
  %v437 = vld [vmem:[%s436] sm:$0xff]
  %v438 = vld [vmem:[%s436 + $0x8] sm:$0xff]
  %v439 = vld [vmem:[%s436 + $0x10] sm:$0xff]
  %v440 = vld [vmem:[%s436 + $0x18] sm:$0xff]
  %442 = vset.pattern.permute.xlu0 0
  %443 = vperm.xlu0 %442, %v437
  %v444 = vpop.permute.xlu0 %443
  %447 = vset.pattern.permute.xlu0 0
  %448 = vperm.xlu0 %447, %v438
  %v449 = vpop.permute.xlu0 %448
  %452 = vset.pattern.permute.xlu0 0
  %453 = vperm.xlu0 %452, %v439
  %v454 = vpop.permute.xlu0 %453
  %457 = vset.pattern.permute.xlu0 0
  %458 = vperm.xlu0 %457, %v440
  %v459 = vpop.permute.xlu0 %458
  %v461 = vmul.f32 %v432, %v444
  %v462 = vmul.f32 %v433, %v449
  %v463 = vmul.f32 %v434, %v454
  %v464 = vmul.f32 %v435, %v459
  %s465 = scalar_lea.vmem %s8, 2
  %v466 = vld [vmem:[%s465] sm:$0x1]
  %v468 = vlaneseq
  %v469 = vshrl.u32 %v468, 7
  %v470 = vsub.s32 0, %v469
  %v471 = vrot.slane %v466, %v470
  %v473 = vmul.f32 %v461, %v471
  %v474 = vmul.f32 %v462, %v471
  %v475 = vmul.f32 %v463, %v471
  %v476 = vmul.f32 %v464, %v471
  %v477 = vadd.f32 %v338, %v473
  %v478 = vadd.f32 %v339, %v474
  %v479 = vadd.f32 %v340, %v475
  %v480 = vadd.f32 %v341, %v476
  %s481 = scalar_lea.vmem %s0, 48
  %v482 = vld [vmem:[%s481] sm:$0xf]
  %v483 = vld [vmem:[%s481 + $0x4] sm:$0xf]
  %v484 = vld [vmem:[%s481 + $0x8] sm:$0xf]
  %v485 = vld [vmem:[%s481 + $0xc] sm:$0xf]
  %v486 = vunpack.c.l.bf16 %v482
  %v487 = vunpack.c.l.bf16 %v483
  %v488 = vunpack.c.l.bf16 %v484
  %v489 = vunpack.c.l.bf16 %v485
  %s490 = scalar_lea.vmem %s2, 3
  %v491 = vld [vmem:[%s490] sm:$0x1]
  %v493 = vlaneseq
  %v494 = vshrl.u32 %v493, 7
  %v495 = vsub.s32 0, %v494
  %v496 = vrot.slane %v491, %v495
  %v498 = vmul.f32 %v486, %v496
  %v499 = vmul.f32 %v487, %v496
  %v500 = vmul.f32 %v488, %v496
  %v501 = vmul.f32 %v489, %v496
  %v502 = vadd.f32 %v363, %v498
  %v503 = vadd.f32 %v364, %v499
  %v504 = vadd.f32 %v365, %v500
  %v505 = vadd.f32 %v366, %v501
  %v510 = vunpack.c.l.b16 %v482
  %v511 = vunpack.c.l.b16 %v483
  %v512 = vunpack.c.l.b16 %v484
  %v513 = vunpack.c.l.b16 %v485
  %v514 = vpack.c.b16 %v511, %v510
  %v515 = vpack.c.b16 %v513, %v512
  %v517 = vsel %vm96, %v514, 0
  %v520 = vsel %vm96, %v515, 0
  %522 = vmatprep.subr.bf16.mxu0 0
  %523 = vmatpush1.bf16.msra.mxu0 %v93
  %524 = vmatprep.subr.bf16.mxu0 0
  %525 = vmatpush1.bf16.msra.mxu0 %v105
  %526 = vmatprep.subr.bf16.mxu0 0
  %527 = vmatpush1.bf16.msra.mxu0 0
  %528 = vmatprep.subr.bf16.mxu0 0
  %529 = vmatpush1.bf16.msra.mxu0 0
  %530 = vmatprep.subr.bf16.mxu0 0
  %531 = vmatpush1.bf16.msra.mxu0 0
  %532 = vmatprep.subr.bf16.mxu0 0
  %533 = vmatpush1.bf16.msra.mxu0 0
  %534 = vmatprep.subr.bf16.mxu0 0
  %535 = vmatpush1.bf16.msra.mxu0 0
  %536 = vmatprep.subr.bf16.mxu0 0
  %537 = vmatpush1.bf16.msra.mxu0 0
  %538 = vmatprep.subr.bf16.mxu0 0
  %539 = vmatpush1.bf16.msra.mxu0 0
  %540 = vmatprep.subr.bf16.mxu0 0
  %541 = vmatpush1.bf16.msra.mxu0 0
  %542 = vmatprep.subr.bf16.mxu0 0
  %543 = vmatpush1.bf16.msra.mxu0 0
  %544 = vmatprep.subr.bf16.mxu0 0
  %545 = vmatpush1.bf16.msra.mxu0 0
  %546 = vmatprep.subr.bf16.mxu0 0
  %547 = vmatpush1.bf16.msra.mxu0 0
  %548 = vmatprep.subr.bf16.mxu0 0
  %549 = vmatpush1.bf16.msra.mxu0 0
  %550 = vmatprep.subr.bf16.mxu0 0
  %551 = vmatpush1.bf16.msra.mxu0 0
  %552 = vmatprep.subr.bf16.mxu0 0
  %553 = vmatpush1.bf16.msra.mxu0 0
  %554 = vmatprep.mubr.bf16.mxu0 0
  %555 = vmatmul.mubr.bf16.gmra.mrb[0].mxu0 %v517
  %v556 = vpop.f32.mrb[0].mxu0
  %v557 = vadd.f32 %v75, %v556
  %v558 = vpop.f32.mrb[0].mxu0
  %v559 = vpop.f32.mrb[0].mxu0
  %v560 = vadd.f32 %v75, %v559
  %v561 = vpop.f32.mrb[0].mxu0
  %562 = vmatprep.mubr.bf16.mxu0 0
  %563 = vmatmul.mubr.bf16.gmra.mrb[0].mxu0 %v520
  %v564 = vpop.f32.mrb[0].mxu0
  %v565 = vadd.f32 %v75, %v564
  %v566 = vpop.f32.mrb[0].mxu0
  %v567 = vpop.f32.mrb[0].mxu0
  %v568 = vadd.f32 %v75, %v567
  %v569 = vpop.f32.mrb[0].mxu0
  %570 = vdwg.mxu0
  %v571 = vmax.f32 %v557, 0.0
  %v572 = vmax.f32 %v560, 0.0
  %v573 = vmax.f32 %v565, 0.0
  %v574 = vmax.f32 %v568, 0.0
  %s575 = scalar_lea.vmem %s1, 96
  %v576 = vld [vmem:[%s575] sm:$0xff]
  %v577 = vld [vmem:[%s575 + $0x8] sm:$0xff]
  %v578 = vld [vmem:[%s575 + $0x10] sm:$0xff]
  %v579 = vld [vmem:[%s575 + $0x18] sm:$0xff]
  %581 = vset.pattern.permute.xlu0 0
  %582 = vperm.xlu0 %581, %v576
  %v583 = vpop.permute.xlu0 %582
  %586 = vset.pattern.permute.xlu0 0
  %587 = vperm.xlu0 %586, %v577
  %v588 = vpop.permute.xlu0 %587
  %591 = vset.pattern.permute.xlu0 0
  %592 = vperm.xlu0 %591, %v578
  %v593 = vpop.permute.xlu0 %592
  %596 = vset.pattern.permute.xlu0 0
  %597 = vperm.xlu0 %596, %v579
  %v598 = vpop.permute.xlu0 %597
  %v600 = vmul.f32 %v571, %v583
  %v601 = vmul.f32 %v572, %v588
  %v602 = vmul.f32 %v573, %v593
  %v603 = vmul.f32 %v574, %v598
  %s604 = scalar_lea.vmem %s8, 3
  %v605 = vld [vmem:[%s604] sm:$0x1]
  %v607 = vlaneseq
  %v608 = vshrl.u32 %v607, 7
  %v609 = vsub.s32 0, %v608
  %v610 = vrot.slane %v605, %v609
  %v612 = vmul.f32 %v600, %v610
  %v613 = vmul.f32 %v601, %v610
  %v614 = vmul.f32 %v602, %v610
  %v615 = vmul.f32 %v603, %v610
  %v616 = vadd.f32 %v477, %v612
  %v617 = vadd.f32 %v478, %v613
  %v618 = vadd.f32 %v479, %v614
  %v619 = vadd.f32 %v480, %v615
  %s620 = scalar_lea.vmem %s0, 64
  %v621 = vld [vmem:[%s620] sm:$0xf]
  %v622 = vld [vmem:[%s620 + $0x4] sm:$0xf]
  %v623 = vld [vmem:[%s620 + $0x8] sm:$0xf]
  %v624 = vld [vmem:[%s620 + $0xc] sm:$0xf]
  %v625 = vunpack.c.l.bf16 %v621
  %v626 = vunpack.c.l.bf16 %v622
  %v627 = vunpack.c.l.bf16 %v623
  %v628 = vunpack.c.l.bf16 %v624
  %s629 = scalar_lea.vmem %s2, 4
  %v630 = vld [vmem:[%s629] sm:$0x1]
  %v632 = vlaneseq
  %v633 = vshrl.u32 %v632, 7
  %v634 = vsub.s32 0, %v633
  %v635 = vrot.slane %v630, %v634
  %v637 = vmul.f32 %v625, %v635
  %v638 = vmul.f32 %v626, %v635
  %v639 = vmul.f32 %v627, %v635
  %v640 = vmul.f32 %v628, %v635
  %v641 = vadd.f32 %v502, %v637
  %v642 = vadd.f32 %v503, %v638
  %v643 = vadd.f32 %v504, %v639
  %v644 = vadd.f32 %v505, %v640
  %v649 = vunpack.c.l.b16 %v621
  %v650 = vunpack.c.l.b16 %v622
  %v651 = vunpack.c.l.b16 %v623
  %v652 = vunpack.c.l.b16 %v624
  %v653 = vpack.c.b16 %v650, %v649
  %v654 = vpack.c.b16 %v652, %v651
  %v656 = vsel %vm96, %v653, 0
  %v659 = vsel %vm96, %v654, 0
  %661 = vmatprep.subr.bf16.mxu0 0
  %662 = vmatpush1.bf16.msra.mxu0 %v93
  %663 = vmatprep.subr.bf16.mxu0 0
  %664 = vmatpush1.bf16.msra.mxu0 %v105
  %665 = vmatprep.subr.bf16.mxu0 0
  %666 = vmatpush1.bf16.msra.mxu0 0
  %667 = vmatprep.subr.bf16.mxu0 0
  %668 = vmatpush1.bf16.msra.mxu0 0
  %669 = vmatprep.subr.bf16.mxu0 0
  %670 = vmatpush1.bf16.msra.mxu0 0
  %671 = vmatprep.subr.bf16.mxu0 0
  %672 = vmatpush1.bf16.msra.mxu0 0
  %673 = vmatprep.subr.bf16.mxu0 0
  %674 = vmatpush1.bf16.msra.mxu0 0
  %675 = vmatprep.subr.bf16.mxu0 0
  %676 = vmatpush1.bf16.msra.mxu0 0
  %677 = vmatprep.subr.bf16.mxu0 0
  %678 = vmatpush1.bf16.msra.mxu0 0
  %679 = vmatprep.subr.bf16.mxu0 0
  %680 = vmatpush1.bf16.msra.mxu0 0
  %681 = vmatprep.subr.bf16.mxu0 0
  %682 = vmatpush1.bf16.msra.mxu0 0
  %683 = vmatprep.subr.bf16.mxu0 0
  %684 = vmatpush1.bf16.msra.mxu0 0
  %685 = vmatprep.subr.bf16.mxu0 0
  %686 = vmatpush1.bf16.msra.mxu0 0
  %687 = vmatprep.subr.bf16.mxu0 0
  %688 = vmatpush1.bf16.msra.mxu0 0
  %689 = vmatprep.subr.bf16.mxu0 0
  %690 = vmatpush1.bf16.msra.mxu0 0
  %691 = vmatprep.subr.bf16.mxu0 0
  %692 = vmatpush1.bf16.msra.mxu0 0
  %693 = vmatprep.mubr.bf16.mxu0 0
  %694 = vmatmul.mubr.bf16.gmra.mrb[0].mxu0 %v656
  %v695 = vpop.f32.mrb[0].mxu0
  %v696 = vadd.f32 %v75, %v695
  %v697 = vpop.f32.mrb[0].mxu0
  %v698 = vpop.f32.mrb[0].mxu0
  %v699 = vadd.f32 %v75, %v698
  %v700 = vpop.f32.mrb[0].mxu0
  %701 = vmatprep.mubr.bf16.mxu0 0
  %702 = vmatmul.mubr.bf16.gmra.mrb[0].mxu0 %v659
  %v703 = vpop.f32.mrb[0].mxu0
  %v704 = vadd.f32 %v75, %v703
  %v705 = vpop.f32.mrb[0].mxu0
  %v706 = vpop.f32.mrb[0].mxu0
  %v707 = vadd.f32 %v75, %v706
  %v708 = vpop.f32.mrb[0].mxu0
  %709 = vdwg.mxu0
  %v710 = vmax.f32 %v696, 0.0
  %v711 = vmax.f32 %v699, 0.0
  %v712 = vmax.f32 %v704, 0.0
  %v713 = vmax.f32 %v707, 0.0
  %s714 = scalar_lea.vmem %s1, 128
  %v715 = vld [vmem:[%s714] sm:$0xff]
  %v716 = vld [vmem:[%s714 + $0x8] sm:$0xff]
  %v717 = vld [vmem:[%s714 + $0x10] sm:$0xff]
  %v718 = vld [vmem:[%s714 + $0x18] sm:$0xff]
  %720 = vset.pattern.permute.xlu0 0
  %721 = vperm.xlu0 %720, %v715
  %v722 = vpop.permute.xlu0 %721
  %725 = vset.pattern.permute.xlu0 0
  %726 = vperm.xlu0 %725, %v716
  %v727 = vpop.permute.xlu0 %726
  %730 = vset.pattern.permute.xlu0 0
  %731 = vperm.xlu0 %730, %v717
  %v732 = vpop.permute.xlu0 %731
  %735 = vset.pattern.permute.xlu0 0
  %736 = vperm.xlu0 %735, %v718
  %v737 = vpop.permute.xlu0 %736
  %v739 = vmul.f32 %v710, %v722
  %v740 = vmul.f32 %v711, %v727
  %v741 = vmul.f32 %v712, %v732
  %v742 = vmul.f32 %v713, %v737
  %s743 = scalar_lea.vmem %s8, 4
  %v744 = vld [vmem:[%s743] sm:$0x1]
  %v746 = vlaneseq
  %v747 = vshrl.u32 %v746, 7
  %v748 = vsub.s32 0, %v747
  %v749 = vrot.slane %v744, %v748
  %v751 = vmul.f32 %v739, %v749
  %v752 = vmul.f32 %v740, %v749
  %v753 = vmul.f32 %v741, %v749
  %v754 = vmul.f32 %v742, %v749
  %v755 = vadd.f32 %v616, %v751
  %v756 = vadd.f32 %v617, %v752
  %v757 = vadd.f32 %v618, %v753
  %v758 = vadd.f32 %v619, %v754
  %s759 = scalar_lea.vmem %s0, 80
  %v760 = vld [vmem:[%s759] sm:$0xf]
  %v761 = vld [vmem:[%s759 + $0x4] sm:$0xf]
  %v762 = vld [vmem:[%s759 + $0x8] sm:$0xf]
  %v763 = vld [vmem:[%s759 + $0xc] sm:$0xf]
  %v764 = vunpack.c.l.bf16 %v760
  %v765 = vunpack.c.l.bf16 %v761
  %v766 = vunpack.c.l.bf16 %v762
  %v767 = vunpack.c.l.bf16 %v763
  %s768 = scalar_lea.vmem %s2, 5
  %v769 = vld [vmem:[%s768] sm:$0x1]
  %v771 = vlaneseq
  %v772 = vshrl.u32 %v771, 7
  %v773 = vsub.s32 0, %v772
  %v774 = vrot.slane %v769, %v773
  %v776 = vmul.f32 %v764, %v774
  %v777 = vmul.f32 %v765, %v774
  %v778 = vmul.f32 %v766, %v774
  %v779 = vmul.f32 %v767, %v774
  %v780 = vadd.f32 %v641, %v776
  %v781 = vadd.f32 %v642, %v777
  %v782 = vadd.f32 %v643, %v778
  %v783 = vadd.f32 %v644, %v779
  %v788 = vunpack.c.l.b16 %v760
  %v789 = vunpack.c.l.b16 %v761
  %v790 = vunpack.c.l.b16 %v762
  %v791 = vunpack.c.l.b16 %v763
  %v792 = vpack.c.b16 %v789, %v788
  %v793 = vpack.c.b16 %v791, %v790
  %v795 = vsel %vm96, %v792, 0
  %v798 = vsel %vm96, %v793, 0
  %800 = vmatprep.subr.bf16.mxu0 0
  %801 = vmatpush1.bf16.msra.mxu0 %v93
  %802 = vmatprep.subr.bf16.mxu0 0
  %803 = vmatpush1.bf16.msra.mxu0 %v105
  %804 = vmatprep.subr.bf16.mxu0 0
  %805 = vmatpush1.bf16.msra.mxu0 0
  %806 = vmatprep.subr.bf16.mxu0 0
  %807 = vmatpush1.bf16.msra.mxu0 0
  %808 = vmatprep.subr.bf16.mxu0 0
  %809 = vmatpush1.bf16.msra.mxu0 0
  %810 = vmatprep.subr.bf16.mxu0 0
  %811 = vmatpush1.bf16.msra.mxu0 0
  %812 = vmatprep.subr.bf16.mxu0 0
  %813 = vmatpush1.bf16.msra.mxu0 0
  %814 = vmatprep.subr.bf16.mxu0 0
  %815 = vmatpush1.bf16.msra.mxu0 0
  %816 = vmatprep.subr.bf16.mxu0 0
  %817 = vmatpush1.bf16.msra.mxu0 0
  %818 = vmatprep.subr.bf16.mxu0 0
  %819 = vmatpush1.bf16.msra.mxu0 0
  %820 = vmatprep.subr.bf16.mxu0 0
  %821 = vmatpush1.bf16.msra.mxu0 0
  %822 = vmatprep.subr.bf16.mxu0 0
  %823 = vmatpush1.bf16.msra.mxu0 0
  %824 = vmatprep.subr.bf16.mxu0 0
  %825 = vmatpush1.bf16.msra.mxu0 0
  %826 = vmatprep.subr.bf16.mxu0 0
  %827 = vmatpush1.bf16.msra.mxu0 0
  %828 = vmatprep.subr.bf16.mxu0 0
  %829 = vmatpush1.bf16.msra.mxu0 0
  %830 = vmatprep.subr.bf16.mxu0 0
  %831 = vmatpush1.bf16.msra.mxu0 0
  %832 = vmatprep.mubr.bf16.mxu0 0
  %833 = vmatmul.mubr.bf16.gmra.mrb[0].mxu0 %v795
  %v834 = vpop.f32.mrb[0].mxu0
  %v835 = vadd.f32 %v75, %v834
  %v836 = vpop.f32.mrb[0].mxu0
  %v837 = vpop.f32.mrb[0].mxu0
  %v838 = vadd.f32 %v75, %v837
  %v839 = vpop.f32.mrb[0].mxu0
  %840 = vmatprep.mubr.bf16.mxu0 0
  %841 = vmatmul.mubr.bf16.gmra.mrb[0].mxu0 %v798
  %v842 = vpop.f32.mrb[0].mxu0
  %v843 = vadd.f32 %v75, %v842
  %v844 = vpop.f32.mrb[0].mxu0
  %v845 = vpop.f32.mrb[0].mxu0
  %v846 = vadd.f32 %v75, %v845
  %v847 = vpop.f32.mrb[0].mxu0
  %848 = vdwg.mxu0
  %v849 = vmax.f32 %v835, 0.0
  %v850 = vmax.f32 %v838, 0.0
  %v851 = vmax.f32 %v843, 0.0
  %v852 = vmax.f32 %v846, 0.0
  %s853 = scalar_lea.vmem %s1, 160
  %v854 = vld [vmem:[%s853] sm:$0xff]
  %v855 = vld [vmem:[%s853 + $0x8] sm:$0xff]
  %v856 = vld [vmem:[%s853 + $0x10] sm:$0xff]
  %v857 = vld [vmem:[%s853 + $0x18] sm:$0xff]
  %859 = vset.pattern.permute.xlu0 0
  %860 = vperm.xlu0 %859, %v854
  %v861 = vpop.permute.xlu0 %860
  %864 = vset.pattern.permute.xlu0 0
  %865 = vperm.xlu0 %864, %v855
  %v866 = vpop.permute.xlu0 %865
  %869 = vset.pattern.permute.xlu0 0
  %870 = vperm.xlu0 %869, %v856
  %v871 = vpop.permute.xlu0 %870
  %874 = vset.pattern.permute.xlu0 0
  %875 = vperm.xlu0 %874, %v857
  %v876 = vpop.permute.xlu0 %875
  %v878 = vmul.f32 %v849, %v861
  %v879 = vmul.f32 %v850, %v866
  %v880 = vmul.f32 %v851, %v871
  %v881 = vmul.f32 %v852, %v876
  %s882 = scalar_lea.vmem %s8, 5
  %v883 = vld [vmem:[%s882] sm:$0x1]
  %v885 = vlaneseq
  %v886 = vshrl.u32 %v885, 7
  %v887 = vsub.s32 0, %v886
  %v888 = vrot.slane %v883, %v887
  %v890 = vmul.f32 %v878, %v888
  %v891 = vmul.f32 %v879, %v888
  %v892 = vmul.f32 %v880, %v888
  %v893 = vmul.f32 %v881, %v888
  %v894 = vadd.f32 %v755, %v890
  %v895 = vadd.f32 %v756, %v891
  %v896 = vadd.f32 %v757, %v892
  %v897 = vadd.f32 %v758, %v893
  %s898 = scalar_lea.vmem %s0, 96
  %v899 = vld [vmem:[%s898] sm:$0xf]
  %v900 = vld [vmem:[%s898 + $0x4] sm:$0xf]
  %v901 = vld [vmem:[%s898 + $0x8] sm:$0xf]
  %v902 = vld [vmem:[%s898 + $0xc] sm:$0xf]
  %v903 = vunpack.c.l.bf16 %v899
  %v904 = vunpack.c.l.bf16 %v900
  %v905 = vunpack.c.l.bf16 %v901
  %v906 = vunpack.c.l.bf16 %v902
  %s907 = scalar_lea.vmem %s2, 6
  %v908 = vld [vmem:[%s907] sm:$0x1]
  %v910 = vlaneseq
  %v911 = vshrl.u32 %v910, 7
  %v912 = vsub.s32 0, %v911
  %v913 = vrot.slane %v908, %v912
  %v915 = vmul.f32 %v903, %v913
  %v916 = vmul.f32 %v904, %v913
  %v917 = vmul.f32 %v905, %v913
  %v918 = vmul.f32 %v906, %v913
  %v919 = vadd.f32 %v780, %v915
  %v920 = vadd.f32 %v781, %v916
  %v921 = vadd.f32 %v782, %v917
  %v922 = vadd.f32 %v783, %v918
  %v927 = vunpack.c.l.b16 %v899
  %v928 = vunpack.c.l.b16 %v900
  %v929 = vunpack.c.l.b16 %v901
  %v930 = vunpack.c.l.b16 %v902
  %v931 = vpack.c.b16 %v928, %v927
  %v932 = vpack.c.b16 %v930, %v929
  %v934 = vsel %vm96, %v931, 0
  %v937 = vsel %vm96, %v932, 0
  %939 = vmatprep.subr.bf16.mxu0 0
  %940 = vmatpush1.bf16.msra.mxu0 %v93
  %941 = vmatprep.subr.bf16.mxu0 0
  %942 = vmatpush1.bf16.msra.mxu0 %v105
  %943 = vmatprep.subr.bf16.mxu0 0
  %944 = vmatpush1.bf16.msra.mxu0 0
  %945 = vmatprep.subr.bf16.mxu0 0
  %946 = vmatpush1.bf16.msra.mxu0 0
  %947 = vmatprep.subr.bf16.mxu0 0
  %948 = vmatpush1.bf16.msra.mxu0 0
  %949 = vmatprep.subr.bf16.mxu0 0
  %950 = vmatpush1.bf16.msra.mxu0 0
  %951 = vmatprep.subr.bf16.mxu0 0
  %952 = vmatpush1.bf16.msra.mxu0 0
  %953 = vmatprep.subr.bf16.mxu0 0
  %954 = vmatpush1.bf16.msra.mxu0 0
  %955 = vmatprep.subr.bf16.mxu0 0
  %956 = vmatpush1.bf16.msra.mxu0 0
  %957 = vmatprep.subr.bf16.mxu0 0
  %958 = vmatpush1.bf16.msra.mxu0 0
  %959 = vmatprep.subr.bf16.mxu0 0
  %960 = vmatpush1.bf16.msra.mxu0 0
  %961 = vmatprep.subr.bf16.mxu0 0
  %962 = vmatpush1.bf16.msra.mxu0 0
  %963 = vmatprep.subr.bf16.mxu0 0
  %964 = vmatpush1.bf16.msra.mxu0 0
  %965 = vmatprep.subr.bf16.mxu0 0
  %966 = vmatpush1.bf16.msra.mxu0 0
  %967 = vmatprep.subr.bf16.mxu0 0
  %968 = vmatpush1.bf16.msra.mxu0 0
  %969 = vmatprep.subr.bf16.mxu0 0
  %970 = vmatpush1.bf16.msra.mxu0 0
  %971 = vmatprep.mubr.bf16.mxu0 0
  %972 = vmatmul.mubr.bf16.gmra.mrb[0].mxu0 %v934
  %v973 = vpop.f32.mrb[0].mxu0
  %v974 = vadd.f32 %v75, %v973
  %v975 = vpop.f32.mrb[0].mxu0
  %v976 = vpop.f32.mrb[0].mxu0
  %v977 = vadd.f32 %v75, %v976
  %v978 = vpop.f32.mrb[0].mxu0
  %979 = vmatprep.mubr.bf16.mxu0 0
  %980 = vmatmul.mubr.bf16.gmra.mrb[0].mxu0 %v937
  %v981 = vpop.f32.mrb[0].mxu0
  %v982 = vadd.f32 %v75, %v981
  %v983 = vpop.f32.mrb[0].mxu0
  %v984 = vpop.f32.mrb[0].mxu0
  %v985 = vadd.f32 %v75, %v984
  %v986 = vpop.f32.mrb[0].mxu0
  %987 = vdwg.mxu0
  %v988 = vmax.f32 %v974, 0.0
  %v989 = vmax.f32 %v977, 0.0
  %v990 = vmax.f32 %v982, 0.0
  %v991 = vmax.f32 %v985, 0.0
  %s992 = scalar_lea.vmem %s1, 192
  %v993 = vld [vmem:[%s992] sm:$0xff]
  %v994 = vld [vmem:[%s992 + $0x8] sm:$0xff]
  %v995 = vld [vmem:[%s992 + $0x10] sm:$0xff]
  %v996 = vld [vmem:[%s992 + $0x18] sm:$0xff]
  %998 = vset.pattern.permute.xlu0 0
  %999 = vperm.xlu0 %998, %v993
  %v1000 = vpop.permute.xlu0 %999
  %1003 = vset.pattern.permute.xlu0 0
  %1004 = vperm.xlu0 %1003, %v994
  %v1005 = vpop.permute.xlu0 %1004
  %1008 = vset.pattern.permute.xlu0 0
  %1009 = vperm.xlu0 %1008, %v995
  %v1010 = vpop.permute.xlu0 %1009
  %1013 = vset.pattern.permute.xlu0 0
  %1014 = vperm.xlu0 %1013, %v996
  %v1015 = vpop.permute.xlu0 %1014
  %v1017 = vmul.f32 %v988, %v1000
  %v1018 = vmul.f32 %v989, %v1005
  %v1019 = vmul.f32 %v990, %v1010
  %v1020 = vmul.f32 %v991, %v1015
  %s1021 = scalar_lea.vmem %s8, 6
  %v1022 = vld [vmem:[%s1021] sm:$0x1]
  %v1024 = vlaneseq
  %v1025 = vshrl.u32 %v1024, 7
  %v1026 = vsub.s32 0, %v1025
  %v1027 = vrot.slane %v1022, %v1026
  %v1029 = vmul.f32 %v1017, %v1027
  %v1030 = vmul.f32 %v1018, %v1027
  %v1031 = vmul.f32 %v1019, %v1027
  %v1032 = vmul.f32 %v1020, %v1027
  %v1033 = vadd.f32 %v894, %v1029
  %v1034 = vadd.f32 %v895, %v1030
  %v1035 = vadd.f32 %v896, %v1031
  %v1036 = vadd.f32 %v897, %v1032
  %s1037 = scalar_lea.vmem %s0, 112
  %v1038 = vld [vmem:[%s1037] sm:$0xf]
  %v1039 = vld [vmem:[%s1037 + $0x4] sm:$0xf]
  %v1040 = vld [vmem:[%s1037 + $0x8] sm:$0xf]
  %v1041 = vld [vmem:[%s1037 + $0xc] sm:$0xf]
  %v1042 = vunpack.c.l.bf16 %v1038
  %v1043 = vunpack.c.l.bf16 %v1039
  %v1044 = vunpack.c.l.bf16 %v1040
  %v1045 = vunpack.c.l.bf16 %v1041
  %s1046 = scalar_lea.vmem %s2, 7
  %v1047 = vld [vmem:[%s1046] sm:$0x1]
  %v1049 = vlaneseq
  %v1050 = vshrl.u32 %v1049, 7
  %v1051 = vsub.s32 0, %v1050
  %v1052 = vrot.slane %v1047, %v1051
  %v1054 = vmul.f32 %v1042, %v1052
  %v1055 = vmul.f32 %v1043, %v1052
  %v1056 = vmul.f32 %v1044, %v1052
  %v1057 = vmul.f32 %v1045, %v1052
  %v1058 = vadd.f32 %v919, %v1054
  %v1059 = vadd.f32 %v920, %v1055
  %v1060 = vadd.f32 %v921, %v1056
  %v1061 = vadd.f32 %v922, %v1057
  %v1066 = vunpack.c.l.b16 %v1038
  %v1067 = vunpack.c.l.b16 %v1039
  %v1068 = vunpack.c.l.b16 %v1040
  %v1069 = vunpack.c.l.b16 %v1041
  %v1070 = vpack.c.b16 %v1067, %v1066
  %v1071 = vpack.c.b16 %v1069, %v1068
  %v1073 = vsel %vm96, %v1070, 0
  %v1076 = vsel %vm96, %v1071, 0
  %1078 = vmatprep.subr.bf16.mxu0 0
  %1079 = vmatpush1.bf16.msra.mxu0 %v93
  %1080 = vmatprep.subr.bf16.mxu0 0
  %1081 = vmatpush1.bf16.msra.mxu0 %v105
  %1082 = vmatprep.subr.bf16.mxu0 0
  %1083 = vmatpush1.bf16.msra.mxu0 0
  %1084 = vmatprep.subr.bf16.mxu0 0
  %1085 = vmatpush1.bf16.msra.mxu0 0
  %1086 = vmatprep.subr.bf16.mxu0 0
  %1087 = vmatpush1.bf16.msra.mxu0 0
  %1088 = vmatprep.subr.bf16.mxu0 0
  %1089 = vmatpush1.bf16.msra.mxu0 0
  %1090 = vmatprep.subr.bf16.mxu0 0
  %1091 = vmatpush1.bf16.msra.mxu0 0
  %1092 = vmatprep.subr.bf16.mxu0 0
  %1093 = vmatpush1.bf16.msra.mxu0 0
  %1094 = vmatprep.subr.bf16.mxu0 0
  %1095 = vmatpush1.bf16.msra.mxu0 0
  %1096 = vmatprep.subr.bf16.mxu0 0
  %1097 = vmatpush1.bf16.msra.mxu0 0
  %1098 = vmatprep.subr.bf16.mxu0 0
  %1099 = vmatpush1.bf16.msra.mxu0 0
  %1100 = vmatprep.subr.bf16.mxu0 0
  %1101 = vmatpush1.bf16.msra.mxu0 0
  %1102 = vmatprep.subr.bf16.mxu0 0
  %1103 = vmatpush1.bf16.msra.mxu0 0
  %1104 = vmatprep.subr.bf16.mxu0 0
  %1105 = vmatpush1.bf16.msra.mxu0 0
  %1106 = vmatprep.subr.bf16.mxu0 0
  %1107 = vmatpush1.bf16.msra.mxu0 0
  %1108 = vmatprep.subr.bf16.mxu0 0
  %1109 = vmatpush1.bf16.msra.mxu0 0
  %1110 = vmatprep.mubr.bf16.mxu0 0
  %1111 = vmatmul.mubr.bf16.gmra.mrb[0].mxu0 %v1073
  %v1112 = vpop.f32.mrb[0].mxu0
  %v1113 = vadd.f32 %v75, %v1112
  %v1114 = vpop.f32.mrb[0].mxu0
  %v1115 = vpop.f32.mrb[0].mxu0
  %v1116 = vadd.f32 %v75, %v1115
  %v1117 = vpop.f32.mrb[0].mxu0
  %1118 = vmatprep.mubr.bf16.mxu0 0
  %1119 = vmatmul.mubr.bf16.gmra.mrb[0].mxu0 %v1076
  %v1120 = vpop.f32.mrb[0].mxu0
  %v1121 = vadd.f32 %v75, %v1120
  %v1122 = vpop.f32.mrb[0].mxu0
  %v1123 = vpop.f32.mrb[0].mxu0
  %v1124 = vadd.f32 %v75, %v1123
  %v1125 = vpop.f32.mrb[0].mxu0
  %1126 = vdwg.mxu0
  %v1127 = vmax.f32 %v1113, 0.0
  %v1128 = vmax.f32 %v1116, 0.0
  %v1129 = vmax.f32 %v1121, 0.0
  %v1130 = vmax.f32 %v1124, 0.0
  %s1131 = scalar_lea.vmem %s1, 224
  %v1132 = vld [vmem:[%s1131] sm:$0xff]
  %v1133 = vld [vmem:[%s1131 + $0x8] sm:$0xff]
  %v1134 = vld [vmem:[%s1131 + $0x10] sm:$0xff]
  %v1135 = vld [vmem:[%s1131 + $0x18] sm:$0xff]
  %1137 = vset.pattern.permute.xlu0 0
  %1138 = vperm.xlu0 %1137, %v1132
  %v1139 = vpop.permute.xlu0 %1138
  %1142 = vset.pattern.permute.xlu0 0
  %1143 = vperm.xlu0 %1142, %v1133
  %v1144 = vpop.permute.xlu0 %1143
  %1147 = vset.pattern.permute.xlu0 0
  %1148 = vperm.xlu0 %1147, %v1134
  %v1149 = vpop.permute.xlu0 %1148
  %1152 = vset.pattern.permute.xlu0 0
  %1153 = vperm.xlu0 %1152, %v1135
  %v1154 = vpop.permute.xlu0 %1153
  %v1156 = vmul.f32 %v1127, %v1139
  %v1157 = vmul.f32 %v1128, %v1144
  %v1158 = vmul.f32 %v1129, %v1149
  %v1159 = vmul.f32 %v1130, %v1154
  %s1160 = scalar_lea.vmem %s8, 7
  %v1161 = vld [vmem:[%s1160] sm:$0x1]
  %v1163 = vlaneseq
  %v1164 = vshrl.u32 %v1163, 7
  %v1165 = vsub.s32 0, %v1164
  %v1166 = vrot.slane %v1161, %v1165
  %v1168 = vmul.f32 %v1156, %v1166
  %v1169 = vmul.f32 %v1157, %v1166
  %v1170 = vmul.f32 %v1158, %v1166
  %v1171 = vmul.f32 %v1159, %v1166
  %v1172 = vadd.f32 %v1033, %v1168
  %v1173 = vadd.f32 %v1034, %v1169
  %v1174 = vadd.f32 %v1035, %v1170
  %v1175 = vadd.f32 %v1036, %v1171
  %s1176 = scalar_lea.vmem %s0, 128
  %v1177 = vld [vmem:[%s1176] sm:$0xf]
  %v1178 = vld [vmem:[%s1176 + $0x4] sm:$0xf]
  %v1179 = vld [vmem:[%s1176 + $0x8] sm:$0xf]
  %v1180 = vld [vmem:[%s1176 + $0xc] sm:$0xf]
  %v1181 = vunpack.c.l.bf16 %v1177
  %v1182 = vunpack.c.l.bf16 %v1178
  %v1183 = vunpack.c.l.bf16 %v1179
  %v1184 = vunpack.c.l.bf16 %v1180
  %s1185 = scalar_lea.vmem %s2, 8
  %v1186 = vld [vmem:[%s1185] sm:$0x1]
  %v1188 = vlaneseq
  %v1189 = vshrl.u32 %v1188, 7
  %v1190 = vsub.s32 0, %v1189
  %v1191 = vrot.slane %v1186, %v1190
  %v1193 = vmul.f32 %v1181, %v1191
  %v1194 = vmul.f32 %v1182, %v1191
  %v1195 = vmul.f32 %v1183, %v1191
  %v1196 = vmul.f32 %v1184, %v1191
  %v1197 = vadd.f32 %v1058, %v1193
  %v1198 = vadd.f32 %v1059, %v1194
  %v1199 = vadd.f32 %v1060, %v1195
  %v1200 = vadd.f32 %v1061, %v1196
  %v1205 = vunpack.c.l.b16 %v1177
  %v1206 = vunpack.c.l.b16 %v1178
  %v1207 = vunpack.c.l.b16 %v1179
  %v1208 = vunpack.c.l.b16 %v1180
  %v1209 = vpack.c.b16 %v1206, %v1205
  %v1210 = vpack.c.b16 %v1208, %v1207
  %v1212 = vsel %vm96, %v1209, 0
  %v1215 = vsel %vm96, %v1210, 0
  %1217 = vmatprep.subr.bf16.mxu0 0
  %1218 = vmatpush1.bf16.msra.mxu0 %v93
  %1219 = vmatprep.subr.bf16.mxu0 0
  %1220 = vmatpush1.bf16.msra.mxu0 %v105
  %1221 = vmatprep.subr.bf16.mxu0 0
  %1222 = vmatpush1.bf16.msra.mxu0 0
  %1223 = vmatprep.subr.bf16.mxu0 0
  %1224 = vmatpush1.bf16.msra.mxu0 0
  %1225 = vmatprep.subr.bf16.mxu0 0
  %1226 = vmatpush1.bf16.msra.mxu0 0
  %1227 = vmatprep.subr.bf16.mxu0 0
  %1228 = vmatpush1.bf16.msra.mxu0 0
  %1229 = vmatprep.subr.bf16.mxu0 0
  %1230 = vmatpush1.bf16.msra.mxu0 0
  %1231 = vmatprep.subr.bf16.mxu0 0
  %1232 = vmatpush1.bf16.msra.mxu0 0
  %1233 = vmatprep.subr.bf16.mxu0 0
  %1234 = vmatpush1.bf16.msra.mxu0 0
  %1235 = vmatprep.subr.bf16.mxu0 0
  %1236 = vmatpush1.bf16.msra.mxu0 0
  %1237 = vmatprep.subr.bf16.mxu0 0
  %1238 = vmatpush1.bf16.msra.mxu0 0
  %1239 = vmatprep.subr.bf16.mxu0 0
  %1240 = vmatpush1.bf16.msra.mxu0 0
  %1241 = vmatprep.subr.bf16.mxu0 0
  %1242 = vmatpush1.bf16.msra.mxu0 0
  %1243 = vmatprep.subr.bf16.mxu0 0
  %1244 = vmatpush1.bf16.msra.mxu0 0
  %1245 = vmatprep.subr.bf16.mxu0 0
  %1246 = vmatpush1.bf16.msra.mxu0 0
  %1247 = vmatprep.subr.bf16.mxu0 0
  %1248 = vmatpush1.bf16.msra.mxu0 0
  %1249 = vmatprep.mubr.bf16.mxu0 0
  %1250 = vmatmul.mubr.bf16.gmra.mrb[0].mxu0 %v1212
  %v1251 = vpop.f32.mrb[0].mxu0
  %v1252 = vadd.f32 %v75, %v1251
  %v1253 = vpop.f32.mrb[0].mxu0
  %v1254 = vpop.f32.mrb[0].mxu0
  %v1255 = vadd.f32 %v75, %v1254
  %v1256 = vpop.f32.mrb[0].mxu0
  %1257 = vmatprep.mubr.bf16.mxu0 0
  %1258 = vmatmul.mubr.bf16.gmra.mrb[0].mxu0 %v1215
  %v1259 = vpop.f32.mrb[0].mxu0
  %v1260 = vadd.f32 %v75, %v1259
  %v1261 = vpop.f32.mrb[0].mxu0
  %v1262 = vpop.f32.mrb[0].mxu0
  %v1263 = vadd.f32 %v75, %v1262
  %v1264 = vpop.f32.mrb[0].mxu0
  %1265 = vdwg.mxu0
  %v1266 = vmax.f32 %v1252, 0.0
  %v1267 = vmax.f32 %v1255, 0.0
  %v1268 = vmax.f32 %v1260, 0.0
  %v1269 = vmax.f32 %v1263, 0.0
  %s1270 = scalar_lea.vmem %s1, 256
  %v1271 = vld [vmem:[%s1270] sm:$0xff]
  %v1272 = vld [vmem:[%s1270 + $0x8] sm:$0xff]
  %v1273 = vld [vmem:[%s1270 + $0x10] sm:$0xff]
  %v1274 = vld [vmem:[%s1270 + $0x18] sm:$0xff]
  %1276 = vset.pattern.permute.xlu0 0
  %1277 = vperm.xlu0 %1276, %v1271
  %v1278 = vpop.permute.xlu0 %1277
  %1281 = vset.pattern.permute.xlu0 0
  %1282 = vperm.xlu0 %1281, %v1272
  %v1283 = vpop.permute.xlu0 %1282
  %1286 = vset.pattern.permute.xlu0 0
  %1287 = vperm.xlu0 %1286, %v1273
  %v1288 = vpop.permute.xlu0 %1287
  %1291 = vset.pattern.permute.xlu0 0
  %1292 = vperm.xlu0 %1291, %v1274
  %v1293 = vpop.permute.xlu0 %1292
  %v1295 = vmul.f32 %v1266, %v1278
  %v1296 = vmul.f32 %v1267, %v1283
  %v1297 = vmul.f32 %v1268, %v1288
  %v1298 = vmul.f32 %v1269, %v1293
  %s1299 = scalar_lea.vmem %s8, 8
  %v1300 = vld [vmem:[%s1299] sm:$0x1]
  %v1302 = vlaneseq
  %v1303 = vshrl.u32 %v1302, 7
  %v1304 = vsub.s32 0, %v1303
  %v1305 = vrot.slane %v1300, %v1304
  %v1307 = vmul.f32 %v1295, %v1305
  %v1308 = vmul.f32 %v1296, %v1305
  %v1309 = vmul.f32 %v1297, %v1305
  %v1310 = vmul.f32 %v1298, %v1305
  %v1311 = vadd.f32 %v1172, %v1307
  %v1312 = vadd.f32 %v1173, %v1308
  %v1313 = vadd.f32 %v1174, %v1309
  %v1314 = vadd.f32 %v1175, %v1310
  %v1315 = vld [vmem:[%s3] sm:$0x1]
  %v1317 = vlaneseq
  %v1318 = vshrl.u32 %v1317, 7
  %v1319 = vsub.s32 0, %v1318
  %v1320 = vrot.slane %v1315, %v1319
  %v1322 = vadd.f32 %v1197, %v1320
  %v1323 = vadd.f32 %v1198, %v1320
  %v1324 = vadd.f32 %v1199, %v1320
  %v1325 = vadd.f32 %v1200, %v1320
  %v1326 = vpack.c.bf16 %v1323, %v1322
  %v1327 = vpack.c.bf16 %v1325, %v1324
  %v1328 = vld [vmem:[%s4] sm:$0xf]
  %v1329 = vld [vmem:[%s4 + $0x4] sm:$0xf]
  %v1330 = vld [vmem:[%s4 + $0x8] sm:$0xf]
  %v1331 = vld [vmem:[%s5] sm:$0x1]
  %v1333 = vlaneseq
  %v1334 = vshrl.u32 %v1333, 7
  %v1335 = vsub.s32 0, %v1334
  %v1336 = vrot.slane %v1331, %v1335
  %v1341 = vunpack.c.l.b16 %v1328
  %v1342 = vunpack.c.l.b16 %v1329
  %v1343 = vunpack.c.l.b16 %v1330
  %v1344 = vpack.c.b16 %v1342, %v1341
  %v1345 = vpack.c.b16 %v1343, %v1343
  %v1348 = vsel %vm96, %v1326, 0
  %v1351 = vsel %vm96, %v1327, 0
  %v1354 = vsel %vm103, %v1345, 0
  %1356 = vmatprep.subr.bf16.mxu0 0
  %1357 = vmatpush1.bf16.msra.mxu0 %v1344
  %1358 = vmatprep.subr.bf16.mxu0 0
  %1359 = vmatpush1.bf16.msra.mxu0 %v1354
  %1360 = vmatprep.subr.bf16.mxu0 0
  %1361 = vmatpush1.bf16.msra.mxu0 0
  %1362 = vmatprep.subr.bf16.mxu0 0
  %1363 = vmatpush1.bf16.msra.mxu0 0
  %1364 = vmatprep.subr.bf16.mxu0 0
  %1365 = vmatpush1.bf16.msra.mxu0 0
  %1366 = vmatprep.subr.bf16.mxu0 0
  %1367 = vmatpush1.bf16.msra.mxu0 0
  %1368 = vmatprep.subr.bf16.mxu0 0
  %1369 = vmatpush1.bf16.msra.mxu0 0
  %1370 = vmatprep.subr.bf16.mxu0 0
  %1371 = vmatpush1.bf16.msra.mxu0 0
  %1372 = vmatprep.subr.bf16.mxu0 0
  %1373 = vmatpush1.bf16.msra.mxu0 0
  %1374 = vmatprep.subr.bf16.mxu0 0
  %1375 = vmatpush1.bf16.msra.mxu0 0
  %1376 = vmatprep.subr.bf16.mxu0 0
  %1377 = vmatpush1.bf16.msra.mxu0 0
  %1378 = vmatprep.subr.bf16.mxu0 0
  %1379 = vmatpush1.bf16.msra.mxu0 0
  %1380 = vmatprep.subr.bf16.mxu0 0
  %1381 = vmatpush1.bf16.msra.mxu0 0
  %1382 = vmatprep.subr.bf16.mxu0 0
  %1383 = vmatpush1.bf16.msra.mxu0 0
  %1384 = vmatprep.subr.bf16.mxu0 0
  %1385 = vmatpush1.bf16.msra.mxu0 0
  %1386 = vmatprep.subr.bf16.mxu0 0
  %1387 = vmatpush1.bf16.msra.mxu0 0
  %1388 = vmatprep.mubr.bf16.mxu0 0
  %1389 = vmatmul.mubr.bf16.gmra.mrb[0].mxu0 %v1348
  %v1390 = vpop.f32.mrb[0].mxu0
  %v1391 = vadd.f32 %v1336, %v1390
  %v1392 = vpop.f32.mrb[0].mxu0
  %v1393 = vpop.f32.mrb[0].mxu0
  %v1394 = vadd.f32 %v1336, %v1393
  %v1395 = vpop.f32.mrb[0].mxu0
  %1396 = vmatprep.mubr.bf16.mxu0 0
  %1397 = vmatmul.mubr.bf16.gmra.mrb[0].mxu0 %v1351
  %v1398 = vpop.f32.mrb[0].mxu0
  %v1399 = vadd.f32 %v1336, %v1398
  %v1400 = vpop.f32.mrb[0].mxu0
  %v1401 = vpop.f32.mrb[0].mxu0
  %v1402 = vadd.f32 %v1336, %v1401
  %v1403 = vpop.f32.mrb[0].mxu0
  %1404 = vdwg.mxu0
  %v1405 = vmax.f32 %v1391, 0.0
  %v1406 = vmax.f32 %v1394, 0.0
  %v1407 = vmax.f32 %v1399, 0.0
  %v1408 = vmax.f32 %v1402, 0.0
  %v1409 = vld [vmem:[%s9] sm:$0x1]
  %v1411 = vlaneseq
  %v1412 = vshrl.u32 %v1411, 7
  %v1413 = vsub.s32 0, %v1412
  %v1414 = vrot.slane %v1409, %v1413
  %v1416 = vadd.f32 %v1311, %v1414
  %v1417 = vadd.f32 %v1312, %v1414
  %v1418 = vadd.f32 %v1313, %v1414
  %v1419 = vadd.f32 %v1314, %v1414
  %v1420 = vpack.c.bf16 %v1417, %v1416
  %v1421 = vpack.c.bf16 %v1419, %v1418
  %v1422 = vld [vmem:[%s10] sm:$0xf]
  %v1423 = vld [vmem:[%s10 + $0x4] sm:$0xf]
  %v1424 = vld [vmem:[%s10 + $0x8] sm:$0xf]
  %v1425 = vld [vmem:[%s10 + $0xc] sm:$0x7]
  %v1426 = vld [vmem:[%s11] sm:$0x1]
  %v1428 = vlaneseq
  %v1429 = vshrl.u32 %v1428, 7
  %v1430 = vsub.s32 0, %v1429
  %v1431 = vrot.slane %v1426, %v1430
  %v1437 = vunpack.c.l.b16 %v1422
  %v1438 = vunpack.c.l.b16 %v1423
  %v1439 = vunpack.c.l.b16 %v1424
  %v1440 = vunpack.c.l.b16 %v1425
  %v1441 = vpack.c.b16 %v1438, %v1437
  %v1442 = vpack.c.b16 %v1440, %v1439
  %vm1444 = vcmask 236544
  %v1446 = vsel %vm1444, %v1420, 0
  %v1449 = vsel %vm1444, %v1421, 0
  %vm1451 = vcmask 1045504
  %vm1452 = vcmask 1046528
  %v1453 = vsel %vm1451, 4294967295, 65535
  %v1454 = vsel %vm1452, %v1453, 0
  %v1456 = vand.u32 %v1442, %v1454
  %1458 = vmatprep.subr.bf16.mxu0 0
  %1459 = vmatpush1.bf16.msra.mxu0 %v1441
  %1460 = vmatprep.subr.bf16.mxu0 0
  %1461 = vmatpush1.bf16.msra.mxu0 %v1456
  %1462 = vmatprep.subr.bf16.mxu0 0
  %1463 = vmatpush1.bf16.msra.mxu0 0
  %1464 = vmatprep.subr.bf16.mxu0 0
  %1465 = vmatpush1.bf16.msra.mxu0 0
  %1466 = vmatprep.subr.bf16.mxu0 0
  %1467 = vmatpush1.bf16.msra.mxu0 0
  %1468 = vmatprep.subr.bf16.mxu0 0
  %1469 = vmatpush1.bf16.msra.mxu0 0
  %1470 = vmatprep.subr.bf16.mxu0 0
  %1471 = vmatpush1.bf16.msra.mxu0 0
  %1472 = vmatprep.subr.bf16.mxu0 0
  %1473 = vmatpush1.bf16.msra.mxu0 0
  %1474 = vmatprep.subr.bf16.mxu0 0
  %1475 = vmatpush1.bf16.msra.mxu0 0
  %1476 = vmatprep.subr.bf16.mxu0 0
  %1477 = vmatpush1.bf16.msra.mxu0 0
  %1478 = vmatprep.subr.bf16.mxu0 0
  %1479 = vmatpush1.bf16.msra.mxu0 0
  %1480 = vmatprep.subr.bf16.mxu0 0
  %1481 = vmatpush1.bf16.msra.mxu0 0
  %1482 = vmatprep.subr.bf16.mxu0 0
  %1483 = vmatpush1.bf16.msra.mxu0 0
  %1484 = vmatprep.subr.bf16.mxu0 0
  %1485 = vmatpush1.bf16.msra.mxu0 0
  %1486 = vmatprep.subr.bf16.mxu0 0
  %1487 = vmatpush1.bf16.msra.mxu0 0
  %1488 = vmatprep.subr.bf16.mxu0 0
  %1489 = vmatpush1.bf16.msra.mxu0 0
  %1490 = vmatprep.mubr.bf16.mxu0 0
  %1491 = vmatmul.mubr.bf16.gmra.mrb[0].mxu0 %v1446
  %v1492 = vpop.f32.mrb[0].mxu0
  %v1493 = vadd.f32 %v1431, %v1492
  %v1494 = vpop.f32.mrb[0].mxu0
  %v1495 = vpop.f32.mrb[0].mxu0
  %v1496 = vadd.f32 %v1431, %v1495
  %v1497 = vpop.f32.mrb[0].mxu0
  %1498 = vmatprep.mubr.bf16.mxu0 0
  %1499 = vmatmul.mubr.bf16.gmra.mrb[0].mxu0 %v1449
  %v1500 = vpop.f32.mrb[0].mxu0
  %v1501 = vadd.f32 %v1431, %v1500
  %v1502 = vpop.f32.mrb[0].mxu0
  %v1503 = vpop.f32.mrb[0].mxu0
  %v1504 = vadd.f32 %v1431, %v1503
  %v1505 = vpop.f32.mrb[0].mxu0
  %1506 = vdwg.mxu0
  %v1507 = vmax.f32 %v1493, 0.0
  %v1508 = vmax.f32 %v1496, 0.0
  %v1509 = vmax.f32 %v1501, 0.0
  %v1510 = vmax.f32 %v1504, 0.0
  %v1511 = vpack.c.bf16 %v1406, %v1405
  %v1512 = vpack.c.bf16 %v1408, %v1407
  %v1515 = vunpack.c.l.b16 %v1511
  %v1516 = vunpack.c.h.b16 %v1511
  %v1517 = vunpack.c.l.b16 %v1512
  %v1518 = vunpack.c.h.b16 %v1512
  %v1519 = vpack.c.b16 %v1515, %v1515
  %v1520 = vpack.c.b16 %v1516, %v1516
  %v1521 = vpack.c.b16 %v1517, %v1517
  %v1522 = vpack.c.b16 %v1518, %v1518
  %vm1527 = vcmask 232448
  %1528 = vst.msk [vmem:[%s12] sm:$0xf] %vm1527, %v1519
  %1529 = vst.msk [vmem:[%s12 + $0x4] sm:$0xf] %vm1527, %v1520
  %1530 = vst.msk [vmem:[%s12 + $0x8] sm:$0xf] %vm1527, %v1521
  %1531 = vst.msk [vmem:[%s12 + $0xc] sm:$0xf] %vm1527, %v1522
  %v1532 = vpack.c.bf16 %v1508, %v1507
  %v1533 = vpack.c.bf16 %v1510, %v1509
  %v1536 = vunpack.c.l.b16 %v1532
  %v1537 = vunpack.c.h.b16 %v1532
  %v1538 = vunpack.c.l.b16 %v1533
  %v1539 = vunpack.c.h.b16 %v1533
  %v1540 = vpack.c.b16 %v1536, %v1536
  %v1541 = vpack.c.b16 %v1537, %v1537
  %v1542 = vpack.c.b16 %v1538, %v1538
  %v1543 = vpack.c.b16 %v1539, %v1539
  %1548 = vst.msk [vmem:[%s13] sm:$0xf] %vm1527, %v1540
  %1549 = vst.msk [vmem:[%s13 + $0x4] sm:$0xf] %vm1527, %v1541
  %1550 = vst.msk [vmem:[%s13 + $0x8] sm:$0xf] %vm1527, %v1542
  %1551 = vst.msk [vmem:[%s13 + $0xc] sm:$0xf] %vm1527, %v1543
  // Predicated region
  $region50: #{shufflenet_v2_forward.21} parent=0 // pred_check
    _
  $region51: #{shufflenet_v2_forward.21} parent=0 // pred_check_branch
    %1553 = sbr.rel (0) target = $region53
  $region52: #{shufflenet_v2_forward.21} parent=0 // pred_region
    _
  $region53: #{shufflenet_v2_forward.21} parent=0 // pred_fallthru
    _
  // Predicated region
  $region54: #{shufflenet_v2_forward.21} parent=0 // pred_check
    _
  $region55: #{shufflenet_v2_forward.21} parent=0 // pred_check_branch
    %1555 = sbr.rel (0) target = $region57
  $region56: #{shufflenet_v2_forward.21} parent=0 // pred_region
    _
  $region57: #{shufflenet_v2_forward.21} parent=0 // pred_fallthru
    _
  // Predicated region
  $region58: #{shufflenet_v2_forward.21} parent=0 // pred_check
    _
  $region59: #{shufflenet_v2_forward.21} parent=0 // pred_check_branch
    %1557 = sbr.rel (0) target = $region61
  $region60: #{shufflenet_v2_forward.21} parent=0 // pred_region
    _
  $region61: #{shufflenet_v2_forward.21} parent=0 // pred_fallthru
    _
  // Predicated region
  $region62: #{shufflenet_v2_forward.21} parent=0 // pred_check
    _
  $region63: #{shufflenet_v2_forward.21} parent=0 // pred_check_branch
    %1559 = sbr.rel (0) target = $region65
  $region64: #{shufflenet_v2_forward.21} parent=0 // pred_region
    _
  $region65: #{shufflenet_v2_forward.21} parent=0 // pred_fallthru
    _

// kernel: shufflenet_v2_forward.22
$region0: #{shufflenet_v2_forward.22}
  #allocation0 [shape = 'u32[]', space=smem, size = 0x4, offset = 0x4, fixed_abs, tag = 'smem constant byte address 0x4 - core index']
  #allocation1 [shape = 'u32[144,128]{1,0:T(1,128)}', space=vmem, size = 0x12000, scoped, tag = 'internal scratch']
  #allocation2 [shape = 'f32[2,6,6,29]{3,2,1,0:T(8,128)}', space=vmem, size = 0xc000, scoped, tag = 'scratch operand']
  %s0 = inlined_call_operand.vmem [shape: bf16[2,4,4,29], index: 0, kind: input, shape index: {}]
  %s1 = inlined_call_operand.vmem [shape: bf16[29,29], index: 1, kind: input, shape index: {}]
  %s2 = inlined_call_operand.vmem [shape: f32[1,29], index: 2, kind: input, shape index: {}]
  %s3 = inlined_call_operand.vmem [shape: f32[9,1,29], index: 3, kind: input, shape index: {}]
  %s4 = inlined_call_operand.vmem [shape: f32[1,29], index: 4, kind: input, shape index: {}]
  %s5 = inlined_call_operand.vmem [shape: bf16[29,29], index: 5, kind: input, shape index: {}]
  %s6 = inlined_call_operand.vmem [shape: f32[1,29], index: 6, kind: input, shape index: {}]
  %s7 = inlined_call_operand.vmem [shape: bf16[2,4,4,29], index: 7, kind: output, shape index: {}]
  %s8 = sld [smem:[#allocation0]]
  $region38: #{shufflenet_v2_forward.22} parent=0
    _
  %s10 = ssub.s32 1, %s8
  %s11 = scalar_select 0, %s10, %s8
  // Predicated region
  $region2: #{shufflenet_v2_forward.22} parent=0 // pred_check
    _
  $region3: #{shufflenet_v2_forward.22} parent=0 // pred_check_branch
    %13 = sbr.rel (0) target = $region5
  $region4: #{shufflenet_v2_forward.22} parent=0 // pred_region
    _
  $region5: #{shufflenet_v2_forward.22} parent=0 // pred_fallthru
    _
  // Predicated region
  $region6: #{shufflenet_v2_forward.22} parent=0 // pred_check
    _
  $region7: #{shufflenet_v2_forward.22} parent=0 // pred_check_branch
    %15 = sbr.rel (0) target = $region9
  $region8: #{shufflenet_v2_forward.22} parent=0 // pred_region
    _
  $region9: #{shufflenet_v2_forward.22} parent=0 // pred_fallthru
    _
  // Predicated region
  $region10: #{shufflenet_v2_forward.22} parent=0 // pred_check
    _
  $region11: #{shufflenet_v2_forward.22} parent=0 // pred_check_branch
    %17 = sbr.rel (0) target = $region13
  $region12: #{shufflenet_v2_forward.22} parent=0 // pred_region
    _
  $region13: #{shufflenet_v2_forward.22} parent=0 // pred_fallthru
    _
  // Predicated region
  $region14: #{shufflenet_v2_forward.22} parent=0 // pred_check
    _
  $region15: #{shufflenet_v2_forward.22} parent=0 // pred_check_branch
    %19 = sbr.rel (0) target = $region17
  $region16: #{shufflenet_v2_forward.22} parent=0 // pred_region
    _
  $region17: #{shufflenet_v2_forward.22} parent=0 // pred_fallthru
    _
  // Predicated region
  $region18: #{shufflenet_v2_forward.22} parent=0 // pred_check
    _
  $region19: #{shufflenet_v2_forward.22} parent=0 // pred_check_branch
    %21 = sbr.rel (0) target = $region21
  $region20: #{shufflenet_v2_forward.22} parent=0 // pred_region
    _
  $region21: #{shufflenet_v2_forward.22} parent=0 // pred_fallthru
    _
  // Predicated region
  $region22: #{shufflenet_v2_forward.22} parent=0 // pred_check
    _
  $region23: #{shufflenet_v2_forward.22} parent=0 // pred_check_branch
    %23 = sbr.rel (0) target = $region25
  $region24: #{shufflenet_v2_forward.22} parent=0 // pred_region
    _
  $region25: #{shufflenet_v2_forward.22} parent=0 // pred_fallthru
    _
  // Predicated region
  $region26: #{shufflenet_v2_forward.22} parent=0 // pred_check
    _
  $region27: #{shufflenet_v2_forward.22} parent=0 // pred_check_branch
    %25 = sbr.rel (0) target = $region29
  $region28: #{shufflenet_v2_forward.22} parent=0 // pred_region
    _
  $region29: #{shufflenet_v2_forward.22} parent=0 // pred_fallthru
    _
  %v27 = vld [vmem:[%s1] sm:$0xf]
  %v28 = vld [vmem:[%s1 + $0x4] sm:$0xf]
  %v29 = vld [vmem:[%s1 + $0x8] sm:$0xf]
  %v30 = vld [vmem:[%s1 + $0xc] sm:$0x7]
  %v31 = vld [vmem:[%s2] sm:$0x1]
  %v32 = vld [vmem:[%s5] sm:$0xf]
  %v33 = vld [vmem:[%s5 + $0x4] sm:$0xf]
  %v34 = vld [vmem:[%s5 + $0x8] sm:$0xf]
  %v35 = vld [vmem:[%s5 + $0xc] sm:$0x7]
  %v36 = vld [vmem:[%s6] sm:$0x1]
  %vm37 = vcmask 234496
  %38 = vst.msk [vmem:[#allocation2] sm:$0x3f] %vm37, 0.0
  %39 = vst.msk [vmem:[#allocation2 + $0x8] sm:$0x3f] %vm37, 0.0
  %40 = vst.msk [vmem:[#allocation2 + $0x10] sm:$0x3f] %vm37, 0.0
  %41 = vst.msk [vmem:[#allocation2 + $0x18] sm:$0x3f] %vm37, 0.0
  %42 = vst.msk [vmem:[#allocation2 + $0x20] sm:$0x3f] %vm37, 0.0
  %43 = vst.msk [vmem:[#allocation2 + $0x28] sm:$0x3f] %vm37, 0.0
  %44 = vst.msk [vmem:[#allocation2 + $0x30] sm:$0x3f] %vm37, 0.0
  %45 = vst.msk [vmem:[#allocation2 + $0x38] sm:$0x3f] %vm37, 0.0
  %46 = vst.msk [vmem:[#allocation2 + $0x40] sm:$0x3f] %vm37, 0.0
  %47 = vst.msk [vmem:[#allocation2 + $0x48] sm:$0x3f] %vm37, 0.0
  %48 = vst.msk [vmem:[#allocation2 + $0x50] sm:$0x3f] %vm37, 0.0
  %49 = vst.msk [vmem:[#allocation2 + $0x58] sm:$0x3f] %vm37, 0.0
  %v50 = vld [vmem:[%s0] sm:$0x3]
  %v52 = vlaneseq
  %v53 = vshrl.u32 %v52, 7
  %v54 = vsub.s32 0, %v53
  %v55 = vrot.slane %v31, %v54
  %v61 = vunpack.c.l.b16 %v27
  %v62 = vunpack.c.l.b16 %v28
  %v63 = vunpack.c.l.b16 %v29
  %v64 = vunpack.c.l.b16 %v30
  %v65 = vpack.c.b16 %v62, %v61
  %v66 = vpack.c.b16 %v64, %v63
  %vm68 = vcmask 236544
  %v70 = vsel %vm68, %v50, 0
  %vm72 = vcmask 1045504
  %vm73 = vcmask 1046528
  %v74 = vsel %vm72, 4294967295, 65535
  %v75 = vsel %vm73, %v74, 0
  %v77 = vand.u32 %v66, %v75
  %79 = vmatprep.subr.bf16.mxu0 0
  %80 = vmatpush1.bf16.msra.mxu0 %v65
  %81 = vmatprep.subr.bf16.mxu0 0
  %82 = vmatpush1.bf16.msra.mxu0 %v77
  %83 = vmatprep.subr.bf16.mxu0 0
  %84 = vmatpush1.bf16.msra.mxu0 0
  %85 = vmatprep.subr.bf16.mxu0 0
  %86 = vmatpush1.bf16.msra.mxu0 0
  %87 = vmatprep.subr.bf16.mxu0 0
  %88 = vmatpush1.bf16.msra.mxu0 0
  %89 = vmatprep.subr.bf16.mxu0 0
  %90 = vmatpush1.bf16.msra.mxu0 0
  %91 = vmatprep.subr.bf16.mxu0 0
  %92 = vmatpush1.bf16.msra.mxu0 0
  %93 = vmatprep.subr.bf16.mxu0 0
  %94 = vmatpush1.bf16.msra.mxu0 0
  %95 = vmatprep.subr.bf16.mxu0 0
  %96 = vmatpush1.bf16.msra.mxu0 0
  %97 = vmatprep.subr.bf16.mxu0 0
  %98 = vmatpush1.bf16.msra.mxu0 0
  %99 = vmatprep.subr.bf16.mxu0 0
  %100 = vmatpush1.bf16.msra.mxu0 0
  %101 = vmatprep.subr.bf16.mxu0 0
  %102 = vmatpush1.bf16.msra.mxu0 0
  %103 = vmatprep.subr.bf16.mxu0 0
  %104 = vmatpush1.bf16.msra.mxu0 0
  %105 = vmatprep.subr.bf16.mxu0 0
  %106 = vmatpush1.bf16.msra.mxu0 0
  %107 = vmatprep.subr.bf16.mxu0 0
  %108 = vmatpush1.bf16.msra.mxu0 0
  %109 = vmatprep.subr.bf16.mxu0 0
  %110 = vmatpush1.bf16.msra.mxu0 0
  %111 = vmatprep.mubr.bf16.mxu0 0
  %112 = vmatmul.mubr.bf16.gmra.mrb[0].mxu0 %v70
  %v113 = vpop.f32.mrb[0].mxu0
  %v114 = vadd.f32 %v55, %v113
  %v115 = vpop.f32.mrb[0].mxu0
  %v116 = vpop.f32.mrb[0].mxu0
  %v117 = vpop.f32.mrb[0].mxu0
  %118 = vdwg.mxu0
  %v119 = vmax.f32 %v114, 0.0
  %s120 = scalar_lea.vmem [#allocation2], 8
  %vm121 = vcmask 232448
  %122 = vst.msk [vmem:[%s120 + $0x1] sm:$0xf] %vm121, %v119
  %s123 = scalar_lea.vmem %s0, 2
  %v124 = vld [vmem:[%s123] sm:$0x3]
  %v126 = vsel %vm68, %v124, 0
  %128 = vmatprep.subr.bf16.mxu0 0
  %129 = vmatpush1.bf16.msra.mxu0 %v65
  %130 = vmatprep.subr.bf16.mxu0 0
  %131 = vmatpush1.bf16.msra.mxu0 %v77
  %132 = vmatprep.subr.bf16.mxu0 0
  %133 = vmatpush1.bf16.msra.mxu0 0
  %134 = vmatprep.subr.bf16.mxu0 0
  %135 = vmatpush1.bf16.msra.mxu0 0
  %136 = vmatprep.subr.bf16.mxu0 0
  %137 = vmatpush1.bf16.msra.mxu0 0
  %138 = vmatprep.subr.bf16.mxu0 0
  %139 = vmatpush1.bf16.msra.mxu0 0
  %140 = vmatprep.subr.bf16.mxu0 0
  %141 = vmatpush1.bf16.msra.mxu0 0
  %142 = vmatprep.subr.bf16.mxu0 0
  %143 = vmatpush1.bf16.msra.mxu0 0
  %144 = vmatprep.subr.bf16.mxu0 0
  %145 = vmatpush1.bf16.msra.mxu0 0
  %146 = vmatprep.subr.bf16.mxu0 0
  %147 = vmatpush1.bf16.msra.mxu0 0
  %148 = vmatprep.subr.bf16.mxu0 0
  %149 = vmatpush1.bf16.msra.mxu0 0
  %150 = vmatprep.subr.bf16.mxu0 0
  %151 = vmatpush1.bf16.msra.mxu0 0
  %152 = vmatprep.subr.bf16.mxu0 0
  %153 = vmatpush1.bf16.msra.mxu0 0
  %154 = vmatprep.subr.bf16.mxu0 0
  %155 = vmatpush1.bf16.msra.mxu0 0
  %156 = vmatprep.subr.bf16.mxu0 0
  %157 = vmatpush1.bf16.msra.mxu0 0
  %158 = vmatprep.subr.bf16.mxu0 0
  %159 = vmatpush1.bf16.msra.mxu0 0
  %160 = vmatprep.mubr.bf16.mxu0 0
  %161 = vmatmul.mubr.bf16.gmra.mrb[0].mxu0 %v126
  %v162 = vpop.f32.mrb[0].mxu0
  %v163 = vadd.f32 %v55, %v162
  %v164 = vpop.f32.mrb[0].mxu0
  %v165 = vpop.f32.mrb[0].mxu0
  %v166 = vpop.f32.mrb[0].mxu0
  %167 = vdwg.mxu0
  %v168 = vmax.f32 %v163, 0.0
  %s169 = scalar_lea.vmem [#allocation2], 16
  %170 = vst.msk [vmem:[%s169 + $0x1] sm:$0xf] %vm121, %v168
  %s171 = scalar_lea.vmem %s0, 4
  %v172 = vld [vmem:[%s171] sm:$0x3]
  %v174 = vsel %vm68, %v172, 0
  %176 = vmatprep.subr.bf16.mxu0 0
  %177 = vmatpush1.bf16.msra.mxu0 %v65
  %178 = vmatprep.subr.bf16.mxu0 0
  %179 = vmatpush1.bf16.msra.mxu0 %v77
  %180 = vmatprep.subr.bf16.mxu0 0
  %181 = vmatpush1.bf16.msra.mxu0 0
  %182 = vmatprep.subr.bf16.mxu0 0
  %183 = vmatpush1.bf16.msra.mxu0 0
  %184 = vmatprep.subr.bf16.mxu0 0
  %185 = vmatpush1.bf16.msra.mxu0 0
  %186 = vmatprep.subr.bf16.mxu0 0
  %187 = vmatpush1.bf16.msra.mxu0 0
  %188 = vmatprep.subr.bf16.mxu0 0
  %189 = vmatpush1.bf16.msra.mxu0 0
  %190 = vmatprep.subr.bf16.mxu0 0
  %191 = vmatpush1.bf16.msra.mxu0 0
  %192 = vmatprep.subr.bf16.mxu0 0
  %193 = vmatpush1.bf16.msra.mxu0 0
  %194 = vmatprep.subr.bf16.mxu0 0
  %195 = vmatpush1.bf16.msra.mxu0 0
  %196 = vmatprep.subr.bf16.mxu0 0
  %197 = vmatpush1.bf16.msra.mxu0 0
  %198 = vmatprep.subr.bf16.mxu0 0
  %199 = vmatpush1.bf16.msra.mxu0 0
  %200 = vmatprep.subr.bf16.mxu0 0
  %201 = vmatpush1.bf16.msra.mxu0 0
  %202 = vmatprep.subr.bf16.mxu0 0
  %203 = vmatpush1.bf16.msra.mxu0 0
  %204 = vmatprep.subr.bf16.mxu0 0
  %205 = vmatpush1.bf16.msra.mxu0 0
  %206 = vmatprep.subr.bf16.mxu0 0
  %207 = vmatpush1.bf16.msra.mxu0 0
  %208 = vmatprep.mubr.bf16.mxu0 0
  %209 = vmatmul.mubr.bf16.gmra.mrb[0].mxu0 %v174
  %v210 = vpop.f32.mrb[0].mxu0
  %v211 = vadd.f32 %v55, %v210
  %v212 = vpop.f32.mrb[0].mxu0
  %v213 = vpop.f32.mrb[0].mxu0
  %v214 = vpop.f32.mrb[0].mxu0
  %215 = vdwg.mxu0
  %v216 = vmax.f32 %v211, 0.0
  %s217 = scalar_lea.vmem [#allocation2], 24
  %218 = vst.msk [vmem:[%s217 + $0x1] sm:$0xf] %vm121, %v216
  %s219 = scalar_lea.vmem %s0, 6
  %v220 = vld [vmem:[%s219] sm:$0x3]
  %v222 = vsel %vm68, %v220, 0
  %224 = vmatprep.subr.bf16.mxu0 0
  %225 = vmatpush1.bf16.msra.mxu0 %v65
  %226 = vmatprep.subr.bf16.mxu0 0
  %227 = vmatpush1.bf16.msra.mxu0 %v77
  %228 = vmatprep.subr.bf16.mxu0 0
  %229 = vmatpush1.bf16.msra.mxu0 0
  %230 = vmatprep.subr.bf16.mxu0 0
  %231 = vmatpush1.bf16.msra.mxu0 0
  %232 = vmatprep.subr.bf16.mxu0 0
  %233 = vmatpush1.bf16.msra.mxu0 0
  %234 = vmatprep.subr.bf16.mxu0 0
  %235 = vmatpush1.bf16.msra.mxu0 0
  %236 = vmatprep.subr.bf16.mxu0 0
  %237 = vmatpush1.bf16.msra.mxu0 0
  %238 = vmatprep.subr.bf16.mxu0 0
  %239 = vmatpush1.bf16.msra.mxu0 0
  %240 = vmatprep.subr.bf16.mxu0 0
  %241 = vmatpush1.bf16.msra.mxu0 0
  %242 = vmatprep.subr.bf16.mxu0 0
  %243 = vmatpush1.bf16.msra.mxu0 0
  %244 = vmatprep.subr.bf16.mxu0 0
  %245 = vmatpush1.bf16.msra.mxu0 0
  %246 = vmatprep.subr.bf16.mxu0 0
  %247 = vmatpush1.bf16.msra.mxu0 0
  %248 = vmatprep.subr.bf16.mxu0 0
  %249 = vmatpush1.bf16.msra.mxu0 0
  %250 = vmatprep.subr.bf16.mxu0 0
  %251 = vmatpush1.bf16.msra.mxu0 0
  %252 = vmatprep.subr.bf16.mxu0 0
  %253 = vmatpush1.bf16.msra.mxu0 0
  %254 = vmatprep.subr.bf16.mxu0 0
  %255 = vmatpush1.bf16.msra.mxu0 0
  %256 = vmatprep.mubr.bf16.mxu0 0
  %257 = vmatmul.mubr.bf16.gmra.mrb[0].mxu0 %v222
  %v258 = vpop.f32.mrb[0].mxu0
  %v259 = vadd.f32 %v55, %v258
  %v260 = vpop.f32.mrb[0].mxu0
  %v261 = vpop.f32.mrb[0].mxu0
  %v262 = vpop.f32.mrb[0].mxu0
  %263 = vdwg.mxu0
  %v264 = vmax.f32 %v259, 0.0
  %s265 = scalar_lea.vmem [#allocation2], 32
  %266 = vst.msk [vmem:[%s265 + $0x1] sm:$0xf] %vm121, %v264
  %s267 = scalar_lea.vmem %s0, 8
  %v268 = vld [vmem:[%s267] sm:$0x3]
  %v270 = vsel %vm68, %v268, 0
  %272 = vmatprep.subr.bf16.mxu0 0
  %273 = vmatpush1.bf16.msra.mxu0 %v65
  %274 = vmatprep.subr.bf16.mxu0 0
  %275 = vmatpush1.bf16.msra.mxu0 %v77
  %276 = vmatprep.subr.bf16.mxu0 0
  %277 = vmatpush1.bf16.msra.mxu0 0
  %278 = vmatprep.subr.bf16.mxu0 0
  %279 = vmatpush1.bf16.msra.mxu0 0
  %280 = vmatprep.subr.bf16.mxu0 0
  %281 = vmatpush1.bf16.msra.mxu0 0
  %282 = vmatprep.subr.bf16.mxu0 0
  %283 = vmatpush1.bf16.msra.mxu0 0
  %284 = vmatprep.subr.bf16.mxu0 0
  %285 = vmatpush1.bf16.msra.mxu0 0
  %286 = vmatprep.subr.bf16.mxu0 0
  %287 = vmatpush1.bf16.msra.mxu0 0
  %288 = vmatprep.subr.bf16.mxu0 0
  %289 = vmatpush1.bf16.msra.mxu0 0
  %290 = vmatprep.subr.bf16.mxu0 0
  %291 = vmatpush1.bf16.msra.mxu0 0
  %292 = vmatprep.subr.bf16.mxu0 0
  %293 = vmatpush1.bf16.msra.mxu0 0
  %294 = vmatprep.subr.bf16.mxu0 0
  %295 = vmatpush1.bf16.msra.mxu0 0
  %296 = vmatprep.subr.bf16.mxu0 0
  %297 = vmatpush1.bf16.msra.mxu0 0
  %298 = vmatprep.subr.bf16.mxu0 0
  %299 = vmatpush1.bf16.msra.mxu0 0
  %300 = vmatprep.subr.bf16.mxu0 0
  %301 = vmatpush1.bf16.msra.mxu0 0
  %302 = vmatprep.subr.bf16.mxu0 0
  %303 = vmatpush1.bf16.msra.mxu0 0
  %304 = vmatprep.mubr.bf16.mxu0 0
  %305 = vmatmul.mubr.bf16.gmra.mrb[0].mxu0 %v270
  %v306 = vpop.f32.mrb[0].mxu0
  %v307 = vadd.f32 %v55, %v306
  %v308 = vpop.f32.mrb[0].mxu0
  %v309 = vpop.f32.mrb[0].mxu0
  %v310 = vpop.f32.mrb[0].mxu0
  %311 = vdwg.mxu0
  %v312 = vmax.f32 %v307, 0.0
  %s313 = scalar_lea.vmem [#allocation2], 56
  %314 = vst.msk [vmem:[%s313 + $0x1] sm:$0xf] %vm121, %v312
  %s315 = scalar_lea.vmem %s0, 10
  %v316 = vld [vmem:[%s315] sm:$0x3]
  %v318 = vsel %vm68, %v316, 0
  %320 = vmatprep.subr.bf16.mxu0 0
  %321 = vmatpush1.bf16.msra.mxu0 %v65
  %322 = vmatprep.subr.bf16.mxu0 0
  %323 = vmatpush1.bf16.msra.mxu0 %v77
  %324 = vmatprep.subr.bf16.mxu0 0
  %325 = vmatpush1.bf16.msra.mxu0 0
  %326 = vmatprep.subr.bf16.mxu0 0
  %327 = vmatpush1.bf16.msra.mxu0 0
  %328 = vmatprep.subr.bf16.mxu0 0
  %329 = vmatpush1.bf16.msra.mxu0 0
  %330 = vmatprep.subr.bf16.mxu0 0
  %331 = vmatpush1.bf16.msra.mxu0 0
  %332 = vmatprep.subr.bf16.mxu0 0
  %333 = vmatpush1.bf16.msra.mxu0 0
  %334 = vmatprep.subr.bf16.mxu0 0
  %335 = vmatpush1.bf16.msra.mxu0 0
  %336 = vmatprep.subr.bf16.mxu0 0
  %337 = vmatpush1.bf16.msra.mxu0 0
  %338 = vmatprep.subr.bf16.mxu0 0
  %339 = vmatpush1.bf16.msra.mxu0 0
  %340 = vmatprep.subr.bf16.mxu0 0
  %341 = vmatpush1.bf16.msra.mxu0 0
  %342 = vmatprep.subr.bf16.mxu0 0
  %343 = vmatpush1.bf16.msra.mxu0 0
  %344 = vmatprep.subr.bf16.mxu0 0
  %345 = vmatpush1.bf16.msra.mxu0 0
  %346 = vmatprep.subr.bf16.mxu0 0
  %347 = vmatpush1.bf16.msra.mxu0 0
  %348 = vmatprep.subr.bf16.mxu0 0
  %349 = vmatpush1.bf16.msra.mxu0 0
  %350 = vmatprep.subr.bf16.mxu0 0
  %351 = vmatpush1.bf16.msra.mxu0 0
  %352 = vmatprep.mubr.bf16.mxu0 0
  %353 = vmatmul.mubr.bf16.gmra.mrb[0].mxu0 %v318
  %v354 = vpop.f32.mrb[0].mxu0
  %v355 = vadd.f32 %v55, %v354
  %v356 = vpop.f32.mrb[0].mxu0
  %v357 = vpop.f32.mrb[0].mxu0
  %v358 = vpop.f32.mrb[0].mxu0
  %359 = vdwg.mxu0
  %v360 = vmax.f32 %v355, 0.0
  %s361 = scalar_lea.vmem [#allocation2], 64
  %362 = vst.msk [vmem:[%s361 + $0x1] sm:$0xf] %vm121, %v360
  %s363 = scalar_lea.vmem %s0, 12
  %v364 = vld [vmem:[%s363] sm:$0x3]
  %v366 = vsel %vm68, %v364, 0
  %368 = vmatprep.subr.bf16.mxu0 0
  %369 = vmatpush1.bf16.msra.mxu0 %v65
  %370 = vmatprep.subr.bf16.mxu0 0
  %371 = vmatpush1.bf16.msra.mxu0 %v77
  %372 = vmatprep.subr.bf16.mxu0 0
  %373 = vmatpush1.bf16.msra.mxu0 0
  %374 = vmatprep.subr.bf16.mxu0 0
  %375 = vmatpush1.bf16.msra.mxu0 0
  %376 = vmatprep.subr.bf16.mxu0 0
  %377 = vmatpush1.bf16.msra.mxu0 0
  %378 = vmatprep.subr.bf16.mxu0 0
  %379 = vmatpush1.bf16.msra.mxu0 0
  %380 = vmatprep.subr.bf16.mxu0 0
  %381 = vmatpush1.bf16.msra.mxu0 0
  %382 = vmatprep.subr.bf16.mxu0 0
  %383 = vmatpush1.bf16.msra.mxu0 0
  %384 = vmatprep.subr.bf16.mxu0 0
  %385 = vmatpush1.bf16.msra.mxu0 0
  %386 = vmatprep.subr.bf16.mxu0 0
  %387 = vmatpush1.bf16.msra.mxu0 0
  %388 = vmatprep.subr.bf16.mxu0 0
  %389 = vmatpush1.bf16.msra.mxu0 0
  %390 = vmatprep.subr.bf16.mxu0 0
  %391 = vmatpush1.bf16.msra.mxu0 0
  %392 = vmatprep.subr.bf16.mxu0 0
  %393 = vmatpush1.bf16.msra.mxu0 0
  %394 = vmatprep.subr.bf16.mxu0 0
  %395 = vmatpush1.bf16.msra.mxu0 0
  %396 = vmatprep.subr.bf16.mxu0 0
  %397 = vmatpush1.bf16.msra.mxu0 0
  %398 = vmatprep.subr.bf16.mxu0 0
  %399 = vmatpush1.bf16.msra.mxu0 0
  %400 = vmatprep.mubr.bf16.mxu0 0
  %401 = vmatmul.mubr.bf16.gmra.mrb[0].mxu0 %v366
  %v402 = vpop.f32.mrb[0].mxu0
  %v403 = vadd.f32 %v55, %v402
  %v404 = vpop.f32.mrb[0].mxu0
  %v405 = vpop.f32.mrb[0].mxu0
  %v406 = vpop.f32.mrb[0].mxu0
  %407 = vdwg.mxu0
  %v408 = vmax.f32 %v403, 0.0
  %s409 = scalar_lea.vmem [#allocation2], 72
  %410 = vst.msk [vmem:[%s409 + $0x1] sm:$0xf] %vm121, %v408
  %s411 = scalar_lea.vmem %s0, 14
  %v412 = vld [vmem:[%s411] sm:$0x3]
  %v414 = vsel %vm68, %v412, 0
  %416 = vmatprep.subr.bf16.mxu0 0
  %417 = vmatpush1.bf16.msra.mxu0 %v65
  %418 = vmatprep.subr.bf16.mxu0 0
  %419 = vmatpush1.bf16.msra.mxu0 %v77
  %420 = vmatprep.subr.bf16.mxu0 0
  %421 = vmatpush1.bf16.msra.mxu0 0
  %422 = vmatprep.subr.bf16.mxu0 0
  %423 = vmatpush1.bf16.msra.mxu0 0
  %424 = vmatprep.subr.bf16.mxu0 0
  %425 = vmatpush1.bf16.msra.mxu0 0
  %426 = vmatprep.subr.bf16.mxu0 0
  %427 = vmatpush1.bf16.msra.mxu0 0
  %428 = vmatprep.subr.bf16.mxu0 0
  %429 = vmatpush1.bf16.msra.mxu0 0
  %430 = vmatprep.subr.bf16.mxu0 0
  %431 = vmatpush1.bf16.msra.mxu0 0
  %432 = vmatprep.subr.bf16.mxu0 0
  %433 = vmatpush1.bf16.msra.mxu0 0
  %434 = vmatprep.subr.bf16.mxu0 0
  %435 = vmatpush1.bf16.msra.mxu0 0
  %436 = vmatprep.subr.bf16.mxu0 0
  %437 = vmatpush1.bf16.msra.mxu0 0
  %438 = vmatprep.subr.bf16.mxu0 0
  %439 = vmatpush1.bf16.msra.mxu0 0
  %440 = vmatprep.subr.bf16.mxu0 0
  %441 = vmatpush1.bf16.msra.mxu0 0
  %442 = vmatprep.subr.bf16.mxu0 0
  %443 = vmatpush1.bf16.msra.mxu0 0
  %444 = vmatprep.subr.bf16.mxu0 0
  %445 = vmatpush1.bf16.msra.mxu0 0
  %446 = vmatprep.subr.bf16.mxu0 0
  %447 = vmatpush1.bf16.msra.mxu0 0
  %448 = vmatprep.mubr.bf16.mxu0 0
  %449 = vmatmul.mubr.bf16.gmra.mrb[0].mxu0 %v414
  %v450 = vpop.f32.mrb[0].mxu0
  %v451 = vadd.f32 %v55, %v450
  %v452 = vpop.f32.mrb[0].mxu0
  %v453 = vpop.f32.mrb[0].mxu0
  %v454 = vpop.f32.mrb[0].mxu0
  %455 = vdwg.mxu0
  %v456 = vmax.f32 %v451, 0.0
  %s457 = scalar_lea.vmem [#allocation2], 80
  %458 = vst.msk [vmem:[%s457 + $0x1] sm:$0xf] %vm121, %v456
  %v459 = vld [vmem:[#allocation2] sm:$0xf]
  %v460 = vld [vmem:[#allocation2 + $0x8] sm:$0xf]
  %v461 = vld [vmem:[#allocation2 + $0x10] sm:$0xf]
  %v462 = vld [vmem:[#allocation2 + $0x18] sm:$0xf]
  %v463 = vld [vmem:[#allocation2 + $0x30] sm:$0xf]
  %v464 = vld [vmem:[#allocation2 + $0x38] sm:$0xf]
  %v465 = vld [vmem:[#allocation2 + $0x40] sm:$0xf]
  %v466 = vld [vmem:[#allocation2 + $0x48] sm:$0xf]
  %v467 = vld [vmem:[%s3] sm:$0x1]
  %v469 = vlaneseq
  %v470 = vshrl.u32 %v469, 7
  %v471 = vsub.s32 0, %v470
  %v472 = vrot.slane %v467, %v471
  %v474 = vmul.f32 %v459, %v472
  %v475 = vmul.f32 %v460, %v472
  %v476 = vmul.f32 %v461, %v472
  %v477 = vmul.f32 %v462, %v472
  %v478 = vmul.f32 %v463, %v472
  %v479 = vmul.f32 %v464, %v472
  %v480 = vmul.f32 %v465, %v472
  %v481 = vmul.f32 %v466, %v472
  %v482 = vadd.f32 %v474, 0.0
  %v483 = vadd.f32 %v475, 0.0
  %v484 = vadd.f32 %v476, 0.0
  %v485 = vadd.f32 %v477, 0.0
  %v486 = vadd.f32 %v478, 0.0
  %v487 = vadd.f32 %v479, 0.0
  %v488 = vadd.f32 %v480, 0.0
  %v489 = vadd.f32 %v481, 0.0
  %v490 = vld [vmem:[#allocation2 + $0x1] sm:$0xf]
  %v491 = vld [vmem:[#allocation2 + $0x9] sm:$0xf]
  %v492 = vld [vmem:[#allocation2 + $0x11] sm:$0xf]
  %v493 = vld [vmem:[#allocation2 + $0x19] sm:$0xf]
  %v494 = vld [vmem:[#allocation2 + $0x31] sm:$0xf]
  %v495 = vld [vmem:[#allocation2 + $0x39] sm:$0xf]
  %v496 = vld [vmem:[#allocation2 + $0x41] sm:$0xf]
  %v497 = vld [vmem:[#allocation2 + $0x49] sm:$0xf]
  %s498 = scalar_lea.vmem %s3, 1
  %v499 = vld [vmem:[%s498] sm:$0x1]
  %v501 = vlaneseq
  %v502 = vshrl.u32 %v501, 7
  %v503 = vsub.s32 0, %v502
  %v504 = vrot.slane %v499, %v503
  %v506 = vmul.f32 %v490, %v504
  %v507 = vmul.f32 %v491, %v504
  %v508 = vmul.f32 %v492, %v504
  %v509 = vmul.f32 %v493, %v504
  %v510 = vmul.f32 %v494, %v504
  %v511 = vmul.f32 %v495, %v504
  %v512 = vmul.f32 %v496, %v504
  %v513 = vmul.f32 %v497, %v504
  %v514 = vadd.f32 %v482, %v506
  %v515 = vadd.f32 %v483, %v507
  %v516 = vadd.f32 %v484, %v508
  %v517 = vadd.f32 %v485, %v509
  %v518 = vadd.f32 %v486, %v510
  %v519 = vadd.f32 %v487, %v511
  %v520 = vadd.f32 %v488, %v512
  %v521 = vadd.f32 %v489, %v513
  %v522 = vld [vmem:[#allocation2 + $0x2] sm:$0xf]
  %v523 = vld [vmem:[#allocation2 + $0xa] sm:$0xf]
  %v524 = vld [vmem:[#allocation2 + $0x12] sm:$0xf]
  %v525 = vld [vmem:[#allocation2 + $0x1a] sm:$0xf]
  %v526 = vld [vmem:[#allocation2 + $0x32] sm:$0xf]
  %v527 = vld [vmem:[#allocation2 + $0x3a] sm:$0xf]
  %v528 = vld [vmem:[#allocation2 + $0x42] sm:$0xf]
  %v529 = vld [vmem:[#allocation2 + $0x4a] sm:$0xf]
  %s530 = scalar_lea.vmem %s3, 2
  %v531 = vld [vmem:[%s530] sm:$0x1]
  %v533 = vlaneseq
  %v534 = vshrl.u32 %v533, 7
  %v535 = vsub.s32 0, %v534
  %v536 = vrot.slane %v531, %v535
  %v538 = vmul.f32 %v522, %v536
  %v539 = vmul.f32 %v523, %v536
  %v540 = vmul.f32 %v524, %v536
  %v541 = vmul.f32 %v525, %v536
  %v542 = vmul.f32 %v526, %v536
  %v543 = vmul.f32 %v527, %v536
  %v544 = vmul.f32 %v528, %v536
  %v545 = vmul.f32 %v529, %v536
  %v546 = vadd.f32 %v514, %v538
  %v547 = vadd.f32 %v515, %v539
  %v548 = vadd.f32 %v516, %v540
  %v549 = vadd.f32 %v517, %v541
  %v550 = vadd.f32 %v518, %v542
  %v551 = vadd.f32 %v519, %v543
  %v552 = vadd.f32 %v520, %v544
  %v553 = vadd.f32 %v521, %v545
  %v554 = vld [vmem:[%s120] sm:$0xf]
  %v555 = vld [vmem:[%s120 + $0x8] sm:$0xf]
  %v556 = vld [vmem:[%s120 + $0x10] sm:$0xf]
  %v557 = vld [vmem:[%s120 + $0x18] sm:$0xf]
  %v558 = vld [vmem:[%s120 + $0x30] sm:$0xf]
  %v559 = vld [vmem:[%s120 + $0x38] sm:$0xf]
  %v560 = vld [vmem:[%s120 + $0x40] sm:$0xf]
  %v561 = vld [vmem:[%s120 + $0x48] sm:$0xf]
  %s562 = scalar_lea.vmem %s3, 3
  %v563 = vld [vmem:[%s562] sm:$0x1]
  %v565 = vlaneseq
  %v566 = vshrl.u32 %v565, 7
  %v567 = vsub.s32 0, %v566
  %v568 = vrot.slane %v563, %v567
  %v570 = vmul.f32 %v554, %v568
  %v571 = vmul.f32 %v555, %v568
  %v572 = vmul.f32 %v556, %v568
  %v573 = vmul.f32 %v557, %v568
  %v574 = vmul.f32 %v558, %v568
  %v575 = vmul.f32 %v559, %v568
  %v576 = vmul.f32 %v560, %v568
  %v577 = vmul.f32 %v561, %v568
  %v578 = vadd.f32 %v546, %v570
  %v579 = vadd.f32 %v547, %v571
  %v580 = vadd.f32 %v548, %v572
  %v581 = vadd.f32 %v549, %v573
  %v582 = vadd.f32 %v550, %v574
  %v583 = vadd.f32 %v551, %v575
  %v584 = vadd.f32 %v552, %v576
  %v585 = vadd.f32 %v553, %v577
  %v586 = vld [vmem:[%s120 + $0x1] sm:$0xf]
  %v587 = vld [vmem:[%s120 + $0x9] sm:$0xf]
  %v588 = vld [vmem:[%s120 + $0x11] sm:$0xf]
  %v589 = vld [vmem:[%s120 + $0x19] sm:$0xf]
  %v590 = vld [vmem:[%s120 + $0x31] sm:$0xf]
  %v591 = vld [vmem:[%s120 + $0x39] sm:$0xf]
  %v592 = vld [vmem:[%s120 + $0x41] sm:$0xf]
  %v593 = vld [vmem:[%s120 + $0x49] sm:$0xf]
  %s594 = scalar_lea.vmem %s3, 4
  %v595 = vld [vmem:[%s594] sm:$0x1]
  %v597 = vlaneseq
  %v598 = vshrl.u32 %v597, 7
  %v599 = vsub.s32 0, %v598
  %v600 = vrot.slane %v595, %v599
  %v602 = vmul.f32 %v586, %v600
  %v603 = vmul.f32 %v587, %v600
  %v604 = vmul.f32 %v588, %v600
  %v605 = vmul.f32 %v589, %v600
  %v606 = vmul.f32 %v590, %v600
  %v607 = vmul.f32 %v591, %v600
  %v608 = vmul.f32 %v592, %v600
  %v609 = vmul.f32 %v593, %v600
  %v610 = vadd.f32 %v578, %v602
  %v611 = vadd.f32 %v579, %v603
  %v612 = vadd.f32 %v580, %v604
  %v613 = vadd.f32 %v581, %v605
  %v614 = vadd.f32 %v582, %v606
  %v615 = vadd.f32 %v583, %v607
  %v616 = vadd.f32 %v584, %v608
  %v617 = vadd.f32 %v585, %v609
  %v618 = vld [vmem:[%s120 + $0x2] sm:$0xf]
  %v619 = vld [vmem:[%s120 + $0xa] sm:$0xf]
  %v620 = vld [vmem:[%s120 + $0x12] sm:$0xf]
  %v621 = vld [vmem:[%s120 + $0x1a] sm:$0xf]
  %v622 = vld [vmem:[%s120 + $0x32] sm:$0xf]
  %v623 = vld [vmem:[%s120 + $0x3a] sm:$0xf]
  %v624 = vld [vmem:[%s120 + $0x42] sm:$0xf]
  %v625 = vld [vmem:[%s120 + $0x4a] sm:$0xf]
  %s626 = scalar_lea.vmem %s3, 5
  %v627 = vld [vmem:[%s626] sm:$0x1]
  %v629 = vlaneseq
  %v630 = vshrl.u32 %v629, 7
  %v631 = vsub.s32 0, %v630
  %v632 = vrot.slane %v627, %v631
  %v634 = vmul.f32 %v618, %v632
  %v635 = vmul.f32 %v619, %v632
  %v636 = vmul.f32 %v620, %v632
  %v637 = vmul.f32 %v621, %v632
  %v638 = vmul.f32 %v622, %v632
  %v639 = vmul.f32 %v623, %v632
  %v640 = vmul.f32 %v624, %v632
  %v641 = vmul.f32 %v625, %v632
  %v642 = vadd.f32 %v610, %v634
  %v643 = vadd.f32 %v611, %v635
  %v644 = vadd.f32 %v612, %v636
  %v645 = vadd.f32 %v613, %v637
  %v646 = vadd.f32 %v614, %v638
  %v647 = vadd.f32 %v615, %v639
  %v648 = vadd.f32 %v616, %v640
  %v649 = vadd.f32 %v617, %v641
  %v650 = vld [vmem:[%s169] sm:$0xf]
  %v651 = vld [vmem:[%s169 + $0x8] sm:$0xf]
  %v652 = vld [vmem:[%s169 + $0x10] sm:$0xf]
  %v653 = vld [vmem:[%s169 + $0x18] sm:$0xf]
  %v654 = vld [vmem:[%s169 + $0x30] sm:$0xf]
  %v655 = vld [vmem:[%s169 + $0x38] sm:$0xf]
  %v656 = vld [vmem:[%s169 + $0x40] sm:$0xf]
  %v657 = vld [vmem:[%s169 + $0x48] sm:$0xf]
  %s658 = scalar_lea.vmem %s3, 6
  %v659 = vld [vmem:[%s658] sm:$0x1]
  %v661 = vlaneseq
  %v662 = vshrl.u32 %v661, 7
  %v663 = vsub.s32 0, %v662
  %v664 = vrot.slane %v659, %v663
  %v666 = vmul.f32 %v650, %v664
  %v667 = vmul.f32 %v651, %v664
  %v668 = vmul.f32 %v652, %v664
  %v669 = vmul.f32 %v653, %v664
  %v670 = vmul.f32 %v654, %v664
  %v671 = vmul.f32 %v655, %v664
  %v672 = vmul.f32 %v656, %v664
  %v673 = vmul.f32 %v657, %v664
  %v674 = vadd.f32 %v642, %v666
  %v675 = vadd.f32 %v643, %v667
  %v676 = vadd.f32 %v644, %v668
  %v677 = vadd.f32 %v645, %v669
  %v678 = vadd.f32 %v646, %v670
  %v679 = vadd.f32 %v647, %v671
  %v680 = vadd.f32 %v648, %v672
  %v681 = vadd.f32 %v649, %v673
  %v682 = vld [vmem:[%s169 + $0x1] sm:$0xf]
  %v683 = vld [vmem:[%s169 + $0x9] sm:$0xf]
  %v684 = vld [vmem:[%s169 + $0x11] sm:$0xf]
  %v685 = vld [vmem:[%s169 + $0x19] sm:$0xf]
  %v686 = vld [vmem:[%s169 + $0x31] sm:$0xf]
  %v687 = vld [vmem:[%s169 + $0x39] sm:$0xf]
  %v688 = vld [vmem:[%s169 + $0x41] sm:$0xf]
  %v689 = vld [vmem:[%s169 + $0x49] sm:$0xf]
  %s690 = scalar_lea.vmem %s3, 7
  %v691 = vld [vmem:[%s690] sm:$0x1]
  %v693 = vlaneseq
  %v694 = vshrl.u32 %v693, 7
  %v695 = vsub.s32 0, %v694
  %v696 = vrot.slane %v691, %v695
  %v698 = vmul.f32 %v682, %v696
  %v699 = vmul.f32 %v683, %v696
  %v700 = vmul.f32 %v684, %v696
  %v701 = vmul.f32 %v685, %v696
  %v702 = vmul.f32 %v686, %v696
  %v703 = vmul.f32 %v687, %v696
  %v704 = vmul.f32 %v688, %v696
  %v705 = vmul.f32 %v689, %v696
  %v706 = vadd.f32 %v674, %v698
  %v707 = vadd.f32 %v675, %v699
  %v708 = vadd.f32 %v676, %v700
  %v709 = vadd.f32 %v677, %v701
  %v710 = vadd.f32 %v678, %v702
  %v711 = vadd.f32 %v679, %v703
  %v712 = vadd.f32 %v680, %v704
  %v713 = vadd.f32 %v681, %v705
  %v714 = vld [vmem:[%s169 + $0x2] sm:$0xf]
  %v715 = vld [vmem:[%s169 + $0xa] sm:$0xf]
  %v716 = vld [vmem:[%s169 + $0x12] sm:$0xf]
  %v717 = vld [vmem:[%s169 + $0x1a] sm:$0xf]
  %v718 = vld [vmem:[%s169 + $0x32] sm:$0xf]
  %v719 = vld [vmem:[%s169 + $0x3a] sm:$0xf]
  %v720 = vld [vmem:[%s169 + $0x42] sm:$0xf]
  %v721 = vld [vmem:[%s169 + $0x4a] sm:$0xf]
  %s722 = scalar_lea.vmem %s3, 8
  %v723 = vld [vmem:[%s722] sm:$0x1]
  %v725 = vlaneseq
  %v726 = vshrl.u32 %v725, 7
  %v727 = vsub.s32 0, %v726
  %v728 = vrot.slane %v723, %v727
  %v730 = vmul.f32 %v714, %v728
  %v731 = vmul.f32 %v715, %v728
  %v732 = vmul.f32 %v716, %v728
  %v733 = vmul.f32 %v717, %v728
  %v734 = vmul.f32 %v718, %v728
  %v735 = vmul.f32 %v719, %v728
  %v736 = vmul.f32 %v720, %v728
  %v737 = vmul.f32 %v721, %v728
  %v738 = vadd.f32 %v706, %v730
  %v739 = vadd.f32 %v707, %v731
  %v740 = vadd.f32 %v708, %v732
  %v741 = vadd.f32 %v709, %v733
  %v742 = vadd.f32 %v710, %v734
  %v743 = vadd.f32 %v711, %v735
  %v744 = vadd.f32 %v712, %v736
  %v745 = vadd.f32 %v713, %v737
  %v746 = vld [vmem:[%s4] sm:$0x1]
  %v748 = vlaneseq
  %v749 = vshrl.u32 %v748, 7
  %v750 = vsub.s32 0, %v749
  %v751 = vrot.slane %v746, %v750
  %v753 = vadd.f32 %v738, %v751
  %v754 = vadd.f32 %v739, %v751
  %v755 = vadd.f32 %v740, %v751
  %v756 = vadd.f32 %v741, %v751
  %v757 = vadd.f32 %v742, %v751
  %v758 = vadd.f32 %v743, %v751
  %v759 = vadd.f32 %v744, %v751
  %v760 = vadd.f32 %v745, %v751
  %v761 = vpack.c.bf16 %v753, %v753
  %v763 = vlaneseq
  %v764 = vshrl.u32 %v763, 7
  %v765 = vsub.s32 0, %v764
  %v766 = vrot.slane %v36, %v765
  %v772 = vunpack.c.l.b16 %v32
  %v773 = vunpack.c.l.b16 %v33
  %v774 = vunpack.c.l.b16 %v34
  %v775 = vunpack.c.l.b16 %v35
  %v776 = vpack.c.b16 %v773, %v772
  %v777 = vpack.c.b16 %v775, %v774
  %v780 = vsel %vm68, %v761, 0
  %v783 = vand.u32 %v777, %v75
  %785 = vmatprep.subr.bf16.mxu0 0
  %786 = vmatpush1.bf16.msra.mxu0 %v776
  %787 = vmatprep.subr.bf16.mxu0 0
  %788 = vmatpush1.bf16.msra.mxu0 %v783
  %789 = vmatprep.subr.bf16.mxu0 0
  %790 = vmatpush1.bf16.msra.mxu0 0
  %791 = vmatprep.subr.bf16.mxu0 0
  %792 = vmatpush1.bf16.msra.mxu0 0
  %793 = vmatprep.subr.bf16.mxu0 0
  %794 = vmatpush1.bf16.msra.mxu0 0
  %795 = vmatprep.subr.bf16.mxu0 0
  %796 = vmatpush1.bf16.msra.mxu0 0
  %797 = vmatprep.subr.bf16.mxu0 0
  %798 = vmatpush1.bf16.msra.mxu0 0
  %799 = vmatprep.subr.bf16.mxu0 0
  %800 = vmatpush1.bf16.msra.mxu0 0
  %801 = vmatprep.subr.bf16.mxu0 0
  %802 = vmatpush1.bf16.msra.mxu0 0
  %803 = vmatprep.subr.bf16.mxu0 0
  %804 = vmatpush1.bf16.msra.mxu0 0
  %805 = vmatprep.subr.bf16.mxu0 0
  %806 = vmatpush1.bf16.msra.mxu0 0
  %807 = vmatprep.subr.bf16.mxu0 0
  %808 = vmatpush1.bf16.msra.mxu0 0
  %809 = vmatprep.subr.bf16.mxu0 0
  %810 = vmatpush1.bf16.msra.mxu0 0
  %811 = vmatprep.subr.bf16.mxu0 0
  %812 = vmatpush1.bf16.msra.mxu0 0
  %813 = vmatprep.subr.bf16.mxu0 0
  %814 = vmatpush1.bf16.msra.mxu0 0
  %815 = vmatprep.subr.bf16.mxu0 0
  %816 = vmatpush1.bf16.msra.mxu0 0
  %817 = vmatprep.mubr.bf16.mxu0 0
  %818 = vmatmul.mubr.bf16.gmra.mrb[0].mxu0 %v780
  %v819 = vpop.f32.mrb[0].mxu0
  %v820 = vadd.f32 %v766, %v819
  %v821 = vpop.f32.mrb[0].mxu0
  %v822 = vpop.f32.mrb[0].mxu0
  %v823 = vpop.f32.mrb[0].mxu0
  %824 = vdwg.mxu0
  %v825 = vmax.f32 %v820, 0.0
  %v826 = vpack.c.bf16 %v825, %v825
  %vm827 = vcmask 230400
  %828 = vst.msk [vmem:[%s7] sm:$0x3] %vm827, %v826
  %v829 = vpack.c.bf16 %v754, %v754
  %v831 = vsel %vm68, %v829, 0
  %833 = vmatprep.subr.bf16.mxu0 0
  %834 = vmatpush1.bf16.msra.mxu0 %v776
  %835 = vmatprep.subr.bf16.mxu0 0
  %836 = vmatpush1.bf16.msra.mxu0 %v783
  %837 = vmatprep.subr.bf16.mxu0 0
  %838 = vmatpush1.bf16.msra.mxu0 0
  %839 = vmatprep.subr.bf16.mxu0 0
  %840 = vmatpush1.bf16.msra.mxu0 0
  %841 = vmatprep.subr.bf16.mxu0 0
  %842 = vmatpush1.bf16.msra.mxu0 0
  %843 = vmatprep.subr.bf16.mxu0 0
  %844 = vmatpush1.bf16.msra.mxu0 0
  %845 = vmatprep.subr.bf16.mxu0 0
  %846 = vmatpush1.bf16.msra.mxu0 0
  %847 = vmatprep.subr.bf16.mxu0 0
  %848 = vmatpush1.bf16.msra.mxu0 0
  %849 = vmatprep.subr.bf16.mxu0 0
  %850 = vmatpush1.bf16.msra.mxu0 0
  %851 = vmatprep.subr.bf16.mxu0 0
  %852 = vmatpush1.bf16.msra.mxu0 0
  %853 = vmatprep.subr.bf16.mxu0 0
  %854 = vmatpush1.bf16.msra.mxu0 0
  %855 = vmatprep.subr.bf16.mxu0 0
  %856 = vmatpush1.bf16.msra.mxu0 0
  %857 = vmatprep.subr.bf16.mxu0 0
  %858 = vmatpush1.bf16.msra.mxu0 0
  %859 = vmatprep.subr.bf16.mxu0 0
  %860 = vmatpush1.bf16.msra.mxu0 0
  %861 = vmatprep.subr.bf16.mxu0 0
  %862 = vmatpush1.bf16.msra.mxu0 0
  %863 = vmatprep.subr.bf16.mxu0 0
  %864 = vmatpush1.bf16.msra.mxu0 0
  %865 = vmatprep.mubr.bf16.mxu0 0
  %866 = vmatmul.mubr.bf16.gmra.mrb[0].mxu0 %v831
  %v867 = vpop.f32.mrb[0].mxu0
  %v868 = vadd.f32 %v766, %v867
  %v869 = vpop.f32.mrb[0].mxu0
  %v870 = vpop.f32.mrb[0].mxu0
  %v871 = vpop.f32.mrb[0].mxu0
  %872 = vdwg.mxu0
  %v873 = vmax.f32 %v868, 0.0
  %v874 = vpack.c.bf16 %v873, %v873
  %s875 = scalar_lea.vmem %s7, 2
  %876 = vst.msk [vmem:[%s875] sm:$0x3] %vm827, %v874
  %v877 = vpack.c.bf16 %v755, %v755
  %v879 = vsel %vm68, %v877, 0
  %881 = vmatprep.subr.bf16.mxu0 0
  %882 = vmatpush1.bf16.msra.mxu0 %v776
  %883 = vmatprep.subr.bf16.mxu0 0
  %884 = vmatpush1.bf16.msra.mxu0 %v783
  %885 = vmatprep.subr.bf16.mxu0 0
  %886 = vmatpush1.bf16.msra.mxu0 0
  %887 = vmatprep.subr.bf16.mxu0 0
  %888 = vmatpush1.bf16.msra.mxu0 0
  %889 = vmatprep.subr.bf16.mxu0 0
  %890 = vmatpush1.bf16.msra.mxu0 0
  %891 = vmatprep.subr.bf16.mxu0 0
  %892 = vmatpush1.bf16.msra.mxu0 0
  %893 = vmatprep.subr.bf16.mxu0 0
  %894 = vmatpush1.bf16.msra.mxu0 0
  %895 = vmatprep.subr.bf16.mxu0 0
  %896 = vmatpush1.bf16.msra.mxu0 0
  %897 = vmatprep.subr.bf16.mxu0 0
  %898 = vmatpush1.bf16.msra.mxu0 0
  %899 = vmatprep.subr.bf16.mxu0 0
  %900 = vmatpush1.bf16.msra.mxu0 0
  %901 = vmatprep.subr.bf16.mxu0 0
  %902 = vmatpush1.bf16.msra.mxu0 0
  %903 = vmatprep.subr.bf16.mxu0 0
  %904 = vmatpush1.bf16.msra.mxu0 0
  %905 = vmatprep.subr.bf16.mxu0 0
  %906 = vmatpush1.bf16.msra.mxu0 0
  %907 = vmatprep.subr.bf16.mxu0 0
  %908 = vmatpush1.bf16.msra.mxu0 0
  %909 = vmatprep.subr.bf16.mxu0 0
  %910 = vmatpush1.bf16.msra.mxu0 0
  %911 = vmatprep.subr.bf16.mxu0 0
  %912 = vmatpush1.bf16.msra.mxu0 0
  %913 = vmatprep.mubr.bf16.mxu0 0
  %914 = vmatmul.mubr.bf16.gmra.mrb[0].mxu0 %v879
  %v915 = vpop.f32.mrb[0].mxu0
  %v916 = vadd.f32 %v766, %v915
  %v917 = vpop.f32.mrb[0].mxu0
  %v918 = vpop.f32.mrb[0].mxu0
  %v919 = vpop.f32.mrb[0].mxu0
  %920 = vdwg.mxu0
  %v921 = vmax.f32 %v916, 0.0
  %v922 = vpack.c.bf16 %v921, %v921
  %s923 = scalar_lea.vmem %s7, 4
  %924 = vst.msk [vmem:[%s923] sm:$0x3] %vm827, %v922
  %v925 = vpack.c.bf16 %v756, %v756
  %v927 = vsel %vm68, %v925, 0
  %929 = vmatprep.subr.bf16.mxu0 0
  %930 = vmatpush1.bf16.msra.mxu0 %v776
  %931 = vmatprep.subr.bf16.mxu0 0
  %932 = vmatpush1.bf16.msra.mxu0 %v783
  %933 = vmatprep.subr.bf16.mxu0 0
  %934 = vmatpush1.bf16.msra.mxu0 0
  %935 = vmatprep.subr.bf16.mxu0 0
  %936 = vmatpush1.bf16.msra.mxu0 0
  %937 = vmatprep.subr.bf16.mxu0 0
  %938 = vmatpush1.bf16.msra.mxu0 0
  %939 = vmatprep.subr.bf16.mxu0 0
  %940 = vmatpush1.bf16.msra.mxu0 0
  %941 = vmatprep.subr.bf16.mxu0 0
  %942 = vmatpush1.bf16.msra.mxu0 0
  %943 = vmatprep.subr.bf16.mxu0 0
  %944 = vmatpush1.bf16.msra.mxu0 0
  %945 = vmatprep.subr.bf16.mxu0 0
  %946 = vmatpush1.bf16.msra.mxu0 0
  %947 = vmatprep.subr.bf16.mxu0 0
  %948 = vmatpush1.bf16.msra.mxu0 0
  %949 = vmatprep.subr.bf16.mxu0 0
  %950 = vmatpush1.bf16.msra.mxu0 0
  %951 = vmatprep.subr.bf16.mxu0 0
  %952 = vmatpush1.bf16.msra.mxu0 0
  %953 = vmatprep.subr.bf16.mxu0 0
  %954 = vmatpush1.bf16.msra.mxu0 0
  %955 = vmatprep.subr.bf16.mxu0 0
  %956 = vmatpush1.bf16.msra.mxu0 0
  %957 = vmatprep.subr.bf16.mxu0 0
  %958 = vmatpush1.bf16.msra.mxu0 0
  %959 = vmatprep.subr.bf16.mxu0 0
  %960 = vmatpush1.bf16.msra.mxu0 0
  %961 = vmatprep.mubr.bf16.mxu0 0
  %962 = vmatmul.mubr.bf16.gmra.mrb[0].mxu0 %v927
  %v963 = vpop.f32.mrb[0].mxu0
  %v964 = vadd.f32 %v766, %v963
  %v965 = vpop.f32.mrb[0].mxu0
  %v966 = vpop.f32.mrb[0].mxu0
  %v967 = vpop.f32.mrb[0].mxu0
  %968 = vdwg.mxu0
  %v969 = vmax.f32 %v964, 0.0
  %v970 = vpack.c.bf16 %v969, %v969
  %s971 = scalar_lea.vmem %s7, 6
  %972 = vst.msk [vmem:[%s971] sm:$0x3] %vm827, %v970
  %v973 = vpack.c.bf16 %v757, %v757
  %v975 = vsel %vm68, %v973, 0
  %977 = vmatprep.subr.bf16.mxu0 0
  %978 = vmatpush1.bf16.msra.mxu0 %v776
  %979 = vmatprep.subr.bf16.mxu0 0
  %980 = vmatpush1.bf16.msra.mxu0 %v783
  %981 = vmatprep.subr.bf16.mxu0 0
  %982 = vmatpush1.bf16.msra.mxu0 0
  %983 = vmatprep.subr.bf16.mxu0 0
  %984 = vmatpush1.bf16.msra.mxu0 0
  %985 = vmatprep.subr.bf16.mxu0 0
  %986 = vmatpush1.bf16.msra.mxu0 0
  %987 = vmatprep.subr.bf16.mxu0 0
  %988 = vmatpush1.bf16.msra.mxu0 0
  %989 = vmatprep.subr.bf16.mxu0 0
  %990 = vmatpush1.bf16.msra.mxu0 0
  %991 = vmatprep.subr.bf16.mxu0 0
  %992 = vmatpush1.bf16.msra.mxu0 0
  %993 = vmatprep.subr.bf16.mxu0 0
  %994 = vmatpush1.bf16.msra.mxu0 0
  %995 = vmatprep.subr.bf16.mxu0 0
  %996 = vmatpush1.bf16.msra.mxu0 0
  %997 = vmatprep.subr.bf16.mxu0 0
  %998 = vmatpush1.bf16.msra.mxu0 0
  %999 = vmatprep.subr.bf16.mxu0 0
  %1000 = vmatpush1.bf16.msra.mxu0 0
  %1001 = vmatprep.subr.bf16.mxu0 0
  %1002 = vmatpush1.bf16.msra.mxu0 0
  %1003 = vmatprep.subr.bf16.mxu0 0
  %1004 = vmatpush1.bf16.msra.mxu0 0
  %1005 = vmatprep.subr.bf16.mxu0 0
  %1006 = vmatpush1.bf16.msra.mxu0 0
  %1007 = vmatprep.subr.bf16.mxu0 0
  %1008 = vmatpush1.bf16.msra.mxu0 0
  %1009 = vmatprep.mubr.bf16.mxu0 0
  %1010 = vmatmul.mubr.bf16.gmra.mrb[0].mxu0 %v975
  %v1011 = vpop.f32.mrb[0].mxu0
  %v1012 = vadd.f32 %v766, %v1011
  %v1013 = vpop.f32.mrb[0].mxu0
  %v1014 = vpop.f32.mrb[0].mxu0
  %v1015 = vpop.f32.mrb[0].mxu0
  %1016 = vdwg.mxu0
  %v1017 = vmax.f32 %v1012, 0.0
  %v1018 = vpack.c.bf16 %v1017, %v1017
  %s1019 = scalar_lea.vmem %s7, 8
  %1020 = vst.msk [vmem:[%s1019] sm:$0x3] %vm827, %v1018
  %v1021 = vpack.c.bf16 %v758, %v758
  %v1023 = vsel %vm68, %v1021, 0
  %1025 = vmatprep.subr.bf16.mxu0 0
  %1026 = vmatpush1.bf16.msra.mxu0 %v776
  %1027 = vmatprep.subr.bf16.mxu0 0
  %1028 = vmatpush1.bf16.msra.mxu0 %v783
  %1029 = vmatprep.subr.bf16.mxu0 0
  %1030 = vmatpush1.bf16.msra.mxu0 0
  %1031 = vmatprep.subr.bf16.mxu0 0
  %1032 = vmatpush1.bf16.msra.mxu0 0
  %1033 = vmatprep.subr.bf16.mxu0 0
  %1034 = vmatpush1.bf16.msra.mxu0 0
  %1035 = vmatprep.subr.bf16.mxu0 0
  %1036 = vmatpush1.bf16.msra.mxu0 0
  %1037 = vmatprep.subr.bf16.mxu0 0
  %1038 = vmatpush1.bf16.msra.mxu0 0
  %1039 = vmatprep.subr.bf16.mxu0 0
  %1040 = vmatpush1.bf16.msra.mxu0 0
  %1041 = vmatprep.subr.bf16.mxu0 0
  %1042 = vmatpush1.bf16.msra.mxu0 0
  %1043 = vmatprep.subr.bf16.mxu0 0
  %1044 = vmatpush1.bf16.msra.mxu0 0
  %1045 = vmatprep.subr.bf16.mxu0 0
  %1046 = vmatpush1.bf16.msra.mxu0 0
  %1047 = vmatprep.subr.bf16.mxu0 0
  %1048 = vmatpush1.bf16.msra.mxu0 0
  %1049 = vmatprep.subr.bf16.mxu0 0
  %1050 = vmatpush1.bf16.msra.mxu0 0
  %1051 = vmatprep.subr.bf16.mxu0 0
  %1052 = vmatpush1.bf16.msra.mxu0 0
  %1053 = vmatprep.subr.bf16.mxu0 0
  %1054 = vmatpush1.bf16.msra.mxu0 0
  %1055 = vmatprep.subr.bf16.mxu0 0
  %1056 = vmatpush1.bf16.msra.mxu0 0
  %1057 = vmatprep.mubr.bf16.mxu0 0
  %1058 = vmatmul.mubr.bf16.gmra.mrb[0].mxu0 %v1023
  %v1059 = vpop.f32.mrb[0].mxu0
  %v1060 = vadd.f32 %v766, %v1059
  %v1061 = vpop.f32.mrb[0].mxu0
  %v1062 = vpop.f32.mrb[0].mxu0
  %v1063 = vpop.f32.mrb[0].mxu0
  %1064 = vdwg.mxu0
  %v1065 = vmax.f32 %v1060, 0.0
  %v1066 = vpack.c.bf16 %v1065, %v1065
  %s1067 = scalar_lea.vmem %s7, 10
  %1068 = vst.msk [vmem:[%s1067] sm:$0x3] %vm827, %v1066
  %v1069 = vpack.c.bf16 %v759, %v759
  %v1071 = vsel %vm68, %v1069, 0
  %1073 = vmatprep.subr.bf16.mxu0 0
  %1074 = vmatpush1.bf16.msra.mxu0 %v776
  %1075 = vmatprep.subr.bf16.mxu0 0
  %1076 = vmatpush1.bf16.msra.mxu0 %v783
  %1077 = vmatprep.subr.bf16.mxu0 0
  %1078 = vmatpush1.bf16.msra.mxu0 0
  %1079 = vmatprep.subr.bf16.mxu0 0
  %1080 = vmatpush1.bf16.msra.mxu0 0
  %1081 = vmatprep.subr.bf16.mxu0 0
  %1082 = vmatpush1.bf16.msra.mxu0 0
  %1083 = vmatprep.subr.bf16.mxu0 0
  %1084 = vmatpush1.bf16.msra.mxu0 0
  %1085 = vmatprep.subr.bf16.mxu0 0
  %1086 = vmatpush1.bf16.msra.mxu0 0
  %1087 = vmatprep.subr.bf16.mxu0 0
  %1088 = vmatpush1.bf16.msra.mxu0 0
  %1089 = vmatprep.subr.bf16.mxu0 0
  %1090 = vmatpush1.bf16.msra.mxu0 0
  %1091 = vmatprep.subr.bf16.mxu0 0
  %1092 = vmatpush1.bf16.msra.mxu0 0
  %1093 = vmatprep.subr.bf16.mxu0 0
  %1094 = vmatpush1.bf16.msra.mxu0 0
  %1095 = vmatprep.subr.bf16.mxu0 0
  %1096 = vmatpush1.bf16.msra.mxu0 0
  %1097 = vmatprep.subr.bf16.mxu0 0
  %1098 = vmatpush1.bf16.msra.mxu0 0
  %1099 = vmatprep.subr.bf16.mxu0 0
  %1100 = vmatpush1.bf16.msra.mxu0 0
  %1101 = vmatprep.subr.bf16.mxu0 0
  %1102 = vmatpush1.bf16.msra.mxu0 0
  %1103 = vmatprep.subr.bf16.mxu0 0
  %1104 = vmatpush1.bf16.msra.mxu0 0
  %1105 = vmatprep.mubr.bf16.mxu0 0
  %1106 = vmatmul.mubr.bf16.gmra.mrb[0].mxu0 %v1071
  %v1107 = vpop.f32.mrb[0].mxu0
  %v1108 = vadd.f32 %v766, %v1107
  %v1109 = vpop.f32.mrb[0].mxu0
  %v1110 = vpop.f32.mrb[0].mxu0
  %v1111 = vpop.f32.mrb[0].mxu0
  %1112 = vdwg.mxu0
  %v1113 = vmax.f32 %v1108, 0.0
  %v1114 = vpack.c.bf16 %v1113, %v1113
  %s1115 = scalar_lea.vmem %s7, 12
  %1116 = vst.msk [vmem:[%s1115] sm:$0x3] %vm827, %v1114
  %v1117 = vpack.c.bf16 %v760, %v760
  %v1119 = vsel %vm68, %v1117, 0
  %1121 = vmatprep.subr.bf16.mxu0 0
  %1122 = vmatpush1.bf16.msra.mxu0 %v776
  %1123 = vmatprep.subr.bf16.mxu0 0
  %1124 = vmatpush1.bf16.msra.mxu0 %v783
  %1125 = vmatprep.subr.bf16.mxu0 0
  %1126 = vmatpush1.bf16.msra.mxu0 0
  %1127 = vmatprep.subr.bf16.mxu0 0
  %1128 = vmatpush1.bf16.msra.mxu0 0
  %1129 = vmatprep.subr.bf16.mxu0 0
  %1130 = vmatpush1.bf16.msra.mxu0 0
  %1131 = vmatprep.subr.bf16.mxu0 0
  %1132 = vmatpush1.bf16.msra.mxu0 0
  %1133 = vmatprep.subr.bf16.mxu0 0
  %1134 = vmatpush1.bf16.msra.mxu0 0
  %1135 = vmatprep.subr.bf16.mxu0 0
  %1136 = vmatpush1.bf16.msra.mxu0 0
  %1137 = vmatprep.subr.bf16.mxu0 0
  %1138 = vmatpush1.bf16.msra.mxu0 0
  %1139 = vmatprep.subr.bf16.mxu0 0
  %1140 = vmatpush1.bf16.msra.mxu0 0
  %1141 = vmatprep.subr.bf16.mxu0 0
  %1142 = vmatpush1.bf16.msra.mxu0 0
  %1143 = vmatprep.subr.bf16.mxu0 0
  %1144 = vmatpush1.bf16.msra.mxu0 0
  %1145 = vmatprep.subr.bf16.mxu0 0
  %1146 = vmatpush1.bf16.msra.mxu0 0
  %1147 = vmatprep.subr.bf16.mxu0 0
  %1148 = vmatpush1.bf16.msra.mxu0 0
  %1149 = vmatprep.subr.bf16.mxu0 0
  %1150 = vmatpush1.bf16.msra.mxu0 0
  %1151 = vmatprep.subr.bf16.mxu0 0
  %1152 = vmatpush1.bf16.msra.mxu0 0
  %1153 = vmatprep.mubr.bf16.mxu0 0
  %1154 = vmatmul.mubr.bf16.gmra.mrb[0].mxu0 %v1119
  %v1155 = vpop.f32.mrb[0].mxu0
  %v1156 = vadd.f32 %v766, %v1155
  %v1157 = vpop.f32.mrb[0].mxu0
  %v1158 = vpop.f32.mrb[0].mxu0
  %v1159 = vpop.f32.mrb[0].mxu0
  %1160 = vdwg.mxu0
  %v1161 = vmax.f32 %v1156, 0.0
  %v1162 = vpack.c.bf16 %v1161, %v1161
  %s1163 = scalar_lea.vmem %s7, 14
  %1164 = vst.msk [vmem:[%s1163] sm:$0x3] %vm827, %v1162
  // Predicated region
  $region30: #{shufflenet_v2_forward.22} parent=0 // pred_check
    _
  $region31: #{shufflenet_v2_forward.22} parent=0 // pred_check_branch
    %1166 = sbr.rel (0) target = $region33
  $region32: #{shufflenet_v2_forward.22} parent=0 // pred_region
    _
  $region33: #{shufflenet_v2_forward.22} parent=0 // pred_fallthru
    _
  // Predicated region
  $region34: #{shufflenet_v2_forward.22} parent=0 // pred_check
    _
  $region35: #{shufflenet_v2_forward.22} parent=0 // pred_check_branch
    %1168 = sbr.rel (0) target = $region37
  $region36: #{shufflenet_v2_forward.22} parent=0 // pred_region
    _
  $region37: #{shufflenet_v2_forward.22} parent=0 // pred_fallthru
    _

// kernel: shufflenet_v2_forward.26
$region0: #{shufflenet_v2_forward.26}
  #allocation0 [shape = 'u32[]', space=smem, size = 0x4, offset = 0x4, fixed_abs, tag = 'smem constant byte address 0x4 - core index']
  #allocation1 [shape = 'u32[144,128]{1,0:T(1,128)}', space=vmem, size = 0x12000, scoped, tag = 'internal scratch']
  #allocation2 [shape = 'f32[2,4,4,58]{3,2,1,0:T(4,128)}', space=vmem, size = 0x4000, scoped, tag = 'scratch operand']
  %s0 = inlined_call_operand.vmem [shape: bf16[2,2,2,58], index: 0, kind: input, shape index: {}]
  %s1 = inlined_call_operand.vmem [shape: bf16[58,58], index: 1, kind: input, shape index: {}]
  %s2 = inlined_call_operand.vmem [shape: f32[1,58], index: 2, kind: input, shape index: {}]
  %s3 = inlined_call_operand.vmem [shape: f32[9,1,58], index: 3, kind: input, shape index: {}]
  %s4 = inlined_call_operand.vmem [shape: f32[1,58], index: 4, kind: input, shape index: {}]
  %s5 = inlined_call_operand.vmem [shape: bf16[58,58], index: 5, kind: input, shape index: {}]
  %s6 = inlined_call_operand.vmem [shape: f32[1,58], index: 6, kind: input, shape index: {}]
  %s7 = inlined_call_operand.vmem [shape: bf16[2,2,2,58], index: 7, kind: output, shape index: {}]
  %s8 = sld [smem:[#allocation0]]
  $region38: #{shufflenet_v2_forward.26} parent=0
    _
  %s10 = ssub.s32 1, %s8
  %s11 = scalar_select 0, %s10, %s8
  // Predicated region
  $region2: #{shufflenet_v2_forward.26} parent=0 // pred_check
    _
  $region3: #{shufflenet_v2_forward.26} parent=0 // pred_check_branch
    %13 = sbr.rel (0) target = $region5
  $region4: #{shufflenet_v2_forward.26} parent=0 // pred_region
    _
  $region5: #{shufflenet_v2_forward.26} parent=0 // pred_fallthru
    _
  // Predicated region
  $region6: #{shufflenet_v2_forward.26} parent=0 // pred_check
    _
  $region7: #{shufflenet_v2_forward.26} parent=0 // pred_check_branch
    %15 = sbr.rel (0) target = $region9
  $region8: #{shufflenet_v2_forward.26} parent=0 // pred_region
    _
  $region9: #{shufflenet_v2_forward.26} parent=0 // pred_fallthru
    _
  // Predicated region
  $region10: #{shufflenet_v2_forward.26} parent=0 // pred_check
    _
  $region11: #{shufflenet_v2_forward.26} parent=0 // pred_check_branch
    %17 = sbr.rel (0) target = $region13
  $region12: #{shufflenet_v2_forward.26} parent=0 // pred_region
    _
  $region13: #{shufflenet_v2_forward.26} parent=0 // pred_fallthru
    _
  // Predicated region
  $region14: #{shufflenet_v2_forward.26} parent=0 // pred_check
    _
  $region15: #{shufflenet_v2_forward.26} parent=0 // pred_check_branch
    %19 = sbr.rel (0) target = $region17
  $region16: #{shufflenet_v2_forward.26} parent=0 // pred_region
    _
  $region17: #{shufflenet_v2_forward.26} parent=0 // pred_fallthru
    _
  // Predicated region
  $region18: #{shufflenet_v2_forward.26} parent=0 // pred_check
    _
  $region19: #{shufflenet_v2_forward.26} parent=0 // pred_check_branch
    %21 = sbr.rel (0) target = $region21
  $region20: #{shufflenet_v2_forward.26} parent=0 // pred_region
    _
  $region21: #{shufflenet_v2_forward.26} parent=0 // pred_fallthru
    _
  // Predicated region
  $region22: #{shufflenet_v2_forward.26} parent=0 // pred_check
    _
  $region23: #{shufflenet_v2_forward.26} parent=0 // pred_check_branch
    %23 = sbr.rel (0) target = $region25
  $region24: #{shufflenet_v2_forward.26} parent=0 // pred_region
    _
  $region25: #{shufflenet_v2_forward.26} parent=0 // pred_fallthru
    _
  // Predicated region
  $region26: #{shufflenet_v2_forward.26} parent=0 // pred_check
    _
  $region27: #{shufflenet_v2_forward.26} parent=0 // pred_check_branch
    %25 = sbr.rel (0) target = $region29
  $region28: #{shufflenet_v2_forward.26} parent=0 // pred_region
    _
  $region29: #{shufflenet_v2_forward.26} parent=0 // pred_fallthru
    _
  %v27 = vld [vmem:[%s1] sm:$0xf]
  %v28 = vld [vmem:[%s1 + $0x4] sm:$0xf]
  %v29 = vld [vmem:[%s1 + $0x8] sm:$0xf]
  %v30 = vld [vmem:[%s1 + $0xc] sm:$0xf]
  %v31 = vld [vmem:[%s1 + $0x10] sm:$0xf]
  %v32 = vld [vmem:[%s1 + $0x14] sm:$0xf]
  %v33 = vld [vmem:[%s1 + $0x18] sm:$0xf]
  %v34 = vld [vmem:[%s1 + $0x1c] sm:$0x1]
  %v35 = vld [vmem:[%s2] sm:$0x1]
  %v36 = vld [vmem:[%s5] sm:$0xf]
  %v37 = vld [vmem:[%s5 + $0x4] sm:$0xf]
  %v38 = vld [vmem:[%s5 + $0x8] sm:$0xf]
  %v39 = vld [vmem:[%s5 + $0xc] sm:$0xf]
  %v40 = vld [vmem:[%s5 + $0x10] sm:$0xf]
  %v41 = vld [vmem:[%s5 + $0x14] sm:$0xf]
  %v42 = vld [vmem:[%s5 + $0x18] sm:$0xf]
  %v43 = vld [vmem:[%s5 + $0x1c] sm:$0x1]
  %v44 = vld [vmem:[%s6] sm:$0x1]
  %vm45 = vcmask 470016
  %46 = vst.msk [vmem:[#allocation2] sm:$0xf] %vm45, 0.0
  %47 = vst.msk [vmem:[#allocation2 + $0x4] sm:$0xf] %vm45, 0.0
  %48 = vst.msk [vmem:[#allocation2 + $0x8] sm:$0xf] %vm45, 0.0
  %49 = vst.msk [vmem:[#allocation2 + $0xc] sm:$0xf] %vm45, 0.0
  %50 = vst.msk [vmem:[#allocation2 + $0x10] sm:$0xf] %vm45, 0.0
  %51 = vst.msk [vmem:[#allocation2 + $0x14] sm:$0xf] %vm45, 0.0
  %52 = vst.msk [vmem:[#allocation2 + $0x18] sm:$0xf] %vm45, 0.0
  %53 = vst.msk [vmem:[#allocation2 + $0x1c] sm:$0xf] %vm45, 0.0
  %v54 = vld [vmem:[%s0] sm:$0x1]
  %v56 = vlaneseq
  %v57 = vshrl.u32 %v56, 7
  %v58 = vsub.s32 0, %v57
  %v59 = vrot.slane %v35, %v58
  %v69 = vunpack.c.l.b16 %v27
  %v70 = vunpack.c.l.b16 %v28
  %v71 = vunpack.c.l.b16 %v29
  %v72 = vunpack.c.l.b16 %v30
  %v73 = vunpack.c.l.b16 %v31
  %v74 = vunpack.c.l.b16 %v32
  %v75 = vunpack.c.l.b16 %v33
  %v76 = vunpack.c.l.b16 %v34
  %v77 = vpack.c.b16 %v70, %v69
  %v78 = vpack.c.b16 %v72, %v71
  %v79 = vpack.c.b16 %v74, %v73
  %v80 = vpack.c.b16 %v76, %v75
  %vm84 = vcmask 474112
  %v86 = vsel %vm84, %v54, 0
  %vm88 = vcmask 1044480
  %v90 = vsel %vm88, %v80, 0
  %92 = vmatprep.subr.bf16.mxu0 0
  %93 = vmatpush1.bf16.msra.mxu0 %v77
  %94 = vmatprep.subr.bf16.mxu0 0
  %95 = vmatpush1.bf16.msra.mxu0 %v78
  %96 = vmatprep.subr.bf16.mxu0 0
  %97 = vmatpush1.bf16.msra.mxu0 %v79
  %98 = vmatprep.subr.bf16.mxu0 0
  %99 = vmatpush1.bf16.msra.mxu0 %v90
  %100 = vmatprep.subr.bf16.mxu0 0
  %101 = vmatpush1.bf16.msra.mxu0 0
  %102 = vmatprep.subr.bf16.mxu0 0
  %103 = vmatpush1.bf16.msra.mxu0 0
  %104 = vmatprep.subr.bf16.mxu0 0
  %105 = vmatpush1.bf16.msra.mxu0 0
  %106 = vmatprep.subr.bf16.mxu0 0
  %107 = vmatpush1.bf16.msra.mxu0 0
  %108 = vmatprep.subr.bf16.mxu0 0
  %109 = vmatpush1.bf16.msra.mxu0 0
  %110 = vmatprep.subr.bf16.mxu0 0
  %111 = vmatpush1.bf16.msra.mxu0 0
  %112 = vmatprep.subr.bf16.mxu0 0
  %113 = vmatpush1.bf16.msra.mxu0 0
  %114 = vmatprep.subr.bf16.mxu0 0
  %115 = vmatpush1.bf16.msra.mxu0 0
  %116 = vmatprep.subr.bf16.mxu0 0
  %117 = vmatpush1.bf16.msra.mxu0 0
  %118 = vmatprep.subr.bf16.mxu0 0
  %119 = vmatpush1.bf16.msra.mxu0 0
  %120 = vmatprep.subr.bf16.mxu0 0
  %121 = vmatpush1.bf16.msra.mxu0 0
  %122 = vmatprep.subr.bf16.mxu0 0
  %123 = vmatpush1.bf16.msra.mxu0 0
  %124 = vmatprep.mubr.bf16.mxu0 0
  %125 = vmatmul.mubr.bf16.gmra.mrb[0].mxu0 %v86
  %v126 = vpop.f32.mrb[0].mxu0
  %v127 = vadd.f32 %v59, %v126
  %v128 = vpop.f32.mrb[0].mxu0
  %v129 = vpop.f32.mrb[0].mxu0
  %v130 = vpop.f32.mrb[0].mxu0
  %131 = vdwg.mxu0
  %v132 = vmax.f32 %v127, 0.0
  %s133 = scalar_lea.vmem [#allocation2], 4
  %vm134 = vcmask 467968
  %135 = vst.msk [vmem:[%s133 + $0x1] sm:$0x3] %vm134, %v132
  %s136 = scalar_lea.vmem %s0, 1
  %v137 = vld [vmem:[%s136] sm:$0x1]
  %v139 = vsel %vm84, %v137, 0
  %141 = vmatprep.subr.bf16.mxu0 0
  %142 = vmatpush1.bf16.msra.mxu0 %v77
  %143 = vmatprep.subr.bf16.mxu0 0
  %144 = vmatpush1.bf16.msra.mxu0 %v78
  %145 = vmatprep.subr.bf16.mxu0 0
  %146 = vmatpush1.bf16.msra.mxu0 %v79
  %147 = vmatprep.subr.bf16.mxu0 0
  %148 = vmatpush1.bf16.msra.mxu0 %v90
  %149 = vmatprep.subr.bf16.mxu0 0
  %150 = vmatpush1.bf16.msra.mxu0 0
  %151 = vmatprep.subr.bf16.mxu0 0
  %152 = vmatpush1.bf16.msra.mxu0 0
  %153 = vmatprep.subr.bf16.mxu0 0
  %154 = vmatpush1.bf16.msra.mxu0 0
  %155 = vmatprep.subr.bf16.mxu0 0
  %156 = vmatpush1.bf16.msra.mxu0 0
  %157 = vmatprep.subr.bf16.mxu0 0
  %158 = vmatpush1.bf16.msra.mxu0 0
  %159 = vmatprep.subr.bf16.mxu0 0
  %160 = vmatpush1.bf16.msra.mxu0 0
  %161 = vmatprep.subr.bf16.mxu0 0
  %162 = vmatpush1.bf16.msra.mxu0 0
  %163 = vmatprep.subr.bf16.mxu0 0
  %164 = vmatpush1.bf16.msra.mxu0 0
  %165 = vmatprep.subr.bf16.mxu0 0
  %166 = vmatpush1.bf16.msra.mxu0 0
  %167 = vmatprep.subr.bf16.mxu0 0
  %168 = vmatpush1.bf16.msra.mxu0 0
  %169 = vmatprep.subr.bf16.mxu0 0
  %170 = vmatpush1.bf16.msra.mxu0 0
  %171 = vmatprep.subr.bf16.mxu0 0
  %172 = vmatpush1.bf16.msra.mxu0 0
  %173 = vmatprep.mubr.bf16.mxu0 0
  %174 = vmatmul.mubr.bf16.gmra.mrb[0].mxu0 %v139
  %v175 = vpop.f32.mrb[0].mxu0
  %v176 = vadd.f32 %v59, %v175
  %v177 = vpop.f32.mrb[0].mxu0
  %v178 = vpop.f32.mrb[0].mxu0
  %v179 = vpop.f32.mrb[0].mxu0
  %180 = vdwg.mxu0
  %v181 = vmax.f32 %v176, 0.0
  %s182 = scalar_lea.vmem [#allocation2], 8
  %183 = vst.msk [vmem:[%s182 + $0x1] sm:$0x3] %vm134, %v181
  %s184 = scalar_lea.vmem %s0, 2
  %v185 = vld [vmem:[%s184] sm:$0x1]
  %v187 = vsel %vm84, %v185, 0
  %189 = vmatprep.subr.bf16.mxu0 0
  %190 = vmatpush1.bf16.msra.mxu0 %v77
  %191 = vmatprep.subr.bf16.mxu0 0
  %192 = vmatpush1.bf16.msra.mxu0 %v78
  %193 = vmatprep.subr.bf16.mxu0 0
  %194 = vmatpush1.bf16.msra.mxu0 %v79
  %195 = vmatprep.subr.bf16.mxu0 0
  %196 = vmatpush1.bf16.msra.mxu0 %v90
  %197 = vmatprep.subr.bf16.mxu0 0
  %198 = vmatpush1.bf16.msra.mxu0 0
  %199 = vmatprep.subr.bf16.mxu0 0
  %200 = vmatpush1.bf16.msra.mxu0 0
  %201 = vmatprep.subr.bf16.mxu0 0
  %202 = vmatpush1.bf16.msra.mxu0 0
  %203 = vmatprep.subr.bf16.mxu0 0
  %204 = vmatpush1.bf16.msra.mxu0 0
  %205 = vmatprep.subr.bf16.mxu0 0
  %206 = vmatpush1.bf16.msra.mxu0 0
  %207 = vmatprep.subr.bf16.mxu0 0
  %208 = vmatpush1.bf16.msra.mxu0 0
  %209 = vmatprep.subr.bf16.mxu0 0
  %210 = vmatpush1.bf16.msra.mxu0 0
  %211 = vmatprep.subr.bf16.mxu0 0
  %212 = vmatpush1.bf16.msra.mxu0 0
  %213 = vmatprep.subr.bf16.mxu0 0
  %214 = vmatpush1.bf16.msra.mxu0 0
  %215 = vmatprep.subr.bf16.mxu0 0
  %216 = vmatpush1.bf16.msra.mxu0 0
  %217 = vmatprep.subr.bf16.mxu0 0
  %218 = vmatpush1.bf16.msra.mxu0 0
  %219 = vmatprep.subr.bf16.mxu0 0
  %220 = vmatpush1.bf16.msra.mxu0 0
  %221 = vmatprep.mubr.bf16.mxu0 0
  %222 = vmatmul.mubr.bf16.gmra.mrb[0].mxu0 %v187
  %v223 = vpop.f32.mrb[0].mxu0
  %v224 = vadd.f32 %v59, %v223
  %v225 = vpop.f32.mrb[0].mxu0
  %v226 = vpop.f32.mrb[0].mxu0
  %v227 = vpop.f32.mrb[0].mxu0
  %228 = vdwg.mxu0
  %v229 = vmax.f32 %v224, 0.0
  %s230 = scalar_lea.vmem [#allocation2], 20
  %231 = vst.msk [vmem:[%s230 + $0x1] sm:$0x3] %vm134, %v229
  %s232 = scalar_lea.vmem %s0, 3
  %v233 = vld [vmem:[%s232] sm:$0x1]
  %v235 = vsel %vm84, %v233, 0
  %237 = vmatprep.subr.bf16.mxu0 0
  %238 = vmatpush1.bf16.msra.mxu0 %v77
  %239 = vmatprep.subr.bf16.mxu0 0
  %240 = vmatpush1.bf16.msra.mxu0 %v78
  %241 = vmatprep.subr.bf16.mxu0 0
  %242 = vmatpush1.bf16.msra.mxu0 %v79
  %243 = vmatprep.subr.bf16.mxu0 0
  %244 = vmatpush1.bf16.msra.mxu0 %v90
  %245 = vmatprep.subr.bf16.mxu0 0
  %246 = vmatpush1.bf16.msra.mxu0 0
  %247 = vmatprep.subr.bf16.mxu0 0
  %248 = vmatpush1.bf16.msra.mxu0 0
  %249 = vmatprep.subr.bf16.mxu0 0
  %250 = vmatpush1.bf16.msra.mxu0 0
  %251 = vmatprep.subr.bf16.mxu0 0
  %252 = vmatpush1.bf16.msra.mxu0 0
  %253 = vmatprep.subr.bf16.mxu0 0
  %254 = vmatpush1.bf16.msra.mxu0 0
  %255 = vmatprep.subr.bf16.mxu0 0
  %256 = vmatpush1.bf16.msra.mxu0 0
  %257 = vmatprep.subr.bf16.mxu0 0
  %258 = vmatpush1.bf16.msra.mxu0 0
  %259 = vmatprep.subr.bf16.mxu0 0
  %260 = vmatpush1.bf16.msra.mxu0 0
  %261 = vmatprep.subr.bf16.mxu0 0
  %262 = vmatpush1.bf16.msra.mxu0 0
  %263 = vmatprep.subr.bf16.mxu0 0
  %264 = vmatpush1.bf16.msra.mxu0 0
  %265 = vmatprep.subr.bf16.mxu0 0
  %266 = vmatpush1.bf16.msra.mxu0 0
  %267 = vmatprep.subr.bf16.mxu0 0
  %268 = vmatpush1.bf16.msra.mxu0 0
  %269 = vmatprep.mubr.bf16.mxu0 0
  %270 = vmatmul.mubr.bf16.gmra.mrb[0].mxu0 %v235
  %v271 = vpop.f32.mrb[0].mxu0
  %v272 = vadd.f32 %v59, %v271
  %v273 = vpop.f32.mrb[0].mxu0
  %v274 = vpop.f32.mrb[0].mxu0
  %v275 = vpop.f32.mrb[0].mxu0
  %276 = vdwg.mxu0
  %v277 = vmax.f32 %v272, 0.0
  %s278 = scalar_lea.vmem [#allocation2], 24
  %279 = vst.msk [vmem:[%s278 + $0x1] sm:$0x3] %vm134, %v277
  %v280 = vld [vmem:[#allocation2] sm:$0x3]
  %v281 = vld [vmem:[#allocation2 + $0x4] sm:$0x3]
  %v282 = vld [vmem:[#allocation2 + $0x10] sm:$0x3]
  %v283 = vld [vmem:[#allocation2 + $0x14] sm:$0x3]
  %v284 = vld [vmem:[%s3] sm:$0x1]
  %v286 = vlaneseq
  %v287 = vshrl.u32 %v286, 7
  %v288 = vsub.s32 0, %v287
  %v289 = vrot.slane %v284, %v288
  %v291 = vmul.f32 %v280, %v289
  %v292 = vmul.f32 %v281, %v289
  %v293 = vmul.f32 %v282, %v289
  %v294 = vmul.f32 %v283, %v289
  %v295 = vadd.f32 %v291, 0.0
  %v296 = vadd.f32 %v292, 0.0
  %v297 = vadd.f32 %v293, 0.0
  %v298 = vadd.f32 %v294, 0.0
  %v299 = vld [vmem:[#allocation2 + $0x1] sm:$0x3]
  %v300 = vld [vmem:[#allocation2 + $0x5] sm:$0x3]
  %v301 = vld [vmem:[#allocation2 + $0x11] sm:$0x3]
  %v302 = vld [vmem:[#allocation2 + $0x15] sm:$0x3]
  %s303 = scalar_lea.vmem %s3, 1
  %v304 = vld [vmem:[%s303] sm:$0x1]
  %v306 = vlaneseq
  %v307 = vshrl.u32 %v306, 7
  %v308 = vsub.s32 0, %v307
  %v309 = vrot.slane %v304, %v308
  %v311 = vmul.f32 %v299, %v309
  %v312 = vmul.f32 %v300, %v309
  %v313 = vmul.f32 %v301, %v309
  %v314 = vmul.f32 %v302, %v309
  %v315 = vadd.f32 %v295, %v311
  %v316 = vadd.f32 %v296, %v312
  %v317 = vadd.f32 %v297, %v313
  %v318 = vadd.f32 %v298, %v314
  %v319 = vld [vmem:[#allocation2 + $0x2] sm:$0x3]
  %v320 = vld [vmem:[#allocation2 + $0x6] sm:$0x3]
  %v321 = vld [vmem:[#allocation2 + $0x12] sm:$0x3]
  %v322 = vld [vmem:[#allocation2 + $0x16] sm:$0x3]
  %s323 = scalar_lea.vmem %s3, 2
  %v324 = vld [vmem:[%s323] sm:$0x1]
  %v326 = vlaneseq
  %v327 = vshrl.u32 %v326, 7
  %v328 = vsub.s32 0, %v327
  %v329 = vrot.slane %v324, %v328
  %v331 = vmul.f32 %v319, %v329
  %v332 = vmul.f32 %v320, %v329
  %v333 = vmul.f32 %v321, %v329
  %v334 = vmul.f32 %v322, %v329
  %v335 = vadd.f32 %v315, %v331
  %v336 = vadd.f32 %v316, %v332
  %v337 = vadd.f32 %v317, %v333
  %v338 = vadd.f32 %v318, %v334
  %v339 = vld [vmem:[%s133] sm:$0x3]
  %v340 = vld [vmem:[%s133 + $0x4] sm:$0x3]
  %v341 = vld [vmem:[%s133 + $0x10] sm:$0x3]
  %v342 = vld [vmem:[%s133 + $0x14] sm:$0x3]
  %s343 = scalar_lea.vmem %s3, 3
  %v344 = vld [vmem:[%s343] sm:$0x1]
  %v346 = vlaneseq
  %v347 = vshrl.u32 %v346, 7
  %v348 = vsub.s32 0, %v347
  %v349 = vrot.slane %v344, %v348
  %v351 = vmul.f32 %v339, %v349
  %v352 = vmul.f32 %v340, %v349
  %v353 = vmul.f32 %v341, %v349
  %v354 = vmul.f32 %v342, %v349
  %v355 = vadd.f32 %v335, %v351
  %v356 = vadd.f32 %v336, %v352
  %v357 = vadd.f32 %v337, %v353
  %v358 = vadd.f32 %v338, %v354
  %v359 = vld [vmem:[%s133 + $0x1] sm:$0x3]
  %v360 = vld [vmem:[%s133 + $0x5] sm:$0x3]
  %v361 = vld [vmem:[%s133 + $0x11] sm:$0x3]
  %v362 = vld [vmem:[%s133 + $0x15] sm:$0x3]
  %s363 = scalar_lea.vmem %s3, 4
  %v364 = vld [vmem:[%s363] sm:$0x1]
  %v366 = vlaneseq
  %v367 = vshrl.u32 %v366, 7
  %v368 = vsub.s32 0, %v367
  %v369 = vrot.slane %v364, %v368
  %v371 = vmul.f32 %v359, %v369
  %v372 = vmul.f32 %v360, %v369
  %v373 = vmul.f32 %v361, %v369
  %v374 = vmul.f32 %v362, %v369
  %v375 = vadd.f32 %v355, %v371
  %v376 = vadd.f32 %v356, %v372
  %v377 = vadd.f32 %v357, %v373
  %v378 = vadd.f32 %v358, %v374
  %v379 = vld [vmem:[%s133 + $0x2] sm:$0x3]
  %v380 = vld [vmem:[%s133 + $0x6] sm:$0x3]
  %v381 = vld [vmem:[%s133 + $0x12] sm:$0x3]
  %v382 = vld [vmem:[%s133 + $0x16] sm:$0x3]
  %s383 = scalar_lea.vmem %s3, 5
  %v384 = vld [vmem:[%s383] sm:$0x1]
  %v386 = vlaneseq
  %v387 = vshrl.u32 %v386, 7
  %v388 = vsub.s32 0, %v387
  %v389 = vrot.slane %v384, %v388
  %v391 = vmul.f32 %v379, %v389
  %v392 = vmul.f32 %v380, %v389
  %v393 = vmul.f32 %v381, %v389
  %v394 = vmul.f32 %v382, %v389
  %v395 = vadd.f32 %v375, %v391
  %v396 = vadd.f32 %v376, %v392
  %v397 = vadd.f32 %v377, %v393
  %v398 = vadd.f32 %v378, %v394
  %v399 = vld [vmem:[%s182] sm:$0x3]
  %v400 = vld [vmem:[%s182 + $0x4] sm:$0x3]
  %v401 = vld [vmem:[%s182 + $0x10] sm:$0x3]
  %v402 = vld [vmem:[%s182 + $0x14] sm:$0x3]
  %s403 = scalar_lea.vmem %s3, 6
  %v404 = vld [vmem:[%s403] sm:$0x1]
  %v406 = vlaneseq
  %v407 = vshrl.u32 %v406, 7
  %v408 = vsub.s32 0, %v407
  %v409 = vrot.slane %v404, %v408
  %v411 = vmul.f32 %v399, %v409
  %v412 = vmul.f32 %v400, %v409
  %v413 = vmul.f32 %v401, %v409
  %v414 = vmul.f32 %v402, %v409
  %v415 = vadd.f32 %v395, %v411
  %v416 = vadd.f32 %v396, %v412
  %v417 = vadd.f32 %v397, %v413
  %v418 = vadd.f32 %v398, %v414
  %v419 = vld [vmem:[%s182 + $0x1] sm:$0x3]
  %v420 = vld [vmem:[%s182 + $0x5] sm:$0x3]
  %v421 = vld [vmem:[%s182 + $0x11] sm:$0x3]
  %v422 = vld [vmem:[%s182 + $0x15] sm:$0x3]
  %s423 = scalar_lea.vmem %s3, 7
  %v424 = vld [vmem:[%s423] sm:$0x1]
  %v426 = vlaneseq
  %v427 = vshrl.u32 %v426, 7
  %v428 = vsub.s32 0, %v427
  %v429 = vrot.slane %v424, %v428
  %v431 = vmul.f32 %v419, %v429
  %v432 = vmul.f32 %v420, %v429
  %v433 = vmul.f32 %v421, %v429
  %v434 = vmul.f32 %v422, %v429
  %v435 = vadd.f32 %v415, %v431
  %v436 = vadd.f32 %v416, %v432
  %v437 = vadd.f32 %v417, %v433
  %v438 = vadd.f32 %v418, %v434
  %v439 = vld [vmem:[%s182 + $0x2] sm:$0x3]
  %v440 = vld [vmem:[%s182 + $0x6] sm:$0x3]
  %v441 = vld [vmem:[%s182 + $0x12] sm:$0x3]
  %v442 = vld [vmem:[%s182 + $0x16] sm:$0x3]
  %s443 = scalar_lea.vmem %s3, 8
  %v444 = vld [vmem:[%s443] sm:$0x1]
  %v446 = vlaneseq
  %v447 = vshrl.u32 %v446, 7
  %v448 = vsub.s32 0, %v447
  %v449 = vrot.slane %v444, %v448
  %v451 = vmul.f32 %v439, %v449
  %v452 = vmul.f32 %v440, %v449
  %v453 = vmul.f32 %v441, %v449
  %v454 = vmul.f32 %v442, %v449
  %v455 = vadd.f32 %v435, %v451
  %v456 = vadd.f32 %v436, %v452
  %v457 = vadd.f32 %v437, %v453
  %v458 = vadd.f32 %v438, %v454
  %v459 = vld [vmem:[%s4] sm:$0x1]
  %v461 = vlaneseq
  %v462 = vshrl.u32 %v461, 7
  %v463 = vsub.s32 0, %v462
  %v464 = vrot.slane %v459, %v463
  %v466 = vadd.f32 %v455, %v464
  %v467 = vadd.f32 %v456, %v464
  %v468 = vadd.f32 %v457, %v464
  %v469 = vadd.f32 %v458, %v464
  %v470 = vpack.c.bf16 %v466, %v466
  %v472 = vlaneseq
  %v473 = vshrl.u32 %v472, 7
  %v474 = vsub.s32 0, %v473
  %v475 = vrot.slane %v44, %v474
  %v485 = vunpack.c.l.b16 %v36
  %v486 = vunpack.c.l.b16 %v37
  %v487 = vunpack.c.l.b16 %v38
  %v488 = vunpack.c.l.b16 %v39
  %v489 = vunpack.c.l.b16 %v40
  %v490 = vunpack.c.l.b16 %v41
  %v491 = vunpack.c.l.b16 %v42
  %v492 = vunpack.c.l.b16 %v43
  %v493 = vpack.c.b16 %v486, %v485
  %v494 = vpack.c.b16 %v488, %v487
  %v495 = vpack.c.b16 %v490, %v489
  %v496 = vpack.c.b16 %v492, %v491
  %v501 = vsel %vm84, %v470, 0
  %v504 = vsel %vm88, %v496, 0
  %506 = vmatprep.subr.bf16.mxu0 0
  %507 = vmatpush1.bf16.msra.mxu0 %v493
  %508 = vmatprep.subr.bf16.mxu0 0
  %509 = vmatpush1.bf16.msra.mxu0 %v494
  %510 = vmatprep.subr.bf16.mxu0 0
  %511 = vmatpush1.bf16.msra.mxu0 %v495
  %512 = vmatprep.subr.bf16.mxu0 0
  %513 = vmatpush1.bf16.msra.mxu0 %v504
  %514 = vmatprep.subr.bf16.mxu0 0
  %515 = vmatpush1.bf16.msra.mxu0 0
  %516 = vmatprep.subr.bf16.mxu0 0
  %517 = vmatpush1.bf16.msra.mxu0 0
  %518 = vmatprep.subr.bf16.mxu0 0
  %519 = vmatpush1.bf16.msra.mxu0 0
  %520 = vmatprep.subr.bf16.mxu0 0
  %521 = vmatpush1.bf16.msra.mxu0 0
  %522 = vmatprep.subr.bf16.mxu0 0
  %523 = vmatpush1.bf16.msra.mxu0 0
  %524 = vmatprep.subr.bf16.mxu0 0
  %525 = vmatpush1.bf16.msra.mxu0 0
  %526 = vmatprep.subr.bf16.mxu0 0
  %527 = vmatpush1.bf16.msra.mxu0 0
  %528 = vmatprep.subr.bf16.mxu0 0
  %529 = vmatpush1.bf16.msra.mxu0 0
  %530 = vmatprep.subr.bf16.mxu0 0
  %531 = vmatpush1.bf16.msra.mxu0 0
  %532 = vmatprep.subr.bf16.mxu0 0
  %533 = vmatpush1.bf16.msra.mxu0 0
  %534 = vmatprep.subr.bf16.mxu0 0
  %535 = vmatpush1.bf16.msra.mxu0 0
  %536 = vmatprep.subr.bf16.mxu0 0
  %537 = vmatpush1.bf16.msra.mxu0 0
  %538 = vmatprep.mubr.bf16.mxu0 0
  %539 = vmatmul.mubr.bf16.gmra.mrb[0].mxu0 %v501
  %v540 = vpop.f32.mrb[0].mxu0
  %v541 = vadd.f32 %v475, %v540
  %v542 = vpop.f32.mrb[0].mxu0
  %v543 = vpop.f32.mrb[0].mxu0
  %v544 = vpop.f32.mrb[0].mxu0
  %545 = vdwg.mxu0
  %v546 = vmax.f32 %v541, 0.0
  %v547 = vpack.c.bf16 %v546, %v546
  %vm548 = vcmask 466944
  %549 = vst.msk [vmem:[%s7] sm:$0x1] %vm548, %v547
  %v550 = vpack.c.bf16 %v467, %v467
  %v552 = vsel %vm84, %v550, 0
  %554 = vmatprep.subr.bf16.mxu0 0
  %555 = vmatpush1.bf16.msra.mxu0 %v493
  %556 = vmatprep.subr.bf16.mxu0 0
  %557 = vmatpush1.bf16.msra.mxu0 %v494
  %558 = vmatprep.subr.bf16.mxu0 0
  %559 = vmatpush1.bf16.msra.mxu0 %v495
  %560 = vmatprep.subr.bf16.mxu0 0
  %561 = vmatpush1.bf16.msra.mxu0 %v504
  %562 = vmatprep.subr.bf16.mxu0 0
  %563 = vmatpush1.bf16.msra.mxu0 0
  %564 = vmatprep.subr.bf16.mxu0 0
  %565 = vmatpush1.bf16.msra.mxu0 0
  %566 = vmatprep.subr.bf16.mxu0 0
  %567 = vmatpush1.bf16.msra.mxu0 0
  %568 = vmatprep.subr.bf16.mxu0 0
  %569 = vmatpush1.bf16.msra.mxu0 0
  %570 = vmatprep.subr.bf16.mxu0 0
  %571 = vmatpush1.bf16.msra.mxu0 0
  %572 = vmatprep.subr.bf16.mxu0 0
  %573 = vmatpush1.bf16.msra.mxu0 0
  %574 = vmatprep.subr.bf16.mxu0 0
  %575 = vmatpush1.bf16.msra.mxu0 0
  %576 = vmatprep.subr.bf16.mxu0 0
  %577 = vmatpush1.bf16.msra.mxu0 0
  %578 = vmatprep.subr.bf16.mxu0 0
  %579 = vmatpush1.bf16.msra.mxu0 0
  %580 = vmatprep.subr.bf16.mxu0 0
  %581 = vmatpush1.bf16.msra.mxu0 0
  %582 = vmatprep.subr.bf16.mxu0 0
  %583 = vmatpush1.bf16.msra.mxu0 0
  %584 = vmatprep.subr.bf16.mxu0 0
  %585 = vmatpush1.bf16.msra.mxu0 0
  %586 = vmatprep.mubr.bf16.mxu0 0
  %587 = vmatmul.mubr.bf16.gmra.mrb[0].mxu0 %v552
  %v588 = vpop.f32.mrb[0].mxu0
  %v589 = vadd.f32 %v475, %v588
  %v590 = vpop.f32.mrb[0].mxu0
  %v591 = vpop.f32.mrb[0].mxu0
  %v592 = vpop.f32.mrb[0].mxu0
  %593 = vdwg.mxu0
  %v594 = vmax.f32 %v589, 0.0
  %v595 = vpack.c.bf16 %v594, %v594
  %s596 = scalar_lea.vmem %s7, 1
  %597 = vst.msk [vmem:[%s596] sm:$0x1] %vm548, %v595
  %v598 = vpack.c.bf16 %v468, %v468
  %v600 = vsel %vm84, %v598, 0
  %602 = vmatprep.subr.bf16.mxu0 0
  %603 = vmatpush1.bf16.msra.mxu0 %v493
  %604 = vmatprep.subr.bf16.mxu0 0
  %605 = vmatpush1.bf16.msra.mxu0 %v494
  %606 = vmatprep.subr.bf16.mxu0 0
  %607 = vmatpush1.bf16.msra.mxu0 %v495
  %608 = vmatprep.subr.bf16.mxu0 0
  %609 = vmatpush1.bf16.msra.mxu0 %v504
  %610 = vmatprep.subr.bf16.mxu0 0
  %611 = vmatpush1.bf16.msra.mxu0 0
  %612 = vmatprep.subr.bf16.mxu0 0
  %613 = vmatpush1.bf16.msra.mxu0 0
  %614 = vmatprep.subr.bf16.mxu0 0
  %615 = vmatpush1.bf16.msra.mxu0 0
  %616 = vmatprep.subr.bf16.mxu0 0
  %617 = vmatpush1.bf16.msra.mxu0 0
  %618 = vmatprep.subr.bf16.mxu0 0
  %619 = vmatpush1.bf16.msra.mxu0 0
  %620 = vmatprep.subr.bf16.mxu0 0
  %621 = vmatpush1.bf16.msra.mxu0 0
  %622 = vmatprep.subr.bf16.mxu0 0
  %623 = vmatpush1.bf16.msra.mxu0 0
  %624 = vmatprep.subr.bf16.mxu0 0
  %625 = vmatpush1.bf16.msra.mxu0 0
  %626 = vmatprep.subr.bf16.mxu0 0
  %627 = vmatpush1.bf16.msra.mxu0 0
  %628 = vmatprep.subr.bf16.mxu0 0
  %629 = vmatpush1.bf16.msra.mxu0 0
  %630 = vmatprep.subr.bf16.mxu0 0
  %631 = vmatpush1.bf16.msra.mxu0 0
  %632 = vmatprep.subr.bf16.mxu0 0
  %633 = vmatpush1.bf16.msra.mxu0 0
  %634 = vmatprep.mubr.bf16.mxu0 0
  %635 = vmatmul.mubr.bf16.gmra.mrb[0].mxu0 %v600
  %v636 = vpop.f32.mrb[0].mxu0
  %v637 = vadd.f32 %v475, %v636
  %v638 = vpop.f32.mrb[0].mxu0
  %v639 = vpop.f32.mrb[0].mxu0
  %v640 = vpop.f32.mrb[0].mxu0
  %641 = vdwg.mxu0
  %v642 = vmax.f32 %v637, 0.0
  %v643 = vpack.c.bf16 %v642, %v642
  %s644 = scalar_lea.vmem %s7, 2
  %645 = vst.msk [vmem:[%s644] sm:$0x1] %vm548, %v643
  %v646 = vpack.c.bf16 %v469, %v469
  %v648 = vsel %vm84, %v646, 0
  %650 = vmatprep.subr.bf16.mxu0 0
  %651 = vmatpush1.bf16.msra.mxu0 %v493
  %652 = vmatprep.subr.bf16.mxu0 0
  %653 = vmatpush1.bf16.msra.mxu0 %v494
  %654 = vmatprep.subr.bf16.mxu0 0
  %655 = vmatpush1.bf16.msra.mxu0 %v495
  %656 = vmatprep.subr.bf16.mxu0 0
  %657 = vmatpush1.bf16.msra.mxu0 %v504
  %658 = vmatprep.subr.bf16.mxu0 0
  %659 = vmatpush1.bf16.msra.mxu0 0
  %660 = vmatprep.subr.bf16.mxu0 0
  %661 = vmatpush1.bf16.msra.mxu0 0
  %662 = vmatprep.subr.bf16.mxu0 0
  %663 = vmatpush1.bf16.msra.mxu0 0
  %664 = vmatprep.subr.bf16.mxu0 0
  %665 = vmatpush1.bf16.msra.mxu0 0
  %666 = vmatprep.subr.bf16.mxu0 0
  %667 = vmatpush1.bf16.msra.mxu0 0
  %668 = vmatprep.subr.bf16.mxu0 0
  %669 = vmatpush1.bf16.msra.mxu0 0
  %670 = vmatprep.subr.bf16.mxu0 0
  %671 = vmatpush1.bf16.msra.mxu0 0
  %672 = vmatprep.subr.bf16.mxu0 0
  %673 = vmatpush1.bf16.msra.mxu0 0
  %674 = vmatprep.subr.bf16.mxu0 0
  %675 = vmatpush1.bf16.msra.mxu0 0
  %676 = vmatprep.subr.bf16.mxu0 0
  %677 = vmatpush1.bf16.msra.mxu0 0
  %678 = vmatprep.subr.bf16.mxu0 0
  %679 = vmatpush1.bf16.msra.mxu0 0
  %680 = vmatprep.subr.bf16.mxu0 0
  %681 = vmatpush1.bf16.msra.mxu0 0
  %682 = vmatprep.mubr.bf16.mxu0 0
  %683 = vmatmul.mubr.bf16.gmra.mrb[0].mxu0 %v648
  %v684 = vpop.f32.mrb[0].mxu0
  %v685 = vadd.f32 %v475, %v684
  %v686 = vpop.f32.mrb[0].mxu0
  %v687 = vpop.f32.mrb[0].mxu0
  %v688 = vpop.f32.mrb[0].mxu0
  %689 = vdwg.mxu0
  %v690 = vmax.f32 %v685, 0.0
  %v691 = vpack.c.bf16 %v690, %v690
  %s692 = scalar_lea.vmem %s7, 3
  %693 = vst.msk [vmem:[%s692] sm:$0x1] %vm548, %v691
  // Predicated region
  $region30: #{shufflenet_v2_forward.26} parent=0 // pred_check
    _
  $region31: #{shufflenet_v2_forward.26} parent=0 // pred_check_branch
    %695 = sbr.rel (0) target = $region33
  $region32: #{shufflenet_v2_forward.26} parent=0 // pred_region
    _
  $region33: #{shufflenet_v2_forward.26} parent=0 // pred_fallthru
    _
  // Predicated region
  $region34: #{shufflenet_v2_forward.26} parent=0 // pred_check
    _
  $region35: #{shufflenet_v2_forward.26} parent=0 // pred_check_branch
    %697 = sbr.rel (0) target = $region37
  $region36: #{shufflenet_v2_forward.26} parent=0 // pred_region
    _
  $region37: #{shufflenet_v2_forward.26} parent=0 // pred_fallthru
    _

// kernel: shufflenet_v2_forward.25
$region0: #{shufflenet_v2_forward.25}
  #allocation0 [shape = 'u32[]', space=smem, size = 0x4, offset = 0x4, fixed_abs, tag = 'smem constant byte address 0x4 - core index']
  #allocation1 [shape = 'u32[144,128]{1,0:T(1,128)}', space=vmem, size = 0x12000, scoped, tag = 'internal scratch']
  %s0 = inlined_call_operand.vmem [shape: bf16[9,8,58], index: 0, kind: input, shape index: {}]
  %s1 = inlined_call_operand.vmem [shape: f32[9,8,1], index: 1, kind: input, shape index: {}]
  %s2 = inlined_call_operand.vmem [shape: f32[9,1,58], index: 2, kind: input, shape index: {}]
  %s3 = inlined_call_operand.vmem [shape: f32[1,58], index: 3, kind: input, shape index: {}]
  %s4 = inlined_call_operand.vmem [shape: bf16[58,58], index: 4, kind: input, shape index: {}]
  %s5 = inlined_call_operand.vmem [shape: f32[1,58], index: 5, kind: input, shape index: {}]
  %s6 = inlined_call_operand.vmem [shape: bf16[58,58], index: 6, kind: input, shape index: {}]
  %s7 = inlined_call_operand.vmem [shape: f32[1,58], index: 7, kind: input, shape index: {}]
  %s8 = inlined_call_operand.vmem [shape: f32[9,1,58], index: 8, kind: input, shape index: {}]
  %s9 = inlined_call_operand.vmem [shape: f32[1,58], index: 9, kind: input, shape index: {}]
  %s10 = inlined_call_operand.vmem [shape: bf16[58,58], index: 10, kind: input, shape index: {}]
  %s11 = inlined_call_operand.vmem [shape: f32[1,58], index: 11, kind: input, shape index: {}]
  %s12 = inlined_call_operand.vmem [shape: bf16[8,58], index: 12, kind: output, shape index: {0}]
  %s13 = inlined_call_operand.vmem [shape: bf16[8,58], index: 13, kind: output, shape index: {1}]
  %14 = xla_tuple %s12, %s13
  %s15 = sld [smem:[#allocation0]]
  $region66: #{shufflenet_v2_forward.25} parent=0
    _
  %s17 = ssub.s32 1, %s15
  %s18 = scalar_select 0, %s17, %s15
  // Predicated region
  $region2: #{shufflenet_v2_forward.25} parent=0 // pred_check
    _
  $region3: #{shufflenet_v2_forward.25} parent=0 // pred_check_branch
    %20 = sbr.rel (0) target = $region5
  $region4: #{shufflenet_v2_forward.25} parent=0 // pred_region
    _
  $region5: #{shufflenet_v2_forward.25} parent=0 // pred_fallthru
    _
  // Predicated region
  $region6: #{shufflenet_v2_forward.25} parent=0 // pred_check
    _
  $region7: #{shufflenet_v2_forward.25} parent=0 // pred_check_branch
    %22 = sbr.rel (0) target = $region9
  $region8: #{shufflenet_v2_forward.25} parent=0 // pred_region
    _
  $region9: #{shufflenet_v2_forward.25} parent=0 // pred_fallthru
    _
  // Predicated region
  $region10: #{shufflenet_v2_forward.25} parent=0 // pred_check
    _
  $region11: #{shufflenet_v2_forward.25} parent=0 // pred_check_branch
    %24 = sbr.rel (0) target = $region13
  $region12: #{shufflenet_v2_forward.25} parent=0 // pred_region
    _
  $region13: #{shufflenet_v2_forward.25} parent=0 // pred_fallthru
    _
  // Predicated region
  $region14: #{shufflenet_v2_forward.25} parent=0 // pred_check
    _
  $region15: #{shufflenet_v2_forward.25} parent=0 // pred_check_branch
    %26 = sbr.rel (0) target = $region17
  $region16: #{shufflenet_v2_forward.25} parent=0 // pred_region
    _
  $region17: #{shufflenet_v2_forward.25} parent=0 // pred_fallthru
    _
  // Predicated region
  $region18: #{shufflenet_v2_forward.25} parent=0 // pred_check
    _
  $region19: #{shufflenet_v2_forward.25} parent=0 // pred_check_branch
    %28 = sbr.rel (0) target = $region21
  $region20: #{shufflenet_v2_forward.25} parent=0 // pred_region
    _
  $region21: #{shufflenet_v2_forward.25} parent=0 // pred_fallthru
    _
  // Predicated region
  $region22: #{shufflenet_v2_forward.25} parent=0 // pred_check
    _
  $region23: #{shufflenet_v2_forward.25} parent=0 // pred_check_branch
    %30 = sbr.rel (0) target = $region25
  $region24: #{shufflenet_v2_forward.25} parent=0 // pred_region
    _
  $region25: #{shufflenet_v2_forward.25} parent=0 // pred_fallthru
    _
  // Predicated region
  $region26: #{shufflenet_v2_forward.25} parent=0 // pred_check
    _
  $region27: #{shufflenet_v2_forward.25} parent=0 // pred_check_branch
    %32 = sbr.rel (0) target = $region29
  $region28: #{shufflenet_v2_forward.25} parent=0 // pred_region
    _
  $region29: #{shufflenet_v2_forward.25} parent=0 // pred_fallthru
    _
  // Predicated region
  $region30: #{shufflenet_v2_forward.25} parent=0 // pred_check
    _
  $region31: #{shufflenet_v2_forward.25} parent=0 // pred_check_branch
    %34 = sbr.rel (0) target = $region33
  $region32: #{shufflenet_v2_forward.25} parent=0 // pred_region
    _
  $region33: #{shufflenet_v2_forward.25} parent=0 // pred_fallthru
    _
  // Predicated region
  $region34: #{shufflenet_v2_forward.25} parent=0 // pred_check
    _
  $region35: #{shufflenet_v2_forward.25} parent=0 // pred_check_branch
    %36 = sbr.rel (0) target = $region37
  $region36: #{shufflenet_v2_forward.25} parent=0 // pred_region
    _
  $region37: #{shufflenet_v2_forward.25} parent=0 // pred_fallthru
    _
  // Predicated region
  $region38: #{shufflenet_v2_forward.25} parent=0 // pred_check
    _
  $region39: #{shufflenet_v2_forward.25} parent=0 // pred_check_branch
    %38 = sbr.rel (0) target = $region41
  $region40: #{shufflenet_v2_forward.25} parent=0 // pred_region
    _
  $region41: #{shufflenet_v2_forward.25} parent=0 // pred_fallthru
    _
  // Predicated region
  $region42: #{shufflenet_v2_forward.25} parent=0 // pred_check
    _
  $region43: #{shufflenet_v2_forward.25} parent=0 // pred_check_branch
    %40 = sbr.rel (0) target = $region45
  $region44: #{shufflenet_v2_forward.25} parent=0 // pred_region
    _
  $region45: #{shufflenet_v2_forward.25} parent=0 // pred_fallthru
    _
  // Predicated region
  $region46: #{shufflenet_v2_forward.25} parent=0 // pred_check
    _
  $region47: #{shufflenet_v2_forward.25} parent=0 // pred_check_branch
    %42 = sbr.rel (0) target = $region49
  $region48: #{shufflenet_v2_forward.25} parent=0 // pred_region
    _
  $region49: #{shufflenet_v2_forward.25} parent=0 // pred_fallthru
    _
  %v44 = vld [vmem:[%s6] sm:$0xf]
  %v45 = vld [vmem:[%s6 + $0x4] sm:$0xf]
  %v46 = vld [vmem:[%s6 + $0x8] sm:$0xf]
  %v47 = vld [vmem:[%s6 + $0xc] sm:$0xf]
  %v48 = vld [vmem:[%s6 + $0x10] sm:$0xf]
  %v49 = vld [vmem:[%s6 + $0x14] sm:$0xf]
  %v50 = vld [vmem:[%s6 + $0x18] sm:$0xf]
  %v51 = vld [vmem:[%s6 + $0x1c] sm:$0x1]
  %v52 = vld [vmem:[%s7] sm:$0x1]
  %v53 = vld [vmem:[%s0] sm:$0xf]
  %v54 = vunpack.c.l.bf16 %v53
  %v55 = vld [vmem:[%s2] sm:$0x1]
  %v57 = vlaneseq
  %v58 = vshrl.u32 %v57, 7
  %v59 = vsub.s32 0, %v58
  %v60 = vrot.slane %v55, %v59
  %v62 = vmul.f32 %v54, %v60
  %v63 = vadd.f32 %v62, 0.0
  %v65 = vlaneseq
  %v66 = vshrl.u32 %v65, 7
  %v67 = vsub.s32 0, %v66
  %v68 = vrot.slane %v52, %v67
  %v78 = vunpack.c.l.b16 %v44
  %v79 = vunpack.c.l.b16 %v45
  %v80 = vunpack.c.l.b16 %v46
  %v81 = vunpack.c.l.b16 %v47
  %v82 = vunpack.c.l.b16 %v48
  %v83 = vunpack.c.l.b16 %v49
  %v84 = vunpack.c.l.b16 %v50
  %v85 = vunpack.c.l.b16 %v51
  %v86 = vpack.c.b16 %v79, %v78
  %v87 = vpack.c.b16 %v81, %v80
  %v88 = vpack.c.b16 %v83, %v82
  %v89 = vpack.c.b16 %v85, %v84
  %vm93 = vcmask 474112
  %v95 = vsel %vm93, %v53, 0
  %vm97 = vcmask 1044480
  %v99 = vsel %vm97, %v89, 0
  %101 = vmatprep.subr.bf16.mxu0 0
  %102 = vmatpush1.bf16.msra.mxu0 %v86
  %103 = vmatprep.subr.bf16.mxu0 0
  %104 = vmatpush1.bf16.msra.mxu0 %v87
  %105 = vmatprep.subr.bf16.mxu0 0
  %106 = vmatpush1.bf16.msra.mxu0 %v88
  %107 = vmatprep.subr.bf16.mxu0 0
  %108 = vmatpush1.bf16.msra.mxu0 %v99
  %109 = vmatprep.subr.bf16.mxu0 0
  %110 = vmatpush1.bf16.msra.mxu0 0
  %111 = vmatprep.subr.bf16.mxu0 0
  %112 = vmatpush1.bf16.msra.mxu0 0
  %113 = vmatprep.subr.bf16.mxu0 0
  %114 = vmatpush1.bf16.msra.mxu0 0
  %115 = vmatprep.subr.bf16.mxu0 0
  %116 = vmatpush1.bf16.msra.mxu0 0
  %117 = vmatprep.subr.bf16.mxu0 0
  %118 = vmatpush1.bf16.msra.mxu0 0
  %119 = vmatprep.subr.bf16.mxu0 0
  %120 = vmatpush1.bf16.msra.mxu0 0
  %121 = vmatprep.subr.bf16.mxu0 0
  %122 = vmatpush1.bf16.msra.mxu0 0
  %123 = vmatprep.subr.bf16.mxu0 0
  %124 = vmatpush1.bf16.msra.mxu0 0
  %125 = vmatprep.subr.bf16.mxu0 0
  %126 = vmatpush1.bf16.msra.mxu0 0
  %127 = vmatprep.subr.bf16.mxu0 0
  %128 = vmatpush1.bf16.msra.mxu0 0
  %129 = vmatprep.subr.bf16.mxu0 0
  %130 = vmatpush1.bf16.msra.mxu0 0
  %131 = vmatprep.subr.bf16.mxu0 0
  %132 = vmatpush1.bf16.msra.mxu0 0
  %133 = vmatprep.mubr.bf16.mxu0 0
  %134 = vmatmul.mubr.bf16.gmra.mrb[0].mxu0 %v95
  %v135 = vpop.f32.mrb[0].mxu0
  %v136 = vadd.f32 %v68, %v135
  %v137 = vpop.f32.mrb[0].mxu0
  %v138 = vpop.f32.mrb[0].mxu0
  %v139 = vpop.f32.mrb[0].mxu0
  %140 = vdwg.mxu0
  %v141 = vmax.f32 %v136, 0.0
  %v142 = vld [vmem:[%s1] sm:$0xff]
  %144 = vset.pattern.permute.xlu0 0
  %145 = vperm.xlu0 %144, %v142
  %v146 = vpop.permute.xlu0 %145
  %v148 = vmul.f32 %v141, %v146
  %v149 = vld [vmem:[%s8] sm:$0x1]
  %v151 = vlaneseq
  %v152 = vshrl.u32 %v151, 7
  %v153 = vsub.s32 0, %v152
  %v154 = vrot.slane %v149, %v153
  %v156 = vmul.f32 %v148, %v154
  %v157 = vadd.f32 %v156, 0.0
  %s158 = scalar_lea.vmem %s0, 4
  %v159 = vld [vmem:[%s158] sm:$0xf]
  %v160 = vunpack.c.l.bf16 %v159
  %s161 = scalar_lea.vmem %s2, 1
  %v162 = vld [vmem:[%s161] sm:$0x1]
  %v164 = vlaneseq
  %v165 = vshrl.u32 %v164, 7
  %v166 = vsub.s32 0, %v165
  %v167 = vrot.slane %v162, %v166
  %v169 = vmul.f32 %v160, %v167
  %v170 = vadd.f32 %v63, %v169
  %v172 = vsel %vm93, %v159, 0
  %174 = vmatprep.subr.bf16.mxu0 0
  %175 = vmatpush1.bf16.msra.mxu0 %v86
  %176 = vmatprep.subr.bf16.mxu0 0
  %177 = vmatpush1.bf16.msra.mxu0 %v87
  %178 = vmatprep.subr.bf16.mxu0 0
  %179 = vmatpush1.bf16.msra.mxu0 %v88
  %180 = vmatprep.subr.bf16.mxu0 0
  %181 = vmatpush1.bf16.msra.mxu0 %v99
  %182 = vmatprep.subr.bf16.mxu0 0
  %183 = vmatpush1.bf16.msra.mxu0 0
  %184 = vmatprep.subr.bf16.mxu0 0
  %185 = vmatpush1.bf16.msra.mxu0 0
  %186 = vmatprep.subr.bf16.mxu0 0
  %187 = vmatpush1.bf16.msra.mxu0 0
  %188 = vmatprep.subr.bf16.mxu0 0
  %189 = vmatpush1.bf16.msra.mxu0 0
  %190 = vmatprep.subr.bf16.mxu0 0
  %191 = vmatpush1.bf16.msra.mxu0 0
  %192 = vmatprep.subr.bf16.mxu0 0
  %193 = vmatpush1.bf16.msra.mxu0 0
  %194 = vmatprep.subr.bf16.mxu0 0
  %195 = vmatpush1.bf16.msra.mxu0 0
  %196 = vmatprep.subr.bf16.mxu0 0
  %197 = vmatpush1.bf16.msra.mxu0 0
  %198 = vmatprep.subr.bf16.mxu0 0
  %199 = vmatpush1.bf16.msra.mxu0 0
  %200 = vmatprep.subr.bf16.mxu0 0
  %201 = vmatpush1.bf16.msra.mxu0 0
  %202 = vmatprep.subr.bf16.mxu0 0
  %203 = vmatpush1.bf16.msra.mxu0 0
  %204 = vmatprep.subr.bf16.mxu0 0
  %205 = vmatpush1.bf16.msra.mxu0 0
  %206 = vmatprep.mubr.bf16.mxu0 0
  %207 = vmatmul.mubr.bf16.gmra.mrb[0].mxu0 %v172
  %v208 = vpop.f32.mrb[0].mxu0
  %v209 = vadd.f32 %v68, %v208
  %v210 = vpop.f32.mrb[0].mxu0
  %v211 = vpop.f32.mrb[0].mxu0
  %v212 = vpop.f32.mrb[0].mxu0
  %213 = vdwg.mxu0
  %v214 = vmax.f32 %v209, 0.0
  %s215 = scalar_lea.vmem %s1, 8
  %v216 = vld [vmem:[%s215] sm:$0xff]
  %218 = vset.pattern.permute.xlu0 0
  %219 = vperm.xlu0 %218, %v216
  %v220 = vpop.permute.xlu0 %219
  %v222 = vmul.f32 %v214, %v220
  %s223 = scalar_lea.vmem %s8, 1
  %v224 = vld [vmem:[%s223] sm:$0x1]
  %v226 = vlaneseq
  %v227 = vshrl.u32 %v226, 7
  %v228 = vsub.s32 0, %v227
  %v229 = vrot.slane %v224, %v228
  %v231 = vmul.f32 %v222, %v229
  %v232 = vadd.f32 %v157, %v231
  %s233 = scalar_lea.vmem %s0, 8
  %v234 = vld [vmem:[%s233] sm:$0xf]
  %v235 = vunpack.c.l.bf16 %v234
  %s236 = scalar_lea.vmem %s2, 2
  %v237 = vld [vmem:[%s236] sm:$0x1]
  %v239 = vlaneseq
  %v240 = vshrl.u32 %v239, 7
  %v241 = vsub.s32 0, %v240
  %v242 = vrot.slane %v237, %v241
  %v244 = vmul.f32 %v235, %v242
  %v245 = vadd.f32 %v170, %v244
  %v247 = vsel %vm93, %v234, 0
  %249 = vmatprep.subr.bf16.mxu0 0
  %250 = vmatpush1.bf16.msra.mxu0 %v86
  %251 = vmatprep.subr.bf16.mxu0 0
  %252 = vmatpush1.bf16.msra.mxu0 %v87
  %253 = vmatprep.subr.bf16.mxu0 0
  %254 = vmatpush1.bf16.msra.mxu0 %v88
  %255 = vmatprep.subr.bf16.mxu0 0
  %256 = vmatpush1.bf16.msra.mxu0 %v99
  %257 = vmatprep.subr.bf16.mxu0 0
  %258 = vmatpush1.bf16.msra.mxu0 0
  %259 = vmatprep.subr.bf16.mxu0 0
  %260 = vmatpush1.bf16.msra.mxu0 0
  %261 = vmatprep.subr.bf16.mxu0 0
  %262 = vmatpush1.bf16.msra.mxu0 0
  %263 = vmatprep.subr.bf16.mxu0 0
  %264 = vmatpush1.bf16.msra.mxu0 0
  %265 = vmatprep.subr.bf16.mxu0 0
  %266 = vmatpush1.bf16.msra.mxu0 0
  %267 = vmatprep.subr.bf16.mxu0 0
  %268 = vmatpush1.bf16.msra.mxu0 0
  %269 = vmatprep.subr.bf16.mxu0 0
  %270 = vmatpush1.bf16.msra.mxu0 0
  %271 = vmatprep.subr.bf16.mxu0 0
  %272 = vmatpush1.bf16.msra.mxu0 0
  %273 = vmatprep.subr.bf16.mxu0 0
  %274 = vmatpush1.bf16.msra.mxu0 0
  %275 = vmatprep.subr.bf16.mxu0 0
  %276 = vmatpush1.bf16.msra.mxu0 0
  %277 = vmatprep.subr.bf16.mxu0 0
  %278 = vmatpush1.bf16.msra.mxu0 0
  %279 = vmatprep.subr.bf16.mxu0 0
  %280 = vmatpush1.bf16.msra.mxu0 0
  %281 = vmatprep.mubr.bf16.mxu0 0
  %282 = vmatmul.mubr.bf16.gmra.mrb[0].mxu0 %v247
  %v283 = vpop.f32.mrb[0].mxu0
  %v284 = vadd.f32 %v68, %v283
  %v285 = vpop.f32.mrb[0].mxu0
  %v286 = vpop.f32.mrb[0].mxu0
  %v287 = vpop.f32.mrb[0].mxu0
  %288 = vdwg.mxu0
  %v289 = vmax.f32 %v284, 0.0
  %s290 = scalar_lea.vmem %s1, 16
  %v291 = vld [vmem:[%s290] sm:$0xff]
  %293 = vset.pattern.permute.xlu0 0
  %294 = vperm.xlu0 %293, %v291
  %v295 = vpop.permute.xlu0 %294
  %v297 = vmul.f32 %v289, %v295
  %s298 = scalar_lea.vmem %s8, 2
  %v299 = vld [vmem:[%s298] sm:$0x1]
  %v301 = vlaneseq
  %v302 = vshrl.u32 %v301, 7
  %v303 = vsub.s32 0, %v302
  %v304 = vrot.slane %v299, %v303
  %v306 = vmul.f32 %v297, %v304
  %v307 = vadd.f32 %v232, %v306
  %s308 = scalar_lea.vmem %s0, 12
  %v309 = vld [vmem:[%s308] sm:$0xf]
  %v310 = vunpack.c.l.bf16 %v309
  %s311 = scalar_lea.vmem %s2, 3
  %v312 = vld [vmem:[%s311] sm:$0x1]
  %v314 = vlaneseq
  %v315 = vshrl.u32 %v314, 7
  %v316 = vsub.s32 0, %v315
  %v317 = vrot.slane %v312, %v316
  %v319 = vmul.f32 %v310, %v317
  %v320 = vadd.f32 %v245, %v319
  %v322 = vsel %vm93, %v309, 0
  %324 = vmatprep.subr.bf16.mxu0 0
  %325 = vmatpush1.bf16.msra.mxu0 %v86
  %326 = vmatprep.subr.bf16.mxu0 0
  %327 = vmatpush1.bf16.msra.mxu0 %v87
  %328 = vmatprep.subr.bf16.mxu0 0
  %329 = vmatpush1.bf16.msra.mxu0 %v88
  %330 = vmatprep.subr.bf16.mxu0 0
  %331 = vmatpush1.bf16.msra.mxu0 %v99
  %332 = vmatprep.subr.bf16.mxu0 0
  %333 = vmatpush1.bf16.msra.mxu0 0
  %334 = vmatprep.subr.bf16.mxu0 0
  %335 = vmatpush1.bf16.msra.mxu0 0
  %336 = vmatprep.subr.bf16.mxu0 0
  %337 = vmatpush1.bf16.msra.mxu0 0
  %338 = vmatprep.subr.bf16.mxu0 0
  %339 = vmatpush1.bf16.msra.mxu0 0
  %340 = vmatprep.subr.bf16.mxu0 0
  %341 = vmatpush1.bf16.msra.mxu0 0
  %342 = vmatprep.subr.bf16.mxu0 0
  %343 = vmatpush1.bf16.msra.mxu0 0
  %344 = vmatprep.subr.bf16.mxu0 0
  %345 = vmatpush1.bf16.msra.mxu0 0
  %346 = vmatprep.subr.bf16.mxu0 0
  %347 = vmatpush1.bf16.msra.mxu0 0
  %348 = vmatprep.subr.bf16.mxu0 0
  %349 = vmatpush1.bf16.msra.mxu0 0
  %350 = vmatprep.subr.bf16.mxu0 0
  %351 = vmatpush1.bf16.msra.mxu0 0
  %352 = vmatprep.subr.bf16.mxu0 0
  %353 = vmatpush1.bf16.msra.mxu0 0
  %354 = vmatprep.subr.bf16.mxu0 0
  %355 = vmatpush1.bf16.msra.mxu0 0
  %356 = vmatprep.mubr.bf16.mxu0 0
  %357 = vmatmul.mubr.bf16.gmra.mrb[0].mxu0 %v322
  %v358 = vpop.f32.mrb[0].mxu0
  %v359 = vadd.f32 %v68, %v358
  %v360 = vpop.f32.mrb[0].mxu0
  %v361 = vpop.f32.mrb[0].mxu0
  %v362 = vpop.f32.mrb[0].mxu0
  %363 = vdwg.mxu0
  %v364 = vmax.f32 %v359, 0.0
  %s365 = scalar_lea.vmem %s1, 24
  %v366 = vld [vmem:[%s365] sm:$0xff]
  %368 = vset.pattern.permute.xlu0 0
  %369 = vperm.xlu0 %368, %v366
  %v370 = vpop.permute.xlu0 %369
  %v372 = vmul.f32 %v364, %v370
  %s373 = scalar_lea.vmem %s8, 3
  %v374 = vld [vmem:[%s373] sm:$0x1]
  %v376 = vlaneseq
  %v377 = vshrl.u32 %v376, 7
  %v378 = vsub.s32 0, %v377
  %v379 = vrot.slane %v374, %v378
  %v381 = vmul.f32 %v372, %v379
  %v382 = vadd.f32 %v307, %v381
  %s383 = scalar_lea.vmem %s0, 16
  %v384 = vld [vmem:[%s383] sm:$0xf]
  %v385 = vunpack.c.l.bf16 %v384
  %s386 = scalar_lea.vmem %s2, 4
  %v387 = vld [vmem:[%s386] sm:$0x1]
  %v389 = vlaneseq
  %v390 = vshrl.u32 %v389, 7
  %v391 = vsub.s32 0, %v390
  %v392 = vrot.slane %v387, %v391
  %v394 = vmul.f32 %v385, %v392
  %v395 = vadd.f32 %v320, %v394
  %v397 = vsel %vm93, %v384, 0
  %399 = vmatprep.subr.bf16.mxu0 0
  %400 = vmatpush1.bf16.msra.mxu0 %v86
  %401 = vmatprep.subr.bf16.mxu0 0
  %402 = vmatpush1.bf16.msra.mxu0 %v87
  %403 = vmatprep.subr.bf16.mxu0 0
  %404 = vmatpush1.bf16.msra.mxu0 %v88
  %405 = vmatprep.subr.bf16.mxu0 0
  %406 = vmatpush1.bf16.msra.mxu0 %v99
  %407 = vmatprep.subr.bf16.mxu0 0
  %408 = vmatpush1.bf16.msra.mxu0 0
  %409 = vmatprep.subr.bf16.mxu0 0
  %410 = vmatpush1.bf16.msra.mxu0 0
  %411 = vmatprep.subr.bf16.mxu0 0
  %412 = vmatpush1.bf16.msra.mxu0 0
  %413 = vmatprep.subr.bf16.mxu0 0
  %414 = vmatpush1.bf16.msra.mxu0 0
  %415 = vmatprep.subr.bf16.mxu0 0
  %416 = vmatpush1.bf16.msra.mxu0 0
  %417 = vmatprep.subr.bf16.mxu0 0
  %418 = vmatpush1.bf16.msra.mxu0 0
  %419 = vmatprep.subr.bf16.mxu0 0
  %420 = vmatpush1.bf16.msra.mxu0 0
  %421 = vmatprep.subr.bf16.mxu0 0
  %422 = vmatpush1.bf16.msra.mxu0 0
  %423 = vmatprep.subr.bf16.mxu0 0
  %424 = vmatpush1.bf16.msra.mxu0 0
  %425 = vmatprep.subr.bf16.mxu0 0
  %426 = vmatpush1.bf16.msra.mxu0 0
  %427 = vmatprep.subr.bf16.mxu0 0
  %428 = vmatpush1.bf16.msra.mxu0 0
  %429 = vmatprep.subr.bf16.mxu0 0
  %430 = vmatpush1.bf16.msra.mxu0 0
  %431 = vmatprep.mubr.bf16.mxu0 0
  %432 = vmatmul.mubr.bf16.gmra.mrb[0].mxu0 %v397
  %v433 = vpop.f32.mrb[0].mxu0
  %v434 = vadd.f32 %v68, %v433
  %v435 = vpop.f32.mrb[0].mxu0
  %v436 = vpop.f32.mrb[0].mxu0
  %v437 = vpop.f32.mrb[0].mxu0
  %438 = vdwg.mxu0
  %v439 = vmax.f32 %v434, 0.0
  %s440 = scalar_lea.vmem %s1, 32
  %v441 = vld [vmem:[%s440] sm:$0xff]
  %443 = vset.pattern.permute.xlu0 0
  %444 = vperm.xlu0 %443, %v441
  %v445 = vpop.permute.xlu0 %444
  %v447 = vmul.f32 %v439, %v445
  %s448 = scalar_lea.vmem %s8, 4
  %v449 = vld [vmem:[%s448] sm:$0x1]
  %v451 = vlaneseq
  %v452 = vshrl.u32 %v451, 7
  %v453 = vsub.s32 0, %v452
  %v454 = vrot.slane %v449, %v453
  %v456 = vmul.f32 %v447, %v454
  %v457 = vadd.f32 %v382, %v456
  %s458 = scalar_lea.vmem %s0, 20
  %v459 = vld [vmem:[%s458] sm:$0xf]
  %v460 = vunpack.c.l.bf16 %v459
  %s461 = scalar_lea.vmem %s2, 5
  %v462 = vld [vmem:[%s461] sm:$0x1]
  %v464 = vlaneseq
  %v465 = vshrl.u32 %v464, 7
  %v466 = vsub.s32 0, %v465
  %v467 = vrot.slane %v462, %v466
  %v469 = vmul.f32 %v460, %v467
  %v470 = vadd.f32 %v395, %v469
  %v472 = vsel %vm93, %v459, 0
  %474 = vmatprep.subr.bf16.mxu0 0
  %475 = vmatpush1.bf16.msra.mxu0 %v86
  %476 = vmatprep.subr.bf16.mxu0 0
  %477 = vmatpush1.bf16.msra.mxu0 %v87
  %478 = vmatprep.subr.bf16.mxu0 0
  %479 = vmatpush1.bf16.msra.mxu0 %v88
  %480 = vmatprep.subr.bf16.mxu0 0
  %481 = vmatpush1.bf16.msra.mxu0 %v99
  %482 = vmatprep.subr.bf16.mxu0 0
  %483 = vmatpush1.bf16.msra.mxu0 0
  %484 = vmatprep.subr.bf16.mxu0 0
  %485 = vmatpush1.bf16.msra.mxu0 0
  %486 = vmatprep.subr.bf16.mxu0 0
  %487 = vmatpush1.bf16.msra.mxu0 0
  %488 = vmatprep.subr.bf16.mxu0 0
  %489 = vmatpush1.bf16.msra.mxu0 0
  %490 = vmatprep.subr.bf16.mxu0 0
  %491 = vmatpush1.bf16.msra.mxu0 0
  %492 = vmatprep.subr.bf16.mxu0 0
  %493 = vmatpush1.bf16.msra.mxu0 0
  %494 = vmatprep.subr.bf16.mxu0 0
  %495 = vmatpush1.bf16.msra.mxu0 0
  %496 = vmatprep.subr.bf16.mxu0 0
  %497 = vmatpush1.bf16.msra.mxu0 0
  %498 = vmatprep.subr.bf16.mxu0 0
  %499 = vmatpush1.bf16.msra.mxu0 0
  %500 = vmatprep.subr.bf16.mxu0 0
  %501 = vmatpush1.bf16.msra.mxu0 0
  %502 = vmatprep.subr.bf16.mxu0 0
  %503 = vmatpush1.bf16.msra.mxu0 0
  %504 = vmatprep.subr.bf16.mxu0 0
  %505 = vmatpush1.bf16.msra.mxu0 0
  %506 = vmatprep.mubr.bf16.mxu0 0
  %507 = vmatmul.mubr.bf16.gmra.mrb[0].mxu0 %v472
  %v508 = vpop.f32.mrb[0].mxu0
  %v509 = vadd.f32 %v68, %v508
  %v510 = vpop.f32.mrb[0].mxu0
  %v511 = vpop.f32.mrb[0].mxu0
  %v512 = vpop.f32.mrb[0].mxu0
  %513 = vdwg.mxu0
  %v514 = vmax.f32 %v509, 0.0
  %s515 = scalar_lea.vmem %s1, 40
  %v516 = vld [vmem:[%s515] sm:$0xff]
  %518 = vset.pattern.permute.xlu0 0
  %519 = vperm.xlu0 %518, %v516
  %v520 = vpop.permute.xlu0 %519
  %v522 = vmul.f32 %v514, %v520
  %s523 = scalar_lea.vmem %s8, 5
  %v524 = vld [vmem:[%s523] sm:$0x1]
  %v526 = vlaneseq
  %v527 = vshrl.u32 %v526, 7
  %v528 = vsub.s32 0, %v527
  %v529 = vrot.slane %v524, %v528
  %v531 = vmul.f32 %v522, %v529
  %v532 = vadd.f32 %v457, %v531
  %s533 = scalar_lea.vmem %s0, 24
  %v534 = vld [vmem:[%s533] sm:$0xf]
  %v535 = vunpack.c.l.bf16 %v534
  %s536 = scalar_lea.vmem %s2, 6
  %v537 = vld [vmem:[%s536] sm:$0x1]
  %v539 = vlaneseq
  %v540 = vshrl.u32 %v539, 7
  %v541 = vsub.s32 0, %v540
  %v542 = vrot.slane %v537, %v541
  %v544 = vmul.f32 %v535, %v542
  %v545 = vadd.f32 %v470, %v544
  %v547 = vsel %vm93, %v534, 0
  %549 = vmatprep.subr.bf16.mxu0 0
  %550 = vmatpush1.bf16.msra.mxu0 %v86
  %551 = vmatprep.subr.bf16.mxu0 0
  %552 = vmatpush1.bf16.msra.mxu0 %v87
  %553 = vmatprep.subr.bf16.mxu0 0
  %554 = vmatpush1.bf16.msra.mxu0 %v88
  %555 = vmatprep.subr.bf16.mxu0 0
  %556 = vmatpush1.bf16.msra.mxu0 %v99
  %557 = vmatprep.subr.bf16.mxu0 0
  %558 = vmatpush1.bf16.msra.mxu0 0
  %559 = vmatprep.subr.bf16.mxu0 0
  %560 = vmatpush1.bf16.msra.mxu0 0
  %561 = vmatprep.subr.bf16.mxu0 0
  %562 = vmatpush1.bf16.msra.mxu0 0
  %563 = vmatprep.subr.bf16.mxu0 0
  %564 = vmatpush1.bf16.msra.mxu0 0
  %565 = vmatprep.subr.bf16.mxu0 0
  %566 = vmatpush1.bf16.msra.mxu0 0
  %567 = vmatprep.subr.bf16.mxu0 0
  %568 = vmatpush1.bf16.msra.mxu0 0
  %569 = vmatprep.subr.bf16.mxu0 0
  %570 = vmatpush1.bf16.msra.mxu0 0
  %571 = vmatprep.subr.bf16.mxu0 0
  %572 = vmatpush1.bf16.msra.mxu0 0
  %573 = vmatprep.subr.bf16.mxu0 0
  %574 = vmatpush1.bf16.msra.mxu0 0
  %575 = vmatprep.subr.bf16.mxu0 0
  %576 = vmatpush1.bf16.msra.mxu0 0
  %577 = vmatprep.subr.bf16.mxu0 0
  %578 = vmatpush1.bf16.msra.mxu0 0
  %579 = vmatprep.subr.bf16.mxu0 0
  %580 = vmatpush1.bf16.msra.mxu0 0
  %581 = vmatprep.mubr.bf16.mxu0 0
  %582 = vmatmul.mubr.bf16.gmra.mrb[0].mxu0 %v547
  %v583 = vpop.f32.mrb[0].mxu0
  %v584 = vadd.f32 %v68, %v583
  %v585 = vpop.f32.mrb[0].mxu0
  %v586 = vpop.f32.mrb[0].mxu0
  %v587 = vpop.f32.mrb[0].mxu0
  %588 = vdwg.mxu0
  %v589 = vmax.f32 %v584, 0.0
  %s590 = scalar_lea.vmem %s1, 48
  %v591 = vld [vmem:[%s590] sm:$0xff]
  %593 = vset.pattern.permute.xlu0 0
  %594 = vperm.xlu0 %593, %v591
  %v595 = vpop.permute.xlu0 %594
  %v597 = vmul.f32 %v589, %v595
  %s598 = scalar_lea.vmem %s8, 6
  %v599 = vld [vmem:[%s598] sm:$0x1]
  %v601 = vlaneseq
  %v602 = vshrl.u32 %v601, 7
  %v603 = vsub.s32 0, %v602
  %v604 = vrot.slane %v599, %v603
  %v606 = vmul.f32 %v597, %v604
  %v607 = vadd.f32 %v532, %v606
  %s608 = scalar_lea.vmem %s0, 28
  %v609 = vld [vmem:[%s608] sm:$0xf]
  %v610 = vunpack.c.l.bf16 %v609
  %s611 = scalar_lea.vmem %s2, 7
  %v612 = vld [vmem:[%s611] sm:$0x1]
  %v614 = vlaneseq
  %v615 = vshrl.u32 %v614, 7
  %v616 = vsub.s32 0, %v615
  %v617 = vrot.slane %v612, %v616
  %v619 = vmul.f32 %v610, %v617
  %v620 = vadd.f32 %v545, %v619
  %v622 = vsel %vm93, %v609, 0
  %624 = vmatprep.subr.bf16.mxu0 0
  %625 = vmatpush1.bf16.msra.mxu0 %v86
  %626 = vmatprep.subr.bf16.mxu0 0
  %627 = vmatpush1.bf16.msra.mxu0 %v87
  %628 = vmatprep.subr.bf16.mxu0 0
  %629 = vmatpush1.bf16.msra.mxu0 %v88
  %630 = vmatprep.subr.bf16.mxu0 0
  %631 = vmatpush1.bf16.msra.mxu0 %v99
  %632 = vmatprep.subr.bf16.mxu0 0
  %633 = vmatpush1.bf16.msra.mxu0 0
  %634 = vmatprep.subr.bf16.mxu0 0
  %635 = vmatpush1.bf16.msra.mxu0 0
  %636 = vmatprep.subr.bf16.mxu0 0
  %637 = vmatpush1.bf16.msra.mxu0 0
  %638 = vmatprep.subr.bf16.mxu0 0
  %639 = vmatpush1.bf16.msra.mxu0 0
  %640 = vmatprep.subr.bf16.mxu0 0
  %641 = vmatpush1.bf16.msra.mxu0 0
  %642 = vmatprep.subr.bf16.mxu0 0
  %643 = vmatpush1.bf16.msra.mxu0 0
  %644 = vmatprep.subr.bf16.mxu0 0
  %645 = vmatpush1.bf16.msra.mxu0 0
  %646 = vmatprep.subr.bf16.mxu0 0
  %647 = vmatpush1.bf16.msra.mxu0 0
  %648 = vmatprep.subr.bf16.mxu0 0
  %649 = vmatpush1.bf16.msra.mxu0 0
  %650 = vmatprep.subr.bf16.mxu0 0
  %651 = vmatpush1.bf16.msra.mxu0 0
  %652 = vmatprep.subr.bf16.mxu0 0
  %653 = vmatpush1.bf16.msra.mxu0 0
  %654 = vmatprep.subr.bf16.mxu0 0
  %655 = vmatpush1.bf16.msra.mxu0 0
  %656 = vmatprep.mubr.bf16.mxu0 0
  %657 = vmatmul.mubr.bf16.gmra.mrb[0].mxu0 %v622
  %v658 = vpop.f32.mrb[0].mxu0
  %v659 = vadd.f32 %v68, %v658
  %v660 = vpop.f32.mrb[0].mxu0
  %v661 = vpop.f32.mrb[0].mxu0
  %v662 = vpop.f32.mrb[0].mxu0
  %663 = vdwg.mxu0
  %v664 = vmax.f32 %v659, 0.0
  %s665 = scalar_lea.vmem %s1, 56
  %v666 = vld [vmem:[%s665] sm:$0xff]
  %668 = vset.pattern.permute.xlu0 0
  %669 = vperm.xlu0 %668, %v666
  %v670 = vpop.permute.xlu0 %669
  %v672 = vmul.f32 %v664, %v670
  %s673 = scalar_lea.vmem %s8, 7
  %v674 = vld [vmem:[%s673] sm:$0x1]
  %v676 = vlaneseq
  %v677 = vshrl.u32 %v676, 7
  %v678 = vsub.s32 0, %v677
  %v679 = vrot.slane %v674, %v678
  %v681 = vmul.f32 %v672, %v679
  %v682 = vadd.f32 %v607, %v681
  %s683 = scalar_lea.vmem %s0, 32
  %v684 = vld [vmem:[%s683] sm:$0xf]
  %v685 = vunpack.c.l.bf16 %v684
  %s686 = scalar_lea.vmem %s2, 8
  %v687 = vld [vmem:[%s686] sm:$0x1]
  %v689 = vlaneseq
  %v690 = vshrl.u32 %v689, 7
  %v691 = vsub.s32 0, %v690
  %v692 = vrot.slane %v687, %v691
  %v694 = vmul.f32 %v685, %v692
  %v695 = vadd.f32 %v620, %v694
  %v697 = vsel %vm93, %v684, 0
  %699 = vmatprep.subr.bf16.mxu0 0
  %700 = vmatpush1.bf16.msra.mxu0 %v86
  %701 = vmatprep.subr.bf16.mxu0 0
  %702 = vmatpush1.bf16.msra.mxu0 %v87
  %703 = vmatprep.subr.bf16.mxu0 0
  %704 = vmatpush1.bf16.msra.mxu0 %v88
  %705 = vmatprep.subr.bf16.mxu0 0
  %706 = vmatpush1.bf16.msra.mxu0 %v99
  %707 = vmatprep.subr.bf16.mxu0 0
  %708 = vmatpush1.bf16.msra.mxu0 0
  %709 = vmatprep.subr.bf16.mxu0 0
  %710 = vmatpush1.bf16.msra.mxu0 0
  %711 = vmatprep.subr.bf16.mxu0 0
  %712 = vmatpush1.bf16.msra.mxu0 0
  %713 = vmatprep.subr.bf16.mxu0 0
  %714 = vmatpush1.bf16.msra.mxu0 0
  %715 = vmatprep.subr.bf16.mxu0 0
  %716 = vmatpush1.bf16.msra.mxu0 0
  %717 = vmatprep.subr.bf16.mxu0 0
  %718 = vmatpush1.bf16.msra.mxu0 0
  %719 = vmatprep.subr.bf16.mxu0 0
  %720 = vmatpush1.bf16.msra.mxu0 0
  %721 = vmatprep.subr.bf16.mxu0 0
  %722 = vmatpush1.bf16.msra.mxu0 0
  %723 = vmatprep.subr.bf16.mxu0 0
  %724 = vmatpush1.bf16.msra.mxu0 0
  %725 = vmatprep.subr.bf16.mxu0 0
  %726 = vmatpush1.bf16.msra.mxu0 0
  %727 = vmatprep.subr.bf16.mxu0 0
  %728 = vmatpush1.bf16.msra.mxu0 0
  %729 = vmatprep.subr.bf16.mxu0 0
  %730 = vmatpush1.bf16.msra.mxu0 0
  %731 = vmatprep.mubr.bf16.mxu0 0
  %732 = vmatmul.mubr.bf16.gmra.mrb[0].mxu0 %v697
  %v733 = vpop.f32.mrb[0].mxu0
  %v734 = vadd.f32 %v68, %v733
  %v735 = vpop.f32.mrb[0].mxu0
  %v736 = vpop.f32.mrb[0].mxu0
  %v737 = vpop.f32.mrb[0].mxu0
  %738 = vdwg.mxu0
  %v739 = vmax.f32 %v734, 0.0
  %s740 = scalar_lea.vmem %s1, 64
  %v741 = vld [vmem:[%s740] sm:$0xff]
  %743 = vset.pattern.permute.xlu0 0
  %744 = vperm.xlu0 %743, %v741
  %v745 = vpop.permute.xlu0 %744
  %v747 = vmul.f32 %v739, %v745
  %s748 = scalar_lea.vmem %s8, 8
  %v749 = vld [vmem:[%s748] sm:$0x1]
  %v751 = vlaneseq
  %v752 = vshrl.u32 %v751, 7
  %v753 = vsub.s32 0, %v752
  %v754 = vrot.slane %v749, %v753
  %v756 = vmul.f32 %v747, %v754
  %v757 = vadd.f32 %v682, %v756
  %v758 = vld [vmem:[%s3] sm:$0x1]
  %v760 = vlaneseq
  %v761 = vshrl.u32 %v760, 7
  %v762 = vsub.s32 0, %v761
  %v763 = vrot.slane %v758, %v762
  %v765 = vadd.f32 %v695, %v763
  %v766 = vpack.c.bf16 %v765, %v765
  %v767 = vld [vmem:[%s4] sm:$0xf]
  %v768 = vld [vmem:[%s4 + $0x4] sm:$0xf]
  %v769 = vld [vmem:[%s4 + $0x8] sm:$0xf]
  %v770 = vld [vmem:[%s4 + $0xc] sm:$0xf]
  %v771 = vld [vmem:[%s4 + $0x10] sm:$0xf]
  %v772 = vld [vmem:[%s4 + $0x14] sm:$0xf]
  %v773 = vld [vmem:[%s4 + $0x18] sm:$0xf]
  %v774 = vld [vmem:[%s4 + $0x1c] sm:$0x1]
  %v775 = vld [vmem:[%s5] sm:$0x1]
  %v777 = vlaneseq
  %v778 = vshrl.u32 %v777, 7
  %v779 = vsub.s32 0, %v778
  %v780 = vrot.slane %v775, %v779
  %v790 = vunpack.c.l.b16 %v767
  %v791 = vunpack.c.l.b16 %v768
  %v792 = vunpack.c.l.b16 %v769
  %v793 = vunpack.c.l.b16 %v770
  %v794 = vunpack.c.l.b16 %v771
  %v795 = vunpack.c.l.b16 %v772
  %v796 = vunpack.c.l.b16 %v773
  %v797 = vunpack.c.l.b16 %v774
  %v798 = vpack.c.b16 %v791, %v790
  %v799 = vpack.c.b16 %v793, %v792
  %v800 = vpack.c.b16 %v795, %v794
  %v801 = vpack.c.b16 %v797, %v796
  %v806 = vsel %vm93, %v766, 0
  %v809 = vsel %vm97, %v801, 0
  %811 = vmatprep.subr.bf16.mxu0 0
  %812 = vmatpush1.bf16.msra.mxu0 %v798
  %813 = vmatprep.subr.bf16.mxu0 0
  %814 = vmatpush1.bf16.msra.mxu0 %v799
  %815 = vmatprep.subr.bf16.mxu0 0
  %816 = vmatpush1.bf16.msra.mxu0 %v800
  %817 = vmatprep.subr.bf16.mxu0 0
  %818 = vmatpush1.bf16.msra.mxu0 %v809
  %819 = vmatprep.subr.bf16.mxu0 0
  %820 = vmatpush1.bf16.msra.mxu0 0
  %821 = vmatprep.subr.bf16.mxu0 0
  %822 = vmatpush1.bf16.msra.mxu0 0
  %823 = vmatprep.subr.bf16.mxu0 0
  %824 = vmatpush1.bf16.msra.mxu0 0
  %825 = vmatprep.subr.bf16.mxu0 0
  %826 = vmatpush1.bf16.msra.mxu0 0
  %827 = vmatprep.subr.bf16.mxu0 0
  %828 = vmatpush1.bf16.msra.mxu0 0
  %829 = vmatprep.subr.bf16.mxu0 0
  %830 = vmatpush1.bf16.msra.mxu0 0
  %831 = vmatprep.subr.bf16.mxu0 0
  %832 = vmatpush1.bf16.msra.mxu0 0
  %833 = vmatprep.subr.bf16.mxu0 0
  %834 = vmatpush1.bf16.msra.mxu0 0
  %835 = vmatprep.subr.bf16.mxu0 0
  %836 = vmatpush1.bf16.msra.mxu0 0
  %837 = vmatprep.subr.bf16.mxu0 0
  %838 = vmatpush1.bf16.msra.mxu0 0
  %839 = vmatprep.subr.bf16.mxu0 0
  %840 = vmatpush1.bf16.msra.mxu0 0
  %841 = vmatprep.subr.bf16.mxu0 0
  %842 = vmatpush1.bf16.msra.mxu0 0
  %843 = vmatprep.mubr.bf16.mxu0 0
  %844 = vmatmul.mubr.bf16.gmra.mrb[0].mxu0 %v806
  %v845 = vpop.f32.mrb[0].mxu0
  %v846 = vadd.f32 %v780, %v845
  %v847 = vpop.f32.mrb[0].mxu0
  %v848 = vpop.f32.mrb[0].mxu0
  %v849 = vpop.f32.mrb[0].mxu0
  %850 = vdwg.mxu0
  %v851 = vmax.f32 %v846, 0.0
  %v852 = vld [vmem:[%s9] sm:$0x1]
  %v854 = vlaneseq
  %v855 = vshrl.u32 %v854, 7
  %v856 = vsub.s32 0, %v855
  %v857 = vrot.slane %v852, %v856
  %v859 = vadd.f32 %v757, %v857
  %v860 = vpack.c.bf16 %v859, %v859
  %v861 = vld [vmem:[%s10] sm:$0xf]
  %v862 = vld [vmem:[%s10 + $0x4] sm:$0xf]
  %v863 = vld [vmem:[%s10 + $0x8] sm:$0xf]
  %v864 = vld [vmem:[%s10 + $0xc] sm:$0xf]
  %v865 = vld [vmem:[%s10 + $0x10] sm:$0xf]
  %v866 = vld [vmem:[%s10 + $0x14] sm:$0xf]
  %v867 = vld [vmem:[%s10 + $0x18] sm:$0xf]
  %v868 = vld [vmem:[%s10 + $0x1c] sm:$0x1]
  %v869 = vld [vmem:[%s11] sm:$0x1]
  %v871 = vlaneseq
  %v872 = vshrl.u32 %v871, 7
  %v873 = vsub.s32 0, %v872
  %v874 = vrot.slane %v869, %v873
  %v884 = vunpack.c.l.b16 %v861
  %v885 = vunpack.c.l.b16 %v862
  %v886 = vunpack.c.l.b16 %v863
  %v887 = vunpack.c.l.b16 %v864
  %v888 = vunpack.c.l.b16 %v865
  %v889 = vunpack.c.l.b16 %v866
  %v890 = vunpack.c.l.b16 %v867
  %v891 = vunpack.c.l.b16 %v868
  %v892 = vpack.c.b16 %v885, %v884
  %v893 = vpack.c.b16 %v887, %v886
  %v894 = vpack.c.b16 %v889, %v888
  %v895 = vpack.c.b16 %v891, %v890
  %v900 = vsel %vm93, %v860, 0
  %v903 = vsel %vm97, %v895, 0
  %905 = vmatprep.subr.bf16.mxu0 0
  %906 = vmatpush1.bf16.msra.mxu0 %v892
  %907 = vmatprep.subr.bf16.mxu0 0
  %908 = vmatpush1.bf16.msra.mxu0 %v893
  %909 = vmatprep.subr.bf16.mxu0 0
  %910 = vmatpush1.bf16.msra.mxu0 %v894
  %911 = vmatprep.subr.bf16.mxu0 0
  %912 = vmatpush1.bf16.msra.mxu0 %v903
  %913 = vmatprep.subr.bf16.mxu0 0
  %914 = vmatpush1.bf16.msra.mxu0 0
  %915 = vmatprep.subr.bf16.mxu0 0
  %916 = vmatpush1.bf16.msra.mxu0 0
  %917 = vmatprep.subr.bf16.mxu0 0
  %918 = vmatpush1.bf16.msra.mxu0 0
  %919 = vmatprep.subr.bf16.mxu0 0
  %920 = vmatpush1.bf16.msra.mxu0 0
  %921 = vmatprep.subr.bf16.mxu0 0
  %922 = vmatpush1.bf16.msra.mxu0 0
  %923 = vmatprep.subr.bf16.mxu0 0
  %924 = vmatpush1.bf16.msra.mxu0 0
  %925 = vmatprep.subr.bf16.mxu0 0
  %926 = vmatpush1.bf16.msra.mxu0 0
  %927 = vmatprep.subr.bf16.mxu0 0
  %928 = vmatpush1.bf16.msra.mxu0 0
  %929 = vmatprep.subr.bf16.mxu0 0
  %930 = vmatpush1.bf16.msra.mxu0 0
  %931 = vmatprep.subr.bf16.mxu0 0
  %932 = vmatpush1.bf16.msra.mxu0 0
  %933 = vmatprep.subr.bf16.mxu0 0
  %934 = vmatpush1.bf16.msra.mxu0 0
  %935 = vmatprep.subr.bf16.mxu0 0
  %936 = vmatpush1.bf16.msra.mxu0 0
  %937 = vmatprep.mubr.bf16.mxu0 0
  %938 = vmatmul.mubr.bf16.gmra.mrb[0].mxu0 %v900
  %v939 = vpop.f32.mrb[0].mxu0
  %v940 = vadd.f32 %v874, %v939
  %v941 = vpop.f32.mrb[0].mxu0
  %v942 = vpop.f32.mrb[0].mxu0
  %v943 = vpop.f32.mrb[0].mxu0
  %944 = vdwg.mxu0
  %v945 = vmax.f32 %v940, 0.0
  %v946 = vpack.c.bf16 %v851, %v851
  %vm947 = vcmask 470016
  %948 = vst.msk [vmem:[%s12] sm:$0xf] %vm947, %v946
  %v949 = vpack.c.bf16 %v945, %v945
  %950 = vst.msk [vmem:[%s13] sm:$0xf] %vm947, %v949
  // Predicated region
  $region50: #{shufflenet_v2_forward.25} parent=0 // pred_check
    _
  $region51: #{shufflenet_v2_forward.25} parent=0 // pred_check_branch
    %952 = sbr.rel (0) target = $region53
  $region52: #{shufflenet_v2_forward.25} parent=0 // pred_region
    _
  $region53: #{shufflenet_v2_forward.25} parent=0 // pred_fallthru
    _
  // Predicated region
  $region54: #{shufflenet_v2_forward.25} parent=0 // pred_check
    _
  $region55: #{shufflenet_v2_forward.25} parent=0 // pred_check_branch
    %954 = sbr.rel (0) target = $region57
  $region56: #{shufflenet_v2_forward.25} parent=0 // pred_region
    _
  $region57: #{shufflenet_v2_forward.25} parent=0 // pred_fallthru
    _
  // Predicated region
  $region58: #{shufflenet_v2_forward.25} parent=0 // pred_check
    _
  $region59: #{shufflenet_v2_forward.25} parent=0 // pred_check_branch
    %956 = sbr.rel (0) target = $region61
  $region60: #{shufflenet_v2_forward.25} parent=0 // pred_region
    _
  $region61: #{shufflenet_v2_forward.25} parent=0 // pred_fallthru
    _
  // Predicated region
  $region62: #{shufflenet_v2_forward.25} parent=0 // pred_check
    _
  $region63: #{shufflenet_v2_forward.25} parent=0 // pred_check_branch
    %958 = sbr.rel (0) target = $region65
  $region64: #{shufflenet_v2_forward.25} parent=0 // pred_region
    _
  $region65: #{shufflenet_v2_forward.25} parent=0 // pred_fallthru
    _

// kernel: shufflenet_v2_forward.34
$region0: #{shufflenet_v2_forward.34}
  #allocation0 [shape = 'u32[]', space=smem, size = 0x4, offset = 0x4, fixed_abs, tag = 'smem constant byte address 0x4 - core index']
  #allocation1 [shape = 'u32[144,128]{1,0:T(1,128)}', space=vmem, size = 0x12000, scoped, tag = 'internal scratch']
  #allocation2 [shape = 'f32[2,3,3,116]{3,2,1,0:T(4,128)}', space=vmem, size = 0x3000, scoped, tag = 'scratch operand']
  %s0 = inlined_call_operand.vmem [shape: bf16[2,1,1,116], index: 0, kind: input, shape index: {}]
  %s1 = inlined_call_operand.vmem [shape: bf16[116,116], index: 1, kind: input, shape index: {}]
  %s2 = inlined_call_operand.vmem [shape: f32[1,116], index: 2, kind: input, shape index: {}]
  %s3 = inlined_call_operand.vmem [shape: f32[9,1,116], index: 3, kind: input, shape index: {}]
  %s4 = inlined_call_operand.vmem [shape: f32[1,116], index: 4, kind: input, shape index: {}]
  %s5 = inlined_call_operand.vmem [shape: bf16[116,116], index: 5, kind: input, shape index: {}]
  %s6 = inlined_call_operand.vmem [shape: f32[1,116], index: 6, kind: input, shape index: {}]
  %s7 = inlined_call_operand.vmem [shape: bf16[2,1,1,116], index: 7, kind: output, shape index: {}]
  %s8 = sld [smem:[#allocation0]]
  $region38: #{shufflenet_v2_forward.34} parent=0
    _
  %s10 = ssub.s32 1, %s8
  %s11 = scalar_select 0, %s10, %s8
  // Predicated region
  $region2: #{shufflenet_v2_forward.34} parent=0 // pred_check
    _
  $region3: #{shufflenet_v2_forward.34} parent=0 // pred_check_branch
    %13 = sbr.rel (0) target = $region5
  $region4: #{shufflenet_v2_forward.34} parent=0 // pred_region
    _
  $region5: #{shufflenet_v2_forward.34} parent=0 // pred_fallthru
    _
  // Predicated region
  $region6: #{shufflenet_v2_forward.34} parent=0 // pred_check
    _
  $region7: #{shufflenet_v2_forward.34} parent=0 // pred_check_branch
    %15 = sbr.rel (0) target = $region9
  $region8: #{shufflenet_v2_forward.34} parent=0 // pred_region
    _
  $region9: #{shufflenet_v2_forward.34} parent=0 // pred_fallthru
    _
  // Predicated region
  $region10: #{shufflenet_v2_forward.34} parent=0 // pred_check
    _
  $region11: #{shufflenet_v2_forward.34} parent=0 // pred_check_branch
    %17 = sbr.rel (0) target = $region13
  $region12: #{shufflenet_v2_forward.34} parent=0 // pred_region
    _
  $region13: #{shufflenet_v2_forward.34} parent=0 // pred_fallthru
    _
  // Predicated region
  $region14: #{shufflenet_v2_forward.34} parent=0 // pred_check
    _
  $region15: #{shufflenet_v2_forward.34} parent=0 // pred_check_branch
    %19 = sbr.rel (0) target = $region17
  $region16: #{shufflenet_v2_forward.34} parent=0 // pred_region
    _
  $region17: #{shufflenet_v2_forward.34} parent=0 // pred_fallthru
    _
  // Predicated region
  $region18: #{shufflenet_v2_forward.34} parent=0 // pred_check
    _
  $region19: #{shufflenet_v2_forward.34} parent=0 // pred_check_branch
    %21 = sbr.rel (0) target = $region21
  $region20: #{shufflenet_v2_forward.34} parent=0 // pred_region
    _
  $region21: #{shufflenet_v2_forward.34} parent=0 // pred_fallthru
    _
  // Predicated region
  $region22: #{shufflenet_v2_forward.34} parent=0 // pred_check
    _
  $region23: #{shufflenet_v2_forward.34} parent=0 // pred_check_branch
    %23 = sbr.rel (0) target = $region25
  $region24: #{shufflenet_v2_forward.34} parent=0 // pred_region
    _
  $region25: #{shufflenet_v2_forward.34} parent=0 // pred_fallthru
    _
  // Predicated region
  $region26: #{shufflenet_v2_forward.34} parent=0 // pred_check
    _
  $region27: #{shufflenet_v2_forward.34} parent=0 // pred_check_branch
    %25 = sbr.rel (0) target = $region29
  $region28: #{shufflenet_v2_forward.34} parent=0 // pred_region
    _
  $region29: #{shufflenet_v2_forward.34} parent=0 // pred_fallthru
    _
  %v27 = vld [vmem:[%s1] sm:$0xf]
  %v28 = vld [vmem:[%s1 + $0x4] sm:$0xf]
  %v29 = vld [vmem:[%s1 + $0x8] sm:$0xf]
  %v30 = vld [vmem:[%s1 + $0xc] sm:$0xf]
  %v31 = vld [vmem:[%s1 + $0x10] sm:$0xf]
  %v32 = vld [vmem:[%s1 + $0x14] sm:$0xf]
  %v33 = vld [vmem:[%s1 + $0x18] sm:$0xf]
  %v34 = vld [vmem:[%s1 + $0x1c] sm:$0xf]
  %v35 = vld [vmem:[%s1 + $0x20] sm:$0xf]
  %v36 = vld [vmem:[%s1 + $0x24] sm:$0xf]
  %v37 = vld [vmem:[%s1 + $0x28] sm:$0xf]
  %v38 = vld [vmem:[%s1 + $0x2c] sm:$0xf]
  %v39 = vld [vmem:[%s1 + $0x30] sm:$0xf]
  %v40 = vld [vmem:[%s1 + $0x34] sm:$0xf]
  %v41 = vld [vmem:[%s1 + $0x38] sm:$0x3]
  %v42 = vld [vmem:[%s2] sm:$0x1]
  %v43 = vld [vmem:[%s5] sm:$0xf]
  %v44 = vld [vmem:[%s5 + $0x4] sm:$0xf]
  %v45 = vld [vmem:[%s5 + $0x8] sm:$0xf]
  %v46 = vld [vmem:[%s5 + $0xc] sm:$0xf]
  %v47 = vld [vmem:[%s5 + $0x10] sm:$0xf]
  %v48 = vld [vmem:[%s5 + $0x14] sm:$0xf]
  %v49 = vld [vmem:[%s5 + $0x18] sm:$0xf]
  %v50 = vld [vmem:[%s5 + $0x1c] sm:$0xf]
  %v51 = vld [vmem:[%s5 + $0x20] sm:$0xf]
  %v52 = vld [vmem:[%s5 + $0x24] sm:$0xf]
  %v53 = vld [vmem:[%s5 + $0x28] sm:$0xf]
  %v54 = vld [vmem:[%s5 + $0x2c] sm:$0xf]
  %v55 = vld [vmem:[%s5 + $0x30] sm:$0xf]
  %v56 = vld [vmem:[%s5 + $0x34] sm:$0xf]
  %v57 = vld [vmem:[%s5 + $0x38] sm:$0x3]
  %v58 = vld [vmem:[%s6] sm:$0x1]
  %vm59 = vcmask 944128
  %60 = vst.msk [vmem:[#allocation2] sm:$0x7] %vm59, 0.0
  %61 = vst.msk [vmem:[#allocation2 + $0x4] sm:$0x7] %vm59, 0.0
  %62 = vst.msk [vmem:[#allocation2 + $0x8] sm:$0x7] %vm59, 0.0
  %63 = vst.msk [vmem:[#allocation2 + $0xc] sm:$0x7] %vm59, 0.0
  %64 = vst.msk [vmem:[#allocation2 + $0x10] sm:$0x7] %vm59, 0.0
  %65 = vst.msk [vmem:[#allocation2 + $0x14] sm:$0x7] %vm59, 0.0
  %v66 = vld [vmem:[%s0] sm:$0x1]
  %v82 = vunpack.c.l.b16 %v27
  %v83 = vunpack.c.l.b16 %v28
  %v84 = vunpack.c.l.b16 %v29
  %v85 = vunpack.c.l.b16 %v30
  %v86 = vunpack.c.l.b16 %v31
  %v87 = vunpack.c.l.b16 %v32
  %v88 = vunpack.c.l.b16 %v33
  %v89 = vunpack.c.l.b16 %v34
  %v90 = vunpack.c.l.b16 %v35
  %v91 = vunpack.c.l.b16 %v36
  %v92 = vunpack.c.l.b16 %v37
  %v93 = vunpack.c.l.b16 %v38
  %v94 = vunpack.c.l.b16 %v39
  %v95 = vunpack.c.l.b16 %v40
  %v96 = vunpack.c.l.b16 %v41
  %v97 = vpack.c.b16 %v83, %v82
  %v98 = vpack.c.b16 %v85, %v84
  %v99 = vpack.c.b16 %v87, %v86
  %v100 = vpack.c.b16 %v89, %v88
  %v101 = vpack.c.b16 %v91, %v90
  %v102 = vpack.c.b16 %v93, %v92
  %v103 = vpack.c.b16 %v95, %v94
  %v104 = vpack.c.b16 %v96, %v96
  %vm112 = vcmask 949248
  %v114 = vsel %vm112, %v66, 0
  %vm116 = vcmask 1041408
  %v118 = vsel %vm116, %v104, 0
  %120 = vmatprep.subr.bf16.mxu0 0
  %121 = vmatpush1.bf16.msra.mxu0 %v97
  %122 = vmatprep.subr.bf16.mxu0 0
  %123 = vmatpush1.bf16.msra.mxu0 %v98
  %124 = vmatprep.subr.bf16.mxu0 0
  %125 = vmatpush1.bf16.msra.mxu0 %v99
  %126 = vmatprep.subr.bf16.mxu0 0
  %127 = vmatpush1.bf16.msra.mxu0 %v100
  %128 = vmatprep.subr.bf16.mxu0 0
  %129 = vmatpush1.bf16.msra.mxu0 %v101
  %130 = vmatprep.subr.bf16.mxu0 0
  %131 = vmatpush1.bf16.msra.mxu0 %v102
  %132 = vmatprep.subr.bf16.mxu0 0
  %133 = vmatpush1.bf16.msra.mxu0 %v103
  %134 = vmatprep.subr.bf16.mxu0 0
  %135 = vmatpush1.bf16.msra.mxu0 %v118
  %136 = vmatprep.subr.bf16.mxu0 0
  %137 = vmatpush1.bf16.msra.mxu0 0
  %138 = vmatprep.subr.bf16.mxu0 0
  %139 = vmatpush1.bf16.msra.mxu0 0
  %140 = vmatprep.subr.bf16.mxu0 0
  %141 = vmatpush1.bf16.msra.mxu0 0
  %142 = vmatprep.subr.bf16.mxu0 0
  %143 = vmatpush1.bf16.msra.mxu0 0
  %144 = vmatprep.subr.bf16.mxu0 0
  %145 = vmatpush1.bf16.msra.mxu0 0
  %146 = vmatprep.subr.bf16.mxu0 0
  %147 = vmatpush1.bf16.msra.mxu0 0
  %148 = vmatprep.subr.bf16.mxu0 0
  %149 = vmatpush1.bf16.msra.mxu0 0
  %150 = vmatprep.subr.bf16.mxu0 0
  %151 = vmatpush1.bf16.msra.mxu0 0
  %152 = vmatprep.mubr.bf16.mxu0 0
  %153 = vmatmul.mubr.bf16.gmra.mrb[0].mxu0 %v114
  %v154 = vpop.f32.mrb[0].mxu0
  %v155 = vadd.f32 %v42, %v154
  %v156 = vpop.f32.mrb[0].mxu0
  %v157 = vpop.f32.mrb[0].mxu0
  %v158 = vpop.f32.mrb[0].mxu0
  %159 = vdwg.mxu0
  %v160 = vmax.f32 %v155, 0.0
  %s161 = scalar_lea.vmem [#allocation2], 4
  %vm162 = vcmask 942080
  %163 = vst.msk [vmem:[%s161 + $0x1] sm:$0x1] %vm162, %v160
  %s164 = scalar_lea.vmem %s0, 1
  %v165 = vld [vmem:[%s164] sm:$0x1]
  %v167 = vsel %vm112, %v165, 0
  %169 = vmatprep.subr.bf16.mxu0 0
  %170 = vmatpush1.bf16.msra.mxu0 %v97
  %171 = vmatprep.subr.bf16.mxu0 0
  %172 = vmatpush1.bf16.msra.mxu0 %v98
  %173 = vmatprep.subr.bf16.mxu0 0
  %174 = vmatpush1.bf16.msra.mxu0 %v99
  %175 = vmatprep.subr.bf16.mxu0 0
  %176 = vmatpush1.bf16.msra.mxu0 %v100
  %177 = vmatprep.subr.bf16.mxu0 0
  %178 = vmatpush1.bf16.msra.mxu0 %v101
  %179 = vmatprep.subr.bf16.mxu0 0
  %180 = vmatpush1.bf16.msra.mxu0 %v102
  %181 = vmatprep.subr.bf16.mxu0 0
  %182 = vmatpush1.bf16.msra.mxu0 %v103
  %183 = vmatprep.subr.bf16.mxu0 0
  %184 = vmatpush1.bf16.msra.mxu0 %v118
  %185 = vmatprep.subr.bf16.mxu0 0
  %186 = vmatpush1.bf16.msra.mxu0 0
  %187 = vmatprep.subr.bf16.mxu0 0
  %188 = vmatpush1.bf16.msra.mxu0 0
  %189 = vmatprep.subr.bf16.mxu0 0
  %190 = vmatpush1.bf16.msra.mxu0 0
  %191 = vmatprep.subr.bf16.mxu0 0
  %192 = vmatpush1.bf16.msra.mxu0 0
  %193 = vmatprep.subr.bf16.mxu0 0
  %194 = vmatpush1.bf16.msra.mxu0 0
  %195 = vmatprep.subr.bf16.mxu0 0
  %196 = vmatpush1.bf16.msra.mxu0 0
  %197 = vmatprep.subr.bf16.mxu0 0
  %198 = vmatpush1.bf16.msra.mxu0 0
  %199 = vmatprep.subr.bf16.mxu0 0
  %200 = vmatpush1.bf16.msra.mxu0 0
  %201 = vmatprep.mubr.bf16.mxu0 0
  %202 = vmatmul.mubr.bf16.gmra.mrb[0].mxu0 %v167
  %v203 = vpop.f32.mrb[0].mxu0
  %v204 = vadd.f32 %v42, %v203
  %v205 = vpop.f32.mrb[0].mxu0
  %v206 = vpop.f32.mrb[0].mxu0
  %v207 = vpop.f32.mrb[0].mxu0
  %208 = vdwg.mxu0
  %v209 = vmax.f32 %v204, 0.0
  %s210 = scalar_lea.vmem [#allocation2], 16
  %211 = vst.msk [vmem:[%s210 + $0x1] sm:$0x1] %vm162, %v209
  %v212 = vld [vmem:[#allocation2] sm:$0x1]
  %v213 = vld [vmem:[#allocation2 + $0xc] sm:$0x1]
  %v214 = vld [vmem:[%s3] sm:$0x1]
  %v215 = vmul.f32 %v212, %v214
  %v216 = vmul.f32 %v213, %v214
  %v217 = vadd.f32 %v215, 0.0
  %v218 = vadd.f32 %v216, 0.0
  %v219 = vld [vmem:[#allocation2 + $0x1] sm:$0x1]
  %v220 = vld [vmem:[#allocation2 + $0xd] sm:$0x1]
  %s221 = scalar_lea.vmem %s3, 1
  %v222 = vld [vmem:[%s221] sm:$0x1]
  %v223 = vmul.f32 %v219, %v222
  %v224 = vmul.f32 %v220, %v222
  %v225 = vadd.f32 %v217, %v223
  %v226 = vadd.f32 %v218, %v224
  %v227 = vld [vmem:[#allocation2 + $0x2] sm:$0x1]
  %v228 = vld [vmem:[#allocation2 + $0xe] sm:$0x1]
  %s229 = scalar_lea.vmem %s3, 2
  %v230 = vld [vmem:[%s229] sm:$0x1]
  %v231 = vmul.f32 %v227, %v230
  %v232 = vmul.f32 %v228, %v230
  %v233 = vadd.f32 %v225, %v231
  %v234 = vadd.f32 %v226, %v232
  %v235 = vld [vmem:[%s161] sm:$0x1]
  %v236 = vld [vmem:[%s161 + $0xc] sm:$0x1]
  %s237 = scalar_lea.vmem %s3, 3
  %v238 = vld [vmem:[%s237] sm:$0x1]
  %v239 = vmul.f32 %v235, %v238
  %v240 = vmul.f32 %v236, %v238
  %v241 = vadd.f32 %v233, %v239
  %v242 = vadd.f32 %v234, %v240
  %v243 = vld [vmem:[%s161 + $0x1] sm:$0x1]
  %v244 = vld [vmem:[%s161 + $0xd] sm:$0x1]
  %s245 = scalar_lea.vmem %s3, 4
  %v246 = vld [vmem:[%s245] sm:$0x1]
  %v247 = vmul.f32 %v243, %v246
  %v248 = vmul.f32 %v244, %v246
  %v249 = vadd.f32 %v241, %v247
  %v250 = vadd.f32 %v242, %v248
  %v251 = vld [vmem:[%s161 + $0x2] sm:$0x1]
  %v252 = vld [vmem:[%s161 + $0xe] sm:$0x1]
  %s253 = scalar_lea.vmem %s3, 5
  %v254 = vld [vmem:[%s253] sm:$0x1]
  %v255 = vmul.f32 %v251, %v254
  %v256 = vmul.f32 %v252, %v254
  %v257 = vadd.f32 %v249, %v255
  %v258 = vadd.f32 %v250, %v256
  %s259 = scalar_lea.vmem [#allocation2], 8
  %v260 = vld [vmem:[%s259] sm:$0x1]
  %v261 = vld [vmem:[%s259 + $0xc] sm:$0x1]
  %s262 = scalar_lea.vmem %s3, 6
  %v263 = vld [vmem:[%s262] sm:$0x1]
  %v264 = vmul.f32 %v260, %v263
  %v265 = vmul.f32 %v261, %v263
  %v266 = vadd.f32 %v257, %v264
  %v267 = vadd.f32 %v258, %v265
  %v268 = vld [vmem:[%s259 + $0x1] sm:$0x1]
  %v269 = vld [vmem:[%s259 + $0xd] sm:$0x1]
  %s270 = scalar_lea.vmem %s3, 7
  %v271 = vld [vmem:[%s270] sm:$0x1]
  %v272 = vmul.f32 %v268, %v271
  %v273 = vmul.f32 %v269, %v271
  %v274 = vadd.f32 %v266, %v272
  %v275 = vadd.f32 %v267, %v273
  %v276 = vld [vmem:[%s259 + $0x2] sm:$0x1]
  %v277 = vld [vmem:[%s259 + $0xe] sm:$0x1]
  %s278 = scalar_lea.vmem %s3, 8
  %v279 = vld [vmem:[%s278] sm:$0x1]
  %v280 = vmul.f32 %v276, %v279
  %v281 = vmul.f32 %v277, %v279
  %v282 = vadd.f32 %v274, %v280
  %v283 = vadd.f32 %v275, %v281
  %v284 = vld [vmem:[%s4] sm:$0x1]
  %v285 = vadd.f32 %v282, %v284
  %v286 = vadd.f32 %v283, %v284
  %v287 = vpack.c.bf16 %v285, %v285
  %v303 = vunpack.c.l.b16 %v43
  %v304 = vunpack.c.l.b16 %v44
  %v305 = vunpack.c.l.b16 %v45
  %v306 = vunpack.c.l.b16 %v46
  %v307 = vunpack.c.l.b16 %v47
  %v308 = vunpack.c.l.b16 %v48
  %v309 = vunpack.c.l.b16 %v49
  %v310 = vunpack.c.l.b16 %v50
  %v311 = vunpack.c.l.b16 %v51
  %v312 = vunpack.c.l.b16 %v52
  %v313 = vunpack.c.l.b16 %v53
  %v314 = vunpack.c.l.b16 %v54
  %v315 = vunpack.c.l.b16 %v55
  %v316 = vunpack.c.l.b16 %v56
  %v317 = vunpack.c.l.b16 %v57
  %v318 = vpack.c.b16 %v304, %v303
  %v319 = vpack.c.b16 %v306, %v305
  %v320 = vpack.c.b16 %v308, %v307
  %v321 = vpack.c.b16 %v310, %v309
  %v322 = vpack.c.b16 %v312, %v311
  %v323 = vpack.c.b16 %v314, %v313
  %v324 = vpack.c.b16 %v316, %v315
  %v325 = vpack.c.b16 %v317, %v317
  %v334 = vsel %vm112, %v287, 0
  %v337 = vsel %vm116, %v325, 0
  %339 = vmatprep.subr.bf16.mxu0 0
  %340 = vmatpush1.bf16.msra.mxu0 %v318
  %341 = vmatprep.subr.bf16.mxu0 0
  %342 = vmatpush1.bf16.msra.mxu0 %v319
  %343 = vmatprep.subr.bf16.mxu0 0
  %344 = vmatpush1.bf16.msra.mxu0 %v320
  %345 = vmatprep.subr.bf16.mxu0 0
  %346 = vmatpush1.bf16.msra.mxu0 %v321
  %347 = vmatprep.subr.bf16.mxu0 0
  %348 = vmatpush1.bf16.msra.mxu0 %v322
  %349 = vmatprep.subr.bf16.mxu0 0
  %350 = vmatpush1.bf16.msra.mxu0 %v323
  %351 = vmatprep.subr.bf16.mxu0 0
  %352 = vmatpush1.bf16.msra.mxu0 %v324
  %353 = vmatprep.subr.bf16.mxu0 0
  %354 = vmatpush1.bf16.msra.mxu0 %v337
  %355 = vmatprep.subr.bf16.mxu0 0
  %356 = vmatpush1.bf16.msra.mxu0 0
  %357 = vmatprep.subr.bf16.mxu0 0
  %358 = vmatpush1.bf16.msra.mxu0 0
  %359 = vmatprep.subr.bf16.mxu0 0
  %360 = vmatpush1.bf16.msra.mxu0 0
  %361 = vmatprep.subr.bf16.mxu0 0
  %362 = vmatpush1.bf16.msra.mxu0 0
  %363 = vmatprep.subr.bf16.mxu0 0
  %364 = vmatpush1.bf16.msra.mxu0 0
  %365 = vmatprep.subr.bf16.mxu0 0
  %366 = vmatpush1.bf16.msra.mxu0 0
  %367 = vmatprep.subr.bf16.mxu0 0
  %368 = vmatpush1.bf16.msra.mxu0 0
  %369 = vmatprep.subr.bf16.mxu0 0
  %370 = vmatpush1.bf16.msra.mxu0 0
  %371 = vmatprep.mubr.bf16.mxu0 0
  %372 = vmatmul.mubr.bf16.gmra.mrb[0].mxu0 %v334
  %v373 = vpop.f32.mrb[0].mxu0
  %v374 = vadd.f32 %v58, %v373
  %v375 = vpop.f32.mrb[0].mxu0
  %v376 = vpop.f32.mrb[0].mxu0
  %v377 = vpop.f32.mrb[0].mxu0
  %378 = vdwg.mxu0
  %v379 = vmax.f32 %v374, 0.0
  %v380 = vpack.c.bf16 %v379, %v379
  %vm381 = vcmask 942080
  %vm382 = vsmask.f32 256
  %vm383 = vmand %vm381, %vm382
  %v384 = vld [vmem:[%s7] sm:$0x1]
  %v385 = vsel %vm383, %v380, %v384
  %386 = vst [vmem:[%s7] sm:$0x1] %v385
  %v387 = vpack.c.bf16 %v286, %v286
  %v389 = vsel %vm112, %v387, 0
  %391 = vmatprep.subr.bf16.mxu0 0
  %392 = vmatpush1.bf16.msra.mxu0 %v318
  %393 = vmatprep.subr.bf16.mxu0 0
  %394 = vmatpush1.bf16.msra.mxu0 %v319
  %395 = vmatprep.subr.bf16.mxu0 0
  %396 = vmatpush1.bf16.msra.mxu0 %v320
  %397 = vmatprep.subr.bf16.mxu0 0
  %398 = vmatpush1.bf16.msra.mxu0 %v321
  %399 = vmatprep.subr.bf16.mxu0 0
  %400 = vmatpush1.bf16.msra.mxu0 %v322
  %401 = vmatprep.subr.bf16.mxu0 0
  %402 = vmatpush1.bf16.msra.mxu0 %v323
  %403 = vmatprep.subr.bf16.mxu0 0
  %404 = vmatpush1.bf16.msra.mxu0 %v324
  %405 = vmatprep.subr.bf16.mxu0 0
  %406 = vmatpush1.bf16.msra.mxu0 %v337
  %407 = vmatprep.subr.bf16.mxu0 0
  %408 = vmatpush1.bf16.msra.mxu0 0
  %409 = vmatprep.subr.bf16.mxu0 0
  %410 = vmatpush1.bf16.msra.mxu0 0
  %411 = vmatprep.subr.bf16.mxu0 0
  %412 = vmatpush1.bf16.msra.mxu0 0
  %413 = vmatprep.subr.bf16.mxu0 0
  %414 = vmatpush1.bf16.msra.mxu0 0
  %415 = vmatprep.subr.bf16.mxu0 0
  %416 = vmatpush1.bf16.msra.mxu0 0
  %417 = vmatprep.subr.bf16.mxu0 0
  %418 = vmatpush1.bf16.msra.mxu0 0
  %419 = vmatprep.subr.bf16.mxu0 0
  %420 = vmatpush1.bf16.msra.mxu0 0
  %421 = vmatprep.subr.bf16.mxu0 0
  %422 = vmatpush1.bf16.msra.mxu0 0
  %423 = vmatprep.mubr.bf16.mxu0 0
  %424 = vmatmul.mubr.bf16.gmra.mrb[0].mxu0 %v389
  %v425 = vpop.f32.mrb[0].mxu0
  %v426 = vadd.f32 %v58, %v425
  %v427 = vpop.f32.mrb[0].mxu0
  %v428 = vpop.f32.mrb[0].mxu0
  %v429 = vpop.f32.mrb[0].mxu0
  %430 = vdwg.mxu0
  %v431 = vmax.f32 %v426, 0.0
  %v432 = vpack.c.bf16 %v431, %v431
  %s433 = scalar_lea.vmem %s7, 1
  %v434 = vld [vmem:[%s433] sm:$0x1]
  %v435 = vsel %vm383, %v432, %v434
  %436 = vst [vmem:[%s433] sm:$0x1] %v435
  // Predicated region
  $region30: #{shufflenet_v2_forward.34} parent=0 // pred_check
    _
  $region31: #{shufflenet_v2_forward.34} parent=0 // pred_check_branch
    %438 = sbr.rel (0) target = $region33
  $region32: #{shufflenet_v2_forward.34} parent=0 // pred_region
    _
  $region33: #{shufflenet_v2_forward.34} parent=0 // pred_fallthru
    _
  // Predicated region
  $region34: #{shufflenet_v2_forward.34} parent=0 // pred_check
    _
  $region35: #{shufflenet_v2_forward.34} parent=0 // pred_check_branch
    %440 = sbr.rel (0) target = $region37
  $region36: #{shufflenet_v2_forward.34} parent=0 // pred_region
    _
  $region37: #{shufflenet_v2_forward.34} parent=0 // pred_fallthru
    _

// kernel: shufflenet_v2_forward.33
$region0: #{shufflenet_v2_forward.33}
  #allocation0 [shape = 'u32[]', space=smem, size = 0x4, offset = 0x4, fixed_abs, tag = 'smem constant byte address 0x4 - core index']
  #allocation1 [shape = 'u32[144,128]{1,0:T(1,128)}', space=vmem, size = 0x12000, scoped, tag = 'internal scratch']
  %s0 = inlined_call_operand.vmem [shape: bf16[9,2,116], index: 0, kind: input, shape index: {}]
  %s1 = inlined_call_operand.vmem [shape: f32[9,2,1], index: 1, kind: input, shape index: {}]
  %s2 = inlined_call_operand.vmem [shape: f32[9,1,116], index: 2, kind: input, shape index: {}]
  %s3 = inlined_call_operand.vmem [shape: f32[1,116], index: 3, kind: input, shape index: {}]
  %s4 = inlined_call_operand.vmem [shape: bf16[116,116], index: 4, kind: input, shape index: {}]
  %s5 = inlined_call_operand.vmem [shape: f32[1,116], index: 5, kind: input, shape index: {}]
  %s6 = inlined_call_operand.vmem [shape: bf16[116,116], index: 6, kind: input, shape index: {}]
  %s7 = inlined_call_operand.vmem [shape: f32[1,116], index: 7, kind: input, shape index: {}]
  %s8 = inlined_call_operand.vmem [shape: f32[9,1,116], index: 8, kind: input, shape index: {}]
  %s9 = inlined_call_operand.vmem [shape: f32[1,116], index: 9, kind: input, shape index: {}]
  %s10 = inlined_call_operand.vmem [shape: bf16[116,116], index: 10, kind: input, shape index: {}]
  %s11 = inlined_call_operand.vmem [shape: f32[1,116], index: 11, kind: input, shape index: {}]
  %s12 = inlined_call_operand.vmem [shape: bf16[2,116], index: 12, kind: output, shape index: {0}]
  %s13 = inlined_call_operand.vmem [shape: bf16[2,116], index: 13, kind: output, shape index: {1}]
  %14 = xla_tuple %s12, %s13
  %s15 = sld [smem:[#allocation0]]
  $region66: #{shufflenet_v2_forward.33} parent=0
    _
  %s17 = ssub.s32 1, %s15
  %s18 = scalar_select 0, %s17, %s15
  // Predicated region
  $region2: #{shufflenet_v2_forward.33} parent=0 // pred_check
    _
  $region3: #{shufflenet_v2_forward.33} parent=0 // pred_check_branch
    %20 = sbr.rel (0) target = $region5
  $region4: #{shufflenet_v2_forward.33} parent=0 // pred_region
    _
  $region5: #{shufflenet_v2_forward.33} parent=0 // pred_fallthru
    _
  // Predicated region
  $region6: #{shufflenet_v2_forward.33} parent=0 // pred_check
    _
  $region7: #{shufflenet_v2_forward.33} parent=0 // pred_check_branch
    %22 = sbr.rel (0) target = $region9
  $region8: #{shufflenet_v2_forward.33} parent=0 // pred_region
    _
  $region9: #{shufflenet_v2_forward.33} parent=0 // pred_fallthru
    _
  // Predicated region
  $region10: #{shufflenet_v2_forward.33} parent=0 // pred_check
    _
  $region11: #{shufflenet_v2_forward.33} parent=0 // pred_check_branch
    %24 = sbr.rel (0) target = $region13
  $region12: #{shufflenet_v2_forward.33} parent=0 // pred_region
    _
  $region13: #{shufflenet_v2_forward.33} parent=0 // pred_fallthru
    _
  // Predicated region
  $region14: #{shufflenet_v2_forward.33} parent=0 // pred_check
    _
  $region15: #{shufflenet_v2_forward.33} parent=0 // pred_check_branch
    %26 = sbr.rel (0) target = $region17
  $region16: #{shufflenet_v2_forward.33} parent=0 // pred_region
    _
  $region17: #{shufflenet_v2_forward.33} parent=0 // pred_fallthru
    _
  // Predicated region
  $region18: #{shufflenet_v2_forward.33} parent=0 // pred_check
    _
  $region19: #{shufflenet_v2_forward.33} parent=0 // pred_check_branch
    %28 = sbr.rel (0) target = $region21
  $region20: #{shufflenet_v2_forward.33} parent=0 // pred_region
    _
  $region21: #{shufflenet_v2_forward.33} parent=0 // pred_fallthru
    _
  // Predicated region
  $region22: #{shufflenet_v2_forward.33} parent=0 // pred_check
    _
  $region23: #{shufflenet_v2_forward.33} parent=0 // pred_check_branch
    %30 = sbr.rel (0) target = $region25
  $region24: #{shufflenet_v2_forward.33} parent=0 // pred_region
    _
  $region25: #{shufflenet_v2_forward.33} parent=0 // pred_fallthru
    _
  // Predicated region
  $region26: #{shufflenet_v2_forward.33} parent=0 // pred_check
    _
  $region27: #{shufflenet_v2_forward.33} parent=0 // pred_check_branch
    %32 = sbr.rel (0) target = $region29
  $region28: #{shufflenet_v2_forward.33} parent=0 // pred_region
    _
  $region29: #{shufflenet_v2_forward.33} parent=0 // pred_fallthru
    _
  // Predicated region
  $region30: #{shufflenet_v2_forward.33} parent=0 // pred_check
    _
  $region31: #{shufflenet_v2_forward.33} parent=0 // pred_check_branch
    %34 = sbr.rel (0) target = $region33
  $region32: #{shufflenet_v2_forward.33} parent=0 // pred_region
    _
  $region33: #{shufflenet_v2_forward.33} parent=0 // pred_fallthru
    _
  // Predicated region
  $region34: #{shufflenet_v2_forward.33} parent=0 // pred_check
    _
  $region35: #{shufflenet_v2_forward.33} parent=0 // pred_check_branch
    %36 = sbr.rel (0) target = $region37
  $region36: #{shufflenet_v2_forward.33} parent=0 // pred_region
    _
  $region37: #{shufflenet_v2_forward.33} parent=0 // pred_fallthru
    _
  // Predicated region
  $region38: #{shufflenet_v2_forward.33} parent=0 // pred_check
    _
  $region39: #{shufflenet_v2_forward.33} parent=0 // pred_check_branch
    %38 = sbr.rel (0) target = $region41
  $region40: #{shufflenet_v2_forward.33} parent=0 // pred_region
    _
  $region41: #{shufflenet_v2_forward.33} parent=0 // pred_fallthru
    _
  // Predicated region
  $region42: #{shufflenet_v2_forward.33} parent=0 // pred_check
    _
  $region43: #{shufflenet_v2_forward.33} parent=0 // pred_check_branch
    %40 = sbr.rel (0) target = $region45
  $region44: #{shufflenet_v2_forward.33} parent=0 // pred_region
    _
  $region45: #{shufflenet_v2_forward.33} parent=0 // pred_fallthru
    _
  // Predicated region
  $region46: #{shufflenet_v2_forward.33} parent=0 // pred_check
    _
  $region47: #{shufflenet_v2_forward.33} parent=0 // pred_check_branch
    %42 = sbr.rel (0) target = $region49
  $region48: #{shufflenet_v2_forward.33} parent=0 // pred_region
    _
  $region49: #{shufflenet_v2_forward.33} parent=0 // pred_fallthru
    _
  %v44 = vld [vmem:[%s6] sm:$0xf]
  %v45 = vld [vmem:[%s6 + $0x4] sm:$0xf]
  %v46 = vld [vmem:[%s6 + $0x8] sm:$0xf]
  %v47 = vld [vmem:[%s6 + $0xc] sm:$0xf]
  %v48 = vld [vmem:[%s6 + $0x10] sm:$0xf]
  %v49 = vld [vmem:[%s6 + $0x14] sm:$0xf]
  %v50 = vld [vmem:[%s6 + $0x18] sm:$0xf]
  %v51 = vld [vmem:[%s6 + $0x1c] sm:$0xf]
  %v52 = vld [vmem:[%s6 + $0x20] sm:$0xf]
  %v53 = vld [vmem:[%s6 + $0x24] sm:$0xf]
  %v54 = vld [vmem:[%s6 + $0x28] sm:$0xf]
  %v55 = vld [vmem:[%s6 + $0x2c] sm:$0xf]
  %v56 = vld [vmem:[%s6 + $0x30] sm:$0xf]
  %v57 = vld [vmem:[%s6 + $0x34] sm:$0xf]
  %v58 = vld [vmem:[%s6 + $0x38] sm:$0x3]
  %v59 = vld [vmem:[%s7] sm:$0x1]
  %v60 = vld [vmem:[%s0] sm:$0x1]
  %v61 = vunpack.c.l.bf16 %v60
  %v62 = vld [vmem:[%s2] sm:$0x1]
  %v64 = vlaneseq
  %v65 = vshrl.u32 %v64, 7
  %v66 = vsub.s32 0, %v65
  %v67 = vrot.slane %v62, %v66
  %v69 = vmul.f32 %v61, %v67
  %v70 = vadd.f32 %v69, 0.0
  %v72 = vlaneseq
  %v73 = vshrl.u32 %v72, 7
  %v74 = vsub.s32 0, %v73
  %v75 = vrot.slane %v59, %v74
  %v92 = vunpack.c.l.b16 %v44
  %v93 = vunpack.c.l.b16 %v45
  %v94 = vunpack.c.l.b16 %v46
  %v95 = vunpack.c.l.b16 %v47
  %v96 = vunpack.c.l.b16 %v48
  %v97 = vunpack.c.l.b16 %v49
  %v98 = vunpack.c.l.b16 %v50
  %v99 = vunpack.c.l.b16 %v51
  %v100 = vunpack.c.l.b16 %v52
  %v101 = vunpack.c.l.b16 %v53
  %v102 = vunpack.c.l.b16 %v54
  %v103 = vunpack.c.l.b16 %v55
  %v104 = vunpack.c.l.b16 %v56
  %v105 = vunpack.c.l.b16 %v57
  %v106 = vunpack.c.l.b16 %v58
  %v107 = vpack.c.b16 %v93, %v92
  %v108 = vpack.c.b16 %v95, %v94
  %v109 = vpack.c.b16 %v97, %v96
  %v110 = vpack.c.b16 %v99, %v98
  %v111 = vpack.c.b16 %v101, %v100
  %v112 = vpack.c.b16 %v103, %v102
  %v113 = vpack.c.b16 %v105, %v104
  %v114 = vpack.c.b16 %v106, %v106
  %vm122 = vcmask 949248
  %v124 = vsel %vm122, %v60, 0
  %vm126 = vcmask 1041408
  %v128 = vsel %vm126, %v114, 0
  %130 = vmatprep.subr.bf16.mxu0 0
  %131 = vmatpush1.bf16.msra.mxu0 %v107
  %132 = vmatprep.subr.bf16.mxu0 0
  %133 = vmatpush1.bf16.msra.mxu0 %v108
  %134 = vmatprep.subr.bf16.mxu0 0
  %135 = vmatpush1.bf16.msra.mxu0 %v109
  %136 = vmatprep.subr.bf16.mxu0 0
  %137 = vmatpush1.bf16.msra.mxu0 %v110
  %138 = vmatprep.subr.bf16.mxu0 0
  %139 = vmatpush1.bf16.msra.mxu0 %v111
  %140 = vmatprep.subr.bf16.mxu0 0
  %141 = vmatpush1.bf16.msra.mxu0 %v112
  %142 = vmatprep.subr.bf16.mxu0 0
  %143 = vmatpush1.bf16.msra.mxu0 %v113
  %144 = vmatprep.subr.bf16.mxu0 0
  %145 = vmatpush1.bf16.msra.mxu0 %v128
  %146 = vmatprep.subr.bf16.mxu0 0
  %147 = vmatpush1.bf16.msra.mxu0 0
  %148 = vmatprep.subr.bf16.mxu0 0
  %149 = vmatpush1.bf16.msra.mxu0 0
  %150 = vmatprep.subr.bf16.mxu0 0
  %151 = vmatpush1.bf16.msra.mxu0 0
  %152 = vmatprep.subr.bf16.mxu0 0
  %153 = vmatpush1.bf16.msra.mxu0 0
  %154 = vmatprep.subr.bf16.mxu0 0
  %155 = vmatpush1.bf16.msra.mxu0 0
  %156 = vmatprep.subr.bf16.mxu0 0
  %157 = vmatpush1.bf16.msra.mxu0 0
  %158 = vmatprep.subr.bf16.mxu0 0
  %159 = vmatpush1.bf16.msra.mxu0 0
  %160 = vmatprep.subr.bf16.mxu0 0
  %161 = vmatpush1.bf16.msra.mxu0 0
  %162 = vmatprep.mubr.bf16.mxu0 0
  %163 = vmatmul.mubr.bf16.gmra.mrb[0].mxu0 %v124
  %v164 = vpop.f32.mrb[0].mxu0
  %v165 = vadd.f32 %v75, %v164
  %v166 = vpop.f32.mrb[0].mxu0
  %v167 = vpop.f32.mrb[0].mxu0
  %v168 = vpop.f32.mrb[0].mxu0
  %169 = vdwg.mxu0
  %v170 = vmax.f32 %v165, 0.0
  %v171 = vld [vmem:[%s1] sm:$0x3]
  %173 = vset.pattern.permute.xlu0 0
  %174 = vperm.xlu0 %173, %v171
  %v175 = vpop.permute.xlu0 %174
  %v177 = vmul.f32 %v170, %v175
  %v178 = vld [vmem:[%s8] sm:$0x1]
  %v180 = vlaneseq
  %v181 = vshrl.u32 %v180, 7
  %v182 = vsub.s32 0, %v181
  %v183 = vrot.slane %v178, %v182
  %v185 = vmul.f32 %v177, %v183
  %v186 = vadd.f32 %v185, 0.0
  %s187 = scalar_lea.vmem %s0, 1
  %v188 = vld [vmem:[%s187] sm:$0x1]
  %v189 = vunpack.c.l.bf16 %v188
  %s190 = scalar_lea.vmem %s2, 1
  %v191 = vld [vmem:[%s190] sm:$0x1]
  %v193 = vlaneseq
  %v194 = vshrl.u32 %v193, 7
  %v195 = vsub.s32 0, %v194
  %v196 = vrot.slane %v191, %v195
  %v198 = vmul.f32 %v189, %v196
  %v199 = vadd.f32 %v70, %v198
  %v201 = vsel %vm122, %v188, 0
  %203 = vmatprep.subr.bf16.mxu0 0
  %204 = vmatpush1.bf16.msra.mxu0 %v107
  %205 = vmatprep.subr.bf16.mxu0 0
  %206 = vmatpush1.bf16.msra.mxu0 %v108
  %207 = vmatprep.subr.bf16.mxu0 0
  %208 = vmatpush1.bf16.msra.mxu0 %v109
  %209 = vmatprep.subr.bf16.mxu0 0
  %210 = vmatpush1.bf16.msra.mxu0 %v110
  %211 = vmatprep.subr.bf16.mxu0 0
  %212 = vmatpush1.bf16.msra.mxu0 %v111
  %213 = vmatprep.subr.bf16.mxu0 0
  %214 = vmatpush1.bf16.msra.mxu0 %v112
  %215 = vmatprep.subr.bf16.mxu0 0
  %216 = vmatpush1.bf16.msra.mxu0 %v113
  %217 = vmatprep.subr.bf16.mxu0 0
  %218 = vmatpush1.bf16.msra.mxu0 %v128
  %219 = vmatprep.subr.bf16.mxu0 0
  %220 = vmatpush1.bf16.msra.mxu0 0
  %221 = vmatprep.subr.bf16.mxu0 0
  %222 = vmatpush1.bf16.msra.mxu0 0
  %223 = vmatprep.subr.bf16.mxu0 0
  %224 = vmatpush1.bf16.msra.mxu0 0
  %225 = vmatprep.subr.bf16.mxu0 0
  %226 = vmatpush1.bf16.msra.mxu0 0
  %227 = vmatprep.subr.bf16.mxu0 0
  %228 = vmatpush1.bf16.msra.mxu0 0
  %229 = vmatprep.subr.bf16.mxu0 0
  %230 = vmatpush1.bf16.msra.mxu0 0
  %231 = vmatprep.subr.bf16.mxu0 0
  %232 = vmatpush1.bf16.msra.mxu0 0
  %233 = vmatprep.subr.bf16.mxu0 0
  %234 = vmatpush1.bf16.msra.mxu0 0
  %235 = vmatprep.mubr.bf16.mxu0 0
  %236 = vmatmul.mubr.bf16.gmra.mrb[0].mxu0 %v201
  %v237 = vpop.f32.mrb[0].mxu0
  %v238 = vadd.f32 %v75, %v237
  %v239 = vpop.f32.mrb[0].mxu0
  %v240 = vpop.f32.mrb[0].mxu0
  %v241 = vpop.f32.mrb[0].mxu0
  %242 = vdwg.mxu0
  %v243 = vmax.f32 %v238, 0.0
  %s244 = scalar_lea.vmem %s1, 2
  %v245 = vld [vmem:[%s244] sm:$0x3]
  %247 = vset.pattern.permute.xlu0 0
  %248 = vperm.xlu0 %247, %v245
  %v249 = vpop.permute.xlu0 %248
  %v251 = vmul.f32 %v243, %v249
  %s252 = scalar_lea.vmem %s8, 1
  %v253 = vld [vmem:[%s252] sm:$0x1]
  %v255 = vlaneseq
  %v256 = vshrl.u32 %v255, 7
  %v257 = vsub.s32 0, %v256
  %v258 = vrot.slane %v253, %v257
  %v260 = vmul.f32 %v251, %v258
  %v261 = vadd.f32 %v186, %v260
  %s262 = scalar_lea.vmem %s0, 2
  %v263 = vld [vmem:[%s262] sm:$0x1]
  %v264 = vunpack.c.l.bf16 %v263
  %s265 = scalar_lea.vmem %s2, 2
  %v266 = vld [vmem:[%s265] sm:$0x1]
  %v268 = vlaneseq
  %v269 = vshrl.u32 %v268, 7
  %v270 = vsub.s32 0, %v269
  %v271 = vrot.slane %v266, %v270
  %v273 = vmul.f32 %v264, %v271
  %v274 = vadd.f32 %v199, %v273
  %v276 = vsel %vm122, %v263, 0
  %278 = vmatprep.subr.bf16.mxu0 0
  %279 = vmatpush1.bf16.msra.mxu0 %v107
  %280 = vmatprep.subr.bf16.mxu0 0
  %281 = vmatpush1.bf16.msra.mxu0 %v108
  %282 = vmatprep.subr.bf16.mxu0 0
  %283 = vmatpush1.bf16.msra.mxu0 %v109
  %284 = vmatprep.subr.bf16.mxu0 0
  %285 = vmatpush1.bf16.msra.mxu0 %v110
  %286 = vmatprep.subr.bf16.mxu0 0
  %287 = vmatpush1.bf16.msra.mxu0 %v111
  %288 = vmatprep.subr.bf16.mxu0 0
  %289 = vmatpush1.bf16.msra.mxu0 %v112
  %290 = vmatprep.subr.bf16.mxu0 0
  %291 = vmatpush1.bf16.msra.mxu0 %v113
  %292 = vmatprep.subr.bf16.mxu0 0
  %293 = vmatpush1.bf16.msra.mxu0 %v128
  %294 = vmatprep.subr.bf16.mxu0 0
  %295 = vmatpush1.bf16.msra.mxu0 0
  %296 = vmatprep.subr.bf16.mxu0 0
  %297 = vmatpush1.bf16.msra.mxu0 0
  %298 = vmatprep.subr.bf16.mxu0 0
  %299 = vmatpush1.bf16.msra.mxu0 0
  %300 = vmatprep.subr.bf16.mxu0 0
  %301 = vmatpush1.bf16.msra.mxu0 0
  %302 = vmatprep.subr.bf16.mxu0 0
  %303 = vmatpush1.bf16.msra.mxu0 0
  %304 = vmatprep.subr.bf16.mxu0 0
  %305 = vmatpush1.bf16.msra.mxu0 0
  %306 = vmatprep.subr.bf16.mxu0 0
  %307 = vmatpush1.bf16.msra.mxu0 0
  %308 = vmatprep.subr.bf16.mxu0 0
  %309 = vmatpush1.bf16.msra.mxu0 0
  %310 = vmatprep.mubr.bf16.mxu0 0
  %311 = vmatmul.mubr.bf16.gmra.mrb[0].mxu0 %v276
  %v312 = vpop.f32.mrb[0].mxu0
  %v313 = vadd.f32 %v75, %v312
  %v314 = vpop.f32.mrb[0].mxu0
  %v315 = vpop.f32.mrb[0].mxu0
  %v316 = vpop.f32.mrb[0].mxu0
  %317 = vdwg.mxu0
  %v318 = vmax.f32 %v313, 0.0
  %s319 = scalar_lea.vmem %s1, 4
  %v320 = vld [vmem:[%s319] sm:$0x3]
  %322 = vset.pattern.permute.xlu0 0
  %323 = vperm.xlu0 %322, %v320
  %v324 = vpop.permute.xlu0 %323
  %v326 = vmul.f32 %v318, %v324
  %s327 = scalar_lea.vmem %s8, 2
  %v328 = vld [vmem:[%s327] sm:$0x1]
  %v330 = vlaneseq
  %v331 = vshrl.u32 %v330, 7
  %v332 = vsub.s32 0, %v331
  %v333 = vrot.slane %v328, %v332
  %v335 = vmul.f32 %v326, %v333
  %v336 = vadd.f32 %v261, %v335
  %s337 = scalar_lea.vmem %s0, 3
  %v338 = vld [vmem:[%s337] sm:$0x1]
  %v339 = vunpack.c.l.bf16 %v338
  %s340 = scalar_lea.vmem %s2, 3
  %v341 = vld [vmem:[%s340] sm:$0x1]
  %v343 = vlaneseq
  %v344 = vshrl.u32 %v343, 7
  %v345 = vsub.s32 0, %v344
  %v346 = vrot.slane %v341, %v345
  %v348 = vmul.f32 %v339, %v346
  %v349 = vadd.f32 %v274, %v348
  %v351 = vsel %vm122, %v338, 0
  %353 = vmatprep.subr.bf16.mxu0 0
  %354 = vmatpush1.bf16.msra.mxu0 %v107
  %355 = vmatprep.subr.bf16.mxu0 0
  %356 = vmatpush1.bf16.msra.mxu0 %v108
  %357 = vmatprep.subr.bf16.mxu0 0
  %358 = vmatpush1.bf16.msra.mxu0 %v109
  %359 = vmatprep.subr.bf16.mxu0 0
  %360 = vmatpush1.bf16.msra.mxu0 %v110
  %361 = vmatprep.subr.bf16.mxu0 0
  %362 = vmatpush1.bf16.msra.mxu0 %v111
  %363 = vmatprep.subr.bf16.mxu0 0
  %364 = vmatpush1.bf16.msra.mxu0 %v112
  %365 = vmatprep.subr.bf16.mxu0 0
  %366 = vmatpush1.bf16.msra.mxu0 %v113
  %367 = vmatprep.subr.bf16.mxu0 0
  %368 = vmatpush1.bf16.msra.mxu0 %v128
  %369 = vmatprep.subr.bf16.mxu0 0
  %370 = vmatpush1.bf16.msra.mxu0 0
  %371 = vmatprep.subr.bf16.mxu0 0
  %372 = vmatpush1.bf16.msra.mxu0 0
  %373 = vmatprep.subr.bf16.mxu0 0
  %374 = vmatpush1.bf16.msra.mxu0 0
  %375 = vmatprep.subr.bf16.mxu0 0
  %376 = vmatpush1.bf16.msra.mxu0 0
  %377 = vmatprep.subr.bf16.mxu0 0
  %378 = vmatpush1.bf16.msra.mxu0 0
  %379 = vmatprep.subr.bf16.mxu0 0
  %380 = vmatpush1.bf16.msra.mxu0 0
  %381 = vmatprep.subr.bf16.mxu0 0
  %382 = vmatpush1.bf16.msra.mxu0 0
  %383 = vmatprep.subr.bf16.mxu0 0
  %384 = vmatpush1.bf16.msra.mxu0 0
  %385 = vmatprep.mubr.bf16.mxu0 0
  %386 = vmatmul.mubr.bf16.gmra.mrb[0].mxu0 %v351
  %v387 = vpop.f32.mrb[0].mxu0
  %v388 = vadd.f32 %v75, %v387
  %v389 = vpop.f32.mrb[0].mxu0
  %v390 = vpop.f32.mrb[0].mxu0
  %v391 = vpop.f32.mrb[0].mxu0
  %392 = vdwg.mxu0
  %v393 = vmax.f32 %v388, 0.0
  %s394 = scalar_lea.vmem %s1, 6
  %v395 = vld [vmem:[%s394] sm:$0x3]
  %397 = vset.pattern.permute.xlu0 0
  %398 = vperm.xlu0 %397, %v395
  %v399 = vpop.permute.xlu0 %398
  %v401 = vmul.f32 %v393, %v399
  %s402 = scalar_lea.vmem %s8, 3
  %v403 = vld [vmem:[%s402] sm:$0x1]
  %v405 = vlaneseq
  %v406 = vshrl.u32 %v405, 7
  %v407 = vsub.s32 0, %v406
  %v408 = vrot.slane %v403, %v407
  %v410 = vmul.f32 %v401, %v408
  %v411 = vadd.f32 %v336, %v410
  %s412 = scalar_lea.vmem %s0, 4
  %v413 = vld [vmem:[%s412] sm:$0x1]
  %v414 = vunpack.c.l.bf16 %v413
  %s415 = scalar_lea.vmem %s2, 4
  %v416 = vld [vmem:[%s415] sm:$0x1]
  %v418 = vlaneseq
  %v419 = vshrl.u32 %v418, 7
  %v420 = vsub.s32 0, %v419
  %v421 = vrot.slane %v416, %v420
  %v423 = vmul.f32 %v414, %v421
  %v424 = vadd.f32 %v349, %v423
  %v426 = vsel %vm122, %v413, 0
  %428 = vmatprep.subr.bf16.mxu0 0
  %429 = vmatpush1.bf16.msra.mxu0 %v107
  %430 = vmatprep.subr.bf16.mxu0 0
  %431 = vmatpush1.bf16.msra.mxu0 %v108
  %432 = vmatprep.subr.bf16.mxu0 0
  %433 = vmatpush1.bf16.msra.mxu0 %v109
  %434 = vmatprep.subr.bf16.mxu0 0
  %435 = vmatpush1.bf16.msra.mxu0 %v110
  %436 = vmatprep.subr.bf16.mxu0 0
  %437 = vmatpush1.bf16.msra.mxu0 %v111
  %438 = vmatprep.subr.bf16.mxu0 0
  %439 = vmatpush1.bf16.msra.mxu0 %v112
  %440 = vmatprep.subr.bf16.mxu0 0
  %441 = vmatpush1.bf16.msra.mxu0 %v113
  %442 = vmatprep.subr.bf16.mxu0 0
  %443 = vmatpush1.bf16.msra.mxu0 %v128
  %444 = vmatprep.subr.bf16.mxu0 0
  %445 = vmatpush1.bf16.msra.mxu0 0
  %446 = vmatprep.subr.bf16.mxu0 0
  %447 = vmatpush1.bf16.msra.mxu0 0
  %448 = vmatprep.subr.bf16.mxu0 0
  %449 = vmatpush1.bf16.msra.mxu0 0
  %450 = vmatprep.subr.bf16.mxu0 0
  %451 = vmatpush1.bf16.msra.mxu0 0
  %452 = vmatprep.subr.bf16.mxu0 0
  %453 = vmatpush1.bf16.msra.mxu0 0
  %454 = vmatprep.subr.bf16.mxu0 0
  %455 = vmatpush1.bf16.msra.mxu0 0
  %456 = vmatprep.subr.bf16.mxu0 0
  %457 = vmatpush1.bf16.msra.mxu0 0
  %458 = vmatprep.subr.bf16.mxu0 0
  %459 = vmatpush1.bf16.msra.mxu0 0
  %460 = vmatprep.mubr.bf16.mxu0 0
  %461 = vmatmul.mubr.bf16.gmra.mrb[0].mxu0 %v426
  %v462 = vpop.f32.mrb[0].mxu0
  %v463 = vadd.f32 %v75, %v462
  %v464 = vpop.f32.mrb[0].mxu0
  %v465 = vpop.f32.mrb[0].mxu0
  %v466 = vpop.f32.mrb[0].mxu0
  %467 = vdwg.mxu0
  %v468 = vmax.f32 %v463, 0.0
  %s469 = scalar_lea.vmem %s1, 8
  %v470 = vld [vmem:[%s469] sm:$0x3]
  %472 = vset.pattern.permute.xlu0 0
  %473 = vperm.xlu0 %472, %v470
  %v474 = vpop.permute.xlu0 %473
  %v476 = vmul.f32 %v468, %v474
  %s477 = scalar_lea.vmem %s8, 4
  %v478 = vld [vmem:[%s477] sm:$0x1]
  %v480 = vlaneseq
  %v481 = vshrl.u32 %v480, 7
  %v482 = vsub.s32 0, %v481
  %v483 = vrot.slane %v478, %v482
  %v485 = vmul.f32 %v476, %v483
  %v486 = vadd.f32 %v411, %v485
  %s487 = scalar_lea.vmem %s0, 5
  %v488 = vld [vmem:[%s487] sm:$0x1]
  %v489 = vunpack.c.l.bf16 %v488
  %s490 = scalar_lea.vmem %s2, 5
  %v491 = vld [vmem:[%s490] sm:$0x1]
  %v493 = vlaneseq
  %v494 = vshrl.u32 %v493, 7
  %v495 = vsub.s32 0, %v494
  %v496 = vrot.slane %v491, %v495
  %v498 = vmul.f32 %v489, %v496
  %v499 = vadd.f32 %v424, %v498
  %v501 = vsel %vm122, %v488, 0
  %503 = vmatprep.subr.bf16.mxu0 0
  %504 = vmatpush1.bf16.msra.mxu0 %v107
  %505 = vmatprep.subr.bf16.mxu0 0
  %506 = vmatpush1.bf16.msra.mxu0 %v108
  %507 = vmatprep.subr.bf16.mxu0 0
  %508 = vmatpush1.bf16.msra.mxu0 %v109
  %509 = vmatprep.subr.bf16.mxu0 0
  %510 = vmatpush1.bf16.msra.mxu0 %v110
  %511 = vmatprep.subr.bf16.mxu0 0
  %512 = vmatpush1.bf16.msra.mxu0 %v111
  %513 = vmatprep.subr.bf16.mxu0 0
  %514 = vmatpush1.bf16.msra.mxu0 %v112
  %515 = vmatprep.subr.bf16.mxu0 0
  %516 = vmatpush1.bf16.msra.mxu0 %v113
  %517 = vmatprep.subr.bf16.mxu0 0
  %518 = vmatpush1.bf16.msra.mxu0 %v128
  %519 = vmatprep.subr.bf16.mxu0 0
  %520 = vmatpush1.bf16.msra.mxu0 0
  %521 = vmatprep.subr.bf16.mxu0 0
  %522 = vmatpush1.bf16.msra.mxu0 0
  %523 = vmatprep.subr.bf16.mxu0 0
  %524 = vmatpush1.bf16.msra.mxu0 0
  %525 = vmatprep.subr.bf16.mxu0 0
  %526 = vmatpush1.bf16.msra.mxu0 0
  %527 = vmatprep.subr.bf16.mxu0 0
  %528 = vmatpush1.bf16.msra.mxu0 0
  %529 = vmatprep.subr.bf16.mxu0 0
  %530 = vmatpush1.bf16.msra.mxu0 0
  %531 = vmatprep.subr.bf16.mxu0 0
  %532 = vmatpush1.bf16.msra.mxu0 0
  %533 = vmatprep.subr.bf16.mxu0 0
  %534 = vmatpush1.bf16.msra.mxu0 0
  %535 = vmatprep.mubr.bf16.mxu0 0
  %536 = vmatmul.mubr.bf16.gmra.mrb[0].mxu0 %v501
  %v537 = vpop.f32.mrb[0].mxu0
  %v538 = vadd.f32 %v75, %v537
  %v539 = vpop.f32.mrb[0].mxu0
  %v540 = vpop.f32.mrb[0].mxu0
  %v541 = vpop.f32.mrb[0].mxu0
  %542 = vdwg.mxu0
  %v543 = vmax.f32 %v538, 0.0
  %s544 = scalar_lea.vmem %s1, 10
  %v545 = vld [vmem:[%s544] sm:$0x3]
  %547 = vset.pattern.permute.xlu0 0
  %548 = vperm.xlu0 %547, %v545
  %v549 = vpop.permute.xlu0 %548
  %v551 = vmul.f32 %v543, %v549
  %s552 = scalar_lea.vmem %s8, 5
  %v553 = vld [vmem:[%s552] sm:$0x1]
  %v555 = vlaneseq
  %v556 = vshrl.u32 %v555, 7
  %v557 = vsub.s32 0, %v556
  %v558 = vrot.slane %v553, %v557
  %v560 = vmul.f32 %v551, %v558
  %v561 = vadd.f32 %v486, %v560
  %s562 = scalar_lea.vmem %s0, 6
  %v563 = vld [vmem:[%s562] sm:$0x1]
  %v564 = vunpack.c.l.bf16 %v563
  %s565 = scalar_lea.vmem %s2, 6
  %v566 = vld [vmem:[%s565] sm:$0x1]
  %v568 = vlaneseq
  %v569 = vshrl.u32 %v568, 7
  %v570 = vsub.s32 0, %v569
  %v571 = vrot.slane %v566, %v570
  %v573 = vmul.f32 %v564, %v571
  %v574 = vadd.f32 %v499, %v573
  %v576 = vsel %vm122, %v563, 0
  %578 = vmatprep.subr.bf16.mxu0 0
  %579 = vmatpush1.bf16.msra.mxu0 %v107
  %580 = vmatprep.subr.bf16.mxu0 0
  %581 = vmatpush1.bf16.msra.mxu0 %v108
  %582 = vmatprep.subr.bf16.mxu0 0
  %583 = vmatpush1.bf16.msra.mxu0 %v109
  %584 = vmatprep.subr.bf16.mxu0 0
  %585 = vmatpush1.bf16.msra.mxu0 %v110
  %586 = vmatprep.subr.bf16.mxu0 0
  %587 = vmatpush1.bf16.msra.mxu0 %v111
  %588 = vmatprep.subr.bf16.mxu0 0
  %589 = vmatpush1.bf16.msra.mxu0 %v112
  %590 = vmatprep.subr.bf16.mxu0 0
  %591 = vmatpush1.bf16.msra.mxu0 %v113
  %592 = vmatprep.subr.bf16.mxu0 0
  %593 = vmatpush1.bf16.msra.mxu0 %v128
  %594 = vmatprep.subr.bf16.mxu0 0
  %595 = vmatpush1.bf16.msra.mxu0 0
  %596 = vmatprep.subr.bf16.mxu0 0
  %597 = vmatpush1.bf16.msra.mxu0 0
  %598 = vmatprep.subr.bf16.mxu0 0
  %599 = vmatpush1.bf16.msra.mxu0 0
  %600 = vmatprep.subr.bf16.mxu0 0
  %601 = vmatpush1.bf16.msra.mxu0 0
  %602 = vmatprep.subr.bf16.mxu0 0
  %603 = vmatpush1.bf16.msra.mxu0 0
  %604 = vmatprep.subr.bf16.mxu0 0
  %605 = vmatpush1.bf16.msra.mxu0 0
  %606 = vmatprep.subr.bf16.mxu0 0
  %607 = vmatpush1.bf16.msra.mxu0 0
  %608 = vmatprep.subr.bf16.mxu0 0
  %609 = vmatpush1.bf16.msra.mxu0 0
  %610 = vmatprep.mubr.bf16.mxu0 0
  %611 = vmatmul.mubr.bf16.gmra.mrb[0].mxu0 %v576
  %v612 = vpop.f32.mrb[0].mxu0
  %v613 = vadd.f32 %v75, %v612
  %v614 = vpop.f32.mrb[0].mxu0
  %v615 = vpop.f32.mrb[0].mxu0
  %v616 = vpop.f32.mrb[0].mxu0
  %617 = vdwg.mxu0
  %v618 = vmax.f32 %v613, 0.0
  %s619 = scalar_lea.vmem %s1, 12
  %v620 = vld [vmem:[%s619] sm:$0x3]
  %622 = vset.pattern.permute.xlu0 0
  %623 = vperm.xlu0 %622, %v620
  %v624 = vpop.permute.xlu0 %623
  %v626 = vmul.f32 %v618, %v624
  %s627 = scalar_lea.vmem %s8, 6
  %v628 = vld [vmem:[%s627] sm:$0x1]
  %v630 = vlaneseq
  %v631 = vshrl.u32 %v630, 7
  %v632 = vsub.s32 0, %v631
  %v633 = vrot.slane %v628, %v632
  %v635 = vmul.f32 %v626, %v633
  %v636 = vadd.f32 %v561, %v635
  %s637 = scalar_lea.vmem %s0, 7
  %v638 = vld [vmem:[%s637] sm:$0x1]
  %v639 = vunpack.c.l.bf16 %v638
  %s640 = scalar_lea.vmem %s2, 7
  %v641 = vld [vmem:[%s640] sm:$0x1]
  %v643 = vlaneseq
  %v644 = vshrl.u32 %v643, 7
  %v645 = vsub.s32 0, %v644
  %v646 = vrot.slane %v641, %v645
  %v648 = vmul.f32 %v639, %v646
  %v649 = vadd.f32 %v574, %v648
  %v651 = vsel %vm122, %v638, 0
  %653 = vmatprep.subr.bf16.mxu0 0
  %654 = vmatpush1.bf16.msra.mxu0 %v107
  %655 = vmatprep.subr.bf16.mxu0 0
  %656 = vmatpush1.bf16.msra.mxu0 %v108
  %657 = vmatprep.subr.bf16.mxu0 0
  %658 = vmatpush1.bf16.msra.mxu0 %v109
  %659 = vmatprep.subr.bf16.mxu0 0
  %660 = vmatpush1.bf16.msra.mxu0 %v110
  %661 = vmatprep.subr.bf16.mxu0 0
  %662 = vmatpush1.bf16.msra.mxu0 %v111
  %663 = vmatprep.subr.bf16.mxu0 0
  %664 = vmatpush1.bf16.msra.mxu0 %v112
  %665 = vmatprep.subr.bf16.mxu0 0
  %666 = vmatpush1.bf16.msra.mxu0 %v113
  %667 = vmatprep.subr.bf16.mxu0 0
  %668 = vmatpush1.bf16.msra.mxu0 %v128
  %669 = vmatprep.subr.bf16.mxu0 0
  %670 = vmatpush1.bf16.msra.mxu0 0
  %671 = vmatprep.subr.bf16.mxu0 0
  %672 = vmatpush1.bf16.msra.mxu0 0
  %673 = vmatprep.subr.bf16.mxu0 0
  %674 = vmatpush1.bf16.msra.mxu0 0
  %675 = vmatprep.subr.bf16.mxu0 0
  %676 = vmatpush1.bf16.msra.mxu0 0
  %677 = vmatprep.subr.bf16.mxu0 0
  %678 = vmatpush1.bf16.msra.mxu0 0
  %679 = vmatprep.subr.bf16.mxu0 0
  %680 = vmatpush1.bf16.msra.mxu0 0
  %681 = vmatprep.subr.bf16.mxu0 0
  %682 = vmatpush1.bf16.msra.mxu0 0
  %683 = vmatprep.subr.bf16.mxu0 0
  %684 = vmatpush1.bf16.msra.mxu0 0
  %685 = vmatprep.mubr.bf16.mxu0 0
  %686 = vmatmul.mubr.bf16.gmra.mrb[0].mxu0 %v651
  %v687 = vpop.f32.mrb[0].mxu0
  %v688 = vadd.f32 %v75, %v687
  %v689 = vpop.f32.mrb[0].mxu0
  %v690 = vpop.f32.mrb[0].mxu0
  %v691 = vpop.f32.mrb[0].mxu0
  %692 = vdwg.mxu0
  %v693 = vmax.f32 %v688, 0.0
  %s694 = scalar_lea.vmem %s1, 14
  %v695 = vld [vmem:[%s694] sm:$0x3]
  %697 = vset.pattern.permute.xlu0 0
  %698 = vperm.xlu0 %697, %v695
  %v699 = vpop.permute.xlu0 %698
  %v701 = vmul.f32 %v693, %v699
  %s702 = scalar_lea.vmem %s8, 7
  %v703 = vld [vmem:[%s702] sm:$0x1]
  %v705 = vlaneseq
  %v706 = vshrl.u32 %v705, 7
  %v707 = vsub.s32 0, %v706
  %v708 = vrot.slane %v703, %v707
  %v710 = vmul.f32 %v701, %v708
  %v711 = vadd.f32 %v636, %v710
  %s712 = scalar_lea.vmem %s0, 8
  %v713 = vld [vmem:[%s712] sm:$0x1]
  %v714 = vunpack.c.l.bf16 %v713
  %s715 = scalar_lea.vmem %s2, 8
  %v716 = vld [vmem:[%s715] sm:$0x1]
  %v718 = vlaneseq
  %v719 = vshrl.u32 %v718, 7
  %v720 = vsub.s32 0, %v719
  %v721 = vrot.slane %v716, %v720
  %v723 = vmul.f32 %v714, %v721
  %v724 = vadd.f32 %v649, %v723
  %v726 = vsel %vm122, %v713, 0
  %728 = vmatprep.subr.bf16.mxu0 0
  %729 = vmatpush1.bf16.msra.mxu0 %v107
  %730 = vmatprep.subr.bf16.mxu0 0
  %731 = vmatpush1.bf16.msra.mxu0 %v108
  %732 = vmatprep.subr.bf16.mxu0 0
  %733 = vmatpush1.bf16.msra.mxu0 %v109
  %734 = vmatprep.subr.bf16.mxu0 0
  %735 = vmatpush1.bf16.msra.mxu0 %v110
  %736 = vmatprep.subr.bf16.mxu0 0
  %737 = vmatpush1.bf16.msra.mxu0 %v111
  %738 = vmatprep.subr.bf16.mxu0 0
  %739 = vmatpush1.bf16.msra.mxu0 %v112
  %740 = vmatprep.subr.bf16.mxu0 0
  %741 = vmatpush1.bf16.msra.mxu0 %v113
  %742 = vmatprep.subr.bf16.mxu0 0
  %743 = vmatpush1.bf16.msra.mxu0 %v128
  %744 = vmatprep.subr.bf16.mxu0 0
  %745 = vmatpush1.bf16.msra.mxu0 0
  %746 = vmatprep.subr.bf16.mxu0 0
  %747 = vmatpush1.bf16.msra.mxu0 0
  %748 = vmatprep.subr.bf16.mxu0 0
  %749 = vmatpush1.bf16.msra.mxu0 0
  %750 = vmatprep.subr.bf16.mxu0 0
  %751 = vmatpush1.bf16.msra.mxu0 0
  %752 = vmatprep.subr.bf16.mxu0 0
  %753 = vmatpush1.bf16.msra.mxu0 0
  %754 = vmatprep.subr.bf16.mxu0 0
  %755 = vmatpush1.bf16.msra.mxu0 0
  %756 = vmatprep.subr.bf16.mxu0 0
  %757 = vmatpush1.bf16.msra.mxu0 0
  %758 = vmatprep.subr.bf16.mxu0 0
  %759 = vmatpush1.bf16.msra.mxu0 0
  %760 = vmatprep.mubr.bf16.mxu0 0
  %761 = vmatmul.mubr.bf16.gmra.mrb[0].mxu0 %v726
  %v762 = vpop.f32.mrb[0].mxu0
  %v763 = vadd.f32 %v75, %v762
  %v764 = vpop.f32.mrb[0].mxu0
  %v765 = vpop.f32.mrb[0].mxu0
  %v766 = vpop.f32.mrb[0].mxu0
  %767 = vdwg.mxu0
  %v768 = vmax.f32 %v763, 0.0
  %s769 = scalar_lea.vmem %s1, 16
  %v770 = vld [vmem:[%s769] sm:$0x3]
  %772 = vset.pattern.permute.xlu0 0
  %773 = vperm.xlu0 %772, %v770
  %v774 = vpop.permute.xlu0 %773
  %v776 = vmul.f32 %v768, %v774
  %s777 = scalar_lea.vmem %s8, 8
  %v778 = vld [vmem:[%s777] sm:$0x1]
  %v780 = vlaneseq
  %v781 = vshrl.u32 %v780, 7
  %v782 = vsub.s32 0, %v781
  %v783 = vrot.slane %v778, %v782
  %v785 = vmul.f32 %v776, %v783
  %v786 = vadd.f32 %v711, %v785
  %v787 = vld [vmem:[%s3] sm:$0x1]
  %v789 = vlaneseq
  %v790 = vshrl.u32 %v789, 7
  %v791 = vsub.s32 0, %v790
  %v792 = vrot.slane %v787, %v791
  %v794 = vadd.f32 %v724, %v792
  %v795 = vpack.c.bf16 %v794, %v794
  %v796 = vld [vmem:[%s4] sm:$0xf]
  %v797 = vld [vmem:[%s4 + $0x4] sm:$0xf]
  %v798 = vld [vmem:[%s4 + $0x8] sm:$0xf]
  %v799 = vld [vmem:[%s4 + $0xc] sm:$0xf]
  %v800 = vld [vmem:[%s4 + $0x10] sm:$0xf]
  %v801 = vld [vmem:[%s4 + $0x14] sm:$0xf]
  %v802 = vld [vmem:[%s4 + $0x18] sm:$0xf]
  %v803 = vld [vmem:[%s4 + $0x1c] sm:$0xf]
  %v804 = vld [vmem:[%s4 + $0x20] sm:$0xf]
  %v805 = vld [vmem:[%s4 + $0x24] sm:$0xf]
  %v806 = vld [vmem:[%s4 + $0x28] sm:$0xf]
  %v807 = vld [vmem:[%s4 + $0x2c] sm:$0xf]
  %v808 = vld [vmem:[%s4 + $0x30] sm:$0xf]
  %v809 = vld [vmem:[%s4 + $0x34] sm:$0xf]
  %v810 = vld [vmem:[%s4 + $0x38] sm:$0x3]
  %v811 = vld [vmem:[%s5] sm:$0x1]
  %v813 = vlaneseq
  %v814 = vshrl.u32 %v813, 7
  %v815 = vsub.s32 0, %v814
  %v816 = vrot.slane %v811, %v815
  %v833 = vunpack.c.l.b16 %v796
  %v834 = vunpack.c.l.b16 %v797
  %v835 = vunpack.c.l.b16 %v798
  %v836 = vunpack.c.l.b16 %v799
  %v837 = vunpack.c.l.b16 %v800
  %v838 = vunpack.c.l.b16 %v801
  %v839 = vunpack.c.l.b16 %v802
  %v840 = vunpack.c.l.b16 %v803
  %v841 = vunpack.c.l.b16 %v804
  %v842 = vunpack.c.l.b16 %v805
  %v843 = vunpack.c.l.b16 %v806
  %v844 = vunpack.c.l.b16 %v807
  %v845 = vunpack.c.l.b16 %v808
  %v846 = vunpack.c.l.b16 %v809
  %v847 = vunpack.c.l.b16 %v810
  %v848 = vpack.c.b16 %v834, %v833
  %v849 = vpack.c.b16 %v836, %v835
  %v850 = vpack.c.b16 %v838, %v837
  %v851 = vpack.c.b16 %v840, %v839
  %v852 = vpack.c.b16 %v842, %v841
  %v853 = vpack.c.b16 %v844, %v843
  %v854 = vpack.c.b16 %v846, %v845
  %v855 = vpack.c.b16 %v847, %v847
  %v864 = vsel %vm122, %v795, 0
  %v867 = vsel %vm126, %v855, 0
  %869 = vmatprep.subr.bf16.mxu0 0
  %870 = vmatpush1.bf16.msra.mxu0 %v848
  %871 = vmatprep.subr.bf16.mxu0 0
  %872 = vmatpush1.bf16.msra.mxu0 %v849
  %873 = vmatprep.subr.bf16.mxu0 0
  %874 = vmatpush1.bf16.msra.mxu0 %v850
  %875 = vmatprep.subr.bf16.mxu0 0
  %876 = vmatpush1.bf16.msra.mxu0 %v851
  %877 = vmatprep.subr.bf16.mxu0 0
  %878 = vmatpush1.bf16.msra.mxu0 %v852
  %879 = vmatprep.subr.bf16.mxu0 0
  %880 = vmatpush1.bf16.msra.mxu0 %v853
  %881 = vmatprep.subr.bf16.mxu0 0
  %882 = vmatpush1.bf16.msra.mxu0 %v854
  %883 = vmatprep.subr.bf16.mxu0 0
  %884 = vmatpush1.bf16.msra.mxu0 %v867
  %885 = vmatprep.subr.bf16.mxu0 0
  %886 = vmatpush1.bf16.msra.mxu0 0
  %887 = vmatprep.subr.bf16.mxu0 0
  %888 = vmatpush1.bf16.msra.mxu0 0
  %889 = vmatprep.subr.bf16.mxu0 0
  %890 = vmatpush1.bf16.msra.mxu0 0
  %891 = vmatprep.subr.bf16.mxu0 0
  %892 = vmatpush1.bf16.msra.mxu0 0
  %893 = vmatprep.subr.bf16.mxu0 0
  %894 = vmatpush1.bf16.msra.mxu0 0
  %895 = vmatprep.subr.bf16.mxu0 0
  %896 = vmatpush1.bf16.msra.mxu0 0
  %897 = vmatprep.subr.bf16.mxu0 0
  %898 = vmatpush1.bf16.msra.mxu0 0
  %899 = vmatprep.subr.bf16.mxu0 0
  %900 = vmatpush1.bf16.msra.mxu0 0
  %901 = vmatprep.mubr.bf16.mxu0 0
  %902 = vmatmul.mubr.bf16.gmra.mrb[0].mxu0 %v864
  %v903 = vpop.f32.mrb[0].mxu0
  %v904 = vadd.f32 %v816, %v903
  %v905 = vpop.f32.mrb[0].mxu0
  %v906 = vpop.f32.mrb[0].mxu0
  %v907 = vpop.f32.mrb[0].mxu0
  %908 = vdwg.mxu0
  %v909 = vmax.f32 %v904, 0.0
  %v910 = vld [vmem:[%s9] sm:$0x1]
  %v912 = vlaneseq
  %v913 = vshrl.u32 %v912, 7
  %v914 = vsub.s32 0, %v913
  %v915 = vrot.slane %v910, %v914
  %v917 = vadd.f32 %v786, %v915
  %v918 = vpack.c.bf16 %v917, %v917
  %v919 = vld [vmem:[%s10] sm:$0xf]
  %v920 = vld [vmem:[%s10 + $0x4] sm:$0xf]
  %v921 = vld [vmem:[%s10 + $0x8] sm:$0xf]
  %v922 = vld [vmem:[%s10 + $0xc] sm:$0xf]
  %v923 = vld [vmem:[%s10 + $0x10] sm:$0xf]
  %v924 = vld [vmem:[%s10 + $0x14] sm:$0xf]
  %v925 = vld [vmem:[%s10 + $0x18] sm:$0xf]
  %v926 = vld [vmem:[%s10 + $0x1c] sm:$0xf]
  %v927 = vld [vmem:[%s10 + $0x20] sm:$0xf]
  %v928 = vld [vmem:[%s10 + $0x24] sm:$0xf]
  %v929 = vld [vmem:[%s10 + $0x28] sm:$0xf]
  %v930 = vld [vmem:[%s10 + $0x2c] sm:$0xf]
  %v931 = vld [vmem:[%s10 + $0x30] sm:$0xf]
  %v932 = vld [vmem:[%s10 + $0x34] sm:$0xf]
  %v933 = vld [vmem:[%s10 + $0x38] sm:$0x3]
  %v934 = vld [vmem:[%s11] sm:$0x1]
  %v936 = vlaneseq
  %v937 = vshrl.u32 %v936, 7
  %v938 = vsub.s32 0, %v937
  %v939 = vrot.slane %v934, %v938
  %v956 = vunpack.c.l.b16 %v919
  %v957 = vunpack.c.l.b16 %v920
  %v958 = vunpack.c.l.b16 %v921
  %v959 = vunpack.c.l.b16 %v922
  %v960 = vunpack.c.l.b16 %v923
  %v961 = vunpack.c.l.b16 %v924
  %v962 = vunpack.c.l.b16 %v925
  %v963 = vunpack.c.l.b16 %v926
  %v964 = vunpack.c.l.b16 %v927
  %v965 = vunpack.c.l.b16 %v928
  %v966 = vunpack.c.l.b16 %v929
  %v967 = vunpack.c.l.b16 %v930
  %v968 = vunpack.c.l.b16 %v931
  %v969 = vunpack.c.l.b16 %v932
  %v970 = vunpack.c.l.b16 %v933
  %v971 = vpack.c.b16 %v957, %v956
  %v972 = vpack.c.b16 %v959, %v958
  %v973 = vpack.c.b16 %v961, %v960
  %v974 = vpack.c.b16 %v963, %v962
  %v975 = vpack.c.b16 %v965, %v964
  %v976 = vpack.c.b16 %v967, %v966
  %v977 = vpack.c.b16 %v969, %v968
  %v978 = vpack.c.b16 %v970, %v970
  %v987 = vsel %vm122, %v918, 0
  %v990 = vsel %vm126, %v978, 0
  %992 = vmatprep.subr.bf16.mxu0 0
  %993 = vmatpush1.bf16.msra.mxu0 %v971
  %994 = vmatprep.subr.bf16.mxu0 0
  %995 = vmatpush1.bf16.msra.mxu0 %v972
  %996 = vmatprep.subr.bf16.mxu0 0
  %997 = vmatpush1.bf16.msra.mxu0 %v973
  %998 = vmatprep.subr.bf16.mxu0 0
  %999 = vmatpush1.bf16.msra.mxu0 %v974
  %1000 = vmatprep.subr.bf16.mxu0 0
  %1001 = vmatpush1.bf16.msra.mxu0 %v975
  %1002 = vmatprep.subr.bf16.mxu0 0
  %1003 = vmatpush1.bf16.msra.mxu0 %v976
  %1004 = vmatprep.subr.bf16.mxu0 0
  %1005 = vmatpush1.bf16.msra.mxu0 %v977
  %1006 = vmatprep.subr.bf16.mxu0 0
  %1007 = vmatpush1.bf16.msra.mxu0 %v990
  %1008 = vmatprep.subr.bf16.mxu0 0
  %1009 = vmatpush1.bf16.msra.mxu0 0
  %1010 = vmatprep.subr.bf16.mxu0 0
  %1011 = vmatpush1.bf16.msra.mxu0 0
  %1012 = vmatprep.subr.bf16.mxu0 0
  %1013 = vmatpush1.bf16.msra.mxu0 0
  %1014 = vmatprep.subr.bf16.mxu0 0
  %1015 = vmatpush1.bf16.msra.mxu0 0
  %1016 = vmatprep.subr.bf16.mxu0 0
  %1017 = vmatpush1.bf16.msra.mxu0 0
  %1018 = vmatprep.subr.bf16.mxu0 0
  %1019 = vmatpush1.bf16.msra.mxu0 0
  %1020 = vmatprep.subr.bf16.mxu0 0
  %1021 = vmatpush1.bf16.msra.mxu0 0
  %1022 = vmatprep.subr.bf16.mxu0 0
  %1023 = vmatpush1.bf16.msra.mxu0 0
  %1024 = vmatprep.mubr.bf16.mxu0 0
  %1025 = vmatmul.mubr.bf16.gmra.mrb[0].mxu0 %v987
  %v1026 = vpop.f32.mrb[0].mxu0
  %v1027 = vadd.f32 %v939, %v1026
  %v1028 = vpop.f32.mrb[0].mxu0
  %v1029 = vpop.f32.mrb[0].mxu0
  %v1030 = vpop.f32.mrb[0].mxu0
  %1031 = vdwg.mxu0
  %v1032 = vmax.f32 %v1027, 0.0
  %v1033 = vpack.c.bf16 %v909, %v909
  %vm1034 = vcmask 942080
  %1035 = vst.msk [vmem:[%s12] sm:$0x1] %vm1034, %v1033
  %v1036 = vpack.c.bf16 %v1032, %v1032
  %1037 = vst.msk [vmem:[%s13] sm:$0x1] %vm1034, %v1036
  // Predicated region
  $region50: #{shufflenet_v2_forward.33} parent=0 // pred_check
    _
  $region51: #{shufflenet_v2_forward.33} parent=0 // pred_check_branch
    %1039 = sbr.rel (0) target = $region53
  $region52: #{shufflenet_v2_forward.33} parent=0 // pred_region
    _
  $region53: #{shufflenet_v2_forward.33} parent=0 // pred_fallthru
    _
  // Predicated region
  $region54: #{shufflenet_v2_forward.33} parent=0 // pred_check
    _
  $region55: #{shufflenet_v2_forward.33} parent=0 // pred_check_branch
    %1041 = sbr.rel (0) target = $region57
  $region56: #{shufflenet_v2_forward.33} parent=0 // pred_region
    _
  $region57: #{shufflenet_v2_forward.33} parent=0 // pred_fallthru
    _
  // Predicated region
  $region58: #{shufflenet_v2_forward.33} parent=0 // pred_check
    _
  $region59: #{shufflenet_v2_forward.33} parent=0 // pred_check_branch
    %1043 = sbr.rel (0) target = $region61
  $region60: #{shufflenet_v2_forward.33} parent=0 // pred_region
    _
  $region61: #{shufflenet_v2_forward.33} parent=0 // pred_fallthru
    _
  // Predicated region
  $region62: #{shufflenet_v2_forward.33} parent=0 // pred_check
    _
  $region63: #{shufflenet_v2_forward.33} parent=0 // pred_check_branch
    %1045 = sbr.rel (0) target = $region65
  $region64: #{shufflenet_v2_forward.33} parent=0 // pred_region
    _
  $region65: #{shufflenet_v2_forward.33} parent=0 // pred_fallthru
    _

// kernel: shufflenet_v2_forward.37
$region0: #{shufflenet_v2_forward.37}
  #allocation0 [shape = 'u32[]', space=smem, size = 0x4, offset = 0x4, fixed_abs, tag = 'smem constant byte address 0x4 - core index']
  #allocation1 [shape = 'u32[144,128]{1,0:T(1,128)}', space=vmem, size = 0x12000, scoped, tag = 'internal scratch']
  %s0 = inlined_call_operand.vmem [shape: bf16[2,232], index: 0, kind: input, shape index: {}]
  %s1 = inlined_call_operand.vmem [shape: bf16[232,512], index: 1, kind: input, shape index: {}]
  %s2 = inlined_call_operand.vmem [shape: f32[1,512], index: 2, kind: input, shape index: {}]
  %s3 = inlined_call_operand.vmem [shape: bf16[512,10], index: 3, kind: input, shape index: {}]
  %s4 = inlined_call_operand.vmem [shape: f32[1,10], index: 4, kind: input, shape index: {}]
  %s5 = inlined_call_operand.hbm [shape: f32[2,10], index: 5, kind: output, shape index: {}]
  %s6 = sld [smem:[#allocation0]]
  $region30: #{shufflenet_v2_forward.37} parent=0
    _
  %s8 = ssub.s32 1, %s6
  %s9 = scalar_select 0, %s8, %s6
  $region1: #{shufflenet_v2_forward.37} parent=0
    #allocation2 [shape = 'u8[1024]{0}', space=vmem, size = 0x400, scoped, tag = 'output window, operand 0, single buffered']
    #allocation3 [shape = 's32[1]{0}', space=sflag, size = 0x4, scoped, tag = 'scoped memory for shufflenet_v2_forward.37']
    %10 = vsyncpa [#allocation3], 0
    // Predicated region
    $region2: #{shufflenet_v2_forward.37} parent=1 // pred_check
      _
    $region3: #{shufflenet_v2_forward.37} parent=1 // pred_check_branch
      %12 = sbr.rel (0) target = $region5
    $region4: #{shufflenet_v2_forward.37} parent=1 // pred_region
      _
    $region5: #{shufflenet_v2_forward.37} parent=1 // pred_fallthru
      _
    // Predicated region
    $region6: #{shufflenet_v2_forward.37} parent=1 // pred_check
      _
    $region7: #{shufflenet_v2_forward.37} parent=1 // pred_check_branch
      %14 = sbr.rel (0) target = $region9
    $region8: #{shufflenet_v2_forward.37} parent=1 // pred_region
      _
    $region9: #{shufflenet_v2_forward.37} parent=1 // pred_fallthru
      _
    // Predicated region
    $region10: #{shufflenet_v2_forward.37} parent=1 // pred_check
      _
    $region11: #{shufflenet_v2_forward.37} parent=1 // pred_check_branch
      %16 = sbr.rel (0) target = $region13
    $region12: #{shufflenet_v2_forward.37} parent=1 // pred_region
      _
    $region13: #{shufflenet_v2_forward.37} parent=1 // pred_fallthru
      _
    // Predicated region
    $region14: #{shufflenet_v2_forward.37} parent=1 // pred_check
      _
    $region15: #{shufflenet_v2_forward.37} parent=1 // pred_check_branch
      %18 = sbr.rel (0) target = $region17
    $region16: #{shufflenet_v2_forward.37} parent=1 // pred_region
      _
    $region17: #{shufflenet_v2_forward.37} parent=1 // pred_fallthru
      _
    // Predicated region
    $region18: #{shufflenet_v2_forward.37} parent=1 // pred_check
      _
    $region19: #{shufflenet_v2_forward.37} parent=1 // pred_check_branch
      %20 = sbr.rel (0) target = $region21
    $region20: #{shufflenet_v2_forward.37} parent=1 // pred_region
      _
    $region21: #{shufflenet_v2_forward.37} parent=1 // pred_fallthru
      _
    %v22 = vld [vmem:[%s0] sm:$0x3]
    %v23 = vld [vmem:[%s1] sm:$0xff]
    %v24 = vld [vmem:[%s1 + $0x8] sm:$0xff]
    %v25 = vld [vmem:[%s1 + $0x10] sm:$0xff]
    %v26 = vld [vmem:[%s1 + $0x18] sm:$0xff]
    %v27 = vld [vmem:[%s1 + $0x20] sm:$0xff]
    %v28 = vld [vmem:[%s1 + $0x28] sm:$0xff]
    %v29 = vld [vmem:[%s1 + $0x30] sm:$0xff]
    %v30 = vld [vmem:[%s1 + $0x38] sm:$0xff]
    %v31 = vld [vmem:[%s1 + $0x40] sm:$0xff]
    %v32 = vld [vmem:[%s1 + $0x48] sm:$0xff]
    %v33 = vld [vmem:[%s1 + $0x50] sm:$0xff]
    %v34 = vld [vmem:[%s1 + $0x58] sm:$0xff]
    %v35 = vld [vmem:[%s1 + $0x60] sm:$0xff]
    %v36 = vld [vmem:[%s1 + $0x68] sm:$0xff]
    %v37 = vld [vmem:[%s1 + $0x70] sm:$0xff]
    %v38 = vld [vmem:[%s1 + $0x78] sm:$0xff]
    %v39 = vld [vmem:[%s1 + $0x80] sm:$0xff]
    %v40 = vld [vmem:[%s1 + $0x88] sm:$0xff]
    %v41 = vld [vmem:[%s1 + $0x90] sm:$0xff]
    %v42 = vld [vmem:[%s1 + $0x98] sm:$0xff]
    %v43 = vld [vmem:[%s1 + $0xa0] sm:$0xff]
    %v44 = vld [vmem:[%s1 + $0xa8] sm:$0xff]
    %v45 = vld [vmem:[%s1 + $0xb0] sm:$0xff]
    %v46 = vld [vmem:[%s1 + $0xb8] sm:$0xff]
    %v47 = vld [vmem:[%s1 + $0xc0] sm:$0xff]
    %v48 = vld [vmem:[%s1 + $0xc8] sm:$0xff]
    %v49 = vld [vmem:[%s1 + $0xd0] sm:$0xff]
    %v50 = vld [vmem:[%s1 + $0xd8] sm:$0xff]
    %v51 = vld [vmem:[%s1 + $0xe0] sm:$0xff]
    %v52 = vld [vmem:[%s1 + $0xe8] sm:$0xff]
    %v53 = vld [vmem:[%s1 + $0xf0] sm:$0xff]
    %v54 = vld [vmem:[%s1 + $0xf8] sm:$0xff]
    %v55 = vld [vmem:[%s1 + $0x100] sm:$0xff]
    %v56 = vld [vmem:[%s1 + $0x108] sm:$0xff]
    %v57 = vld [vmem:[%s1 + $0x110] sm:$0xff]
    %v58 = vld [vmem:[%s1 + $0x118] sm:$0xff]
    %v59 = vld [vmem:[%s1 + $0x120] sm:$0xff]
    %v60 = vld [vmem:[%s1 + $0x128] sm:$0xff]
    %v61 = vld [vmem:[%s1 + $0x130] sm:$0xff]
    %v62 = vld [vmem:[%s1 + $0x138] sm:$0xff]
    %v63 = vld [vmem:[%s1 + $0x140] sm:$0xff]
    %v64 = vld [vmem:[%s1 + $0x148] sm:$0xff]
    %v65 = vld [vmem:[%s1 + $0x150] sm:$0xff]
    %v66 = vld [vmem:[%s1 + $0x158] sm:$0xff]
    %v67 = vld [vmem:[%s1 + $0x160] sm:$0xff]
    %v68 = vld [vmem:[%s1 + $0x168] sm:$0xff]
    %v69 = vld [vmem:[%s1 + $0x170] sm:$0xff]
    %v70 = vld [vmem:[%s1 + $0x178] sm:$0xff]
    %v71 = vld [vmem:[%s1 + $0x180] sm:$0xff]
    %v72 = vld [vmem:[%s1 + $0x188] sm:$0xff]
    %v73 = vld [vmem:[%s1 + $0x190] sm:$0xff]
    %v74 = vld [vmem:[%s1 + $0x198] sm:$0xff]
    %v75 = vld [vmem:[%s1 + $0x1a0] sm:$0xff]
    %v76 = vld [vmem:[%s1 + $0x1a8] sm:$0xff]
    %v77 = vld [vmem:[%s1 + $0x1b0] sm:$0xff]
    %v78 = vld [vmem:[%s1 + $0x1b8] sm:$0xff]
    %v79 = vld [vmem:[%s1 + $0x1c0] sm:$0xff]
    %v80 = vld [vmem:[%s1 + $0x1c8] sm:$0xff]
    %v81 = vld [vmem:[%s2] sm:$0xf]
    %v83 = vlaneseq
    %v84 = vshrl.u32 %v83, 7
    %v85 = vsub.s32 0, %v84
    %v86 = vrot.slane %v81, %v85
    %v87 = vlaneseq
    %v88 = vshrl.u32 %v87, 7
    %v89 = vsub.s32 1, %v88
    %v90 = vrot.slane %v81, %v89
    %v91 = vlaneseq
    %v92 = vshrl.u32 %v91, 7
    %v93 = vsub.s32 2, %v92
    %v94 = vrot.slane %v81, %v93
    %v95 = vlaneseq
    %v96 = vshrl.u32 %v95, 7
    %v97 = vsub.s32 3, %v96
    %v98 = vrot.slane %v81, %v97
    %v105 = vunpack.c.l.s4 1966171168
    %v106 = vunpack.c.0.s8 %v105
    %v107 = vlaneseq
    %v108 = vshrl.u32 %v107, 7
    %v109 = vsub.s32 %v106, %v108
    %v110 = vrot.slane %v22, %v109
    %v111 = vcombine.high %v110, %v110
    %v113 = vunpack.c.l.s4 1966171168
    %v114 = vunpack.c.0.s8 %v113
    %v115 = vlaneseq
    %v116 = vshrl.u32 %v115, 7
    %v117 = vsub.s32 %v114, %v116
    %v118 = vrot.slane %v110, %v117
    %v120 = vunpack.c.l.s4 1966171168
    %v121 = vunpack.c.0.s8 %v120
    %v122 = vlaneseq
    %v123 = vshrl.u32 %v122, 7
    %v124 = vsub.s32 %v121, %v123
    %v125 = vrot.slane %v111, %v124
    %v185 = vunpack.c.l.b16 %v23
    %v186 = vunpack.c.h.b16 %v23
    %v187 = vunpack.c.l.b16 %v24
    %v188 = vunpack.c.h.b16 %v24
    %v189 = vunpack.c.l.b16 %v25
    %v190 = vunpack.c.h.b16 %v25
    %v191 = vunpack.c.l.b16 %v26
    %v192 = vunpack.c.h.b16 %v26
    %v193 = vunpack.c.l.b16 %v27
    %v194 = vunpack.c.h.b16 %v27
    %v195 = vunpack.c.l.b16 %v28
    %v196 = vunpack.c.h.b16 %v28
    %v197 = vunpack.c.l.b16 %v29
    %v198 = vunpack.c.h.b16 %v29
    %v199 = vunpack.c.l.b16 %v30
    %v200 = vunpack.c.h.b16 %v30
    %v201 = vunpack.c.l.b16 %v31
    %v202 = vunpack.c.h.b16 %v31
    %v203 = vunpack.c.l.b16 %v32
    %v204 = vunpack.c.h.b16 %v32
    %v205 = vunpack.c.l.b16 %v33
    %v206 = vunpack.c.h.b16 %v33
    %v207 = vunpack.c.l.b16 %v34
    %v208 = vunpack.c.h.b16 %v34
    %v209 = vunpack.c.l.b16 %v35
    %v210 = vunpack.c.h.b16 %v35
    %v211 = vunpack.c.l.b16 %v36
    %v212 = vunpack.c.h.b16 %v36
    %v213 = vunpack.c.l.b16 %v37
    %v214 = vunpack.c.h.b16 %v37
    %v215 = vunpack.c.l.b16 %v38
    %v216 = vunpack.c.h.b16 %v38
    %v217 = vunpack.c.l.b16 %v39
    %v218 = vunpack.c.h.b16 %v39
    %v219 = vunpack.c.l.b16 %v40
    %v220 = vunpack.c.h.b16 %v40
    %v221 = vunpack.c.l.b16 %v41
    %v222 = vunpack.c.h.b16 %v41
    %v223 = vunpack.c.l.b16 %v42
    %v224 = vunpack.c.h.b16 %v42
    %v225 = vunpack.c.l.b16 %v43
    %v226 = vunpack.c.h.b16 %v43
    %v227 = vunpack.c.l.b16 %v44
    %v228 = vunpack.c.h.b16 %v44
    %v229 = vunpack.c.l.b16 %v45
    %v230 = vunpack.c.h.b16 %v45
    %v231 = vunpack.c.l.b16 %v46
    %v232 = vunpack.c.h.b16 %v46
    %v233 = vunpack.c.l.b16 %v47
    %v234 = vunpack.c.h.b16 %v47
    %v235 = vunpack.c.l.b16 %v48
    %v236 = vunpack.c.h.b16 %v48
    %v237 = vunpack.c.l.b16 %v49
    %v238 = vunpack.c.h.b16 %v49
    %v239 = vunpack.c.l.b16 %v50
    %v240 = vunpack.c.h.b16 %v50
    %v241 = vunpack.c.l.b16 %v51
    %v242 = vunpack.c.h.b16 %v51
    %v243 = vunpack.c.l.b16 %v52
    %v244 = vunpack.c.h.b16 %v52
    %v245 = vunpack.c.l.b16 %v53
    %v246 = vunpack.c.h.b16 %v53
    %v247 = vunpack.c.l.b16 %v54
    %v248 = vunpack.c.h.b16 %v54
    %v249 = vunpack.c.l.b16 %v55
    %v250 = vunpack.c.h.b16 %v55
    %v251 = vunpack.c.l.b16 %v56
    %v252 = vunpack.c.h.b16 %v56
    %v253 = vunpack.c.l.b16 %v57
    %v254 = vunpack.c.h.b16 %v57
    %v255 = vunpack.c.l.b16 %v58
    %v256 = vunpack.c.h.b16 %v58
    %v257 = vunpack.c.l.b16 %v59
    %v258 = vunpack.c.h.b16 %v59
    %v259 = vunpack.c.l.b16 %v60
    %v260 = vunpack.c.h.b16 %v60
    %v261 = vunpack.c.l.b16 %v61
    %v262 = vunpack.c.h.b16 %v61
    %v263 = vunpack.c.l.b16 %v62
    %v264 = vunpack.c.h.b16 %v62
    %v265 = vunpack.c.l.b16 %v63
    %v266 = vunpack.c.h.b16 %v63
    %v267 = vunpack.c.l.b16 %v64
    %v268 = vunpack.c.h.b16 %v64
    %v269 = vunpack.c.l.b16 %v65
    %v270 = vunpack.c.h.b16 %v65
    %v271 = vunpack.c.l.b16 %v66
    %v272 = vunpack.c.h.b16 %v66
    %v273 = vunpack.c.l.b16 %v67
    %v274 = vunpack.c.h.b16 %v67
    %v275 = vunpack.c.l.b16 %v68
    %v276 = vunpack.c.h.b16 %v68
    %v277 = vunpack.c.l.b16 %v69
    %v278 = vunpack.c.h.b16 %v69
    %v279 = vunpack.c.l.b16 %v70
    %v280 = vunpack.c.h.b16 %v70
    %v281 = vunpack.c.l.b16 %v71
    %v282 = vunpack.c.h.b16 %v71
    %v283 = vunpack.c.l.b16 %v72
    %v284 = vunpack.c.h.b16 %v72
    %v285 = vunpack.c.l.b16 %v73
    %v286 = vunpack.c.h.b16 %v73
    %v287 = vunpack.c.l.b16 %v74
    %v288 = vunpack.c.h.b16 %v74
    %v289 = vunpack.c.l.b16 %v75
    %v290 = vunpack.c.h.b16 %v75
    %v291 = vunpack.c.l.b16 %v76
    %v292 = vunpack.c.h.b16 %v76
    %v293 = vunpack.c.l.b16 %v77
    %v294 = vunpack.c.h.b16 %v77
    %v295 = vunpack.c.l.b16 %v78
    %v296 = vunpack.c.h.b16 %v78
    %v297 = vunpack.c.l.b16 %v79
    %v298 = vunpack.c.h.b16 %v79
    %v299 = vunpack.c.l.b16 %v80
    %v300 = vunpack.c.h.b16 %v80
    %v301 = vpack.c.b16 %v189, %v185
    %v302 = vpack.c.b16 %v190, %v186
    %v303 = vpack.c.b16 %v191, %v187
    %v304 = vpack.c.b16 %v192, %v188
    %v305 = vpack.c.b16 %v197, %v193
    %v306 = vpack.c.b16 %v198, %v194
    %v307 = vpack.c.b16 %v199, %v195
    %v308 = vpack.c.b16 %v200, %v196
    %v309 = vpack.c.b16 %v205, %v201
    %v310 = vpack.c.b16 %v206, %v202
    %v311 = vpack.c.b16 %v207, %v203
    %v312 = vpack.c.b16 %v208, %v204
    %v313 = vpack.c.b16 %v213, %v209
    %v314 = vpack.c.b16 %v214, %v210
    %v315 = vpack.c.b16 %v215, %v211
    %v316 = vpack.c.b16 %v216, %v212
    %v317 = vpack.c.b16 %v221, %v217
    %v318 = vpack.c.b16 %v222, %v218
    %v319 = vpack.c.b16 %v223, %v219
    %v320 = vpack.c.b16 %v224, %v220
    %v321 = vpack.c.b16 %v229, %v225
    %v322 = vpack.c.b16 %v230, %v226
    %v323 = vpack.c.b16 %v231, %v227
    %v324 = vpack.c.b16 %v232, %v228
    %v325 = vpack.c.b16 %v237, %v233
    %v326 = vpack.c.b16 %v238, %v234
    %v327 = vpack.c.b16 %v239, %v235
    %v328 = vpack.c.b16 %v240, %v236
    %v329 = vpack.c.b16 %v245, %v241
    %v330 = vpack.c.b16 %v246, %v242
    %v331 = vpack.c.b16 %v247, %v243
    %v332 = vpack.c.b16 %v248, %v244
    %v333 = vpack.c.b16 %v253, %v249
    %v334 = vpack.c.b16 %v254, %v250
    %v335 = vpack.c.b16 %v255, %v251
    %v336 = vpack.c.b16 %v256, %v252
    %v337 = vpack.c.b16 %v261, %v257
    %v338 = vpack.c.b16 %v262, %v258
    %v339 = vpack.c.b16 %v263, %v259
    %v340 = vpack.c.b16 %v264, %v260
    %v341 = vpack.c.b16 %v269, %v265
    %v342 = vpack.c.b16 %v270, %v266
    %v343 = vpack.c.b16 %v271, %v267
    %v344 = vpack.c.b16 %v272, %v268
    %v345 = vpack.c.b16 %v277, %v273
    %v346 = vpack.c.b16 %v278, %v274
    %v347 = vpack.c.b16 %v279, %v275
    %v348 = vpack.c.b16 %v280, %v276
    %v349 = vpack.c.b16 %v285, %v281
    %v350 = vpack.c.b16 %v286, %v282
    %v351 = vpack.c.b16 %v287, %v283
    %v352 = vpack.c.b16 %v288, %v284
    %v353 = vpack.c.b16 %v293, %v289
    %v354 = vpack.c.b16 %v294, %v290
    %v355 = vpack.c.b16 %v295, %v291
    %v356 = vpack.c.b16 %v296, %v292
    %v357 = vpack.c.b16 %v297, %v297
    %v358 = vpack.c.b16 %v298, %v298
    %v359 = vpack.c.b16 %v299, %v299
    %v360 = vpack.c.b16 %v300, %v300
    %vm417 = vcmask 850944
    %v419 = vsel %vm417, %v125, 0
    %vm421 = vcmask 1043456
    %v423 = vsel %vm421, %v357, 0
    %v426 = vsel %vm421, %v358, 0
    %v429 = vsel %vm421, %v359, 0
    %v432 = vsel %vm421, %v360, 0
    %434 = vmatprep.subr.bf16.mxu0 %v302
    %435 = vmatpush1.bf16.msra.mxu0 %v301
    %436 = vmatprep.subr.bf16.mxu0 %v306
    %437 = vmatpush1.bf16.msra.mxu0 %v305
    %438 = vmatprep.subr.bf16.mxu0 %v310
    %439 = vmatpush1.bf16.msra.mxu0 %v309
    %440 = vmatprep.subr.bf16.mxu0 %v314
    %441 = vmatpush1.bf16.msra.mxu0 %v313
    %442 = vmatprep.subr.bf16.mxu0 %v318
    %443 = vmatpush1.bf16.msra.mxu0 %v317
    %444 = vmatprep.subr.bf16.mxu0 %v322
    %445 = vmatpush1.bf16.msra.mxu0 %v321
    %446 = vmatprep.subr.bf16.mxu0 %v326
    %447 = vmatpush1.bf16.msra.mxu0 %v325
    %448 = vmatprep.subr.bf16.mxu0 %v330
    %449 = vmatpush1.bf16.msra.mxu0 %v329
    %450 = vmatprep.subr.bf16.mxu0 %v334
    %451 = vmatpush1.bf16.msra.mxu0 %v333
    %452 = vmatprep.subr.bf16.mxu0 %v338
    %453 = vmatpush1.bf16.msra.mxu0 %v337
    %454 = vmatprep.subr.bf16.mxu0 %v342
    %455 = vmatpush1.bf16.msra.mxu0 %v341
    %456 = vmatprep.subr.bf16.mxu0 %v346
    %457 = vmatpush1.bf16.msra.mxu0 %v345
    %458 = vmatprep.subr.bf16.mxu0 %v350
    %459 = vmatpush1.bf16.msra.mxu0 %v349
    %460 = vmatprep.subr.bf16.mxu0 %v354
    %461 = vmatpush1.bf16.msra.mxu0 %v353
    %462 = vmatprep.subr.bf16.mxu0 %v426
    %463 = vmatpush1.bf16.msra.mxu0 %v423
    %464 = vmatprep.subr.bf16.mxu0 0
    %465 = vmatpush1.bf16.msra.mxu0 0
    %466 = vmatprep.mubr.bf16.mxu0 %v419
    %467 = vmatmul.mubr.bf16.gmra.mrb[0].mxu0 %v118
    %v468 = vpop.f32.mrb[0].mxu0
    %v469 = vadd.f32 %v86, %v468
    %v470 = vpop.f32.mrb[0].mxu0
    %v471 = vadd.f32 %v90, %v470
    %v472 = vpop.f32.mrb[0].mxu0
    %v473 = vpop.f32.mrb[0].mxu0
    %474 = vdwg.mxu0
    %475 = vmatprep.subr.bf16.mxu0 %v304
    %476 = vmatpush1.bf16.msra.mxu0 %v303
    %477 = vmatprep.subr.bf16.mxu0 %v308
    %478 = vmatpush1.bf16.msra.mxu0 %v307
    %479 = vmatprep.subr.bf16.mxu0 %v312
    %480 = vmatpush1.bf16.msra.mxu0 %v311
    %481 = vmatprep.subr.bf16.mxu0 %v316
    %482 = vmatpush1.bf16.msra.mxu0 %v315
    %483 = vmatprep.subr.bf16.mxu0 %v320
    %484 = vmatpush1.bf16.msra.mxu0 %v319
    %485 = vmatprep.subr.bf16.mxu0 %v324
    %486 = vmatpush1.bf16.msra.mxu0 %v323
    %487 = vmatprep.subr.bf16.mxu0 %v328
    %488 = vmatpush1.bf16.msra.mxu0 %v327
    %489 = vmatprep.subr.bf16.mxu0 %v332
    %490 = vmatpush1.bf16.msra.mxu0 %v331
    %491 = vmatprep.subr.bf16.mxu0 %v336
    %492 = vmatpush1.bf16.msra.mxu0 %v335
    %493 = vmatprep.subr.bf16.mxu0 %v340
    %494 = vmatpush1.bf16.msra.mxu0 %v339
    %495 = vmatprep.subr.bf16.mxu0 %v344
    %496 = vmatpush1.bf16.msra.mxu0 %v343
    %497 = vmatprep.subr.bf16.mxu0 %v348
    %498 = vmatpush1.bf16.msra.mxu0 %v347
    %499 = vmatprep.subr.bf16.mxu0 %v352
    %500 = vmatpush1.bf16.msra.mxu0 %v351
    %501 = vmatprep.subr.bf16.mxu0 %v356
    %502 = vmatpush1.bf16.msra.mxu0 %v355
    %503 = vmatprep.subr.bf16.mxu0 %v432
    %504 = vmatpush1.bf16.msra.mxu0 %v429
    %505 = vmatprep.subr.bf16.mxu0 0
    %506 = vmatpush1.bf16.msra.mxu0 0
    %507 = vmatprep.mubr.bf16.mxu0 %v419
    %508 = vmatmul.mubr.bf16.gmra.mrb[0].mxu0 %v118
    %v509 = vpop.f32.mrb[0].mxu0
    %v510 = vadd.f32 %v94, %v509
    %v511 = vpop.f32.mrb[0].mxu0
    %v512 = vadd.f32 %v98, %v511
    %v513 = vpop.f32.mrb[0].mxu0
    %v514 = vpop.f32.mrb[0].mxu0
    %515 = vdwg.mxu0
    %v516 = vmax.f32 %v469, 0.0
    %v517 = vmax.f32 %v471, 0.0
    %v518 = vmax.f32 %v510, 0.0
    %v519 = vmax.f32 %v512, 0.0
    %v520 = vld [vmem:[%s3] sm:$0xf]
    %v521 = vld [vmem:[%s3 + $0x4] sm:$0xf]
    %v522 = vld [vmem:[%s3 + $0x8] sm:$0xf]
    %v523 = vld [vmem:[%s3 + $0xc] sm:$0xf]
    %v524 = vld [vmem:[%s3 + $0x10] sm:$0xf]
    %v525 = vld [vmem:[%s3 + $0x14] sm:$0xf]
    %v526 = vld [vmem:[%s3 + $0x18] sm:$0xf]
    %v527 = vld [vmem:[%s3 + $0x1c] sm:$0xf]
    %v528 = vld [vmem:[%s3 + $0x20] sm:$0xf]
    %v529 = vld [vmem:[%s3 + $0x24] sm:$0xf]
    %v530 = vld [vmem:[%s3 + $0x28] sm:$0xf]
    %v531 = vld [vmem:[%s3 + $0x2c] sm:$0xf]
    %v532 = vld [vmem:[%s3 + $0x30] sm:$0xf]
    %v533 = vld [vmem:[%s3 + $0x34] sm:$0xf]
    %v534 = vld [vmem:[%s3 + $0x38] sm:$0xf]
    %v535 = vld [vmem:[%s3 + $0x3c] sm:$0xf]
    %v536 = vld [vmem:[%s3 + $0x40] sm:$0xf]
    %v537 = vld [vmem:[%s3 + $0x44] sm:$0xf]
    %v538 = vld [vmem:[%s3 + $0x48] sm:$0xf]
    %v539 = vld [vmem:[%s3 + $0x4c] sm:$0xf]
    %v540 = vld [vmem:[%s3 + $0x50] sm:$0xf]
    %v541 = vld [vmem:[%s3 + $0x54] sm:$0xf]
    %v542 = vld [vmem:[%s3 + $0x58] sm:$0xf]
    %v543 = vld [vmem:[%s3 + $0x5c] sm:$0xf]
    %v544 = vld [vmem:[%s3 + $0x60] sm:$0xf]
    %v545 = vld [vmem:[%s3 + $0x64] sm:$0xf]
    %v546 = vld [vmem:[%s3 + $0x68] sm:$0xf]
    %v547 = vld [vmem:[%s3 + $0x6c] sm:$0xf]
    %v548 = vld [vmem:[%s3 + $0x70] sm:$0xf]
    %v549 = vld [vmem:[%s3 + $0x74] sm:$0xf]
    %v550 = vld [vmem:[%s3 + $0x78] sm:$0xf]
    %v551 = vld [vmem:[%s3 + $0x7c] sm:$0xf]
    %v552 = vld [vmem:[%s3 + $0x80] sm:$0xf]
    %v553 = vld [vmem:[%s3 + $0x84] sm:$0xf]
    %v554 = vld [vmem:[%s3 + $0x88] sm:$0xf]
    %v555 = vld [vmem:[%s3 + $0x8c] sm:$0xf]
    %v556 = vld [vmem:[%s3 + $0x90] sm:$0xf]
    %v557 = vld [vmem:[%s3 + $0x94] sm:$0xf]
    %v558 = vld [vmem:[%s3 + $0x98] sm:$0xf]
    %v559 = vld [vmem:[%s3 + $0x9c] sm:$0xf]
    %v560 = vld [vmem:[%s3 + $0xa0] sm:$0xf]
    %v561 = vld [vmem:[%s3 + $0xa4] sm:$0xf]
    %v562 = vld [vmem:[%s3 + $0xa8] sm:$0xf]
    %v563 = vld [vmem:[%s3 + $0xac] sm:$0xf]
    %v564 = vld [vmem:[%s3 + $0xb0] sm:$0xf]
    %v565 = vld [vmem:[%s3 + $0xb4] sm:$0xf]
    %v566 = vld [vmem:[%s3 + $0xb8] sm:$0xf]
    %v567 = vld [vmem:[%s3 + $0xbc] sm:$0xf]
    %v568 = vld [vmem:[%s3 + $0xc0] sm:$0xf]
    %v569 = vld [vmem:[%s3 + $0xc4] sm:$0xf]
    %v570 = vld [vmem:[%s3 + $0xc8] sm:$0xf]
    %v571 = vld [vmem:[%s3 + $0xcc] sm:$0xf]
    %v572 = vld [vmem:[%s3 + $0xd0] sm:$0xf]
    %v573 = vld [vmem:[%s3 + $0xd4] sm:$0xf]
    %v574 = vld [vmem:[%s3 + $0xd8] sm:$0xf]
    %v575 = vld [vmem:[%s3 + $0xdc] sm:$0xf]
    %v576 = vld [vmem:[%s3 + $0xe0] sm:$0xf]
    %v577 = vld [vmem:[%s3 + $0xe4] sm:$0xf]
    %v578 = vld [vmem:[%s3 + $0xe8] sm:$0xf]
    %v579 = vld [vmem:[%s3 + $0xec] sm:$0xf]
    %v580 = vld [vmem:[%s3 + $0xf0] sm:$0xf]
    %v581 = vld [vmem:[%s3 + $0xf4] sm:$0xf]
    %v582 = vld [vmem:[%s3 + $0xf8] sm:$0xf]
    %v583 = vld [vmem:[%s3 + $0xfc] sm:$0xf]
    %v584 = vld [vmem:[%s4] sm:$0x1]
    %v585 = vadd.f32 %v516, 0.0
    %v586 = vadd.f32 %v517, 0.0
    %v587 = vadd.f32 %v518, 0.0
    %v588 = vadd.f32 %v519, 0.0
    %v589 = vpack.c.bf16 %v585, %v585
    %v590 = vpack.c.bf16 %v586, %v586
    %v591 = vpack.c.bf16 %v587, %v587
    %v592 = vpack.c.bf16 %v588, %v588
    %v657 = vunpack.c.l.b16 %v520
    %v658 = vunpack.c.l.b16 %v521
    %v659 = vunpack.c.l.b16 %v522
    %v660 = vunpack.c.l.b16 %v523
    %v661 = vunpack.c.l.b16 %v524
    %v662 = vunpack.c.l.b16 %v525
    %v663 = vunpack.c.l.b16 %v526
    %v664 = vunpack.c.l.b16 %v527
    %v665 = vunpack.c.l.b16 %v528
    %v666 = vunpack.c.l.b16 %v529
    %v667 = vunpack.c.l.b16 %v530
    %v668 = vunpack.c.l.b16 %v531
    %v669 = vunpack.c.l.b16 %v532
    %v670 = vunpack.c.l.b16 %v533
    %v671 = vunpack.c.l.b16 %v534
    %v672 = vunpack.c.l.b16 %v535
    %v673 = vunpack.c.l.b16 %v536
    %v674 = vunpack.c.l.b16 %v537
    %v675 = vunpack.c.l.b16 %v538
    %v676 = vunpack.c.l.b16 %v539
    %v677 = vunpack.c.l.b16 %v540
    %v678 = vunpack.c.l.b16 %v541
    %v679 = vunpack.c.l.b16 %v542
    %v680 = vunpack.c.l.b16 %v543
    %v681 = vunpack.c.l.b16 %v544
    %v682 = vunpack.c.l.b16 %v545
    %v683 = vunpack.c.l.b16 %v546
    %v684 = vunpack.c.l.b16 %v547
    %v685 = vunpack.c.l.b16 %v548
    %v686 = vunpack.c.l.b16 %v549
    %v687 = vunpack.c.l.b16 %v550
    %v688 = vunpack.c.l.b16 %v551
    %v689 = vunpack.c.l.b16 %v552
    %v690 = vunpack.c.l.b16 %v553
    %v691 = vunpack.c.l.b16 %v554
    %v692 = vunpack.c.l.b16 %v555
    %v693 = vunpack.c.l.b16 %v556
    %v694 = vunpack.c.l.b16 %v557
    %v695 = vunpack.c.l.b16 %v558
    %v696 = vunpack.c.l.b16 %v559
    %v697 = vunpack.c.l.b16 %v560
    %v698 = vunpack.c.l.b16 %v561
    %v699 = vunpack.c.l.b16 %v562
    %v700 = vunpack.c.l.b16 %v563
    %v701 = vunpack.c.l.b16 %v564
    %v702 = vunpack.c.l.b16 %v565
    %v703 = vunpack.c.l.b16 %v566
    %v704 = vunpack.c.l.b16 %v567
    %v705 = vunpack.c.l.b16 %v568
    %v706 = vunpack.c.l.b16 %v569
    %v707 = vunpack.c.l.b16 %v570
    %v708 = vunpack.c.l.b16 %v571
    %v709 = vunpack.c.l.b16 %v572
    %v710 = vunpack.c.l.b16 %v573
    %v711 = vunpack.c.l.b16 %v574
    %v712 = vunpack.c.l.b16 %v575
    %v713 = vunpack.c.l.b16 %v576
    %v714 = vunpack.c.l.b16 %v577
    %v715 = vunpack.c.l.b16 %v578
    %v716 = vunpack.c.l.b16 %v579
    %v717 = vunpack.c.l.b16 %v580
    %v718 = vunpack.c.l.b16 %v581
    %v719 = vunpack.c.l.b16 %v582
    %v720 = vunpack.c.l.b16 %v583
    %v721 = vpack.c.b16 %v658, %v657
    %v722 = vpack.c.b16 %v660, %v659
    %v723 = vpack.c.b16 %v662, %v661
    %v724 = vpack.c.b16 %v664, %v663
    %v725 = vpack.c.b16 %v666, %v665
    %v726 = vpack.c.b16 %v668, %v667
    %v727 = vpack.c.b16 %v670, %v669
    %v728 = vpack.c.b16 %v672, %v671
    %v729 = vpack.c.b16 %v674, %v673
    %v730 = vpack.c.b16 %v676, %v675
    %v731 = vpack.c.b16 %v678, %v677
    %v732 = vpack.c.b16 %v680, %v679
    %v733 = vpack.c.b16 %v682, %v681
    %v734 = vpack.c.b16 %v684, %v683
    %v735 = vpack.c.b16 %v686, %v685
    %v736 = vpack.c.b16 %v688, %v687
    %v737 = vpack.c.b16 %v690, %v689
    %v738 = vpack.c.b16 %v692, %v691
    %v739 = vpack.c.b16 %v694, %v693
    %v740 = vpack.c.b16 %v696, %v695
    %v741 = vpack.c.b16 %v698, %v697
    %v742 = vpack.c.b16 %v700, %v699
    %v743 = vpack.c.b16 %v702, %v701
    %v744 = vpack.c.b16 %v704, %v703
    %v745 = vpack.c.b16 %v706, %v705
    %v746 = vpack.c.b16 %v708, %v707
    %v747 = vpack.c.b16 %v710, %v709
    %v748 = vpack.c.b16 %v712, %v711
    %v749 = vpack.c.b16 %v714, %v713
    %v750 = vpack.c.b16 %v716, %v715
    %v751 = vpack.c.b16 %v718, %v717
    %v752 = vpack.c.b16 %v720, %v719
    %785 = vmatprep.subr.bf16.mxu0 0
    %786 = vmatpush1.bf16.msra.mxu0 %v721
    %787 = vmatprep.subr.bf16.mxu0 0
    %788 = vmatpush1.bf16.msra.mxu0 %v722
    %789 = vmatprep.subr.bf16.mxu0 0
    %790 = vmatpush1.bf16.msra.mxu0 %v723
    %791 = vmatprep.subr.bf16.mxu0 0
    %792 = vmatpush1.bf16.msra.mxu0 %v724
    %793 = vmatprep.subr.bf16.mxu0 0
    %794 = vmatpush1.bf16.msra.mxu0 %v725
    %795 = vmatprep.subr.bf16.mxu0 0
    %796 = vmatpush1.bf16.msra.mxu0 %v726
    %797 = vmatprep.subr.bf16.mxu0 0
    %798 = vmatpush1.bf16.msra.mxu0 %v727
    %799 = vmatprep.subr.bf16.mxu0 0
    %800 = vmatpush1.bf16.msra.mxu0 %v728
    %801 = vmatprep.subr.bf16.mxu0 0
    %802 = vmatpush1.bf16.msra.mxu0 %v729
    %803 = vmatprep.subr.bf16.mxu0 0
    %804 = vmatpush1.bf16.msra.mxu0 %v730
    %805 = vmatprep.subr.bf16.mxu0 0
    %806 = vmatpush1.bf16.msra.mxu0 %v731
    %807 = vmatprep.subr.bf16.mxu0 0
    %808 = vmatpush1.bf16.msra.mxu0 %v732
    %809 = vmatprep.subr.bf16.mxu0 0
    %810 = vmatpush1.bf16.msra.mxu0 %v733
    %811 = vmatprep.subr.bf16.mxu0 0
    %812 = vmatpush1.bf16.msra.mxu0 %v734
    %813 = vmatprep.subr.bf16.mxu0 0
    %814 = vmatpush1.bf16.msra.mxu0 %v735
    %815 = vmatprep.subr.bf16.mxu0 0
    %816 = vmatpush1.bf16.msra.mxu0 %v736
    %817 = vmatprep.mubr.bf16.mxu0 %v590
    %818 = vmatmul.mubr.bf16.gmra.mrb[0].mxu0 %v589
    %v819 = vpop.f32.mrb[0].mxu0
    %v820 = vadd.f32 %v584, %v819
    %v821 = vpop.f32.mrb[0].mxu0
    %v822 = vpop.f32.mrb[0].mxu0
    %v823 = vpop.f32.mrb[0].mxu0
    %824 = vdwg.mxu0
    %825 = vmatprep.subr.bf16.mxu0 0
    %826 = vmatpush1.bf16.msra.mxu0 %v737
    %827 = vmatprep.subr.bf16.mxu0 0
    %828 = vmatpush1.bf16.msra.mxu0 %v738
    %829 = vmatprep.subr.bf16.mxu0 0
    %830 = vmatpush1.bf16.msra.mxu0 %v739
    %831 = vmatprep.subr.bf16.mxu0 0
    %832 = vmatpush1.bf16.msra.mxu0 %v740
    %833 = vmatprep.subr.bf16.mxu0 0
    %834 = vmatpush1.bf16.msra.mxu0 %v741
    %835 = vmatprep.subr.bf16.mxu0 0
    %836 = vmatpush1.bf16.msra.mxu0 %v742
    %837 = vmatprep.subr.bf16.mxu0 0
    %838 = vmatpush1.bf16.msra.mxu0 %v743
    %839 = vmatprep.subr.bf16.mxu0 0
    %840 = vmatpush1.bf16.msra.mxu0 %v744
    %841 = vmatprep.subr.bf16.mxu0 0
    %842 = vmatpush1.bf16.msra.mxu0 %v745
    %843 = vmatprep.subr.bf16.mxu0 0
    %844 = vmatpush1.bf16.msra.mxu0 %v746
    %845 = vmatprep.subr.bf16.mxu0 0
    %846 = vmatpush1.bf16.msra.mxu0 %v747
    %847 = vmatprep.subr.bf16.mxu0 0
    %848 = vmatpush1.bf16.msra.mxu0 %v748
    %849 = vmatprep.subr.bf16.mxu0 0
    %850 = vmatpush1.bf16.msra.mxu0 %v749
    %851 = vmatprep.subr.bf16.mxu0 0
    %852 = vmatpush1.bf16.msra.mxu0 %v750
    %853 = vmatprep.subr.bf16.mxu0 0
    %854 = vmatpush1.bf16.msra.mxu0 %v751
    %855 = vmatprep.subr.bf16.mxu0 0
    %856 = vmatpush1.bf16.msra.mxu0 %v752
    %857 = vmatprep.mubr.bf16.mxu0 %v592
    %858 = vmatmul.mubr.bf16.gmra.mrb[0].mxu0 %v591
    %v859 = vpop.f32.mrb[0].mxu0
    %v860 = vadd.f32 %v820, %v859
    %v861 = vpop.f32.mrb[0].mxu0
    %v862 = vpop.f32.mrb[0].mxu0
    %v863 = vpop.f32.mrb[0].mxu0
    %864 = vdwg.mxu0
    %vm865 = vcmask 73728
    %866 = vst.msk [vmem:[#allocation2] sm:$0x1] %vm865, %v860
    %v868 = vshrl.u32 %v589, 16
    %v871 = vshrl.u32 %v590, 16
    %v874 = vshrl.u32 %v591, 16
    %v877 = vshrl.u32 %v592, 16
    %883 = vmatprep.subr.bf16.mxu0 0
    %884 = vmatpush1.bf16.msra.mxu0 %v721
    %885 = vmatprep.subr.bf16.mxu0 0
    %886 = vmatpush1.bf16.msra.mxu0 %v722
    %887 = vmatprep.subr.bf16.mxu0 0
    %888 = vmatpush1.bf16.msra.mxu0 %v723
    %889 = vmatprep.subr.bf16.mxu0 0
    %890 = vmatpush1.bf16.msra.mxu0 %v724
    %891 = vmatprep.subr.bf16.mxu0 0
    %892 = vmatpush1.bf16.msra.mxu0 %v725
    %893 = vmatprep.subr.bf16.mxu0 0
    %894 = vmatpush1.bf16.msra.mxu0 %v726
    %895 = vmatprep.subr.bf16.mxu0 0
    %896 = vmatpush1.bf16.msra.mxu0 %v727
    %897 = vmatprep.subr.bf16.mxu0 0
    %898 = vmatpush1.bf16.msra.mxu0 %v728
    %899 = vmatprep.subr.bf16.mxu0 0
    %900 = vmatpush1.bf16.msra.mxu0 %v729
    %901 = vmatprep.subr.bf16.mxu0 0
    %902 = vmatpush1.bf16.msra.mxu0 %v730
    %903 = vmatprep.subr.bf16.mxu0 0
    %904 = vmatpush1.bf16.msra.mxu0 %v731
    %905 = vmatprep.subr.bf16.mxu0 0
    %906 = vmatpush1.bf16.msra.mxu0 %v732
    %907 = vmatprep.subr.bf16.mxu0 0
    %908 = vmatpush1.bf16.msra.mxu0 %v733
    %909 = vmatprep.subr.bf16.mxu0 0
    %910 = vmatpush1.bf16.msra.mxu0 %v734
    %911 = vmatprep.subr.bf16.mxu0 0
    %912 = vmatpush1.bf16.msra.mxu0 %v735
    %913 = vmatprep.subr.bf16.mxu0 0
    %914 = vmatpush1.bf16.msra.mxu0 %v736
    %915 = vmatprep.mubr.bf16.mxu0 %v871
    %916 = vmatmul.mubr.bf16.gmra.mrb[0].mxu0 %v868
    %v917 = vpop.f32.mrb[0].mxu0
    %v918 = vadd.f32 %v584, %v917
    %v919 = vpop.f32.mrb[0].mxu0
    %v920 = vpop.f32.mrb[0].mxu0
    %v921 = vpop.f32.mrb[0].mxu0
    %922 = vdwg.mxu0
    %923 = vmatprep.subr.bf16.mxu0 0
    %924 = vmatpush1.bf16.msra.mxu0 %v737
    %925 = vmatprep.subr.bf16.mxu0 0
    %926 = vmatpush1.bf16.msra.mxu0 %v738
    %927 = vmatprep.subr.bf16.mxu0 0
    %928 = vmatpush1.bf16.msra.mxu0 %v739
    %929 = vmatprep.subr.bf16.mxu0 0
    %930 = vmatpush1.bf16.msra.mxu0 %v740
    %931 = vmatprep.subr.bf16.mxu0 0
    %932 = vmatpush1.bf16.msra.mxu0 %v741
    %933 = vmatprep.subr.bf16.mxu0 0
    %934 = vmatpush1.bf16.msra.mxu0 %v742
    %935 = vmatprep.subr.bf16.mxu0 0
    %936 = vmatpush1.bf16.msra.mxu0 %v743
    %937 = vmatprep.subr.bf16.mxu0 0
    %938 = vmatpush1.bf16.msra.mxu0 %v744
    %939 = vmatprep.subr.bf16.mxu0 0
    %940 = vmatpush1.bf16.msra.mxu0 %v745
    %941 = vmatprep.subr.bf16.mxu0 0
    %942 = vmatpush1.bf16.msra.mxu0 %v746
    %943 = vmatprep.subr.bf16.mxu0 0
    %944 = vmatpush1.bf16.msra.mxu0 %v747
    %945 = vmatprep.subr.bf16.mxu0 0
    %946 = vmatpush1.bf16.msra.mxu0 %v748
    %947 = vmatprep.subr.bf16.mxu0 0
    %948 = vmatpush1.bf16.msra.mxu0 %v749
    %949 = vmatprep.subr.bf16.mxu0 0
    %950 = vmatpush1.bf16.msra.mxu0 %v750
    %951 = vmatprep.subr.bf16.mxu0 0
    %952 = vmatpush1.bf16.msra.mxu0 %v751
    %953 = vmatprep.subr.bf16.mxu0 0
    %954 = vmatpush1.bf16.msra.mxu0 %v752
    %955 = vmatprep.mubr.bf16.mxu0 %v877
    %956 = vmatmul.mubr.bf16.gmra.mrb[0].mxu0 %v874
    %v957 = vpop.f32.mrb[0].mxu0
    %v958 = vadd.f32 %v918, %v957
    %v959 = vpop.f32.mrb[0].mxu0
    %v960 = vpop.f32.mrb[0].mxu0
    %v961 = vpop.f32.mrb[0].mxu0
    %962 = vdwg.mxu0
    %963 = vst.msk [vmem:[#allocation2 + $0x1] sm:$0x1] %vm865, %v958
    // Predicated region
    $region22: #{shufflenet_v2_forward.37} parent=1 // pred_check
      _
    $region23: #{shufflenet_v2_forward.37} parent=1 // pred_check_branch
      %965 = sbr.rel (0) target = $region25
    $region24: #{shufflenet_v2_forward.37} parent=1 // pred_region
      %s967 = ssub.s32 32, 32
      %968 = vsyncadd [#allocation3], %s967
      %s970 = sshll.u32 [#allocation2], 4
      %s971 = int_to_ptr.vmem [resolvable:$true] %s970
      %973 = dma.vmem_to_hbm [thread:$0]  %s971, 32, %s5, [#allocation3]
    $region25: #{shufflenet_v2_forward.37} parent=1 // pred_fallthru
      _
    // Predicated region
    $region26: #{shufflenet_v2_forward.37} parent=1 // pred_check
      _
    $region27: #{shufflenet_v2_forward.37} parent=1 // pred_check_branch
      %975 = sbr.rel (0) target = $region29
    $region28: #{shufflenet_v2_forward.37} parent=1 // pred_region
      %976 = dma.done [#allocation3], 32
    $region29: #{shufflenet_v2_forward.37} parent=1 // pred_fallthru
      _
    %977 = vsyncpa [#allocation3], 1

</llo_original>
